<compile_context>
chip_gen: v5e
topology: v5e:2x2
jax: 0.10.0
libtpu: 0.0.40
codegen_flags: <defaults>
</compile_context>

<pallas_src>
import numpy as np
import jax
import jax.numpy as jnp
from jax import lax
from jax.experimental import pallas as pl
from jax.experimental.pallas import tpu as pltpu

BN_EPS = 1e-5


# ---------------- Pallas kernel (fully fused UpConvBlock) ----------------

def _conv3x3_relu_bn_packed(src_scr, n_in, w_ref, b_row, s_row, t_row,
                            Ho, Wo, Cout):
    """Lane-packed 3x3 SAME conv + bias + ReLU + folded BN(eval).

    src_scr : VMEM scratch of zero-padded (Hp, Wp) input planes.
    w_ref   : (n_in*9, Cout*Wo) pre-tiled per-tap weight rows; lane segment o
              of row i*9 + dy*3 + dx holds w[o, i, dy, dx].
    b/s/t_row : (1, Cout*Wo) packed bias / BN-scale / BN-offset rows.

    The accumulator is one lane-dense (Ho, Cout*Wo) array covering all Cout
    output channels: each tap is one full-width VPU FMA instead of Cout
    quarter-width ones, and the epilogue / store are unmasked.
    """
    L = Cout * Wo
    acc = jnp.zeros((Ho, L), jnp.float32) + b_row          # bias init
    for i in range(n_in):
        p = src_scr[i]                                     # (Hp, Wp), zero border
        for dx in range(3):
            col = p[:, dx:dx + Wo]                         # lane shift, once per dx
            tiled = jnp.concatenate([col] * Cout, axis=1)  # (Hp, L) lane-tiled tap
            for dy in range(3):
                r = i * 9 + dy * 3 + dx
                wrow = w_ref[r:r + 1, :]                   # (1, L) pre-tiled weights
                acc = acc + wrow * tiled[dy:dy + Ho, :]    # packed FMA (all Cout)
    return jnp.maximum(acc, 0.0) * s_row + t_row           # ReLU + folded BN(eval)


def upconv_fused_kernel(x_ref, skip_ref, ahp_ref, awtp_ref,
                        wa_ref, ea_ref, wb_ref, eb_ref,
                        w1_s, b1_s,
                        o_ref, pad_scr, mid_scr):
    """One batch image per grid step.

    x_ref    : (1, Cin, H, W)        input feature map
    skip_ref : (1, Cout, 2H, 2W)     skip connection (UNPADDED)
    ahp_ref  : (2H+2, H)   bilinear-x2 row matrix with zero border rows
    awtp_ref : (W, 2W+2)   bilinear-x2 col matrix (transposed), zero border cols
    wa_ref   : (2*Cout*9, Cout*Wo)   conv1 per-tap lane-tiled weight rows
    ea_ref   : (3, Cout*Wo)          conv1 packed [bias, bn_scale, bn_offset] rows
    wb_ref   : (Cout*9, Cout*Wo)     conv2 per-tap lane-tiled weight rows
    eb_ref   : (3, Cout*Wo)          conv2 packed epilogue rows
    w1_s/b1_s: SMEM 1x1-conv weights / bias
    o_ref    : (1, 2H, Cout*2W)      lane-packed output (unpacked in wrapper)
    pad_scr  : VMEM (2*Cout, 2H+2, 2W+2)  conv1 padded input planes (up ++ skip)
    mid_scr  : VMEM (Cout,   2H+2, 2W+2)  conv2 padded input planes
    """
    _, Cin, H, W = x_ref.shape
    _, Cout, Ho, Wo = skip_ref.shape

    # Zero the padded-plane scratches (the zero border is the SAME-conv halo).
    pad_scr[...] = jnp.zeros_like(pad_scr)
    mid_scr[...] = jnp.zeros_like(mid_scr)

    ahp = ahp_ref[...]                                     # (Hp, H)
    awtp = awtp_ref[...]                                   # (W, Wp)

    # ---- UpsampleBlock('up_conv'): 1x1 conv (VPU scalar mix) then separable
    #      bilinear x2 (two tiny MXU matmuls per channel).  The zero-bordered
    #      upsample matrices make `up` come out already zero-padded; each
    #      plane is staged straight into VMEM scratch (short live ranges).
    for o in range(Cout):
        pw = jnp.zeros((H, W), jnp.float32) + b1_s[o]      # bias commutes w/ bilinear
        for c in range(Cin):
            pw = pw + w1_s[o * Cin + c] * x_ref[0, c]      # 1x1 conv channel mix
        uw = jnp.dot(pw, awtp, preferred_element_type=jnp.float32)   # (H, Wp)
        pad_scr[o] = jnp.dot(ahp, uw, preferred_element_type=jnp.float32)

    # ---- concat([up, skip], channel) == write skip into the second half of
    #      the padded scratch (no HBM concat, no wrapper-side jnp.pad).
    for c in range(Cout):
        pad_scr[Cout + c, pl.ds(1, Ho), pl.ds(1, Wo)] = skip_ref[0, c]

    # ---- ConvBlock conv1: 3x3 SAME + bias + ReLU + BN(eval, folded) ----
    ba_row, sa_row, ta_row = ea_ref[0:1, :], ea_ref[1:2, :], ea_ref[2:3, :]
    y1 = _conv3x3_relu_bn_packed(pad_scr, 2 * Cout, wa_ref,
                                 ba_row, sa_row, ta_row, Ho, Wo, Cout)

    # Re-pad conv1 output via VMEM scratch (replaces the old pv/ph matmuls).
    for o in range(Cout):
        mid_scr[o, pl.ds(1, Ho), pl.ds(1, Wo)] = y1[:, o * Wo:(o + 1) * Wo]

    # ---- ConvBlock conv2: 3x3 SAME + bias + ReLU + BN(eval, folded) ----
    bb_row, sb_row, tb_row = eb_ref[0:1, :], eb_ref[1:2, :], eb_ref[2:3, :]
    y2 = _conv3x3_relu_bn_packed(mid_scr, Cout, wb_ref,
                                 bb_row, sb_row, tb_row, Ho, Wo, Cout)

    # Lane-dense (Ho, Cout*Wo) store; wrapper unpacks back to NCHW.
    o_ref[0] = y2.astype(o_ref.dtype)


# ---------------- wrapper (glue: BN folding, weight packing, BlockSpecs) ----------------

def bilinear_up_matrix(n_in):
    """nn.Upsample(scale_factor=2, mode='bilinear', align_corners=False) along
    one spatial dim, as an exact (2*n_in, n_in) interpolation matrix."""
    n_out = 2 * n_in
    A = np.zeros((n_out, n_in), np.float64)
    for i in range(n_out):
        src = max((i + 0.5) * (n_in / n_out) - 0.5, 0.0)
        i0 = min(int(np.floor(src)), n_in - 1)
        i1 = min(i0 + 1, n_in - 1)
        lam = src - i0
        A[i, i0] += 1.0 - lam
        A[i, i1] += lam
    return A


def _upsample_matrices(H, W):
    """Separable bilinear-x2 matrices with a zero border, so the upsampled
    result is already zero-padded for the following 3x3 SAME conv."""
    Ho, Wo = 2 * H, 2 * W
    Ah = bilinear_up_matrix(H)                             # (Ho, H)
    Aw = bilinear_up_matrix(W)                             # (Wo, W)
    ah_pad = np.zeros((Ho + 2, H), np.float32); ah_pad[1:-1, :] = Ah
    awt_pad = np.zeros((W, Wo + 2), np.float32); awt_pad[:, 1:-1] = Aw.T
    return jnp.asarray(ah_pad), jnp.asarray(awt_pad)


def upconv_block_forward(x, skip, params):
    """UpConvBlock forward (up_mode='up_conv', conv_bridge=False, shortcut=False)."""
    N, Cin, H, W = x.shape
    Cout = params["w_up"].shape[0]
    Ho, Wo = 2 * H, 2 * W
    Hp, Wp = Ho + 2, Wo + 2
    L = Cout * Wo                                          # packed lane width

    ah_pad, awt_pad = _upsample_matrices(H, W)

    # Fold BN(eval) into per-channel scale/offset: y = relu(conv) * s + t
    sa = params["g_a"] * lax.rsqrt(params["var_a"] + BN_EPS)
    ta = params["bt_a"] - params["mu_a"] * sa
    sb = params["g_b"] * lax.rsqrt(params["var_b"] + BN_EPS)
    tb = params["bt_b"] - params["mu_b"] * sb

    # Lane-packed per-tap weight rows: row (i*9 + dy*3 + dx), lane segment o
    # (Wo lanes wide) holds w[o, i, dy, dx].
    def pack_rows(w):                                      # (Cout, Cin_c, 3, 3)
        cin_c = w.shape[1]
        return jnp.repeat(w.transpose(1, 2, 3, 0).reshape(cin_c * 9, Cout), Wo, axis=1)

    def pack_vec(v):                                       # (Cout,) -> (Cout*Wo,)
        return jnp.repeat(v, Wo)

    wa_rows = pack_rows(params["w_a"])                     # (2*Cout*9, L)
    wb_rows = pack_rows(params["w_b"])                     # (Cout*9,   L)
    epi_a = jnp.stack([pack_vec(params["b_a"]), pack_vec(sa), pack_vec(ta)])   # (3, L)
    epi_b = jnp.stack([pack_vec(params["b_b"]), pack_vec(sb), pack_vec(tb)])   # (3, L)

    smem = pl.BlockSpec(memory_space=pltpu.MemorySpace.SMEM)
    out_packed = pl.pallas_call(
        upconv_fused_kernel,
        out_shape=jax.ShapeDtypeStruct((N, Ho, L), jnp.float32),
        grid=(N,),
        in_specs=[
            pl.BlockSpec((1, Cin, H, W), lambda n: (n, 0, 0, 0)),       # x
            pl.BlockSpec((1, Cout, Ho, Wo), lambda n: (n, 0, 0, 0)),    # skip (unpadded)
            pl.BlockSpec((Hp, H), lambda n: (0, 0)),                    # A_h (padded)
            pl.BlockSpec((W, Wp), lambda n: (0, 0)),                    # A_w^T (padded)
            pl.BlockSpec((2 * Cout * 9, L), lambda n: (0, 0)),          # conv1 weight rows
            pl.BlockSpec((3, L), lambda n: (0, 0)),                     # conv1 epilogue rows
            pl.BlockSpec((Cout * 9, L), lambda n: (0, 0)),              # conv2 weight rows
            pl.BlockSpec((3, L), lambda n: (0, 0)),                     # conv2 epilogue rows
            smem, smem,                                                 # w_up, b_up
        ],
        out_specs=pl.BlockSpec((1, Ho, L), lambda n: (n, 0, 0)),        # lane-dense output
        scratch_shapes=[pltpu.VMEM((2 * Cout, Hp, Wp), jnp.float32),    # conv1 padded planes
                        pltpu.VMEM((Cout, Hp, Wp), jnp.float32)],       # conv2 padded planes
        compiler_params=pltpu.CompilerParams(dimension_semantics=("parallel",)),
    )(x, skip, ah_pad, awt_pad, wa_rows, epi_a, wb_rows, epi_b,
      params["w_up"].reshape(-1), params["b_up"])

    # Unpack the lane-packed output back to NCHW (tiny wrapper-side transpose).
    return out_packed.reshape(N, Ho, Cout, Wo).transpose(0, 2, 1, 3)


# ---------------- pure-JAX reference (for correctness check) ----------------

def _conv_ref(x, w, b, padding):
    y = lax.conv_general_dilated(x, w, (1, 1), padding,
                                 dimension_numbers=("NCHW", "OIHW", "NCHW"),
                                 precision=lax.Precision.HIGHEST)
    return y + b[None, :, None, None]


def _bn_ref(x, g, bt, mu, var):
    s = (g / jnp.sqrt(var + BN_EPS))[None, :, None, None]
    return (x - mu[None, :, None, None]) * s + bt[None, :, None, None]


def reference_forward(x, skip, params):
    N, Cin, H, W = x.shape
    Ah = jnp.asarray(bilinear_up_matrix(H), jnp.float32)
    Aw = jnp.asarray(bilinear_up_matrix(W), jnp.float32)
    up_x = jnp.einsum("ph,nchw,qw->ncpq", Ah, x, Aw, precision="highest")
    up = _conv_ref(up_x, params["w_up"][:, :, None, None], params["b_up"], "VALID")
    out = jnp.concatenate([up, skip], axis=1)
    out = _bn_ref(jnp.maximum(_conv_ref(out, params["w_a"], params["b_a"], "SAME"), 0.0),
                  params["g_a"], params["bt_a"], params["mu_a"], params["var_a"])
    out = _bn_ref(jnp.maximum(_conv_ref(out, params["w_b"], params["b_b"], "SAME"), 0.0),
                  params["g_b"], params["bt_b"], params["mu_b"], params["var_b"])
    return out


if __name__ == "__main__":
    in_c, out_c = 8, 4
    N, H, W = 2, 16, 16
    f32 = jnp.float32
    ks = jax.random.split(jax.random.PRNGKey(0), 16)

    x = jax.random.normal(ks[0], (N, in_c, H, W), f32)
    skip = jax.random.normal(ks[1], (N, out_c, 2 * H, 2 * W), f32)

    params = dict(
        # UpsampleBlock 'up_conv': Conv2d(in_c, out_c, kernel_size=1) weight/bias
        w_up=0.2 * jax.random.normal(ks[2], (out_c, in_c), f32),
        b_up=0.1 * jax.random.normal(ks[3], (out_c,), f32),
        # ConvBlock(2*out_c, out_c): conv1 + BN1
        w_a=0.2 * jax.random.normal(ks[4], (out_c, 2 * out_c, 3, 3), f32),
        b_a=0.1 * jax.random.normal(ks[5], (out_c,), f32),
        g_a=1.0 + 0.1 * jax.random.normal(ks[6], (out_c,), f32),
        bt_a=0.1 * jax.random.normal(ks[7], (out_c,), f32),
        mu_a=0.1 * jax.random.normal(ks[8], (out_c,), f32),
        var_a=0.9 + 0.2 * jax.random.uniform(ks[9], (out_c,), f32),
        # ConvBlock conv2 + BN2
        w_b=0.2 * jax.random.normal(ks[10], (out_c, out_c, 3, 3), f32),
        b_b=0.1 * jax.random.normal(ks[11], (out_c,), f32),
        g_b=1.0 + 0.1 * jax.random.normal(ks[12], (out_c,), f32),
        bt_b=0.1 * jax.random.normal(ks[13], (out_c,), f32),
        mu_b=0.1 * jax.random.normal(ks[14], (out_c,), f32),
        var_b=0.9 + 0.2 * jax.random.uniform(ks[15], (out_c,), f32),
    )

    out = jax.jit(upconv_block_forward)(x, skip, params)
    out = jax.block_until_ready(out)
    assert out.shape == (N, out_c, 2 * H, 2 * W), out.shape

    ref = reference_forward(x, skip, params)
    np.testing.assert_allclose(np.asarray(out), np.asarray(ref), atol=2e-4, rtol=2e-4)
    print("KERNEL_OK")
</pallas_src>

<mosaic_0001>
module attributes {stable_mosaic.version = 11 : i64} {
  func.func @upconv_fused_kernel(%arg0: i32, %arg1: memref<1x8x16x16xf32, #tpu.memory_space<vmem>>, %arg2: memref<1x4x32x32xf32, #tpu.memory_space<vmem>>, %arg3: memref<34x16xf32, #tpu.memory_space<vmem>>, %arg4: memref<16x34xf32, #tpu.memory_space<vmem>>, %arg5: memref<72x128xf32, #tpu.memory_space<vmem>>, %arg6: memref<3x128xf32, #tpu.memory_space<vmem>>, %arg7: memref<36x128xf32, #tpu.memory_space<vmem>>, %arg8: memref<3x128xf32, #tpu.memory_space<vmem>>, %arg9: memref<32xf32, #tpu.memory_space<smem>>, %arg10: memref<4xf32, #tpu.memory_space<smem>>, %arg11: memref<1x32x128xf32, #tpu.memory_space<vmem>>, %arg12: memref<8x34x34xf32, #tpu.memory_space<vmem>>, %arg13: memref<4x34x34xf32, #tpu.memory_space<vmem>>) attributes {dimension_semantics = [#tpu.dimension_semantics<parallel>], iteration_bounds = array<i64: 2>, scalar_prefetch = 0 : i64, scratch_operands = 2 : i64, tpu.core_type = #tpu.core_type<tc>, window_params = [{transform_indices = @transform_0, window_bounds = array<i64: 1, 8, 16, 16>}, {transform_indices = @transform_1, window_bounds = array<i64: 1, 4, 32, 32>}, {pipeline_mode = #tpu.pipeline_mode<synchronous>, transform_indices = @transform_2, window_bounds = array<i64: 34, 16>}, {pipeline_mode = #tpu.pipeline_mode<synchronous>, transform_indices = @transform_3, window_bounds = array<i64: 16, 34>}, {pipeline_mode = #tpu.pipeline_mode<synchronous>, transform_indices = @transform_4, window_bounds = array<i64: 72, 128>}, {pipeline_mode = #tpu.pipeline_mode<synchronous>, transform_indices = @transform_5, window_bounds = array<i64: 3, 128>}, {pipeline_mode = #tpu.pipeline_mode<synchronous>, transform_indices = @transform_6, window_bounds = array<i64: 36, 128>}, {pipeline_mode = #tpu.pipeline_mode<synchronous>, transform_indices = @transform_7, window_bounds = array<i64: 3, 128>}, {transform_indices = @transform_8, window_bounds = array<i64: 32>}, {transform_indices = @transform_9, window_bounds = array<i64: 4>}, {transform_indices = @transform_10, window_bounds = array<i64: 1, 32, 128>}]} {
    %cst = arith.constant 0.000000e+00 : f32
    %0 = vector.broadcast %cst : f32 to vector<8x34x34xf32>
    %c0 = arith.constant 0 : index
    %c0_0 = arith.constant 0 : index
    %c0_1 = arith.constant 0 : index
    %1 = vector.load %arg12[%c0, %c0_0, %c0_1] : memref<8x34x34xf32, #tpu.memory_space<vmem>>, vector<8x34x34xf32>
    tpu.vector_store %arg12[%c0, %c0_0, %c0_1], %0 {strides = array<i32>} : memref<8x34x34xf32, #tpu.memory_space<vmem>>, vector<8x34x34xf32>,
    %cst_2 = arith.constant 0.000000e+00 : f32
    %2 = vector.broadcast %cst_2 : f32 to vector<4x34x34xf32>
    %c0_3 = arith.constant 0 : index
    %c0_4 = arith.constant 0 : index
    %c0_5 = arith.constant 0 : index
    %3 = vector.load %arg13[%c0_3, %c0_4, %c0_5] : memref<4x34x34xf32, #tpu.memory_space<vmem>>, vector<4x34x34xf32>
    tpu.vector_store %arg13[%c0_3, %c0_4, %c0_5], %2 {strides = array<i32>} : memref<4x34x34xf32, #tpu.memory_space<vmem>>, vector<4x34x34xf32>,
    %c0_6 = arith.constant 0 : index
    %c0_7 = arith.constant 0 : index
    %4 = vector.load %arg3[%c0_6, %c0_7] : memref<34x16xf32, #tpu.memory_space<vmem>>, vector<34x16xf32>
    %c0_8 = arith.constant 0 : index
    %c0_9 = arith.constant 0 : index
    %5 = vector.load %arg4[%c0_8, %c0_9] : memref<16x34xf32, #tpu.memory_space<vmem>>, vector<16x34xf32>
    %cst_10 = arith.constant 0.000000e+00 : f32
    %6 = vector.broadcast %cst_10 : f32 to vector<16x16xf32>
    %c0_11 = arith.constant 0 : index
    %7 = memref.load %arg10[%c0_11] : memref<4xf32, #tpu.memory_space<smem>>
    %8 = vector.broadcast %7 : f32 to vector<16x16xf32>
    %9 = arith.addf %6, %8 : vector<16x16xf32>
    %c0_12 = arith.constant 0 : index
    %10 = memref.load %arg9[%c0_12] : memref<32xf32, #tpu.memory_space<smem>>
    %c0_13 = arith.constant 0 : index
    %c0_14 = arith.constant 0 : index
    %c0_15 = arith.constant 0 : index
    %c0_16 = arith.constant 0 : index
    %11 = vector.load %arg1[%c0_13, %c0_14, %c0_15, %c0_16] : memref<1x8x16x16xf32, #tpu.memory_space<vmem>>, vector<1x1x16x16xf32>
    %12 = vector.shape_cast %11 : vector<1x1x16x16xf32> to vector<16x16xf32>
    %13 = vector.broadcast %10 : f32 to vector<16x16xf32>
    %14 = arith.mulf %13, %12 : vector<16x16xf32>
    %15 = arith.addf %9, %14 : vector<16x16xf32>
    %c1 = arith.constant 1 : index
    %16 = memref.load %arg9[%c1] : memref<32xf32, #tpu.memory_space<smem>>
    %c0_17 = arith.constant 0 : index
    %c1_18 = arith.constant 1 : index
    %c0_19 = arith.constant 0 : index
    %c0_20 = arith.constant 0 : index
    %17 = vector.load %arg1[%c0_17, %c1_18, %c0_19, %c0_20] : memref<1x8x16x16xf32, #tpu.memory_space<vmem>>, vector<1x1x16x16xf32>
    %18 = vector.shape_cast %17 : vector<1x1x16x16xf32> to vector<16x16xf32>
    %19 = vector.broadcast %16 : f32 to vector<16x16xf32>
    %20 = arith.mulf %19, %18 : vector<16x16xf32>
    %21 = arith.addf %15, %20 : vector<16x16xf32>
    %c2 = arith.constant 2 : index
    %22 = memref.load %arg9[%c2] : memref<32xf32, #tpu.memory_space<smem>>
    %c0_21 = arith.constant 0 : index
    %c2_22 = arith.constant 2 : index
    %c0_23 = arith.constant 0 : index
    %c0_24 = arith.constant 0 : index
    %23 = vector.load %arg1[%c0_21, %c2_22, %c0_23, %c0_24] : memref<1x8x16x16xf32, #tpu.memory_space<vmem>>, vector<1x1x16x16xf32>
    %24 = vector.shape_cast %23 : vector<1x1x16x16xf32> to vector<16x16xf32>
    %25 = vector.broadcast %22 : f32 to vector<16x16xf32>
    %26 = arith.mulf %25, %24 : vector<16x16xf32>
    %27 = arith.addf %21, %26 : vector<16x16xf32>
    %c3 = arith.constant 3 : index
    %28 = memref.load %arg9[%c3] : memref<32xf32, #tpu.memory_space<smem>>
    %c0_25 = arith.constant 0 : index
    %c3_26 = arith.constant 3 : index
    %c0_27 = arith.constant 0 : index
    %c0_28 = arith.constant 0 : index
    %29 = vector.load %arg1[%c0_25, %c3_26, %c0_27, %c0_28] : memref<1x8x16x16xf32, #tpu.memory_space<vmem>>, vector<1x1x16x16xf32>
    %30 = vector.shape_cast %29 : vector<1x1x16x16xf32> to vector<16x16xf32>
    %31 = vector.broadcast %28 : f32 to vector<16x16xf32>
    %32 = arith.mulf %31, %30 : vector<16x16xf32>
    %33 = arith.addf %27, %32 : vector<16x16xf32>
    %c4 = arith.constant 4 : index
    %34 = memref.load %arg9[%c4] : memref<32xf32, #tpu.memory_space<smem>>
    %c0_29 = arith.constant 0 : index
    %c4_30 = arith.constant 4 : index
    %c0_31 = arith.constant 0 : index
    %c0_32 = arith.constant 0 : index
    %35 = vector.load %arg1[%c0_29, %c4_30, %c0_31, %c0_32] : memref<1x8x16x16xf32, #tpu.memory_space<vmem>>, vector<1x1x16x16xf32>
    %36 = vector.shape_cast %35 : vector<1x1x16x16xf32> to vector<16x16xf32>
    %37 = vector.broadcast %34 : f32 to vector<16x16xf32>
    %38 = arith.mulf %37, %36 : vector<16x16xf32>
    %39 = arith.addf %33, %38 : vector<16x16xf32>
    %c5 = arith.constant 5 : index
    %40 = memref.load %arg9[%c5] : memref<32xf32, #tpu.memory_space<smem>>
    %c0_33 = arith.constant 0 : index
    %c5_34 = arith.constant 5 : index
    %c0_35 = arith.constant 0 : index
    %c0_36 = arith.constant 0 : index
    %41 = vector.load %arg1[%c0_33, %c5_34, %c0_35, %c0_36] : memref<1x8x16x16xf32, #tpu.memory_space<vmem>>, vector<1x1x16x16xf32>
    %42 = vector.shape_cast %41 : vector<1x1x16x16xf32> to vector<16x16xf32>
    %43 = vector.broadcast %40 : f32 to vector<16x16xf32>
    %44 = arith.mulf %43, %42 : vector<16x16xf32>
    %45 = arith.addf %39, %44 : vector<16x16xf32>
    %c6 = arith.constant 6 : index
    %46 = memref.load %arg9[%c6] : memref<32xf32, #tpu.memory_space<smem>>
    %c0_37 = arith.constant 0 : index
    %c6_38 = arith.constant 6 : index
    %c0_39 = arith.constant 0 : index
    %c0_40 = arith.constant 0 : index
    %47 = vector.load %arg1[%c0_37, %c6_38, %c0_39, %c0_40] : memref<1x8x16x16xf32, #tpu.memory_space<vmem>>, vector<1x1x16x16xf32>
    %48 = vector.shape_cast %47 : vector<1x1x16x16xf32> to vector<16x16xf32>
    %49 = vector.broadcast %46 : f32 to vector<16x16xf32>
    %50 = arith.mulf %49, %48 : vector<16x16xf32>
    %51 = arith.addf %45, %50 : vector<16x16xf32>
    %c7 = arith.constant 7 : index
    %52 = memref.load %arg9[%c7] : memref<32xf32, #tpu.memory_space<smem>>
    %c0_41 = arith.constant 0 : index
    %c7_42 = arith.constant 7 : index
    %c0_43 = arith.constant 0 : index
    %c0_44 = arith.constant 0 : index
    %53 = vector.load %arg1[%c0_41, %c7_42, %c0_43, %c0_44] : memref<1x8x16x16xf32, #tpu.memory_space<vmem>>, vector<1x1x16x16xf32>
    %54 = vector.shape_cast %53 : vector<1x1x16x16xf32> to vector<16x16xf32>
    %55 = vector.broadcast %52 : f32 to vector<16x16xf32>
    %56 = arith.mulf %55, %54 : vector<16x16xf32>
    %57 = arith.addf %51, %56 : vector<16x16xf32>
    %cst_45 = arith.constant dense<0.000000e+00> : vector<16x34xf32>
    %58 = tpu.matmul %57, %5, %cst_45 {dimension_numbers = #tpu.dot_dimension_numbers<[1], [0], [0], [1], [0, 0, 1, 1], [], []>} : vector<16x16xf32>, vector<16x34xf32>, vector<16x34xf32> -> vector<16x34xf32>
    %cst_46 = arith.constant dense<0.000000e+00> : vector<34x34xf32>
    %59 = tpu.matmul %4, %58, %cst_46 {dimension_numbers = #tpu.dot_dimension_numbers<[1], [0], [0], [1], [0, 0, 1, 1], [], []>} : vector<34x16xf32>, vector<16x34xf32>, vector<34x34xf32> -> vector<34x34xf32>
    %c0_47 = arith.constant 0 : index
    %c0_48 = arith.constant 0 : index
    %c0_49 = arith.constant 0 : index
    %60 = vector.load %arg12[%c0_47, %c0_48, %c0_49] : memref<8x34x34xf32, #tpu.memory_space<vmem>>, vector<1x34x34xf32>
    %61 = vector.shape_cast %60 : vector<1x34x34xf32> to vector<34x34xf32>
    %62 = vector.shape_cast %59 : vector<34x34xf32> to vector<1x34x34xf32>
    tpu.vector_store %arg12[%c0_47, %c0_48, %c0_49], %62 {strides = array<i32>} : memref<8x34x34xf32, #tpu.memory_space<vmem>>, vector<1x34x34xf32>,
    %cst_50 = arith.constant 0.000000e+00 : f32
    %63 = vector.broadcast %cst_50 : f32 to vector<16x16xf32>
    %c1_51 = arith.constant 1 : index
    %64 = memref.load %arg10[%c1_51] : memref<4xf32, #tpu.memory_space<smem>>
    %65 = vector.broadcast %64 : f32 to vector<16x16xf32>
    %66 = arith.addf %63, %65 : vector<16x16xf32>
    %c8 = arith.constant 8 : index
    %67 = memref.load %arg9[%c8] : memref<32xf32, #tpu.memory_space<smem>>
    %c0_52 = arith.constant 0 : index
    %c0_53 = arith.constant 0 : index
    %c0_54 = arith.constant 0 : index
    %c0_55 = arith.constant 0 : index
    %68 = vector.load %arg1[%c0_52, %c0_53, %c0_54, %c0_55] : memref<1x8x16x16xf32, #tpu.memory_space<vmem>>, vector<1x1x16x16xf32>
    %69 = vector.shape_cast %68 : vector<1x1x16x16xf32> to vector<16x16xf32>
    %70 = vector.broadcast %67 : f32 to vector<16x16xf32>
    %71 = arith.mulf %70, %69 : vector<16x16xf32>
    %72 = arith.addf %66, %71 : vector<16x16xf32>
    %c9 = arith.constant 9 : index
    %73 = memref.load %arg9[%c9] : memref<32xf32, #tpu.memory_space<smem>>
    %c0_56 = arith.constant 0 : index
    %c1_57 = arith.constant 1 : index
    %c0_58 = arith.constant 0 : index
    %c0_59 = arith.constant 0 : index
    %74 = vector.load %arg1[%c0_56, %c1_57, %c0_58, %c0_59] : memref<1x8x16x16xf32, #tpu.memory_space<vmem>>, vector<1x1x16x16xf32>
    %75 = vector.shape_cast %74 : vector<1x1x16x16xf32> to vector<16x16xf32>
    %76 = vector.broadcast %73 : f32 to vector<16x16xf32>
    %77 = arith.mulf %76, %75 : vector<16x16xf32>
    %78 = arith.addf %72, %77 : vector<16x16xf32>
    %c10 = arith.constant 10 : index
    %79 = memref.load %arg9[%c10] : memref<32xf32, #tpu.memory_space<smem>>
    %c0_60 = arith.constant 0 : index
    %c2_61 = arith.constant 2 : index
    %c0_62 = arith.constant 0 : index
    %c0_63 = arith.constant 0 : index
    %80 = vector.load %arg1[%c0_60, %c2_61, %c0_62, %c0_63] : memref<1x8x16x16xf32, #tpu.memory_space<vmem>>, vector<1x1x16x16xf32>
    %81 = vector.shape_cast %80 : vector<1x1x16x16xf32> to vector<16x16xf32>
    %82 = vector.broadcast %79 : f32 to vector<16x16xf32>
    %83 = arith.mulf %82, %81 : vector<16x16xf32>
    %84 = arith.addf %78, %83 : vector<16x16xf32>
    %c11 = arith.constant 11 : index
    %85 = memref.load %arg9[%c11] : memref<32xf32, #tpu.memory_space<smem>>
    %c0_64 = arith.constant 0 : index
    %c3_65 = arith.constant 3 : index
    %c0_66 = arith.constant 0 : index
    %c0_67 = arith.constant 0 : index
    %86 = vector.load %arg1[%c0_64, %c3_65, %c0_66, %c0_67] : memref<1x8x16x16xf32, #tpu.memory_space<vmem>>, vector<1x1x16x16xf32>
    %87 = vector.shape_cast %86 : vector<1x1x16x16xf32> to vector<16x16xf32>
    %88 = vector.broadcast %85 : f32 to vector<16x16xf32>
    %89 = arith.mulf %88, %87 : vector<16x16xf32>
    %90 = arith.addf %84, %89 : vector<16x16xf32>
    %c12 = arith.constant 12 : index
    %91 = memref.load %arg9[%c12] : memref<32xf32, #tpu.memory_space<smem>>
    %c0_68 = arith.constant 0 : index
    %c4_69 = arith.constant 4 : index
    %c0_70 = arith.constant 0 : index
    %c0_71 = arith.constant 0 : index
    %92 = vector.load %arg1[%c0_68, %c4_69, %c0_70, %c0_71] : memref<1x8x16x16xf32, #tpu.memory_space<vmem>>, vector<1x1x16x16xf32>
    %93 = vector.shape_cast %92 : vector<1x1x16x16xf32> to vector<16x16xf32>
    %94 = vector.broadcast %91 : f32 to vector<16x16xf32>
    %95 = arith.mulf %94, %93 : vector<16x16xf32>
    %96 = arith.addf %90, %95 : vector<16x16xf32>
    %c13 = arith.constant 13 : index
    %97 = memref.load %arg9[%c13] : memref<32xf32, #tpu.memory_space<smem>>
    %c0_72 = arith.constant 0 : index
    %c5_73 = arith.constant 5 : index
    %c0_74 = arith.constant 0 : index
    %c0_75 = arith.constant 0 : index
    %98 = vector.load %arg1[%c0_72, %c5_73, %c0_74, %c0_75] : memref<1x8x16x16xf32, #tpu.memory_space<vmem>>, vector<1x1x16x16xf32>
    %99 = vector.shape_cast %98 : vector<1x1x16x16xf32> to vector<16x16xf32>
    %100 = vector.broadcast %97 : f32 to vector<16x16xf32>
    %101 = arith.mulf %100, %99 : vector<16x16xf32>
    %102 = arith.addf %96, %101 : vector<16x16xf32>
    %c14 = arith.constant 14 : index
    %103 = memref.load %arg9[%c14] : memref<32xf32, #tpu.memory_space<smem>>
    %c0_76 = arith.constant 0 : index
    %c6_77 = arith.constant 6 : index
    %c0_78 = arith.constant 0 : index
    %c0_79 = arith.constant 0 : index
    %104 = vector.load %arg1[%c0_76, %c6_77, %c0_78, %c0_79] : memref<1x8x16x16xf32, #tpu.memory_space<vmem>>, vector<1x1x16x16xf32>
    %105 = vector.shape_cast %104 : vector<1x1x16x16xf32> to vector<16x16xf32>
    %106 = vector.broadcast %103 : f32 to vector<16x16xf32>
    %107 = arith.mulf %106, %105 : vector<16x16xf32>
    %108 = arith.addf %102, %107 : vector<16x16xf32>
    %c15 = arith.constant 15 : index
    %109 = memref.load %arg9[%c15] : memref<32xf32, #tpu.memory_space<smem>>
    %c0_80 = arith.constant 0 : index
    %c7_81 = arith.constant 7 : index
    %c0_82 = arith.constant 0 : index
    %c0_83 = arith.constant 0 : index
    %110 = vector.load %arg1[%c0_80, %c7_81, %c0_82, %c0_83] : memref<1x8x16x16xf32, #tpu.memory_space<vmem>>, vector<1x1x16x16xf32>
    %111 = vector.shape_cast %110 : vector<1x1x16x16xf32> to vector<16x16xf32>
    %112 = vector.broadcast %109 : f32 to vector<16x16xf32>
    %113 = arith.mulf %112, %111 : vector<16x16xf32>
    %114 = arith.addf %108, %113 : vector<16x16xf32>
    %cst_84 = arith.constant dense<0.000000e+00> : vector<16x34xf32>
    %115 = tpu.matmul %114, %5, %cst_84 {dimension_numbers = #tpu.dot_dimension_numbers<[1], [0], [0], [1], [0, 0, 1, 1], [], []>} : vector<16x16xf32>, vector<16x34xf32>, vector<16x34xf32> -> vector<16x34xf32>
    %cst_85 = arith.constant dense<0.000000e+00> : vector<34x34xf32>
    %116 = tpu.matmul %4, %115, %cst_85 {dimension_numbers = #tpu.dot_dimension_numbers<[1], [0], [0], [1], [0, 0, 1, 1], [], []>} : vector<34x16xf32>, vector<16x34xf32>, vector<34x34xf32> -> vector<34x34xf32>
    %c1_86 = arith.constant 1 : index
    %c0_87 = arith.constant 0 : index
    %c0_88 = arith.constant 0 : index
    %117 = vector.load %arg12[%c1_86, %c0_87, %c0_88] : memref<8x34x34xf32, #tpu.memory_space<vmem>>, vector<1x34x34xf32>
    %118 = vector.shape_cast %117 : vector<1x34x34xf32> to vector<34x34xf32>
    %119 = vector.shape_cast %116 : vector<34x34xf32> to vector<1x34x34xf32>
    tpu.vector_store %arg12[%c1_86, %c0_87, %c0_88], %119 {strides = array<i32>} : memref<8x34x34xf32, #tpu.memory_space<vmem>>, vector<1x34x34xf32>,
    %cst_89 = arith.constant 0.000000e+00 : f32
    %120 = vector.broadcast %cst_89 : f32 to vector<16x16xf32>
    %c2_90 = arith.constant 2 : index
    %121 = memref.load %arg10[%c2_90] : memref<4xf32, #tpu.memory_space<smem>>
    %122 = vector.broadcast %121 : f32 to vector<16x16xf32>
    %123 = arith.addf %120, %122 : vector<16x16xf32>
    %c16 = arith.constant 16 : index
    %124 = memref.load %arg9[%c16] : memref<32xf32, #tpu.memory_space<smem>>
    %c0_91 = arith.constant 0 : index
    %c0_92 = arith.constant 0 : index
    %c0_93 = arith.constant 0 : index
    %c0_94 = arith.constant 0 : index
    %125 = vector.load %arg1[%c0_91, %c0_92, %c0_93, %c0_94] : memref<1x8x16x16xf32, #tpu.memory_space<vmem>>, vector<1x1x16x16xf32>
    %126 = vector.shape_cast %125 : vector<1x1x16x16xf32> to vector<16x16xf32>
    %127 = vector.broadcast %124 : f32 to vector<16x16xf32>
    %128 = arith.mulf %127, %126 : vector<16x16xf32>
    %129 = arith.addf %123, %128 : vector<16x16xf32>
    %c17 = arith.constant 17 : index
    %130 = memref.load %arg9[%c17] : memref<32xf32, #tpu.memory_space<smem>>
    %c0_95 = arith.constant 0 : index
    %c1_96 = arith.constant 1 : index
    %c0_97 = arith.constant 0 : index
    %c0_98 = arith.constant 0 : index
    %131 = vector.load %arg1[%c0_95, %c1_96, %c0_97, %c0_98] : memref<1x8x16x16xf32, #tpu.memory_space<vmem>>, vector<1x1x16x16xf32>
    %132 = vector.shape_cast %131 : vector<1x1x16x16xf32> to vector<16x16xf32>
    %133 = vector.broadcast %130 : f32 to vector<16x16xf32>
    %134 = arith.mulf %133, %132 : vector<16x16xf32>
    %135 = arith.addf %129, %134 : vector<16x16xf32>
    %c18 = arith.constant 18 : index
    %136 = memref.load %arg9[%c18] : memref<32xf32, #tpu.memory_space<smem>>
    %c0_99 = arith.constant 0 : index
    %c2_100 = arith.constant 2 : index
    %c0_101 = arith.constant 0 : index
    %c0_102 = arith.constant 0 : index
    %137 = vector.load %arg1[%c0_99, %c2_100, %c0_101, %c0_102] : memref<1x8x16x16xf32, #tpu.memory_space<vmem>>, vector<1x1x16x16xf32>
    %138 = vector.shape_cast %137 : vector<1x1x16x16xf32> to vector<16x16xf32>
    %139 = vector.broadcast %136 : f32 to vector<16x16xf32>
    %140 = arith.mulf %139, %138 : vector<16x16xf32>
    %141 = arith.addf %135, %140 : vector<16x16xf32>
    %c19 = arith.constant 19 : index
    %142 = memref.load %arg9[%c19] : memref<32xf32, #tpu.memory_space<smem>>
    %c0_103 = arith.constant 0 : index
    %c3_104 = arith.constant 3 : index
    %c0_105 = arith.constant 0 : index
    %c0_106 = arith.constant 0 : index
    %143 = vector.load %arg1[%c0_103, %c3_104, %c0_105, %c0_106] : memref<1x8x16x16xf32, #tpu.memory_space<vmem>>, vector<1x1x16x16xf32>
    %144 = vector.shape_cast %143 : vector<1x1x16x16xf32> to vector<16x16xf32>
    %145 = vector.broadcast %142 : f32 to vector<16x16xf32>
    %146 = arith.mulf %145, %144 : vector<16x16xf32>
    %147 = arith.addf %141, %146 : vector<16x16xf32>
    %c20 = arith.constant 20 : index
    %148 = memref.load %arg9[%c20] : memref<32xf32, #tpu.memory_space<smem>>
    %c0_107 = arith.constant 0 : index
    %c4_108 = arith.constant 4 : index
    %c0_109 = arith.constant 0 : index
    %c0_110 = arith.constant 0 : index
    %149 = vector.load %arg1[%c0_107, %c4_108, %c0_109, %c0_110] : memref<1x8x16x16xf32, #tpu.memory_space<vmem>>, vector<1x1x16x16xf32>
    %150 = vector.shape_cast %149 : vector<1x1x16x16xf32> to vector<16x16xf32>
    %151 = vector.broadcast %148 : f32 to vector<16x16xf32>
    %152 = arith.mulf %151, %150 : vector<16x16xf32>
    %153 = arith.addf %147, %152 : vector<16x16xf32>
    %c21 = arith.constant 21 : index
    %154 = memref.load %arg9[%c21] : memref<32xf32, #tpu.memory_space<smem>>
    %c0_111 = arith.constant 0 : index
    %c5_112 = arith.constant 5 : index
    %c0_113 = arith.constant 0 : index
    %c0_114 = arith.constant 0 : index
    %155 = vector.load %arg1[%c0_111, %c5_112, %c0_113, %c0_114] : memref<1x8x16x16xf32, #tpu.memory_space<vmem>>, vector<1x1x16x16xf32>
    %156 = vector.shape_cast %155 : vector<1x1x16x16xf32> to vector<16x16xf32>
    %157 = vector.broadcast %154 : f32 to vector<16x16xf32>
    %158 = arith.mulf %157, %156 : vector<16x16xf32>
    %159 = arith.addf %153, %158 : vector<16x16xf32>
    %c22 = arith.constant 22 : index
    %160 = memref.load %arg9[%c22] : memref<32xf32, #tpu.memory_space<smem>>
    %c0_115 = arith.constant 0 : index
    %c6_116 = arith.constant 6 : index
    %c0_117 = arith.constant 0 : index
    %c0_118 = arith.constant 0 : index
    %161 = vector.load %arg1[%c0_115, %c6_116, %c0_117, %c0_118] : memref<1x8x16x16xf32, #tpu.memory_space<vmem>>, vector<1x1x16x16xf32>
    %162 = vector.shape_cast %161 : vector<1x1x16x16xf32> to vector<16x16xf32>
    %163 = vector.broadcast %160 : f32 to vector<16x16xf32>
    %164 = arith.mulf %163, %162 : vector<16x16xf32>
    %165 = arith.addf %159, %164 : vector<16x16xf32>
    %c23 = arith.constant 23 : index
    %166 = memref.load %arg9[%c23] : memref<32xf32, #tpu.memory_space<smem>>
    %c0_119 = arith.constant 0 : index
    %c7_120 = arith.constant 7 : index
    %c0_121 = arith.constant 0 : index
    %c0_122 = arith.constant 0 : index
    %167 = vector.load %arg1[%c0_119, %c7_120, %c0_121, %c0_122] : memref<1x8x16x16xf32, #tpu.memory_space<vmem>>, vector<1x1x16x16xf32>
    %168 = vector.shape_cast %167 : vector<1x1x16x16xf32> to vector<16x16xf32>
    %169 = vector.broadcast %166 : f32 to vector<16x16xf32>
    %170 = arith.mulf %169, %168 : vector<16x16xf32>
    %171 = arith.addf %165, %170 : vector<16x16xf32>
    %cst_123 = arith.constant dense<0.000000e+00> : vector<16x34xf32>
    %172 = tpu.matmul %171, %5, %cst_123 {dimension_numbers = #tpu.dot_dimension_numbers<[1], [0], [0], [1], [0, 0, 1, 1], [], []>} : vector<16x16xf32>, vector<16x34xf32>, vector<16x34xf32> -> vector<16x34xf32>
    %cst_124 = arith.constant dense<0.000000e+00> : vector<34x34xf32>
    %173 = tpu.matmul %4, %172, %cst_124 {dimension_numbers = #tpu.dot_dimension_numbers<[1], [0], [0], [1], [0, 0, 1, 1], [], []>} : vector<34x16xf32>, vector<16x34xf32>, vector<34x34xf32> -> vector<34x34xf32>
    %c2_125 = arith.constant 2 : index
    %c0_126 = arith.constant 0 : index
    %c0_127 = arith.constant 0 : index
    %174 = vector.load %arg12[%c2_125, %c0_126, %c0_127] : memref<8x34x34xf32, #tpu.memory_space<vmem>>, vector<1x34x34xf32>
    %175 = vector.shape_cast %174 : vector<1x34x34xf32> to vector<34x34xf32>
    %176 = vector.shape_cast %173 : vector<34x34xf32> to vector<1x34x34xf32>
    tpu.vector_store %arg12[%c2_125, %c0_126, %c0_127], %176 {strides = array<i32>} : memref<8x34x34xf32, #tpu.memory_space<vmem>>, vector<1x34x34xf32>,
    %cst_128 = arith.constant 0.000000e+00 : f32
    %177 = vector.broadcast %cst_128 : f32 to vector<16x16xf32>
    %c3_129 = arith.constant 3 : index
    %178 = memref.load %arg10[%c3_129] : memref<4xf32, #tpu.memory_space<smem>>
    %179 = vector.broadcast %178 : f32 to vector<16x16xf32>
    %180 = arith.addf %177, %179 : vector<16x16xf32>
    %c24 = arith.constant 24 : index
    %181 = memref.load %arg9[%c24] : memref<32xf32, #tpu.memory_space<smem>>
    %c0_130 = arith.constant 0 : index
    %c0_131 = arith.constant 0 : index
    %c0_132 = arith.constant 0 : index
    %c0_133 = arith.constant 0 : index
    %182 = vector.load %arg1[%c0_130, %c0_131, %c0_132, %c0_133] : memref<1x8x16x16xf32, #tpu.memory_space<vmem>>, vector<1x1x16x16xf32>
    %183 = vector.shape_cast %182 : vector<1x1x16x16xf32> to vector<16x16xf32>
    %184 = vector.broadcast %181 : f32 to vector<16x16xf32>
    %185 = arith.mulf %184, %183 : vector<16x16xf32>
    %186 = arith.addf %180, %185 : vector<16x16xf32>
    %c25 = arith.constant 25 : index
    %187 = memref.load %arg9[%c25] : memref<32xf32, #tpu.memory_space<smem>>
    %c0_134 = arith.constant 0 : index
    %c1_135 = arith.constant 1 : index
    %c0_136 = arith.constant 0 : index
    %c0_137 = arith.constant 0 : index
    %188 = vector.load %arg1[%c0_134, %c1_135, %c0_136, %c0_137] : memref<1x8x16x16xf32, #tpu.memory_space<vmem>>, vector<1x1x16x16xf32>
    %189 = vector.shape_cast %188 : vector<1x1x16x16xf32> to vector<16x16xf32>
    %190 = vector.broadcast %187 : f32 to vector<16x16xf32>
    %191 = arith.mulf %190, %189 : vector<16x16xf32>
    %192 = arith.addf %186, %191 : vector<16x16xf32>
    %c26 = arith.constant 26 : index
    %193 = memref.load %arg9[%c26] : memref<32xf32, #tpu.memory_space<smem>>
    %c0_138 = arith.constant 0 : index
    %c2_139 = arith.constant 2 : index
    %c0_140 = arith.constant 0 : index
    %c0_141 = arith.constant 0 : index
    %194 = vector.load %arg1[%c0_138, %c2_139, %c0_140, %c0_141] : memref<1x8x16x16xf32, #tpu.memory_space<vmem>>, vector<1x1x16x16xf32>
    %195 = vector.shape_cast %194 : vector<1x1x16x16xf32> to vector<16x16xf32>
    %196 = vector.broadcast %193 : f32 to vector<16x16xf32>
    %197 = arith.mulf %196, %195 : vector<16x16xf32>
    %198 = arith.addf %192, %197 : vector<16x16xf32>
    %c27 = arith.constant 27 : index
    %199 = memref.load %arg9[%c27] : memref<32xf32, #tpu.memory_space<smem>>
    %c0_142 = arith.constant 0 : index
    %c3_143 = arith.constant 3 : index
    %c0_144 = arith.constant 0 : index
    %c0_145 = arith.constant 0 : index
    %200 = vector.load %arg1[%c0_142, %c3_143, %c0_144, %c0_145] : memref<1x8x16x16xf32, #tpu.memory_space<vmem>>, vector<1x1x16x16xf32>
    %201 = vector.shape_cast %200 : vector<1x1x16x16xf32> to vector<16x16xf32>
    %202 = vector.broadcast %199 : f32 to vector<16x16xf32>
    %203 = arith.mulf %202, %201 : vector<16x16xf32>
    %204 = arith.addf %198, %203 : vector<16x16xf32>
    %c28 = arith.constant 28 : index
    %205 = memref.load %arg9[%c28] : memref<32xf32, #tpu.memory_space<smem>>
    %c0_146 = arith.constant 0 : index
    %c4_147 = arith.constant 4 : index
    %c0_148 = arith.constant 0 : index
    %c0_149 = arith.constant 0 : index
    %206 = vector.load %arg1[%c0_146, %c4_147, %c0_148, %c0_149] : memref<1x8x16x16xf32, #tpu.memory_space<vmem>>, vector<1x1x16x16xf32>
    %207 = vector.shape_cast %206 : vector<1x1x16x16xf32> to vector<16x16xf32>
    %208 = vector.broadcast %205 : f32 to vector<16x16xf32>
    %209 = arith.mulf %208, %207 : vector<16x16xf32>
    %210 = arith.addf %204, %209 : vector<16x16xf32>
    %c29 = arith.constant 29 : index
    %211 = memref.load %arg9[%c29] : memref<32xf32, #tpu.memory_space<smem>>
    %c0_150 = arith.constant 0 : index
    %c5_151 = arith.constant 5 : index
    %c0_152 = arith.constant 0 : index
    %c0_153 = arith.constant 0 : index
    %212 = vector.load %arg1[%c0_150, %c5_151, %c0_152, %c0_153] : memref<1x8x16x16xf32, #tpu.memory_space<vmem>>, vector<1x1x16x16xf32>
    %213 = vector.shape_cast %212 : vector<1x1x16x16xf32> to vector<16x16xf32>
    %214 = vector.broadcast %211 : f32 to vector<16x16xf32>
    %215 = arith.mulf %214, %213 : vector<16x16xf32>
    %216 = arith.addf %210, %215 : vector<16x16xf32>
    %c30 = arith.constant 30 : index
    %217 = memref.load %arg9[%c30] : memref<32xf32, #tpu.memory_space<smem>>
    %c0_154 = arith.constant 0 : index
    %c6_155 = arith.constant 6 : index
    %c0_156 = arith.constant 0 : index
    %c0_157 = arith.constant 0 : index
    %218 = vector.load %arg1[%c0_154, %c6_155, %c0_156, %c0_157] : memref<1x8x16x16xf32, #tpu.memory_space<vmem>>, vector<1x1x16x16xf32>
    %219 = vector.shape_cast %218 : vector<1x1x16x16xf32> to vector<16x16xf32>
    %220 = vector.broadcast %217 : f32 to vector<16x16xf32>
    %221 = arith.mulf %220, %219 : vector<16x16xf32>
    %222 = arith.addf %216, %221 : vector<16x16xf32>
    %c31 = arith.constant 31 : index
    %223 = memref.load %arg9[%c31] : memref<32xf32, #tpu.memory_space<smem>>
    %c0_158 = arith.constant 0 : index
    %c7_159 = arith.constant 7 : index
    %c0_160 = arith.constant 0 : index
    %c0_161 = arith.constant 0 : index
    %224 = vector.load %arg1[%c0_158, %c7_159, %c0_160, %c0_161] : memref<1x8x16x16xf32, #tpu.memory_space<vmem>>, vector<1x1x16x16xf32>
    %225 = vector.shape_cast %224 : vector<1x1x16x16xf32> to vector<16x16xf32>
    %226 = vector.broadcast %223 : f32 to vector<16x16xf32>
    %227 = arith.mulf %226, %225 : vector<16x16xf32>
    %228 = arith.addf %222, %227 : vector<16x16xf32>
    %cst_162 = arith.constant dense<0.000000e+00> : vector<16x34xf32>
    %229 = tpu.matmul %228, %5, %cst_162 {dimension_numbers = #tpu.dot_dimension_numbers<[1], [0], [0], [1], [0, 0, 1, 1], [], []>} : vector<16x16xf32>, vector<16x34xf32>, vector<16x34xf32> -> vector<16x34xf32>
    %cst_163 = arith.constant dense<0.000000e+00> : vector<34x34xf32>
    %230 = tpu.matmul %4, %229, %cst_163 {dimension_numbers = #tpu.dot_dimension_numbers<[1], [0], [0], [1], [0, 0, 1, 1], [], []>} : vector<34x16xf32>, vector<16x34xf32>, vector<34x34xf32> -> vector<34x34xf32>
    %c3_164 = arith.constant 3 : index
    %c0_165 = arith.constant 0 : index
    %c0_166 = arith.constant 0 : index
    %231 = vector.load %arg12[%c3_164, %c0_165, %c0_166] : memref<8x34x34xf32, #tpu.memory_space<vmem>>, vector<1x34x34xf32>
    %232 = vector.shape_cast %231 : vector<1x34x34xf32> to vector<34x34xf32>
    %233 = vector.shape_cast %230 : vector<34x34xf32> to vector<1x34x34xf32>
    tpu.vector_store %arg12[%c3_164, %c0_165, %c0_166], %233 {strides = array<i32>} : memref<8x34x34xf32, #tpu.memory_space<vmem>>, vector<1x34x34xf32>,
    %c0_167 = arith.constant 0 : index
    %c0_168 = arith.constant 0 : index
    %c0_169 = arith.constant 0 : index
    %c0_170 = arith.constant 0 : index
    %234 = vector.load %arg2[%c0_167, %c0_168, %c0_169, %c0_170] : memref<1x4x32x32xf32, #tpu.memory_space<vmem>>, vector<1x1x32x32xf32>
    %235 = vector.shape_cast %234 : vector<1x1x32x32xf32> to vector<32x32xf32>
    %c4_171 = arith.constant 4 : index
    %c1_172 = arith.constant 1 : index
    %c1_173 = arith.constant 1 : index
    %236 = vector.load %arg12[%c4_171, %c1_172, %c1_173] : memref<8x34x34xf32, #tpu.memory_space<vmem>>, vector<1x32x32xf32>
    %237 = vector.shape_cast %236 : vector<1x32x32xf32> to vector<32x32xf32>
    %238 = vector.shape_cast %235 : vector<32x32xf32> to vector<1x32x32xf32>
    tpu.vector_store %arg12[%c4_171, %c1_172, %c1_173], %238 {strides = array<i32>} : memref<8x34x34xf32, #tpu.memory_space<vmem>>, vector<1x32x32xf32>,
    %c0_174 = arith.constant 0 : index
    %c1_175 = arith.constant 1 : index
    %c0_176 = arith.constant 0 : index
    %c0_177 = arith.constant 0 : index
    %239 = vector.load %arg2[%c0_174, %c1_175, %c0_176, %c0_177] : memref<1x4x32x32xf32, #tpu.memory_space<vmem>>, vector<1x1x32x32xf32>
    %240 = vector.shape_cast %239 : vector<1x1x32x32xf32> to vector<32x32xf32>
    %c5_178 = arith.constant 5 : index
    %c1_179 = arith.constant 1 : index
    %c1_180 = arith.constant 1 : index
    %241 = vector.load %arg12[%c5_178, %c1_179, %c1_180] : memref<8x34x34xf32, #tpu.memory_space<vmem>>, vector<1x32x32xf32>
    %242 = vector.shape_cast %241 : vector<1x32x32xf32> to vector<32x32xf32>
    %243 = vector.shape_cast %240 : vector<32x32xf32> to vector<1x32x32xf32>
    tpu.vector_store %arg12[%c5_178, %c1_179, %c1_180], %243 {strides = array<i32>} : memref<8x34x34xf32, #tpu.memory_space<vmem>>, vector<1x32x32xf32>,
    %c0_181 = arith.constant 0 : index
    %c2_182 = arith.constant 2 : index
    %c0_183 = arith.constant 0 : index
    %c0_184 = arith.constant 0 : index
    %244 = vector.load %arg2[%c0_181, %c2_182, %c0_183, %c0_184] : memref<1x4x32x32xf32, #tpu.memory_space<vmem>>, vector<1x1x32x32xf32>
    %245 = vector.shape_cast %244 : vector<1x1x32x32xf32> to vector<32x32xf32>
    %c6_185 = arith.constant 6 : index
    %c1_186 = arith.constant 1 : index
    %c1_187 = arith.constant 1 : index
    %246 = vector.load %arg12[%c6_185, %c1_186, %c1_187] : memref<8x34x34xf32, #tpu.memory_space<vmem>>, vector<1x32x32xf32>
    %247 = vector.shape_cast %246 : vector<1x32x32xf32> to vector<32x32xf32>
    %248 = vector.shape_cast %245 : vector<32x32xf32> to vector<1x32x32xf32>
    tpu.vector_store %arg12[%c6_185, %c1_186, %c1_187], %248 {strides = array<i32>} : memref<8x34x34xf32, #tpu.memory_space<vmem>>, vector<1x32x32xf32>,
    %c0_188 = arith.constant 0 : index
    %c3_189 = arith.constant 3 : index
    %c0_190 = arith.constant 0 : index
    %c0_191 = arith.constant 0 : index
    %249 = vector.load %arg2[%c0_188, %c3_189, %c0_190, %c0_191] : memref<1x4x32x32xf32, #tpu.memory_space<vmem>>, vector<1x1x32x32xf32>
    %250 = vector.shape_cast %249 : vector<1x1x32x32xf32> to vector<32x32xf32>
    %c7_192 = arith.constant 7 : index
    %c1_193 = arith.constant 1 : index
    %c1_194 = arith.constant 1 : index
    %251 = vector.load %arg12[%c7_192, %c1_193, %c1_194] : memref<8x34x34xf32, #tpu.memory_space<vmem>>, vector<1x32x32xf32>
    %252 = vector.shape_cast %251 : vector<1x32x32xf32> to vector<32x32xf32>
    %253 = vector.shape_cast %250 : vector<32x32xf32> to vector<1x32x32xf32>
    tpu.vector_store %arg12[%c7_192, %c1_193, %c1_194], %253 {strides = array<i32>} : memref<8x34x34xf32, #tpu.memory_space<vmem>>, vector<1x32x32xf32>,
    %c0_195 = arith.constant 0 : index
    %c0_196 = arith.constant 0 : index
    %254 = vector.load %arg6[%c0_195, %c0_196] : memref<3x128xf32, #tpu.memory_space<vmem>>, vector<1x128xf32>
    %c1_197 = arith.constant 1 : index
    %c0_198 = arith.constant 0 : index
    %255 = vector.load %arg6[%c1_197, %c0_198] : memref<3x128xf32, #tpu.memory_space<vmem>>, vector<1x128xf32>
    %c2_199 = arith.constant 2 : index
    %c0_200 = arith.constant 0 : index
    %256 = vector.load %arg6[%c2_199, %c0_200] : memref<3x128xf32, #tpu.memory_space<vmem>>, vector<1x128xf32>
    %cst_201 = arith.constant 0.000000e+00 : f32
    %257 = vector.broadcast %cst_201 : f32 to vector<32x128xf32>
    %258 = vector.broadcast %254 : vector<1x128xf32> to vector<32x128xf32>
    %259 = arith.addf %257, %258 : vector<32x128xf32>
    %c0_202 = arith.constant 0 : index
    %c0_203 = arith.constant 0 : index
    %c0_204 = arith.constant 0 : index
    %260 = vector.load %arg12[%c0_202, %c0_203, %c0_204] : memref<8x34x34xf32, #tpu.memory_space<vmem>>, vector<1x34x34xf32>
    %261 = vector.shape_cast %260 : vector<1x34x34xf32> to vector<34x34xf32>
    %262 = vector.extract_strided_slice %261 {offsets = [0, 0], sizes = [34, 32], strides = [1, 1]} : vector<34x34xf32> to vector<34x32xf32>
    %263 = tpu.concatenate %262, %262, %262, %262 in 1 : vector<34x32xf32>, vector<34x32xf32>, vector<34x32xf32>, vector<34x32xf32> -> vector<34x128xf32>
    %c0_205 = arith.constant 0 : index
    %c0_206 = arith.constant 0 : index
    %264 = vector.load %arg5[%c0_205, %c0_206] : memref<72x128xf32, #tpu.memory_space<vmem>>, vector<1x128xf32>
    %265 = vector.extract_strided_slice %263 {offsets = [0, 0], sizes = [32, 128], strides = [1, 1]} : vector<34x128xf32> to vector<32x128xf32>
    %266 = vector.broadcast %264 : vector<1x128xf32> to vector<32x128xf32>
    %267 = arith.mulf %266, %265 : vector<32x128xf32>
    %268 = arith.addf %259, %267 : vector<32x128xf32>
    %c3_207 = arith.constant 3 : index
    %c0_208 = arith.constant 0 : index
    %269 = vector.load %arg5[%c3_207, %c0_208] : memref<72x128xf32, #tpu.memory_space<vmem>>, vector<1x128xf32>
    %270 = vector.extract_strided_slice %263 {offsets = [1, 0], sizes = [32, 128], strides = [1, 1]} : vector<34x128xf32> to vector<32x128xf32>
    %271 = vector.broadcast %269 : vector<1x128xf32> to vector<32x128xf32>
    %272 = arith.mulf %271, %270 : vector<32x128xf32>
    %273 = arith.addf %268, %272 : vector<32x128xf32>
    %c6_209 = arith.constant 6 : index
    %c0_210 = arith.constant 0 : index
    %274 = vector.load %arg5[%c6_209, %c0_210] : memref<72x128xf32, #tpu.memory_space<vmem>>, vector<1x128xf32>
    %275 = vector.extract_strided_slice %263 {offsets = [2, 0], sizes = [32, 128], strides = [1, 1]} : vector<34x128xf32> to vector<32x128xf32>
    %276 = vector.broadcast %274 : vector<1x128xf32> to vector<32x128xf32>
    %277 = arith.mulf %276, %275 : vector<32x128xf32>
    %278 = arith.addf %273, %277 : vector<32x128xf32>
    %279 = vector.extract_strided_slice %261 {offsets = [0, 1], sizes = [34, 32], strides = [1, 1]} : vector<34x34xf32> to vector<34x32xf32>
    %280 = tpu.concatenate %279, %279, %279, %279 in 1 : vector<34x32xf32>, vector<34x32xf32>, vector<34x32xf32>, vector<34x32xf32> -> vector<34x128xf32>
    %c1_211 = arith.constant 1 : index
    %c0_212 = arith.constant 0 : index
    %281 = vector.load %arg5[%c1_211, %c0_212] : memref<72x128xf32, #tpu.memory_space<vmem>>, vector<1x128xf32>
    %282 = vector.extract_strided_slice %280 {offsets = [0, 0], sizes = [32, 128], strides = [1, 1]} : vector<34x128xf32> to vector<32x128xf32>
    %283 = vector.broadcast %281 : vector<1x128xf32> to vector<32x128xf32>
    %284 = arith.mulf %283, %282 : vector<32x128xf32>
    %285 = arith.addf %278, %284 : vector<32x128xf32>
    %c4_213 = arith.constant 4 : index
    %c0_214 = arith.constant 0 : index
    %286 = vector.load %arg5[%c4_213, %c0_214] : memref<72x128xf32, #tpu.memory_space<vmem>>, vector<1x128xf32>
    %287 = vector.extract_strided_slice %280 {offsets = [1, 0], sizes = [32, 128], strides = [1, 1]} : vector<34x128xf32> to vector<32x128xf32>
    %288 = vector.broadcast %286 : vector<1x128xf32> to vector<32x128xf32>
    %289 = arith.mulf %288, %287 : vector<32x128xf32>
    %290 = arith.addf %285, %289 : vector<32x128xf32>
    %c7_215 = arith.constant 7 : index
    %c0_216 = arith.constant 0 : index
    %291 = vector.load %arg5[%c7_215, %c0_216] : memref<72x128xf32, #tpu.memory_space<vmem>>, vector<1x128xf32>
    %292 = vector.extract_strided_slice %280 {offsets = [2, 0], sizes = [32, 128], strides = [1, 1]} : vector<34x128xf32> to vector<32x128xf32>
    %293 = vector.broadcast %291 : vector<1x128xf32> to vector<32x128xf32>
    %294 = arith.mulf %293, %292 : vector<32x128xf32>
    %295 = arith.addf %290, %294 : vector<32x128xf32>
    %296 = vector.extract_strided_slice %261 {offsets = [0, 2], sizes = [34, 32], strides = [1, 1]} : vector<34x34xf32> to vector<34x32xf32>
    %297 = tpu.concatenate %296, %296, %296, %296 in 1 : vector<34x32xf32>, vector<34x32xf32>, vector<34x32xf32>, vector<34x32xf32> -> vector<34x128xf32>
    %c2_217 = arith.constant 2 : index
    %c0_218 = arith.constant 0 : index
    %298 = vector.load %arg5[%c2_217, %c0_218] : memref<72x128xf32, #tpu.memory_space<vmem>>, vector<1x128xf32>
    %299 = vector.extract_strided_slice %297 {offsets = [0, 0], sizes = [32, 128], strides = [1, 1]} : vector<34x128xf32> to vector<32x128xf32>
    %300 = vector.broadcast %298 : vector<1x128xf32> to vector<32x128xf32>
    %301 = arith.mulf %300, %299 : vector<32x128xf32>
    %302 = arith.addf %295, %301 : vector<32x128xf32>
    %c5_219 = arith.constant 5 : index
    %c0_220 = arith.constant 0 : index
    %303 = vector.load %arg5[%c5_219, %c0_220] : memref<72x128xf32, #tpu.memory_space<vmem>>, vector<1x128xf32>
    %304 = vector.extract_strided_slice %297 {offsets = [1, 0], sizes = [32, 128], strides = [1, 1]} : vector<34x128xf32> to vector<32x128xf32>
    %305 = vector.broadcast %303 : vector<1x128xf32> to vector<32x128xf32>
    %306 = arith.mulf %305, %304 : vector<32x128xf32>
    %307 = arith.addf %302, %306 : vector<32x128xf32>
    %c8_221 = arith.constant 8 : index
    %c0_222 = arith.constant 0 : index
    %308 = vector.load %arg5[%c8_221, %c0_222] : memref<72x128xf32, #tpu.memory_space<vmem>>, vector<1x128xf32>
    %309 = vector.extract_strided_slice %297 {offsets = [2, 0], sizes = [32, 128], strides = [1, 1]} : vector<34x128xf32> to vector<32x128xf32>
    %310 = vector.broadcast %308 : vector<1x128xf32> to vector<32x128xf32>
    %311 = arith.mulf %310, %309 : vector<32x128xf32>
    %312 = arith.addf %307, %311 : vector<32x128xf32>
    %c1_223 = arith.constant 1 : index
    %c0_224 = arith.constant 0 : index
    %c0_225 = arith.constant 0 : index
    %313 = vector.load %arg12[%c1_223, %c0_224, %c0_225] : memref<8x34x34xf32, #tpu.memory_space<vmem>>, vector<1x34x34xf32>
    %314 = vector.shape_cast %313 : vector<1x34x34xf32> to vector<34x34xf32>
    %315 = vector.extract_strided_slice %314 {offsets = [0, 0], sizes = [34, 32], strides = [1, 1]} : vector<34x34xf32> to vector<34x32xf32>
    %316 = tpu.concatenate %315, %315, %315, %315 in 1 : vector<34x32xf32>, vector<34x32xf32>, vector<34x32xf32>, vector<34x32xf32> -> vector<34x128xf32>
    %c9_226 = arith.constant 9 : index
    %c0_227 = arith.constant 0 : index
    %317 = vector.load %arg5[%c9_226, %c0_227] : memref<72x128xf32, #tpu.memory_space<vmem>>, vector<1x128xf32>
    %318 = vector.extract_strided_slice %316 {offsets = [0, 0], sizes = [32, 128], strides = [1, 1]} : vector<34x128xf32> to vector<32x128xf32>
    %319 = vector.broadcast %317 : vector<1x128xf32> to vector<32x128xf32>
    %320 = arith.mulf %319, %318 : vector<32x128xf32>
    %321 = arith.addf %312, %320 : vector<32x128xf32>
    %c12_228 = arith.constant 12 : index
    %c0_229 = arith.constant 0 : index
    %322 = vector.load %arg5[%c12_228, %c0_229] : memref<72x128xf32, #tpu.memory_space<vmem>>, vector<1x128xf32>
    %323 = vector.extract_strided_slice %316 {offsets = [1, 0], sizes = [32, 128], strides = [1, 1]} : vector<34x128xf32> to vector<32x128xf32>
    %324 = vector.broadcast %322 : vector<1x128xf32> to vector<32x128xf32>
    %325 = arith.mulf %324, %323 : vector<32x128xf32>
    %326 = arith.addf %321, %325 : vector<32x128xf32>
    %c15_230 = arith.constant 15 : index
    %c0_231 = arith.constant 0 : index
    %327 = vector.load %arg5[%c15_230, %c0_231] : memref<72x128xf32, #tpu.memory_space<vmem>>, vector<1x128xf32>
    %328 = vector.extract_strided_slice %316 {offsets = [2, 0], sizes = [32, 128], strides = [1, 1]} : vector<34x128xf32> to vector<32x128xf32>
    %329 = vector.broadcast %327 : vector<1x128xf32> to vector<32x128xf32>
    %330 = arith.mulf %329, %328 : vector<32x128xf32>
    %331 = arith.addf %326, %330 : vector<32x128xf32>
    %332 = vector.extract_strided_slice %314 {offsets = [0, 1], sizes = [34, 32], strides = [1, 1]} : vector<34x34xf32> to vector<34x32xf32>
    %333 = tpu.concatenate %332, %332, %332, %332 in 1 : vector<34x32xf32>, vector<34x32xf32>, vector<34x32xf32>, vector<34x32xf32> -> vector<34x128xf32>
    %c10_232 = arith.constant 10 : index
    %c0_233 = arith.constant 0 : index
    %334 = vector.load %arg5[%c10_232, %c0_233] : memref<72x128xf32, #tpu.memory_space<vmem>>, vector<1x128xf32>
    %335 = vector.extract_strided_slice %333 {offsets = [0, 0], sizes = [32, 128], strides = [1, 1]} : vector<34x128xf32> to vector<32x128xf32>
    %336 = vector.broadcast %334 : vector<1x128xf32> to vector<32x128xf32>
    %337 = arith.mulf %336, %335 : vector<32x128xf32>
    %338 = arith.addf %331, %337 : vector<32x128xf32>
    %c13_234 = arith.constant 13 : index
    %c0_235 = arith.constant 0 : index
    %339 = vector.load %arg5[%c13_234, %c0_235] : memref<72x128xf32, #tpu.memory_space<vmem>>, vector<1x128xf32>
    %340 = vector.extract_strided_slice %333 {offsets = [1, 0], sizes = [32, 128], strides = [1, 1]} : vector<34x128xf32> to vector<32x128xf32>
    %341 = vector.broadcast %339 : vector<1x128xf32> to vector<32x128xf32>
    %342 = arith.mulf %341, %340 : vector<32x128xf32>
    %343 = arith.addf %338, %342 : vector<32x128xf32>
    %c16_236 = arith.constant 16 : index
    %c0_237 = arith.constant 0 : index
    %344 = vector.load %arg5[%c16_236, %c0_237] : memref<72x128xf32, #tpu.memory_space<vmem>>, vector<1x128xf32>
    %345 = vector.extract_strided_slice %333 {offsets = [2, 0], sizes = [32, 128], strides = [1, 1]} : vector<34x128xf32> to vector<32x128xf32>
    %346 = vector.broadcast %344 : vector<1x128xf32> to vector<32x128xf32>
    %347 = arith.mulf %346, %345 : vector<32x128xf32>
    %348 = arith.addf %343, %347 : vector<32x128xf32>
    %349 = vector.extract_strided_slice %314 {offsets = [0, 2], sizes = [34, 32], strides = [1, 1]} : vector<34x34xf32> to vector<34x32xf32>
    %350 = tpu.concatenate %349, %349, %349, %349 in 1 : vector<34x32xf32>, vector<34x32xf32>, vector<34x32xf32>, vector<34x32xf32> -> vector<34x128xf32>
    %c11_238 = arith.constant 11 : index
    %c0_239 = arith.constant 0 : index
    %351 = vector.load %arg5[%c11_238, %c0_239] : memref<72x128xf32, #tpu.memory_space<vmem>>, vector<1x128xf32>
    %352 = vector.extract_strided_slice %350 {offsets = [0, 0], sizes = [32, 128], strides = [1, 1]} : vector<34x128xf32> to vector<32x128xf32>
    %353 = vector.broadcast %351 : vector<1x128xf32> to vector<32x128xf32>
    %354 = arith.mulf %353, %352 : vector<32x128xf32>
    %355 = arith.addf %348, %354 : vector<32x128xf32>
    %c14_240 = arith.constant 14 : index
    %c0_241 = arith.constant 0 : index
    %356 = vector.load %arg5[%c14_240, %c0_241] : memref<72x128xf32, #tpu.memory_space<vmem>>, vector<1x128xf32>
    %357 = vector.extract_strided_slice %350 {offsets = [1, 0], sizes = [32, 128], strides = [1, 1]} : vector<34x128xf32> to vector<32x128xf32>
    %358 = vector.broadcast %356 : vector<1x128xf32> to vector<32x128xf32>
    %359 = arith.mulf %358, %357 : vector<32x128xf32>
    %360 = arith.addf %355, %359 : vector<32x128xf32>
    %c17_242 = arith.constant 17 : index
    %c0_243 = arith.constant 0 : index
    %361 = vector.load %arg5[%c17_242, %c0_243] : memref<72x128xf32, #tpu.memory_space<vmem>>, vector<1x128xf32>
    %362 = vector.extract_strided_slice %350 {offsets = [2, 0], sizes = [32, 128], strides = [1, 1]} : vector<34x128xf32> to vector<32x128xf32>
    %363 = vector.broadcast %361 : vector<1x128xf32> to vector<32x128xf32>
    %364 = arith.mulf %363, %362 : vector<32x128xf32>
    %365 = arith.addf %360, %364 : vector<32x128xf32>
    %c2_244 = arith.constant 2 : index
    %c0_245 = arith.constant 0 : index
    %c0_246 = arith.constant 0 : index
    %366 = vector.load %arg12[%c2_244, %c0_245, %c0_246] : memref<8x34x34xf32, #tpu.memory_space<vmem>>, vector<1x34x34xf32>
    %367 = vector.shape_cast %366 : vector<1x34x34xf32> to vector<34x34xf32>
    %368 = vector.extract_strided_slice %367 {offsets = [0, 0], sizes = [34, 32], strides = [1, 1]} : vector<34x34xf32> to vector<34x32xf32>
    %369 = tpu.concatenate %368, %368, %368, %368 in 1 : vector<34x32xf32>, vector<34x32xf32>, vector<34x32xf32>, vector<34x32xf32> -> vector<34x128xf32>
    %c18_247 = arith.constant 18 : index
    %c0_248 = arith.constant 0 : index
    %370 = vector.load %arg5[%c18_247, %c0_248] : memref<72x128xf32, #tpu.memory_space<vmem>>, vector<1x128xf32>
    %371 = vector.extract_strided_slice %369 {offsets = [0, 0], sizes = [32, 128], strides = [1, 1]} : vector<34x128xf32> to vector<32x128xf32>
    %372 = vector.broadcast %370 : vector<1x128xf32> to vector<32x128xf32>
    %373 = arith.mulf %372, %371 : vector<32x128xf32>
    %374 = arith.addf %365, %373 : vector<32x128xf32>
    %c21_249 = arith.constant 21 : index
    %c0_250 = arith.constant 0 : index
    %375 = vector.load %arg5[%c21_249, %c0_250] : memref<72x128xf32, #tpu.memory_space<vmem>>, vector<1x128xf32>
    %376 = vector.extract_strided_slice %369 {offsets = [1, 0], sizes = [32, 128], strides = [1, 1]} : vector<34x128xf32> to vector<32x128xf32>
    %377 = vector.broadcast %375 : vector<1x128xf32> to vector<32x128xf32>
    %378 = arith.mulf %377, %376 : vector<32x128xf32>
    %379 = arith.addf %374, %378 : vector<32x128xf32>
    %c24_251 = arith.constant 24 : index
    %c0_252 = arith.constant 0 : index
    %380 = vector.load %arg5[%c24_251, %c0_252] : memref<72x128xf32, #tpu.memory_space<vmem>>, vector<1x128xf32>
    %381 = vector.extract_strided_slice %369 {offsets = [2, 0], sizes = [32, 128], strides = [1, 1]} : vector<34x128xf32> to vector<32x128xf32>
    %382 = vector.broadcast %380 : vector<1x128xf32> to vector<32x128xf32>
    %383 = arith.mulf %382, %381 : vector<32x128xf32>
    %384 = arith.addf %379, %383 : vector<32x128xf32>
    %385 = vector.extract_strided_slice %367 {offsets = [0, 1], sizes = [34, 32], strides = [1, 1]} : vector<34x34xf32> to vector<34x32xf32>
    %386 = tpu.concatenate %385, %385, %385, %385 in 1 : vector<34x32xf32>, vector<34x32xf32>, vector<34x32xf32>, vector<34x32xf32> -> vector<34x128xf32>
    %c19_253 = arith.constant 19 : index
    %c0_254 = arith.constant 0 : index
    %387 = vector.load %arg5[%c19_253, %c0_254] : memref<72x128xf32, #tpu.memory_space<vmem>>, vector<1x128xf32>
    %388 = vector.extract_strided_slice %386 {offsets = [0, 0], sizes = [32, 128], strides = [1, 1]} : vector<34x128xf32> to vector<32x128xf32>
    %389 = vector.broadcast %387 : vector<1x128xf32> to vector<32x128xf32>
    %390 = arith.mulf %389, %388 : vector<32x128xf32>
    %391 = arith.addf %384, %390 : vector<32x128xf32>
    %c22_255 = arith.constant 22 : index
    %c0_256 = arith.constant 0 : index
    %392 = vector.load %arg5[%c22_255, %c0_256] : memref<72x128xf32, #tpu.memory_space<vmem>>, vector<1x128xf32>
    %393 = vector.extract_strided_slice %386 {offsets = [1, 0], sizes = [32, 128], strides = [1, 1]} : vector<34x128xf32> to vector<32x128xf32>
    %394 = vector.broadcast %392 : vector<1x128xf32> to vector<32x128xf32>
    %395 = arith.mulf %394, %393 : vector<32x128xf32>
    %396 = arith.addf %391, %395 : vector<32x128xf32>
    %c25_257 = arith.constant 25 : index
    %c0_258 = arith.constant 0 : index
    %397 = vector.load %arg5[%c25_257, %c0_258] : memref<72x128xf32, #tpu.memory_space<vmem>>, vector<1x128xf32>
    %398 = vector.extract_strided_slice %386 {offsets = [2, 0], sizes = [32, 128], strides = [1, 1]} : vector<34x128xf32> to vector<32x128xf32>
    %399 = vector.broadcast %397 : vector<1x128xf32> to vector<32x128xf32>
    %400 = arith.mulf %399, %398 : vector<32x128xf32>
    %401 = arith.addf %396, %400 : vector<32x128xf32>
    %402 = vector.extract_strided_slice %367 {offsets = [0, 2], sizes = [34, 32], strides = [1, 1]} : vector<34x34xf32> to vector<34x32xf32>
    %403 = tpu.concatenate %402, %402, %402, %402 in 1 : vector<34x32xf32>, vector<34x32xf32>, vector<34x32xf32>, vector<34x32xf32> -> vector<34x128xf32>
    %c20_259 = arith.constant 20 : index
    %c0_260 = arith.constant 0 : index
    %404 = vector.load %arg5[%c20_259, %c0_260] : memref<72x128xf32, #tpu.memory_space<vmem>>, vector<1x128xf32>
    %405 = vector.extract_strided_slice %403 {offsets = [0, 0], sizes = [32, 128], strides = [1, 1]} : vector<34x128xf32> to vector<32x128xf32>
    %406 = vector.broadcast %404 : vector<1x128xf32> to vector<32x128xf32>
    %407 = arith.mulf %406, %405 : vector<32x128xf32>
    %408 = arith.addf %401, %407 : vector<32x128xf32>
    %c23_261 = arith.constant 23 : index
    %c0_262 = arith.constant 0 : index
    %409 = vector.load %arg5[%c23_261, %c0_262] : memref<72x128xf32, #tpu.memory_space<vmem>>, vector<1x128xf32>
    %410 = vector.extract_strided_slice %403 {offsets = [1, 0], sizes = [32, 128], strides = [1, 1]} : vector<34x128xf32> to vector<32x128xf32>
    %411 = vector.broadcast %409 : vector<1x128xf32> to vector<32x128xf32>
    %412 = arith.mulf %411, %410 : vector<32x128xf32>
    %413 = arith.addf %408, %412 : vector<32x128xf32>
    %c26_263 = arith.constant 26 : index
    %c0_264 = arith.constant 0 : index
    %414 = vector.load %arg5[%c26_263, %c0_264] : memref<72x128xf32, #tpu.memory_space<vmem>>, vector<1x128xf32>
    %415 = vector.extract_strided_slice %403 {offsets = [2, 0], sizes = [32, 128], strides = [1, 1]} : vector<34x128xf32> to vector<32x128xf32>
    %416 = vector.broadcast %414 : vector<1x128xf32> to vector<32x128xf32>
    %417 = arith.mulf %416, %415 : vector<32x128xf32>
    %418 = arith.addf %413, %417 : vector<32x128xf32>
    %c3_265 = arith.constant 3 : index
    %c0_266 = arith.constant 0 : index
    %c0_267 = arith.constant 0 : index
    %419 = vector.load %arg12[%c3_265, %c0_266, %c0_267] : memref<8x34x34xf32, #tpu.memory_space<vmem>>, vector<1x34x34xf32>
    %420 = vector.shape_cast %419 : vector<1x34x34xf32> to vector<34x34xf32>
    %421 = vector.extract_strided_slice %420 {offsets = [0, 0], sizes = [34, 32], strides = [1, 1]} : vector<34x34xf32> to vector<34x32xf32>
    %422 = tpu.concatenate %421, %421, %421, %421 in 1 : vector<34x32xf32>, vector<34x32xf32>, vector<34x32xf32>, vector<34x32xf32> -> vector<34x128xf32>
    %c27_268 = arith.constant 27 : index
    %c0_269 = arith.constant 0 : index
    %423 = vector.load %arg5[%c27_268, %c0_269] : memref<72x128xf32, #tpu.memory_space<vmem>>, vector<1x128xf32>
    %424 = vector.extract_strided_slice %422 {offsets = [0, 0], sizes = [32, 128], strides = [1, 1]} : vector<34x128xf32> to vector<32x128xf32>
    %425 = vector.broadcast %423 : vector<1x128xf32> to vector<32x128xf32>
    %426 = arith.mulf %425, %424 : vector<32x128xf32>
    %427 = arith.addf %418, %426 : vector<32x128xf32>
    %c30_270 = arith.constant 30 : index
    %c0_271 = arith.constant 0 : index
    %428 = vector.load %arg5[%c30_270, %c0_271] : memref<72x128xf32, #tpu.memory_space<vmem>>, vector<1x128xf32>
    %429 = vector.extract_strided_slice %422 {offsets = [1, 0], sizes = [32, 128], strides = [1, 1]} : vector<34x128xf32> to vector<32x128xf32>
    %430 = vector.broadcast %428 : vector<1x128xf32> to vector<32x128xf32>
    %431 = arith.mulf %430, %429 : vector<32x128xf32>
    %432 = arith.addf %427, %431 : vector<32x128xf32>
    %c33 = arith.constant 33 : index
    %c0_272 = arith.constant 0 : index
    %433 = vector.load %arg5[%c33, %c0_272] : memref<72x128xf32, #tpu.memory_space<vmem>>, vector<1x128xf32>
    %434 = vector.extract_strided_slice %422 {offsets = [2, 0], sizes = [32, 128], strides = [1, 1]} : vector<34x128xf32> to vector<32x128xf32>
    %435 = vector.broadcast %433 : vector<1x128xf32> to vector<32x128xf32>
    %436 = arith.mulf %435, %434 : vector<32x128xf32>
    %437 = arith.addf %432, %436 : vector<32x128xf32>
    %438 = vector.extract_strided_slice %420 {offsets = [0, 1], sizes = [34, 32], strides = [1, 1]} : vector<34x34xf32> to vector<34x32xf32>
    %439 = tpu.concatenate %438, %438, %438, %438 in 1 : vector<34x32xf32>, vector<34x32xf32>, vector<34x32xf32>, vector<34x32xf32> -> vector<34x128xf32>
    %c28_273 = arith.constant 28 : index
    %c0_274 = arith.constant 0 : index
    %440 = vector.load %arg5[%c28_273, %c0_274] : memref<72x128xf32, #tpu.memory_space<vmem>>, vector<1x128xf32>
    %441 = vector.extract_strided_slice %439 {offsets = [0, 0], sizes = [32, 128], strides = [1, 1]} : vector<34x128xf32> to vector<32x128xf32>
    %442 = vector.broadcast %440 : vector<1x128xf32> to vector<32x128xf32>
    %443 = arith.mulf %442, %441 : vector<32x128xf32>
    %444 = arith.addf %437, %443 : vector<32x128xf32>
    %c31_275 = arith.constant 31 : index
    %c0_276 = arith.constant 0 : index
    %445 = vector.load %arg5[%c31_275, %c0_276] : memref<72x128xf32, #tpu.memory_space<vmem>>, vector<1x128xf32>
    %446 = vector.extract_strided_slice %439 {offsets = [1, 0], sizes = [32, 128], strides = [1, 1]} : vector<34x128xf32> to vector<32x128xf32>
    %447 = vector.broadcast %445 : vector<1x128xf32> to vector<32x128xf32>
    %448 = arith.mulf %447, %446 : vector<32x128xf32>
    %449 = arith.addf %444, %448 : vector<32x128xf32>
    %c34 = arith.constant 34 : index
    %c0_277 = arith.constant 0 : index
    %450 = vector.load %arg5[%c34, %c0_277] : memref<72x128xf32, #tpu.memory_space<vmem>>, vector<1x128xf32>
    %451 = vector.extract_strided_slice %439 {offsets = [2, 0], sizes = [32, 128], strides = [1, 1]} : vector<34x128xf32> to vector<32x128xf32>
    %452 = vector.broadcast %450 : vector<1x128xf32> to vector<32x128xf32>
    %453 = arith.mulf %452, %451 : vector<32x128xf32>
    %454 = arith.addf %449, %453 : vector<32x128xf32>
    %455 = vector.extract_strided_slice %420 {offsets = [0, 2], sizes = [34, 32], strides = [1, 1]} : vector<34x34xf32> to vector<34x32xf32>
    %456 = tpu.concatenate %455, %455, %455, %455 in 1 : vector<34x32xf32>, vector<34x32xf32>, vector<34x32xf32>, vector<34x32xf32> -> vector<34x128xf32>
    %c29_278 = arith.constant 29 : index
    %c0_279 = arith.constant 0 : index
    %457 = vector.load %arg5[%c29_278, %c0_279] : memref<72x128xf32, #tpu.memory_space<vmem>>, vector<1x128xf32>
    %458 = vector.extract_strided_slice %456 {offsets = [0, 0], sizes = [32, 128], strides = [1, 1]} : vector<34x128xf32> to vector<32x128xf32>
    %459 = vector.broadcast %457 : vector<1x128xf32> to vector<32x128xf32>
    %460 = arith.mulf %459, %458 : vector<32x128xf32>
    %461 = arith.addf %454, %460 : vector<32x128xf32>
    %c32 = arith.constant 32 : index
    %c0_280 = arith.constant 0 : index
    %462 = vector.load %arg5[%c32, %c0_280] : memref<72x128xf32, #tpu.memory_space<vmem>>, vector<1x128xf32>
    %463 = vector.extract_strided_slice %456 {offsets = [1, 0], sizes = [32, 128], strides = [1, 1]} : vector<34x128xf32> to vector<32x128xf32>
    %464 = vector.broadcast %462 : vector<1x128xf32> to vector<32x128xf32>
    %465 = arith.mulf %464, %463 : vector<32x128xf32>
    %466 = arith.addf %461, %465 : vector<32x128xf32>
    %c35 = arith.constant 35 : index
    %c0_281 = arith.constant 0 : index
    %467 = vector.load %arg5[%c35, %c0_281] : memref<72x128xf32, #tpu.memory_space<vmem>>, vector<1x128xf32>
    %468 = vector.extract_strided_slice %456 {offsets = [2, 0], sizes = [32, 128], strides = [1, 1]} : vector<34x128xf32> to vector<32x128xf32>
    %469 = vector.broadcast %467 : vector<1x128xf32> to vector<32x128xf32>
    %470 = arith.mulf %469, %468 : vector<32x128xf32>
    %471 = arith.addf %466, %470 : vector<32x128xf32>
    %c4_282 = arith.constant 4 : index
    %c0_283 = arith.constant 0 : index
    %c0_284 = arith.constant 0 : index
    %472 = vector.load %arg12[%c4_282, %c0_283, %c0_284] : memref<8x34x34xf32, #tpu.memory_space<vmem>>, vector<1x34x34xf32>
    %473 = vector.shape_cast %472 : vector<1x34x34xf32> to vector<34x34xf32>
    %474 = vector.extract_strided_slice %473 {offsets = [0, 0], sizes = [34, 32], strides = [1, 1]} : vector<34x34xf32> to vector<34x32xf32>
    %475 = tpu.concatenate %474, %474, %474, %474 in 1 : vector<34x32xf32>, vector<34x32xf32>, vector<34x32xf32>, vector<34x32xf32> -> vector<34x128xf32>
    %c36 = arith.constant 36 : index
    %c0_285 = arith.constant 0 : index
    %476 = vector.load %arg5[%c36, %c0_285] : memref<72x128xf32, #tpu.memory_space<vmem>>, vector<1x128xf32>
    %477 = vector.extract_strided_slice %475 {offsets = [0, 0], sizes = [32, 128], strides = [1, 1]} : vector<34x128xf32> to vector<32x128xf32>
    %478 = vector.broadcast %476 : vector<1x128xf32> to vector<32x128xf32>
    %479 = arith.mulf %478, %477 : vector<32x128xf32>
    %480 = arith.addf %471, %479 : vector<32x128xf32>
    %c39 = arith.constant 39 : index
    %c0_286 = arith.constant 0 : index
    %481 = vector.load %arg5[%c39, %c0_286] : memref<72x128xf32, #tpu.memory_space<vmem>>, vector<1x128xf32>
    %482 = vector.extract_strided_slice %475 {offsets = [1, 0], sizes = [32, 128], strides = [1, 1]} : vector<34x128xf32> to vector<32x128xf32>
    %483 = vector.broadcast %481 : vector<1x128xf32> to vector<32x128xf32>
    %484 = arith.mulf %483, %482 : vector<32x128xf32>
    %485 = arith.addf %480, %484 : vector<32x128xf32>
    %c42 = arith.constant 42 : index
    %c0_287 = arith.constant 0 : index
    %486 = vector.load %arg5[%c42, %c0_287] : memref<72x128xf32, #tpu.memory_space<vmem>>, vector<1x128xf32>
    %487 = vector.extract_strided_slice %475 {offsets = [2, 0], sizes = [32, 128], strides = [1, 1]} : vector<34x128xf32> to vector<32x128xf32>
    %488 = vector.broadcast %486 : vector<1x128xf32> to vector<32x128xf32>
    %489 = arith.mulf %488, %487 : vector<32x128xf32>
    %490 = arith.addf %485, %489 : vector<32x128xf32>
    %491 = vector.extract_strided_slice %473 {offsets = [0, 1], sizes = [34, 32], strides = [1, 1]} : vector<34x34xf32> to vector<34x32xf32>
    %492 = tpu.concatenate %491, %491, %491, %491 in 1 : vector<34x32xf32>, vector<34x32xf32>, vector<34x32xf32>, vector<34x32xf32> -> vector<34x128xf32>
    %c37 = arith.constant 37 : index
    %c0_288 = arith.constant 0 : index
    %493 = vector.load %arg5[%c37, %c0_288] : memref<72x128xf32, #tpu.memory_space<vmem>>, vector<1x128xf32>
    %494 = vector.extract_strided_slice %492 {offsets = [0, 0], sizes = [32, 128], strides = [1, 1]} : vector<34x128xf32> to vector<32x128xf32>
    %495 = vector.broadcast %493 : vector<1x128xf32> to vector<32x128xf32>
    %496 = arith.mulf %495, %494 : vector<32x128xf32>
    %497 = arith.addf %490, %496 : vector<32x128xf32>
    %c40 = arith.constant 40 : index
    %c0_289 = arith.constant 0 : index
    %498 = vector.load %arg5[%c40, %c0_289] : memref<72x128xf32, #tpu.memory_space<vmem>>, vector<1x128xf32>
    %499 = vector.extract_strided_slice %492 {offsets = [1, 0], sizes = [32, 128], strides = [1, 1]} : vector<34x128xf32> to vector<32x128xf32>
    %500 = vector.broadcast %498 : vector<1x128xf32> to vector<32x128xf32>
    %501 = arith.mulf %500, %499 : vector<32x128xf32>
    %502 = arith.addf %497, %501 : vector<32x128xf32>
    %c43 = arith.constant 43 : index
    %c0_290 = arith.constant 0 : index
    %503 = vector.load %arg5[%c43, %c0_290] : memref<72x128xf32, #tpu.memory_space<vmem>>, vector<1x128xf32>
    %504 = vector.extract_strided_slice %492 {offsets = [2, 0], sizes = [32, 128], strides = [1, 1]} : vector<34x128xf32> to vector<32x128xf32>
    %505 = vector.broadcast %503 : vector<1x128xf32> to vector<32x128xf32>
    %506 = arith.mulf %505, %504 : vector<32x128xf32>
    %507 = arith.addf %502, %506 : vector<32x128xf32>
    %508 = vector.extract_strided_slice %473 {offsets = [0, 2], sizes = [34, 32], strides = [1, 1]} : vector<34x34xf32> to vector<34x32xf32>
    %509 = tpu.concatenate %508, %508, %508, %508 in 1 : vector<34x32xf32>, vector<34x32xf32>, vector<34x32xf32>, vector<34x32xf32> -> vector<34x128xf32>
    %c38 = arith.constant 38 : index
    %c0_291 = arith.constant 0 : index
    %510 = vector.load %arg5[%c38, %c0_291] : memref<72x128xf32, #tpu.memory_space<vmem>>, vector<1x128xf32>
    %511 = vector.extract_strided_slice %509 {offsets = [0, 0], sizes = [32, 128], strides = [1, 1]} : vector<34x128xf32> to vector<32x128xf32>
    %512 = vector.broadcast %510 : vector<1x128xf32> to vector<32x128xf32>
    %513 = arith.mulf %512, %511 : vector<32x128xf32>
    %514 = arith.addf %507, %513 : vector<32x128xf32>
    %c41 = arith.constant 41 : index
    %c0_292 = arith.constant 0 : index
    %515 = vector.load %arg5[%c41, %c0_292] : memref<72x128xf32, #tpu.memory_space<vmem>>, vector<1x128xf32>
    %516 = vector.extract_strided_slice %509 {offsets = [1, 0], sizes = [32, 128], strides = [1, 1]} : vector<34x128xf32> to vector<32x128xf32>
    %517 = vector.broadcast %515 : vector<1x128xf32> to vector<32x128xf32>
    %518 = arith.mulf %517, %516 : vector<32x128xf32>
    %519 = arith.addf %514, %518 : vector<32x128xf32>
    %c44 = arith.constant 44 : index
    %c0_293 = arith.constant 0 : index
    %520 = vector.load %arg5[%c44, %c0_293] : memref<72x128xf32, #tpu.memory_space<vmem>>, vector<1x128xf32>
    %521 = vector.extract_strided_slice %509 {offsets = [2, 0], sizes = [32, 128], strides = [1, 1]} : vector<34x128xf32> to vector<32x128xf32>
    %522 = vector.broadcast %520 : vector<1x128xf32> to vector<32x128xf32>
    %523 = arith.mulf %522, %521 : vector<32x128xf32>
    %524 = arith.addf %519, %523 : vector<32x128xf32>
    %c5_294 = arith.constant 5 : index
    %c0_295 = arith.constant 0 : index
    %c0_296 = arith.constant 0 : index
    %525 = vector.load %arg12[%c5_294, %c0_295, %c0_296] : memref<8x34x34xf32, #tpu.memory_space<vmem>>, vector<1x34x34xf32>
    %526 = vector.shape_cast %525 : vector<1x34x34xf32> to vector<34x34xf32>
    %527 = vector.extract_strided_slice %526 {offsets = [0, 0], sizes = [34, 32], strides = [1, 1]} : vector<34x34xf32> to vector<34x32xf32>
    %528 = tpu.concatenate %527, %527, %527, %527 in 1 : vector<34x32xf32>, vector<34x32xf32>, vector<34x32xf32>, vector<34x32xf32> -> vector<34x128xf32>
    %c45 = arith.constant 45 : index
    %c0_297 = arith.constant 0 : index
    %529 = vector.load %arg5[%c45, %c0_297] : memref<72x128xf32, #tpu.memory_space<vmem>>, vector<1x128xf32>
    %530 = vector.extract_strided_slice %528 {offsets = [0, 0], sizes = [32, 128], strides = [1, 1]} : vector<34x128xf32> to vector<32x128xf32>
    %531 = vector.broadcast %529 : vector<1x128xf32> to vector<32x128xf32>
    %532 = arith.mulf %531, %530 : vector<32x128xf32>
    %533 = arith.addf %524, %532 : vector<32x128xf32>
    %c48 = arith.constant 48 : index
    %c0_298 = arith.constant 0 : index
    %534 = vector.load %arg5[%c48, %c0_298] : memref<72x128xf32, #tpu.memory_space<vmem>>, vector<1x128xf32>
    %535 = vector.extract_strided_slice %528 {offsets = [1, 0], sizes = [32, 128], strides = [1, 1]} : vector<34x128xf32> to vector<32x128xf32>
    %536 = vector.broadcast %534 : vector<1x128xf32> to vector<32x128xf32>
    %537 = arith.mulf %536, %535 : vector<32x128xf32>
    %538 = arith.addf %533, %537 : vector<32x128xf32>
    %c51 = arith.constant 51 : index
    %c0_299 = arith.constant 0 : index
    %539 = vector.load %arg5[%c51, %c0_299] : memref<72x128xf32, #tpu.memory_space<vmem>>, vector<1x128xf32>
    %540 = vector.extract_strided_slice %528 {offsets = [2, 0], sizes = [32, 128], strides = [1, 1]} : vector<34x128xf32> to vector<32x128xf32>
    %541 = vector.broadcast %539 : vector<1x128xf32> to vector<32x128xf32>
    %542 = arith.mulf %541, %540 : vector<32x128xf32>
    %543 = arith.addf %538, %542 : vector<32x128xf32>
    %544 = vector.extract_strided_slice %526 {offsets = [0, 1], sizes = [34, 32], strides = [1, 1]} : vector<34x34xf32> to vector<34x32xf32>
    %545 = tpu.concatenate %544, %544, %544, %544 in 1 : vector<34x32xf32>, vector<34x32xf32>, vector<34x32xf32>, vector<34x32xf32> -> vector<34x128xf32>
    %c46 = arith.constant 46 : index
    %c0_300 = arith.constant 0 : index
    %546 = vector.load %arg5[%c46, %c0_300] : memref<72x128xf32, #tpu.memory_space<vmem>>, vector<1x128xf32>
    %547 = vector.extract_strided_slice %545 {offsets = [0, 0], sizes = [32, 128], strides = [1, 1]} : vector<34x128xf32> to vector<32x128xf32>
    %548 = vector.broadcast %546 : vector<1x128xf32> to vector<32x128xf32>
    %549 = arith.mulf %548, %547 : vector<32x128xf32>
    %550 = arith.addf %543, %549 : vector<32x128xf32>
    %c49 = arith.constant 49 : index
    %c0_301 = arith.constant 0 : index
    %551 = vector.load %arg5[%c49, %c0_301] : memref<72x128xf32, #tpu.memory_space<vmem>>, vector<1x128xf32>
    %552 = vector.extract_strided_slice %545 {offsets = [1, 0], sizes = [32, 128], strides = [1, 1]} : vector<34x128xf32> to vector<32x128xf32>
    %553 = vector.broadcast %551 : vector<1x128xf32> to vector<32x128xf32>
    %554 = arith.mulf %553, %552 : vector<32x128xf32>
    %555 = arith.addf %550, %554 : vector<32x128xf32>
    %c52 = arith.constant 52 : index
    %c0_302 = arith.constant 0 : index
    %556 = vector.load %arg5[%c52, %c0_302] : memref<72x128xf32, #tpu.memory_space<vmem>>, vector<1x128xf32>
    %557 = vector.extract_strided_slice %545 {offsets = [2, 0], sizes = [32, 128], strides = [1, 1]} : vector<34x128xf32> to vector<32x128xf32>
    %558 = vector.broadcast %556 : vector<1x128xf32> to vector<32x128xf32>
    %559 = arith.mulf %558, %557 : vector<32x128xf32>
    %560 = arith.addf %555, %559 : vector<32x128xf32>
    %561 = vector.extract_strided_slice %526 {offsets = [0, 2], sizes = [34, 32], strides = [1, 1]} : vector<34x34xf32> to vector<34x32xf32>
    %562 = tpu.concatenate %561, %561, %561, %561 in 1 : vector<34x32xf32>, vector<34x32xf32>, vector<34x32xf32>, vector<34x32xf32> -> vector<34x128xf32>
    %c47 = arith.constant 47 : index
    %c0_303 = arith.constant 0 : index
    %563 = vector.load %arg5[%c47, %c0_303] : memref<72x128xf32, #tpu.memory_space<vmem>>, vector<1x128xf32>
    %564 = vector.extract_strided_slice %562 {offsets = [0, 0], sizes = [32, 128], strides = [1, 1]} : vector<34x128xf32> to vector<32x128xf32>
    %565 = vector.broadcast %563 : vector<1x128xf32> to vector<32x128xf32>
    %566 = arith.mulf %565, %564 : vector<32x128xf32>
    %567 = arith.addf %560, %566 : vector<32x128xf32>
    %c50 = arith.constant 50 : index
    %c0_304 = arith.constant 0 : index
    %568 = vector.load %arg5[%c50, %c0_304] : memref<72x128xf32, #tpu.memory_space<vmem>>, vector<1x128xf32>
    %569 = vector.extract_strided_slice %562 {offsets = [1, 0], sizes = [32, 128], strides = [1, 1]} : vector<34x128xf32> to vector<32x128xf32>
    %570 = vector.broadcast %568 : vector<1x128xf32> to vector<32x128xf32>
    %571 = arith.mulf %570, %569 : vector<32x128xf32>
    %572 = arith.addf %567, %571 : vector<32x128xf32>
    %c53 = arith.constant 53 : index
    %c0_305 = arith.constant 0 : index
    %573 = vector.load %arg5[%c53, %c0_305] : memref<72x128xf32, #tpu.memory_space<vmem>>, vector<1x128xf32>
    %574 = vector.extract_strided_slice %562 {offsets = [2, 0], sizes = [32, 128], strides = [1, 1]} : vector<34x128xf32> to vector<32x128xf32>
    %575 = vector.broadcast %573 : vector<1x128xf32> to vector<32x128xf32>
    %576 = arith.mulf %575, %574 : vector<32x128xf32>
    %577 = arith.addf %572, %576 : vector<32x128xf32>
    %c6_306 = arith.constant 6 : index
    %c0_307 = arith.constant 0 : index
    %c0_308 = arith.constant 0 : index
    %578 = vector.load %arg12[%c6_306, %c0_307, %c0_308] : memref<8x34x34xf32, #tpu.memory_space<vmem>>, vector<1x34x34xf32>
    %579 = vector.shape_cast %578 : vector<1x34x34xf32> to vector<34x34xf32>
    %580 = vector.extract_strided_slice %579 {offsets = [0, 0], sizes = [34, 32], strides = [1, 1]} : vector<34x34xf32> to vector<34x32xf32>
    %581 = tpu.concatenate %580, %580, %580, %580 in 1 : vector<34x32xf32>, vector<34x32xf32>, vector<34x32xf32>, vector<34x32xf32> -> vector<34x128xf32>
    %c54 = arith.constant 54 : index
    %c0_309 = arith.constant 0 : index
    %582 = vector.load %arg5[%c54, %c0_309] : memref<72x128xf32, #tpu.memory_space<vmem>>, vector<1x128xf32>
    %583 = vector.extract_strided_slice %581 {offsets = [0, 0], sizes = [32, 128], strides = [1, 1]} : vector<34x128xf32> to vector<32x128xf32>
    %584 = vector.broadcast %582 : vector<1x128xf32> to vector<32x128xf32>
    %585 = arith.mulf %584, %583 : vector<32x128xf32>
    %586 = arith.addf %577, %585 : vector<32x128xf32>
    %c57 = arith.constant 57 : index
    %c0_310 = arith.constant 0 : index
    %587 = vector.load %arg5[%c57, %c0_310] : memref<72x128xf32, #tpu.memory_space<vmem>>, vector<1x128xf32>
    %588 = vector.extract_strided_slice %581 {offsets = [1, 0], sizes = [32, 128], strides = [1, 1]} : vector<34x128xf32> to vector<32x128xf32>
    %589 = vector.broadcast %587 : vector<1x128xf32> to vector<32x128xf32>
    %590 = arith.mulf %589, %588 : vector<32x128xf32>
    %591 = arith.addf %586, %590 : vector<32x128xf32>
    %c60 = arith.constant 60 : index
    %c0_311 = arith.constant 0 : index
    %592 = vector.load %arg5[%c60, %c0_311] : memref<72x128xf32, #tpu.memory_space<vmem>>, vector<1x128xf32>
    %593 = vector.extract_strided_slice %581 {offsets = [2, 0], sizes = [32, 128], strides = [1, 1]} : vector<34x128xf32> to vector<32x128xf32>
    %594 = vector.broadcast %592 : vector<1x128xf32> to vector<32x128xf32>
    %595 = arith.mulf %594, %593 : vector<32x128xf32>
    %596 = arith.addf %591, %595 : vector<32x128xf32>
    %597 = vector.extract_strided_slice %579 {offsets = [0, 1], sizes = [34, 32], strides = [1, 1]} : vector<34x34xf32> to vector<34x32xf32>
    %598 = tpu.concatenate %597, %597, %597, %597 in 1 : vector<34x32xf32>, vector<34x32xf32>, vector<34x32xf32>, vector<34x32xf32> -> vector<34x128xf32>
    %c55 = arith.constant 55 : index
    %c0_312 = arith.constant 0 : index
    %599 = vector.load %arg5[%c55, %c0_312] : memref<72x128xf32, #tpu.memory_space<vmem>>, vector<1x128xf32>
    %600 = vector.extract_strided_slice %598 {offsets = [0, 0], sizes = [32, 128], strides = [1, 1]} : vector<34x128xf32> to vector<32x128xf32>
    %601 = vector.broadcast %599 : vector<1x128xf32> to vector<32x128xf32>
    %602 = arith.mulf %601, %600 : vector<32x128xf32>
    %603 = arith.addf %596, %602 : vector<32x128xf32>
    %c58 = arith.constant 58 : index
    %c0_313 = arith.constant 0 : index
    %604 = vector.load %arg5[%c58, %c0_313] : memref<72x128xf32, #tpu.memory_space<vmem>>, vector<1x128xf32>
    %605 = vector.extract_strided_slice %598 {offsets = [1, 0], sizes = [32, 128], strides = [1, 1]} : vector<34x128xf32> to vector<32x128xf32>
    %606 = vector.broadcast %604 : vector<1x128xf32> to vector<32x128xf32>
    %607 = arith.mulf %606, %605 : vector<32x128xf32>
    %608 = arith.addf %603, %607 : vector<32x128xf32>
    %c61 = arith.constant 61 : index
    %c0_314 = arith.constant 0 : index
    %609 = vector.load %arg5[%c61, %c0_314] : memref<72x128xf32, #tpu.memory_space<vmem>>, vector<1x128xf32>
    %610 = vector.extract_strided_slice %598 {offsets = [2, 0], sizes = [32, 128], strides = [1, 1]} : vector<34x128xf32> to vector<32x128xf32>
    %611 = vector.broadcast %609 : vector<1x128xf32> to vector<32x128xf32>
    %612 = arith.mulf %611, %610 : vector<32x128xf32>
    %613 = arith.addf %608, %612 : vector<32x128xf32>
    %614 = vector.extract_strided_slice %579 {offsets = [0, 2], sizes = [34, 32], strides = [1, 1]} : vector<34x34xf32> to vector<34x32xf32>
    %615 = tpu.concatenate %614, %614, %614, %614 in 1 : vector<34x32xf32>, vector<34x32xf32>, vector<34x32xf32>, vector<34x32xf32> -> vector<34x128xf32>
    %c56 = arith.constant 56 : index
    %c0_315 = arith.constant 0 : index
    %616 = vector.load %arg5[%c56, %c0_315] : memref<72x128xf32, #tpu.memory_space<vmem>>, vector<1x128xf32>
    %617 = vector.extract_strided_slice %615 {offsets = [0, 0], sizes = [32, 128], strides = [1, 1]} : vector<34x128xf32> to vector<32x128xf32>
    %618 = vector.broadcast %616 : vector<1x128xf32> to vector<32x128xf32>
    %619 = arith.mulf %618, %617 : vector<32x128xf32>
    %620 = arith.addf %613, %619 : vector<32x128xf32>
    %c59 = arith.constant 59 : index
    %c0_316 = arith.constant 0 : index
    %621 = vector.load %arg5[%c59, %c0_316] : memref<72x128xf32, #tpu.memory_space<vmem>>, vector<1x128xf32>
    %622 = vector.extract_strided_slice %615 {offsets = [1, 0], sizes = [32, 128], strides = [1, 1]} : vector<34x128xf32> to vector<32x128xf32>
    %623 = vector.broadcast %621 : vector<1x128xf32> to vector<32x128xf32>
    %624 = arith.mulf %623, %622 : vector<32x128xf32>
    %625 = arith.addf %620, %624 : vector<32x128xf32>
    %c62 = arith.constant 62 : index
    %c0_317 = arith.constant 0 : index
    %626 = vector.load %arg5[%c62, %c0_317] : memref<72x128xf32, #tpu.memory_space<vmem>>, vector<1x128xf32>
    %627 = vector.extract_strided_slice %615 {offsets = [2, 0], sizes = [32, 128], strides = [1, 1]} : vector<34x128xf32> to vector<32x128xf32>
    %628 = vector.broadcast %626 : vector<1x128xf32> to vector<32x128xf32>
    %629 = arith.mulf %628, %627 : vector<32x128xf32>
    %630 = arith.addf %625, %629 : vector<32x128xf32>
    %c7_318 = arith.constant 7 : index
    %c0_319 = arith.constant 0 : index
    %c0_320 = arith.constant 0 : index
    %631 = vector.load %arg12[%c7_318, %c0_319, %c0_320] : memref<8x34x34xf32, #tpu.memory_space<vmem>>, vector<1x34x34xf32>
    %632 = vector.shape_cast %631 : vector<1x34x34xf32> to vector<34x34xf32>
    %633 = vector.extract_strided_slice %632 {offsets = [0, 0], sizes = [34, 32], strides = [1, 1]} : vector<34x34xf32> to vector<34x32xf32>
    %634 = tpu.concatenate %633, %633, %633, %633 in 1 : vector<34x32xf32>, vector<34x32xf32>, vector<34x32xf32>, vector<34x32xf32> -> vector<34x128xf32>
    %c63 = arith.constant 63 : index
    %c0_321 = arith.constant 0 : index
    %635 = vector.load %arg5[%c63, %c0_321] : memref<72x128xf32, #tpu.memory_space<vmem>>, vector<1x128xf32>
    %636 = vector.extract_strided_slice %634 {offsets = [0, 0], sizes = [32, 128], strides = [1, 1]} : vector<34x128xf32> to vector<32x128xf32>
    %637 = vector.broadcast %635 : vector<1x128xf32> to vector<32x128xf32>
    %638 = arith.mulf %637, %636 : vector<32x128xf32>
    %639 = arith.addf %630, %638 : vector<32x128xf32>
    %c66 = arith.constant 66 : index
    %c0_322 = arith.constant 0 : index
    %640 = vector.load %arg5[%c66, %c0_322] : memref<72x128xf32, #tpu.memory_space<vmem>>, vector<1x128xf32>
    %641 = vector.extract_strided_slice %634 {offsets = [1, 0], sizes = [32, 128], strides = [1, 1]} : vector<34x128xf32> to vector<32x128xf32>
    %642 = vector.broadcast %640 : vector<1x128xf32> to vector<32x128xf32>
    %643 = arith.mulf %642, %641 : vector<32x128xf32>
    %644 = arith.addf %639, %643 : vector<32x128xf32>
    %c69 = arith.constant 69 : index
    %c0_323 = arith.constant 0 : index
    %645 = vector.load %arg5[%c69, %c0_323] : memref<72x128xf32, #tpu.memory_space<vmem>>, vector<1x128xf32>
    %646 = vector.extract_strided_slice %634 {offsets = [2, 0], sizes = [32, 128], strides = [1, 1]} : vector<34x128xf32> to vector<32x128xf32>
    %647 = vector.broadcast %645 : vector<1x128xf32> to vector<32x128xf32>
    %648 = arith.mulf %647, %646 : vector<32x128xf32>
    %649 = arith.addf %644, %648 : vector<32x128xf32>
    %650 = vector.extract_strided_slice %632 {offsets = [0, 1], sizes = [34, 32], strides = [1, 1]} : vector<34x34xf32> to vector<34x32xf32>
    %651 = tpu.concatenate %650, %650, %650, %650 in 1 : vector<34x32xf32>, vector<34x32xf32>, vector<34x32xf32>, vector<34x32xf32> -> vector<34x128xf32>
    %c64 = arith.constant 64 : index
    %c0_324 = arith.constant 0 : index
    %652 = vector.load %arg5[%c64, %c0_324] : memref<72x128xf32, #tpu.memory_space<vmem>>, vector<1x128xf32>
    %653 = vector.extract_strided_slice %651 {offsets = [0, 0], sizes = [32, 128], strides = [1, 1]} : vector<34x128xf32> to vector<32x128xf32>
    %654 = vector.broadcast %652 : vector<1x128xf32> to vector<32x128xf32>
    %655 = arith.mulf %654, %653 : vector<32x128xf32>
    %656 = arith.addf %649, %655 : vector<32x128xf32>
    %c67 = arith.constant 67 : index
    %c0_325 = arith.constant 0 : index
    %657 = vector.load %arg5[%c67, %c0_325] : memref<72x128xf32, #tpu.memory_space<vmem>>, vector<1x128xf32>
    %658 = vector.extract_strided_slice %651 {offsets = [1, 0], sizes = [32, 128], strides = [1, 1]} : vector<34x128xf32> to vector<32x128xf32>
    %659 = vector.broadcast %657 : vector<1x128xf32> to vector<32x128xf32>
    %660 = arith.mulf %659, %658 : vector<32x128xf32>
    %661 = arith.addf %656, %660 : vector<32x128xf32>
    %c70 = arith.constant 70 : index
    %c0_326 = arith.constant 0 : index
    %662 = vector.load %arg5[%c70, %c0_326] : memref<72x128xf32, #tpu.memory_space<vmem>>, vector<1x128xf32>
    %663 = vector.extract_strided_slice %651 {offsets = [2, 0], sizes = [32, 128], strides = [1, 1]} : vector<34x128xf32> to vector<32x128xf32>
    %664 = vector.broadcast %662 : vector<1x128xf32> to vector<32x128xf32>
    %665 = arith.mulf %664, %663 : vector<32x128xf32>
    %666 = arith.addf %661, %665 : vector<32x128xf32>
    %667 = vector.extract_strided_slice %632 {offsets = [0, 2], sizes = [34, 32], strides = [1, 1]} : vector<34x34xf32> to vector<34x32xf32>
    %668 = tpu.concatenate %667, %667, %667, %667 in 1 : vector<34x32xf32>, vector<34x32xf32>, vector<34x32xf32>, vector<34x32xf32> -> vector<34x128xf32>
    %c65 = arith.constant 65 : index
    %c0_327 = arith.constant 0 : index
    %669 = vector.load %arg5[%c65, %c0_327] : memref<72x128xf32, #tpu.memory_space<vmem>>, vector<1x128xf32>
    %670 = vector.extract_strided_slice %668 {offsets = [0, 0], sizes = [32, 128], strides = [1, 1]} : vector<34x128xf32> to vector<32x128xf32>
    %671 = vector.broadcast %669 : vector<1x128xf32> to vector<32x128xf32>
    %672 = arith.mulf %671, %670 : vector<32x128xf32>
    %673 = arith.addf %666, %672 : vector<32x128xf32>
    %c68 = arith.constant 68 : index
    %c0_328 = arith.constant 0 : index
    %674 = vector.load %arg5[%c68, %c0_328] : memref<72x128xf32, #tpu.memory_space<vmem>>, vector<1x128xf32>
    %675 = vector.extract_strided_slice %668 {offsets = [1, 0], sizes = [32, 128], strides = [1, 1]} : vector<34x128xf32> to vector<32x128xf32>
    %676 = vector.broadcast %674 : vector<1x128xf32> to vector<32x128xf32>
    %677 = arith.mulf %676, %675 : vector<32x128xf32>
    %678 = arith.addf %673, %677 : vector<32x128xf32>
    %c71 = arith.constant 71 : index
    %c0_329 = arith.constant 0 : index
    %679 = vector.load %arg5[%c71, %c0_329] : memref<72x128xf32, #tpu.memory_space<vmem>>, vector<1x128xf32>
    %680 = vector.extract_strided_slice %668 {offsets = [2, 0], sizes = [32, 128], strides = [1, 1]} : vector<34x128xf32> to vector<32x128xf32>
    %681 = vector.broadcast %679 : vector<1x128xf32> to vector<32x128xf32>
    %682 = arith.mulf %681, %680 : vector<32x128xf32>
    %683 = arith.addf %678, %682 : vector<32x128xf32>
    %cst_330 = arith.constant 0.000000e+00 : f32
    %684 = vector.broadcast %cst_330 : f32 to vector<32x128xf32>
    %685 = arith.maximumf %683, %684 : vector<32x128xf32>
    %686 = vector.broadcast %255 : vector<1x128xf32> to vector<32x128xf32>
    %687 = arith.mulf %685, %686 : vector<32x128xf32>
    %688 = vector.broadcast %256 : vector<1x128xf32> to vector<32x128xf32>
    %689 = arith.addf %687, %688 : vector<32x128xf32>
    %690 = vector.extract_strided_slice %689 {offsets = [0, 0], sizes = [32, 32], strides = [1, 1]} : vector<32x128xf32> to vector<32x32xf32>
    %c0_331 = arith.constant 0 : index
    %c1_332 = arith.constant 1 : index
    %c1_333 = arith.constant 1 : index
    %691 = vector.load %arg13[%c0_331, %c1_332, %c1_333] : memref<4x34x34xf32, #tpu.memory_space<vmem>>, vector<1x32x32xf32>
    %692 = vector.shape_cast %691 : vector<1x32x32xf32> to vector<32x32xf32>
    %693 = vector.shape_cast %690 : vector<32x32xf32> to vector<1x32x32xf32>
    tpu.vector_store %arg13[%c0_331, %c1_332, %c1_333], %693 {strides = array<i32>} : memref<4x34x34xf32, #tpu.memory_space<vmem>>, vector<1x32x32xf32>,
    %694 = vector.extract_strided_slice %689 {offsets = [0, 32], sizes = [32, 32], strides = [1, 1]} : vector<32x128xf32> to vector<32x32xf32>
    %c1_334 = arith.constant 1 : index
    %c1_335 = arith.constant 1 : index
    %c1_336 = arith.constant 1 : index
    %695 = vector.load %arg13[%c1_334, %c1_335, %c1_336] : memref<4x34x34xf32, #tpu.memory_space<vmem>>, vector<1x32x32xf32>
    %696 = vector.shape_cast %695 : vector<1x32x32xf32> to vector<32x32xf32>
    %697 = vector.shape_cast %694 : vector<32x32xf32> to vector<1x32x32xf32>
    tpu.vector_store %arg13[%c1_334, %c1_335, %c1_336], %697 {strides = array<i32>} : memref<4x34x34xf32, #tpu.memory_space<vmem>>, vector<1x32x32xf32>,
    %698 = vector.extract_strided_slice %689 {offsets = [0, 64], sizes = [32, 32], strides = [1, 1]} : vector<32x128xf32> to vector<32x32xf32>
    %c2_337 = arith.constant 2 : index
    %c1_338 = arith.constant 1 : index
    %c1_339 = arith.constant 1 : index
    %699 = vector.load %arg13[%c2_337, %c1_338, %c1_339] : memref<4x34x34xf32, #tpu.memory_space<vmem>>, vector<1x32x32xf32>
    %700 = vector.shape_cast %699 : vector<1x32x32xf32> to vector<32x32xf32>
    %701 = vector.shape_cast %698 : vector<32x32xf32> to vector<1x32x32xf32>
    tpu.vector_store %arg13[%c2_337, %c1_338, %c1_339], %701 {strides = array<i32>} : memref<4x34x34xf32, #tpu.memory_space<vmem>>, vector<1x32x32xf32>,
    %702 = vector.extract_strided_slice %689 {offsets = [0, 96], sizes = [32, 32], strides = [1, 1]} : vector<32x128xf32> to vector<32x32xf32>
    %c3_340 = arith.constant 3 : index
    %c1_341 = arith.constant 1 : index
    %c1_342 = arith.constant 1 : index
    %703 = vector.load %arg13[%c3_340, %c1_341, %c1_342] : memref<4x34x34xf32, #tpu.memory_space<vmem>>, vector<1x32x32xf32>
    %704 = vector.shape_cast %703 : vector<1x32x32xf32> to vector<32x32xf32>
    %705 = vector.shape_cast %702 : vector<32x32xf32> to vector<1x32x32xf32>
    tpu.vector_store %arg13[%c3_340, %c1_341, %c1_342], %705 {strides = array<i32>} : memref<4x34x34xf32, #tpu.memory_space<vmem>>, vector<1x32x32xf32>,
    %c0_343 = arith.constant 0 : index
    %c0_344 = arith.constant 0 : index
    %706 = vector.load %arg8[%c0_343, %c0_344] : memref<3x128xf32, #tpu.memory_space<vmem>>, vector<1x128xf32>
    %c1_345 = arith.constant 1 : index
    %c0_346 = arith.constant 0 : index
    %707 = vector.load %arg8[%c1_345, %c0_346] : memref<3x128xf32, #tpu.memory_space<vmem>>, vector<1x128xf32>
    %c2_347 = arith.constant 2 : index
    %c0_348 = arith.constant 0 : index
    %708 = vector.load %arg8[%c2_347, %c0_348] : memref<3x128xf32, #tpu.memory_space<vmem>>, vector<1x128xf32>
    %cst_349 = arith.constant 0.000000e+00 : f32
    %709 = vector.broadcast %cst_349 : f32 to vector<32x128xf32>
    %710 = vector.broadcast %706 : vector<1x128xf32> to vector<32x128xf32>
    %711 = arith.addf %709, %710 : vector<32x128xf32>
    %c0_350 = arith.constant 0 : index
    %c0_351 = arith.constant 0 : index
    %c0_352 = arith.constant 0 : index
    %712 = vector.load %arg13[%c0_350, %c0_351, %c0_352] : memref<4x34x34xf32, #tpu.memory_space<vmem>>, vector<1x34x34xf32>
    %713 = vector.shape_cast %712 : vector<1x34x34xf32> to vector<34x34xf32>
    %714 = vector.extract_strided_slice %713 {offsets = [0, 0], sizes = [34, 32], strides = [1, 1]} : vector<34x34xf32> to vector<34x32xf32>
    %715 = tpu.concatenate %714, %714, %714, %714 in 1 : vector<34x32xf32>, vector<34x32xf32>, vector<34x32xf32>, vector<34x32xf32> -> vector<34x128xf32>
    %c0_353 = arith.constant 0 : index
    %c0_354 = arith.constant 0 : index
    %716 = vector.load %arg7[%c0_353, %c0_354] : memref<36x128xf32, #tpu.memory_space<vmem>>, vector<1x128xf32>
    %717 = vector.extract_strided_slice %715 {offsets = [0, 0], sizes = [32, 128], strides = [1, 1]} : vector<34x128xf32> to vector<32x128xf32>
    %718 = vector.broadcast %716 : vector<1x128xf32> to vector<32x128xf32>
    %719 = arith.mulf %718, %717 : vector<32x128xf32>
    %720 = arith.addf %711, %719 : vector<32x128xf32>
    %c3_355 = arith.constant 3 : index
    %c0_356 = arith.constant 0 : index
    %721 = vector.load %arg7[%c3_355, %c0_356] : memref<36x128xf32, #tpu.memory_space<vmem>>, vector<1x128xf32>
    %722 = vector.extract_strided_slice %715 {offsets = [1, 0], sizes = [32, 128], strides = [1, 1]} : vector<34x128xf32> to vector<32x128xf32>
    %723 = vector.broadcast %721 : vector<1x128xf32> to vector<32x128xf32>
    %724 = arith.mulf %723, %722 : vector<32x128xf32>
    %725 = arith.addf %720, %724 : vector<32x128xf32>
    %c6_357 = arith.constant 6 : index
    %c0_358 = arith.constant 0 : index
    %726 = vector.load %arg7[%c6_357, %c0_358] : memref<36x128xf32, #tpu.memory_space<vmem>>, vector<1x128xf32>
    %727 = vector.extract_strided_slice %715 {offsets = [2, 0], sizes = [32, 128], strides = [1, 1]} : vector<34x128xf32> to vector<32x128xf32>
    %728 = vector.broadcast %726 : vector<1x128xf32> to vector<32x128xf32>
    %729 = arith.mulf %728, %727 : vector<32x128xf32>
    %730 = arith.addf %725, %729 : vector<32x128xf32>
    %731 = vector.extract_strided_slice %713 {offsets = [0, 1], sizes = [34, 32], strides = [1, 1]} : vector<34x34xf32> to vector<34x32xf32>
    %732 = tpu.concatenate %731, %731, %731, %731 in 1 : vector<34x32xf32>, vector<34x32xf32>, vector<34x32xf32>, vector<34x32xf32> -> vector<34x128xf32>
    %c1_359 = arith.constant 1 : index
    %c0_360 = arith.constant 0 : index
    %733 = vector.load %arg7[%c1_359, %c0_360] : memref<36x128xf32, #tpu.memory_space<vmem>>, vector<1x128xf32>
    %734 = vector.extract_strided_slice %732 {offsets = [0, 0], sizes = [32, 128], strides = [1, 1]} : vector<34x128xf32> to vector<32x128xf32>
    %735 = vector.broadcast %733 : vector<1x128xf32> to vector<32x128xf32>
    %736 = arith.mulf %735, %734 : vector<32x128xf32>
    %737 = arith.addf %730, %736 : vector<32x128xf32>
    %c4_361 = arith.constant 4 : index
    %c0_362 = arith.constant 0 : index
    %738 = vector.load %arg7[%c4_361, %c0_362] : memref<36x128xf32, #tpu.memory_space<vmem>>, vector<1x128xf32>
    %739 = vector.extract_strided_slice %732 {offsets = [1, 0], sizes = [32, 128], strides = [1, 1]} : vector<34x128xf32> to vector<32x128xf32>
    %740 = vector.broadcast %738 : vector<1x128xf32> to vector<32x128xf32>
    %741 = arith.mulf %740, %739 : vector<32x128xf32>
    %742 = arith.addf %737, %741 : vector<32x128xf32>
    %c7_363 = arith.constant 7 : index
    %c0_364 = arith.constant 0 : index
    %743 = vector.load %arg7[%c7_363, %c0_364] : memref<36x128xf32, #tpu.memory_space<vmem>>, vector<1x128xf32>
    %744 = vector.extract_strided_slice %732 {offsets = [2, 0], sizes = [32, 128], strides = [1, 1]} : vector<34x128xf32> to vector<32x128xf32>
    %745 = vector.broadcast %743 : vector<1x128xf32> to vector<32x128xf32>
    %746 = arith.mulf %745, %744 : vector<32x128xf32>
    %747 = arith.addf %742, %746 : vector<32x128xf32>
    %748 = vector.extract_strided_slice %713 {offsets = [0, 2], sizes = [34, 32], strides = [1, 1]} : vector<34x34xf32> to vector<34x32xf32>
    %749 = tpu.concatenate %748, %748, %748, %748 in 1 : vector<34x32xf32>, vector<34x32xf32>, vector<34x32xf32>, vector<34x32xf32> -> vector<34x128xf32>
    %c2_365 = arith.constant 2 : index
    %c0_366 = arith.constant 0 : index
    %750 = vector.load %arg7[%c2_365, %c0_366] : memref<36x128xf32, #tpu.memory_space<vmem>>, vector<1x128xf32>
    %751 = vector.extract_strided_slice %749 {offsets = [0, 0], sizes = [32, 128], strides = [1, 1]} : vector<34x128xf32> to vector<32x128xf32>
    %752 = vector.broadcast %750 : vector<1x128xf32> to vector<32x128xf32>
    %753 = arith.mulf %752, %751 : vector<32x128xf32>
    %754 = arith.addf %747, %753 : vector<32x128xf32>
    %c5_367 = arith.constant 5 : index
    %c0_368 = arith.constant 0 : index
    %755 = vector.load %arg7[%c5_367, %c0_368] : memref<36x128xf32, #tpu.memory_space<vmem>>, vector<1x128xf32>
    %756 = vector.extract_strided_slice %749 {offsets = [1, 0], sizes = [32, 128], strides = [1, 1]} : vector<34x128xf32> to vector<32x128xf32>
    %757 = vector.broadcast %755 : vector<1x128xf32> to vector<32x128xf32>
    %758 = arith.mulf %757, %756 : vector<32x128xf32>
    %759 = arith.addf %754, %758 : vector<32x128xf32>
    %c8_369 = arith.constant 8 : index
    %c0_370 = arith.constant 0 : index
    %760 = vector.load %arg7[%c8_369, %c0_370] : memref<36x128xf32, #tpu.memory_space<vmem>>, vector<1x128xf32>
    %761 = vector.extract_strided_slice %749 {offsets = [2, 0], sizes = [32, 128], strides = [1, 1]} : vector<34x128xf32> to vector<32x128xf32>
    %762 = vector.broadcast %760 : vector<1x128xf32> to vector<32x128xf32>
    %763 = arith.mulf %762, %761 : vector<32x128xf32>
    %764 = arith.addf %759, %763 : vector<32x128xf32>
    %c1_371 = arith.constant 1 : index
    %c0_372 = arith.constant 0 : index
    %c0_373 = arith.constant 0 : index
    %765 = vector.load %arg13[%c1_371, %c0_372, %c0_373] : memref<4x34x34xf32, #tpu.memory_space<vmem>>, vector<1x34x34xf32>
    %766 = vector.shape_cast %765 : vector<1x34x34xf32> to vector<34x34xf32>
    %767 = vector.extract_strided_slice %766 {offsets = [0, 0], sizes = [34, 32], strides = [1, 1]} : vector<34x34xf32> to vector<34x32xf32>
    %768 = tpu.concatenate %767, %767, %767, %767 in 1 : vector<34x32xf32>, vector<34x32xf32>, vector<34x32xf32>, vector<34x32xf32> -> vector<34x128xf32>
    %c9_374 = arith.constant 9 : index
    %c0_375 = arith.constant 0 : index
    %769 = vector.load %arg7[%c9_374, %c0_375] : memref<36x128xf32, #tpu.memory_space<vmem>>, vector<1x128xf32>
    %770 = vector.extract_strided_slice %768 {offsets = [0, 0], sizes = [32, 128], strides = [1, 1]} : vector<34x128xf32> to vector<32x128xf32>
    %771 = vector.broadcast %769 : vector<1x128xf32> to vector<32x128xf32>
    %772 = arith.mulf %771, %770 : vector<32x128xf32>
    %773 = arith.addf %764, %772 : vector<32x128xf32>
    %c12_376 = arith.constant 12 : index
    %c0_377 = arith.constant 0 : index
    %774 = vector.load %arg7[%c12_376, %c0_377] : memref<36x128xf32, #tpu.memory_space<vmem>>, vector<1x128xf32>
    %775 = vector.extract_strided_slice %768 {offsets = [1, 0], sizes = [32, 128], strides = [1, 1]} : vector<34x128xf32> to vector<32x128xf32>
    %776 = vector.broadcast %774 : vector<1x128xf32> to vector<32x128xf32>
    %777 = arith.mulf %776, %775 : vector<32x128xf32>
    %778 = arith.addf %773, %777 : vector<32x128xf32>
    %c15_378 = arith.constant 15 : index
    %c0_379 = arith.constant 0 : index
    %779 = vector.load %arg7[%c15_378, %c0_379] : memref<36x128xf32, #tpu.memory_space<vmem>>, vector<1x128xf32>
    %780 = vector.extract_strided_slice %768 {offsets = [2, 0], sizes = [32, 128], strides = [1, 1]} : vector<34x128xf32> to vector<32x128xf32>
    %781 = vector.broadcast %779 : vector<1x128xf32> to vector<32x128xf32>
    %782 = arith.mulf %781, %780 : vector<32x128xf32>
    %783 = arith.addf %778, %782 : vector<32x128xf32>
    %784 = vector.extract_strided_slice %766 {offsets = [0, 1], sizes = [34, 32], strides = [1, 1]} : vector<34x34xf32> to vector<34x32xf32>
    %785 = tpu.concatenate %784, %784, %784, %784 in 1 : vector<34x32xf32>, vector<34x32xf32>, vector<34x32xf32>, vector<34x32xf32> -> vector<34x128xf32>
    %c10_380 = arith.constant 10 : index
    %c0_381 = arith.constant 0 : index
    %786 = vector.load %arg7[%c10_380, %c0_381] : memref<36x128xf32, #tpu.memory_space<vmem>>, vector<1x128xf32>
    %787 = vector.extract_strided_slice %785 {offsets = [0, 0], sizes = [32, 128], strides = [1, 1]} : vector<34x128xf32> to vector<32x128xf32>
    %788 = vector.broadcast %786 : vector<1x128xf32> to vector<32x128xf32>
    %789 = arith.mulf %788, %787 : vector<32x128xf32>
    %790 = arith.addf %783, %789 : vector<32x128xf32>
    %c13_382 = arith.constant 13 : index
    %c0_383 = arith.constant 0 : index
    %791 = vector.load %arg7[%c13_382, %c0_383] : memref<36x128xf32, #tpu.memory_space<vmem>>, vector<1x128xf32>
    %792 = vector.extract_strided_slice %785 {offsets = [1, 0], sizes = [32, 128], strides = [1, 1]} : vector<34x128xf32> to vector<32x128xf32>
    %793 = vector.broadcast %791 : vector<1x128xf32> to vector<32x128xf32>
    %794 = arith.mulf %793, %792 : vector<32x128xf32>
    %795 = arith.addf %790, %794 : vector<32x128xf32>
    %c16_384 = arith.constant 16 : index
    %c0_385 = arith.constant 0 : index
    %796 = vector.load %arg7[%c16_384, %c0_385] : memref<36x128xf32, #tpu.memory_space<vmem>>, vector<1x128xf32>
    %797 = vector.extract_strided_slice %785 {offsets = [2, 0], sizes = [32, 128], strides = [1, 1]} : vector<34x128xf32> to vector<32x128xf32>
    %798 = vector.broadcast %796 : vector<1x128xf32> to vector<32x128xf32>
    %799 = arith.mulf %798, %797 : vector<32x128xf32>
    %800 = arith.addf %795, %799 : vector<32x128xf32>
    %801 = vector.extract_strided_slice %766 {offsets = [0, 2], sizes = [34, 32], strides = [1, 1]} : vector<34x34xf32> to vector<34x32xf32>
    %802 = tpu.concatenate %801, %801, %801, %801 in 1 : vector<34x32xf32>, vector<34x32xf32>, vector<34x32xf32>, vector<34x32xf32> -> vector<34x128xf32>
    %c11_386 = arith.constant 11 : index
    %c0_387 = arith.constant 0 : index
    %803 = vector.load %arg7[%c11_386, %c0_387] : memref<36x128xf32, #tpu.memory_space<vmem>>, vector<1x128xf32>
    %804 = vector.extract_strided_slice %802 {offsets = [0, 0], sizes = [32, 128], strides = [1, 1]} : vector<34x128xf32> to vector<32x128xf32>
    %805 = vector.broadcast %803 : vector<1x128xf32> to vector<32x128xf32>
    %806 = arith.mulf %805, %804 : vector<32x128xf32>
    %807 = arith.addf %800, %806 : vector<32x128xf32>
    %c14_388 = arith.constant 14 : index
    %c0_389 = arith.constant 0 : index
    %808 = vector.load %arg7[%c14_388, %c0_389] : memref<36x128xf32, #tpu.memory_space<vmem>>, vector<1x128xf32>
    %809 = vector.extract_strided_slice %802 {offsets = [1, 0], sizes = [32, 128], strides = [1, 1]} : vector<34x128xf32> to vector<32x128xf32>
    %810 = vector.broadcast %808 : vector<1x128xf32> to vector<32x128xf32>
    %811 = arith.mulf %810, %809 : vector<32x128xf32>
    %812 = arith.addf %807, %811 : vector<32x128xf32>
    %c17_390 = arith.constant 17 : index
    %c0_391 = arith.constant 0 : index
    %813 = vector.load %arg7[%c17_390, %c0_391] : memref<36x128xf32, #tpu.memory_space<vmem>>, vector<1x128xf32>
    %814 = vector.extract_strided_slice %802 {offsets = [2, 0], sizes = [32, 128], strides = [1, 1]} : vector<34x128xf32> to vector<32x128xf32>
    %815 = vector.broadcast %813 : vector<1x128xf32> to vector<32x128xf32>
    %816 = arith.mulf %815, %814 : vector<32x128xf32>
    %817 = arith.addf %812, %816 : vector<32x128xf32>
    %c2_392 = arith.constant 2 : index
    %c0_393 = arith.constant 0 : index
    %c0_394 = arith.constant 0 : index
    %818 = vector.load %arg13[%c2_392, %c0_393, %c0_394] : memref<4x34x34xf32, #tpu.memory_space<vmem>>, vector<1x34x34xf32>
    %819 = vector.shape_cast %818 : vector<1x34x34xf32> to vector<34x34xf32>
    %820 = vector.extract_strided_slice %819 {offsets = [0, 0], sizes = [34, 32], strides = [1, 1]} : vector<34x34xf32> to vector<34x32xf32>
    %821 = tpu.concatenate %820, %820, %820, %820 in 1 : vector<34x32xf32>, vector<34x32xf32>, vector<34x32xf32>, vector<34x32xf32> -> vector<34x128xf32>
    %c18_395 = arith.constant 18 : index
    %c0_396 = arith.constant 0 : index
    %822 = vector.load %arg7[%c18_395, %c0_396] : memref<36x128xf32, #tpu.memory_space<vmem>>, vector<1x128xf32>
    %823 = vector.extract_strided_slice %821 {offsets = [0, 0], sizes = [32, 128], strides = [1, 1]} : vector<34x128xf32> to vector<32x128xf32>
    %824 = vector.broadcast %822 : vector<1x128xf32> to vector<32x128xf32>
    %825 = arith.mulf %824, %823 : vector<32x128xf32>
    %826 = arith.addf %817, %825 : vector<32x128xf32>
    %c21_397 = arith.constant 21 : index
    %c0_398 = arith.constant 0 : index
    %827 = vector.load %arg7[%c21_397, %c0_398] : memref<36x128xf32, #tpu.memory_space<vmem>>, vector<1x128xf32>
    %828 = vector.extract_strided_slice %821 {offsets = [1, 0], sizes = [32, 128], strides = [1, 1]} : vector<34x128xf32> to vector<32x128xf32>
    %829 = vector.broadcast %827 : vector<1x128xf32> to vector<32x128xf32>
    %830 = arith.mulf %829, %828 : vector<32x128xf32>
    %831 = arith.addf %826, %830 : vector<32x128xf32>
    %c24_399 = arith.constant 24 : index
    %c0_400 = arith.constant 0 : index
    %832 = vector.load %arg7[%c24_399, %c0_400] : memref<36x128xf32, #tpu.memory_space<vmem>>, vector<1x128xf32>
    %833 = vector.extract_strided_slice %821 {offsets = [2, 0], sizes = [32, 128], strides = [1, 1]} : vector<34x128xf32> to vector<32x128xf32>
    %834 = vector.broadcast %832 : vector<1x128xf32> to vector<32x128xf32>
    %835 = arith.mulf %834, %833 : vector<32x128xf32>
    %836 = arith.addf %831, %835 : vector<32x128xf32>
    %837 = vector.extract_strided_slice %819 {offsets = [0, 1], sizes = [34, 32], strides = [1, 1]} : vector<34x34xf32> to vector<34x32xf32>
    %838 = tpu.concatenate %837, %837, %837, %837 in 1 : vector<34x32xf32>, vector<34x32xf32>, vector<34x32xf32>, vector<34x32xf32> -> vector<34x128xf32>
    %c19_401 = arith.constant 19 : index
    %c0_402 = arith.constant 0 : index
    %839 = vector.load %arg7[%c19_401, %c0_402] : memref<36x128xf32, #tpu.memory_space<vmem>>, vector<1x128xf32>
    %840 = vector.extract_strided_slice %838 {offsets = [0, 0], sizes = [32, 128], strides = [1, 1]} : vector<34x128xf32> to vector<32x128xf32>
    %841 = vector.broadcast %839 : vector<1x128xf32> to vector<32x128xf32>
    %842 = arith.mulf %841, %840 : vector<32x128xf32>
    %843 = arith.addf %836, %842 : vector<32x128xf32>
    %c22_403 = arith.constant 22 : index
    %c0_404 = arith.constant 0 : index
    %844 = vector.load %arg7[%c22_403, %c0_404] : memref<36x128xf32, #tpu.memory_space<vmem>>, vector<1x128xf32>
    %845 = vector.extract_strided_slice %838 {offsets = [1, 0], sizes = [32, 128], strides = [1, 1]} : vector<34x128xf32> to vector<32x128xf32>
    %846 = vector.broadcast %844 : vector<1x128xf32> to vector<32x128xf32>
    %847 = arith.mulf %846, %845 : vector<32x128xf32>
    %848 = arith.addf %843, %847 : vector<32x128xf32>
    %c25_405 = arith.constant 25 : index
    %c0_406 = arith.constant 0 : index
    %849 = vector.load %arg7[%c25_405, %c0_406] : memref<36x128xf32, #tpu.memory_space<vmem>>, vector<1x128xf32>
    %850 = vector.extract_strided_slice %838 {offsets = [2, 0], sizes = [32, 128], strides = [1, 1]} : vector<34x128xf32> to vector<32x128xf32>
    %851 = vector.broadcast %849 : vector<1x128xf32> to vector<32x128xf32>
    %852 = arith.mulf %851, %850 : vector<32x128xf32>
    %853 = arith.addf %848, %852 : vector<32x128xf32>
    %854 = vector.extract_strided_slice %819 {offsets = [0, 2], sizes = [34, 32], strides = [1, 1]} : vector<34x34xf32> to vector<34x32xf32>
    %855 = tpu.concatenate %854, %854, %854, %854 in 1 : vector<34x32xf32>, vector<34x32xf32>, vector<34x32xf32>, vector<34x32xf32> -> vector<34x128xf32>
    %c20_407 = arith.constant 20 : index
    %c0_408 = arith.constant 0 : index
    %856 = vector.load %arg7[%c20_407, %c0_408] : memref<36x128xf32, #tpu.memory_space<vmem>>, vector<1x128xf32>
    %857 = vector.extract_strided_slice %855 {offsets = [0, 0], sizes = [32, 128], strides = [1, 1]} : vector<34x128xf32> to vector<32x128xf32>
    %858 = vector.broadcast %856 : vector<1x128xf32> to vector<32x128xf32>
    %859 = arith.mulf %858, %857 : vector<32x128xf32>
    %860 = arith.addf %853, %859 : vector<32x128xf32>
    %c23_409 = arith.constant 23 : index
    %c0_410 = arith.constant 0 : index
    %861 = vector.load %arg7[%c23_409, %c0_410] : memref<36x128xf32, #tpu.memory_space<vmem>>, vector<1x128xf32>
    %862 = vector.extract_strided_slice %855 {offsets = [1, 0], sizes = [32, 128], strides = [1, 1]} : vector<34x128xf32> to vector<32x128xf32>
    %863 = vector.broadcast %861 : vector<1x128xf32> to vector<32x128xf32>
    %864 = arith.mulf %863, %862 : vector<32x128xf32>
    %865 = arith.addf %860, %864 : vector<32x128xf32>
    %c26_411 = arith.constant 26 : index
    %c0_412 = arith.constant 0 : index
    %866 = vector.load %arg7[%c26_411, %c0_412] : memref<36x128xf32, #tpu.memory_space<vmem>>, vector<1x128xf32>
    %867 = vector.extract_strided_slice %855 {offsets = [2, 0], sizes = [32, 128], strides = [1, 1]} : vector<34x128xf32> to vector<32x128xf32>
    %868 = vector.broadcast %866 : vector<1x128xf32> to vector<32x128xf32>
    %869 = arith.mulf %868, %867 : vector<32x128xf32>
    %870 = arith.addf %865, %869 : vector<32x128xf32>
    %c3_413 = arith.constant 3 : index
    %c0_414 = arith.constant 0 : index
    %c0_415 = arith.constant 0 : index
    %871 = vector.load %arg13[%c3_413, %c0_414, %c0_415] : memref<4x34x34xf32, #tpu.memory_space<vmem>>, vector<1x34x34xf32>
    %872 = vector.shape_cast %871 : vector<1x34x34xf32> to vector<34x34xf32>
    %873 = vector.extract_strided_slice %872 {offsets = [0, 0], sizes = [34, 32], strides = [1, 1]} : vector<34x34xf32> to vector<34x32xf32>
    %874 = tpu.concatenate %873, %873, %873, %873 in 1 : vector<34x32xf32>, vector<34x32xf32>, vector<34x32xf32>, vector<34x32xf32> -> vector<34x128xf32>
    %c27_416 = arith.constant 27 : index
    %c0_417 = arith.constant 0 : index
    %875 = vector.load %arg7[%c27_416, %c0_417] : memref<36x128xf32, #tpu.memory_space<vmem>>, vector<1x128xf32>
    %876 = vector.extract_strided_slice %874 {offsets = [0, 0], sizes = [32, 128], strides = [1, 1]} : vector<34x128xf32> to vector<32x128xf32>
    %877 = vector.broadcast %875 : vector<1x128xf32> to vector<32x128xf32>
    %878 = arith.mulf %877, %876 : vector<32x128xf32>
    %879 = arith.addf %870, %878 : vector<32x128xf32>
    %c30_418 = arith.constant 30 : index
    %c0_419 = arith.constant 0 : index
    %880 = vector.load %arg7[%c30_418, %c0_419] : memref<36x128xf32, #tpu.memory_space<vmem>>, vector<1x128xf32>
    %881 = vector.extract_strided_slice %874 {offsets = [1, 0], sizes = [32, 128], strides = [1, 1]} : vector<34x128xf32> to vector<32x128xf32>
    %882 = vector.broadcast %880 : vector<1x128xf32> to vector<32x128xf32>
    %883 = arith.mulf %882, %881 : vector<32x128xf32>
    %884 = arith.addf %879, %883 : vector<32x128xf32>
    %c33_420 = arith.constant 33 : index
    %c0_421 = arith.constant 0 : index
    %885 = vector.load %arg7[%c33_420, %c0_421] : memref<36x128xf32, #tpu.memory_space<vmem>>, vector<1x128xf32>
    %886 = vector.extract_strided_slice %874 {offsets = [2, 0], sizes = [32, 128], strides = [1, 1]} : vector<34x128xf32> to vector<32x128xf32>
    %887 = vector.broadcast %885 : vector<1x128xf32> to vector<32x128xf32>
    %888 = arith.mulf %887, %886 : vector<32x128xf32>
    %889 = arith.addf %884, %888 : vector<32x128xf32>
    %890 = vector.extract_strided_slice %872 {offsets = [0, 1], sizes = [34, 32], strides = [1, 1]} : vector<34x34xf32> to vector<34x32xf32>
    %891 = tpu.concatenate %890, %890, %890, %890 in 1 : vector<34x32xf32>, vector<34x32xf32>, vector<34x32xf32>, vector<34x32xf32> -> vector<34x128xf32>
    %c28_422 = arith.constant 28 : index
    %c0_423 = arith.constant 0 : index
    %892 = vector.load %arg7[%c28_422, %c0_423] : memref<36x128xf32, #tpu.memory_space<vmem>>, vector<1x128xf32>
    %893 = vector.extract_strided_slice %891 {offsets = [0, 0], sizes = [32, 128], strides = [1, 1]} : vector<34x128xf32> to vector<32x128xf32>
    %894 = vector.broadcast %892 : vector<1x128xf32> to vector<32x128xf32>
    %895 = arith.mulf %894, %893 : vector<32x128xf32>
    %896 = arith.addf %889, %895 : vector<32x128xf32>
    %c31_424 = arith.constant 31 : index
    %c0_425 = arith.constant 0 : index
    %897 = vector.load %arg7[%c31_424, %c0_425] : memref<36x128xf32, #tpu.memory_space<vmem>>, vector<1x128xf32>
    %898 = vector.extract_strided_slice %891 {offsets = [1, 0], sizes = [32, 128], strides = [1, 1]} : vector<34x128xf32> to vector<32x128xf32>
    %899 = vector.broadcast %897 : vector<1x128xf32> to vector<32x128xf32>
    %900 = arith.mulf %899, %898 : vector<32x128xf32>
    %901 = arith.addf %896, %900 : vector<32x128xf32>
    %c34_426 = arith.constant 34 : index
    %c0_427 = arith.constant 0 : index
    %902 = vector.load %arg7[%c34_426, %c0_427] : memref<36x128xf32, #tpu.memory_space<vmem>>, vector<1x128xf32>
    %903 = vector.extract_strided_slice %891 {offsets = [2, 0], sizes = [32, 128], strides = [1, 1]} : vector<34x128xf32> to vector<32x128xf32>
    %904 = vector.broadcast %902 : vector<1x128xf32> to vector<32x128xf32>
    %905 = arith.mulf %904, %903 : vector<32x128xf32>
    %906 = arith.addf %901, %905 : vector<32x128xf32>
    %907 = vector.extract_strided_slice %872 {offsets = [0, 2], sizes = [34, 32], strides = [1, 1]} : vector<34x34xf32> to vector<34x32xf32>
    %908 = tpu.concatenate %907, %907, %907, %907 in 1 : vector<34x32xf32>, vector<34x32xf32>, vector<34x32xf32>, vector<34x32xf32> -> vector<34x128xf32>
    %c29_428 = arith.constant 29 : index
    %c0_429 = arith.constant 0 : index
    %909 = vector.load %arg7[%c29_428, %c0_429] : memref<36x128xf32, #tpu.memory_space<vmem>>, vector<1x128xf32>
    %910 = vector.extract_strided_slice %908 {offsets = [0, 0], sizes = [32, 128], strides = [1, 1]} : vector<34x128xf32> to vector<32x128xf32>
    %911 = vector.broadcast %909 : vector<1x128xf32> to vector<32x128xf32>
    %912 = arith.mulf %911, %910 : vector<32x128xf32>
    %913 = arith.addf %906, %912 : vector<32x128xf32>
    %c32_430 = arith.constant 32 : index
    %c0_431 = arith.constant 0 : index
    %914 = vector.load %arg7[%c32_430, %c0_431] : memref<36x128xf32, #tpu.memory_space<vmem>>, vector<1x128xf32>
    %915 = vector.extract_strided_slice %908 {offsets = [1, 0], sizes = [32, 128], strides = [1, 1]} : vector<34x128xf32> to vector<32x128xf32>
    %916 = vector.broadcast %914 : vector<1x128xf32> to vector<32x128xf32>
    %917 = arith.mulf %916, %915 : vector<32x128xf32>
    %918 = arith.addf %913, %917 : vector<32x128xf32>
    %c35_432 = arith.constant 35 : index
    %c0_433 = arith.constant 0 : index
    %919 = vector.load %arg7[%c35_432, %c0_433] : memref<36x128xf32, #tpu.memory_space<vmem>>, vector<1x128xf32>
    %920 = vector.extract_strided_slice %908 {offsets = [2, 0], sizes = [32, 128], strides = [1, 1]} : vector<34x128xf32> to vector<32x128xf32>
    %921 = vector.broadcast %919 : vector<1x128xf32> to vector<32x128xf32>
    %922 = arith.mulf %921, %920 : vector<32x128xf32>
    %923 = arith.addf %918, %922 : vector<32x128xf32>
    %cst_434 = arith.constant 0.000000e+00 : f32
    %924 = vector.broadcast %cst_434 : f32 to vector<32x128xf32>
    %925 = arith.maximumf %923, %924 : vector<32x128xf32>
    %926 = vector.broadcast %707 : vector<1x128xf32> to vector<32x128xf32>
    %927 = arith.mulf %925, %926 : vector<32x128xf32>
    %928 = vector.broadcast %708 : vector<1x128xf32> to vector<32x128xf32>
    %929 = arith.addf %927, %928 : vector<32x128xf32>
    %c0_435 = arith.constant 0 : index
    %c0_436 = arith.constant 0 : index
    %c0_437 = arith.constant 0 : index
    %930 = vector.load %arg11[%c0_435, %c0_436, %c0_437] : memref<1x32x128xf32, #tpu.memory_space<vmem>>, vector<1x32x128xf32>
    %931 = vector.shape_cast %930 : vector<1x32x128xf32> to vector<32x128xf32>
    %932 = vector.shape_cast %929 : vector<32x128xf32> to vector<1x32x128xf32>
    tpu.vector_store %arg11[%c0_435, %c0_436, %c0_437], %932 {strides = array<i32>} : memref<1x32x128xf32, #tpu.memory_space<vmem>>, vector<1x32x128xf32>,
    return
  }
  func.func @transform_0(%arg0: i32) -> (i32, i32, i32, i32) {
    %c0_i32 = arith.constant 0 : i32
    %c0_i32_0 = arith.constant 0 : i32
    %c0_i32_1 = arith.constant 0 : i32
    %c0_i32_2 = arith.constant 0 : i32
    return %arg0, %c0_i32, %c0_i32_0, %c0_i32_1 : i32, i32, i32, i32
  }
  func.func @transform_1(%arg0: i32) -> (i32, i32, i32, i32) {
    %c0_i32 = arith.constant 0 : i32
    %c0_i32_0 = arith.constant 0 : i32
    %c0_i32_1 = arith.constant 0 : i32
    %c0_i32_2 = arith.constant 0 : i32
    return %arg0, %c0_i32, %c0_i32_0, %c0_i32_1 : i32, i32, i32, i32
  }
  func.func @transform_2(%arg0: i32) -> (i32, i32) {
    %c0_i32 = arith.constant 0 : i32
    %c0_i32_0 = arith.constant 0 : i32
    %c0_i32_1 = arith.constant 0 : i32
    return %c0_i32, %c0_i32_0 : i32, i32
  }
  func.func @transform_3(%arg0: i32) -> (i32, i32) {
    %c0_i32 = arith.constant 0 : i32
    %c0_i32_0 = arith.constant 0 : i32
    %c0_i32_1 = arith.constant 0 : i32
    return %c0_i32, %c0_i32_0 : i32, i32
  }
  func.func @transform_4(%arg0: i32) -> (i32, i32) {
    %c0_i32 = arith.constant 0 : i32
    %c0_i32_0 = arith.constant 0 : i32
    %c0_i32_1 = arith.constant 0 : i32
    return %c0_i32, %c0_i32_0 : i32, i32
  }
  func.func @transform_5(%arg0: i32) -> (i32, i32) {
    %c0_i32 = arith.constant 0 : i32
    %c0_i32_0 = arith.constant 0 : i32
    %c0_i32_1 = arith.constant 0 : i32
    return %c0_i32, %c0_i32_0 : i32, i32
  }
  func.func @transform_6(%arg0: i32) -> (i32, i32) {
    %c0_i32 = arith.constant 0 : i32
    %c0_i32_0 = arith.constant 0 : i32
    %c0_i32_1 = arith.constant 0 : i32
    return %c0_i32, %c0_i32_0 : i32, i32
  }
  func.func @transform_7(%arg0: i32) -> (i32, i32) {
    %c0_i32 = arith.constant 0 : i32
    %c0_i32_0 = arith.constant 0 : i32
    %c0_i32_1 = arith.constant 0 : i32
    return %c0_i32, %c0_i32_0 : i32, i32
  }
  func.func @transform_8(%arg0: i32) -> i32 {
    %c0_i32 = arith.constant 0 : i32
    %c0_i32_0 = arith.constant 0 : i32
    return %c0_i32 : i32
  }
  func.func @transform_9(%arg0: i32) -> i32 {
    %c0_i32 = arith.constant 0 : i32
    %c0_i32_0 = arith.constant 0 : i32
    return %c0_i32 : i32
  }
  func.func @transform_10(%arg0: i32) -> (i32, i32, i32) {
    %c0_i32 = arith.constant 0 : i32
    %c0_i32_0 = arith.constant 0 : i32
    %c0_i32_1 = arith.constant 0 : i32
    return %arg0, %c0_i32, %c0_i32_0 : i32, i32, i32
  }
}

</mosaic_0001>

<llo_original>
// kernel: upconv_block_forward.1
$region0: #{upconv_block_forward.1}
  #allocation0 [shape = 'u32[]', space=smem, size = 0x4, offset = 0x4, fixed_abs, tag = 'smem constant byte address 0x4 - core index']
  #allocation1 [shape = 'u32[72,128]{1,0:T(1,128)}', space=vmem, size = 0x9000, scoped, tag = 'internal scratch']
  #allocation2 [shape = 'f32[8,34,34]{2,1,0:T(8,128)}', space=vmem, size = 0x28000, scoped, tag = 'scratch operand']
  #allocation3 [shape = 'f32[4,34,34]{2,1,0:T(8,128)}', space=vmem, size = 0x14000, scoped, tag = 'scratch operand']
  %s0 = inlined_call_operand.vmem [shape: f32[2,8,16,16], index: 0, kind: input, shape index: {}]
  %s1 = inlined_call_operand.vmem [shape: f32[2,4,32,32], index: 1, kind: input, shape index: {}]
  %s2 = inlined_call_operand.vmem [shape: f32[34,16], index: 2, kind: input, shape index: {}]
  %s3 = inlined_call_operand.vmem [shape: f32[16,34], index: 3, kind: input, shape index: {}]
  %s4 = inlined_call_operand.vmem [shape: f32[72,128], index: 4, kind: input, shape index: {}]
  %s5 = inlined_call_operand.vmem [shape: f32[3,128], index: 5, kind: input, shape index: {}]
  %s6 = inlined_call_operand.vmem [shape: f32[36,128], index: 6, kind: input, shape index: {}]
  %s7 = inlined_call_operand.vmem [shape: f32[3,128], index: 7, kind: input, shape index: {}]
  %s8 = inlined_call_operand.vmem [shape: f32[32], index: 8, kind: input, shape index: {}]
  %s9 = inlined_call_operand.vmem [shape: f32[4], index: 9, kind: input, shape index: {}]
  %s10 = inlined_call_operand.vmem [shape: f32[2,32,128], index: 10, kind: output, shape index: {}]
  %s11 = sld [smem:[#allocation0]]
  $region81: #{upconv_block_forward.1} parent=0
    _
  %s13 = ssub.s32 1, %s11
  %s14 = scalar_select 0, %s13, %s11
  $region1: #{upconv_block_forward.1} parent=0
    #allocation4 [shape = 'u8[512]{0}', space=smem, size = 0x200, scoped, tag = 'input window, operand 8, single buffered']
    #allocation5 [shape = 's32[2]{0}', space=sflag, size = 0x8, scoped, tag = 'scoped memory for upconv_block_forward.1']
    #allocation6 [shape = 'u8[512]{0}', space=smem, size = 0x200, scoped, tag = 'input window, operand 9, single buffered']
    #allocation7 [shape = 's32[1]{0}', space=sflag, size = 0x4, scoped, tag = 'scoped memory for upconv_block_forward.1']
    %15 = vsyncpa [#allocation5], 0
    %16 = vsyncpa [#allocation7], 0
    loop: start=0, step=1, limit=4
    $region2: #{upconv_block_forward.1} parent=1 // loop_pre_header
      _
    $region3: #{upconv_block_forward.1} parent=1 // loop_header
      %s18 = sphi 0, %s22
      %p19 = scmp.ge.s32.totalorder %s18, 4
      %s28 = sphi 0, %s30
      %s31 = sphi 0, %s28
      %s32 = sphi 0, %s31
      %s48 = sphi 0, %s32
      %s54 = sphi 0, %s56
      %s57 = sphi 0, %s54
      %s58 = sphi 0, %s57
      %s74 = sphi 0, %s58
      %s78 = sphi 0, %s78
      %s80 = sphi 0, %s78
      %s81 = sphi 0, %s80
      %s95 = sphi 0, %s81
      %s99 = sphi 0, %s99
      %s101 = sphi 0, %s99
      %s102 = sphi 0, %s101
      %s116 = sphi 0, %s102
      %s120 = sphi 0, %s120
      %s122 = sphi 0, %s120
      %s123 = sphi 0, %s122
      %s137 = sphi 0, %s123
      %s141 = sphi 0, %s141
      %s143 = sphi 0, %s141
      %s144 = sphi 0, %s143
      %s158 = sphi 0, %s144
      %s162 = sphi 0, %s162
      %s164 = sphi 0, %s162
      %s165 = sphi 0, %s164
      %s179 = sphi 0, %s165
      %s183 = sphi 0, %s183
      %s185 = sphi 0, %s183
      %s186 = sphi 0, %s185
      %s200 = sphi 0, %s186
      %s204 = sphi 0, %s204
      %s206 = sphi 0, %s204
      %s207 = sphi 0, %s206
      %s221 = sphi 0, %s207
      %s225 = sphi 0, %s225
      %s227 = sphi 0, %s225
      %s228 = sphi 0, %s227
      %s242 = sphi 0, %s228
      %s248 = sphi 0, %s250
      %s251 = sphi 0, %s248
      %s252 = sphi 0, %s251
      %s268 = sphi 0, %s252
    $region4: #{upconv_block_forward.1} parent=1 // loop_header_branch
      %21 = sbr.rel (%p19) target = $region8
    $region5: #{upconv_block_forward.1} parent=1 // loop_body
      %s23 = ssub.s32 %s18, 1
      %s24 = ssub.s32 %s18, 2
      %s25 = sadd.s32 %s18, 1
      %s26 = ssub.s32 %s18, %s25
      %p27 = scmp.eq.s32.totalorder %s26, 0
      %s29 = sadd.s32 %s28, 1
      %s30 = scalar_select %p27, %s28, %s29
      %p33 = pneg %p27
      %p34 = scmp.eq.s32.totalorder %s18, 1
      %p35 = por %p33, %p34
      %p36 = scmp.ne.s32.totalorder %s28, %s31
      %p37 = scmp.eq.s32.totalorder %s18, 0
      %p38 = por %p36, %p37
      %p39 = scmp.ne.s32.totalorder %s28, %s31
      %p40 = scmp.eq.s32.totalorder %s23, 1
      %p41 = por %p39, %p40
      %p42 = scmp.ne.s32.totalorder %s31, %s32
      %p43 = scmp.eq.s32.totalorder %s23, 0
      %p44 = por %p42, %p43
      %p45 = scmp.ne.s32.totalorder %s31, %s32
      %p46 = scmp.eq.s32.totalorder %s24, 1
      %p47 = por %p45, %p46
      %p49 = scmp.ne.s32.totalorder %s32, %s48
      %p50 = scmp.eq.s32.totalorder %s24, 0
      %p51 = por %p49, %p50
      %s52 = ssub.s32 %s18, %s25
      %p53 = scmp.eq.s32.totalorder %s52, 0
      %s55 = sadd.s32 %s54, 1
      %s56 = scalar_select %p53, %s54, %s55
      %p59 = pneg %p53
      %p60 = scmp.eq.s32.totalorder %s18, 1
      %p61 = por %p59, %p60
      %p62 = scmp.ne.s32.totalorder %s54, %s57
      %p63 = scmp.eq.s32.totalorder %s18, 0
      %p64 = por %p62, %p63
      %p65 = scmp.ne.s32.totalorder %s54, %s57
      %p66 = scmp.eq.s32.totalorder %s23, 1
      %p67 = por %p65, %p66
      %p68 = scmp.ne.s32.totalorder %s57, %s58
      %p69 = scmp.eq.s32.totalorder %s23, 0
      %p70 = por %p68, %p69
      %p71 = scmp.ne.s32.totalorder %s57, %s58
      %p72 = scmp.eq.s32.totalorder %s24, 1
      %p73 = por %p71, %p72
      %p75 = scmp.ne.s32.totalorder %s58, %s74
      %p76 = scmp.eq.s32.totalorder %s24, 0
      %p77 = por %p75, %p76
      %s79 = sadd.s32 %s78, 1
      %p82 = scmp.eq.s32.totalorder %s18, 1
      %p83 = scmp.ne.s32.totalorder %s78, %s80
      %p84 = scmp.eq.s32.totalorder %s18, 0
      %p85 = por %p83, %p84
      %p86 = scmp.ne.s32.totalorder %s78, %s80
      %p87 = scmp.eq.s32.totalorder %s23, 1
      %p88 = por %p86, %p87
      %p89 = scmp.ne.s32.totalorder %s80, %s81
      %p90 = scmp.eq.s32.totalorder %s23, 0
      %p91 = por %p89, %p90
      %p92 = scmp.ne.s32.totalorder %s80, %s81
      %p93 = scmp.eq.s32.totalorder %s24, 1
      %p94 = por %p92, %p93
      %p96 = scmp.ne.s32.totalorder %s81, %s95
      %p97 = scmp.eq.s32.totalorder %s24, 0
      %p98 = por %p96, %p97
      %s100 = sadd.s32 %s99, 1
      %p103 = scmp.eq.s32.totalorder %s18, 1
      %p104 = scmp.ne.s32.totalorder %s99, %s101
      %p105 = scmp.eq.s32.totalorder %s18, 0
      %p106 = por %p104, %p105
      %p107 = scmp.ne.s32.totalorder %s99, %s101
      %p108 = scmp.eq.s32.totalorder %s23, 1
      %p109 = por %p107, %p108
      %p110 = scmp.ne.s32.totalorder %s101, %s102
      %p111 = scmp.eq.s32.totalorder %s23, 0
      %p112 = por %p110, %p111
      %p113 = scmp.ne.s32.totalorder %s101, %s102
      %p114 = scmp.eq.s32.totalorder %s24, 1
      %p115 = por %p113, %p114
      %p117 = scmp.ne.s32.totalorder %s102, %s116
      %p118 = scmp.eq.s32.totalorder %s24, 0
      %p119 = por %p117, %p118
      %s121 = sadd.s32 %s120, 1
      %p124 = scmp.eq.s32.totalorder %s18, 1
      %p125 = scmp.ne.s32.totalorder %s120, %s122
      %p126 = scmp.eq.s32.totalorder %s18, 0
      %p127 = por %p125, %p126
      %p128 = scmp.ne.s32.totalorder %s120, %s122
      %p129 = scmp.eq.s32.totalorder %s23, 1
      %p130 = por %p128, %p129
      %p131 = scmp.ne.s32.totalorder %s122, %s123
      %p132 = scmp.eq.s32.totalorder %s23, 0
      %p133 = por %p131, %p132
      %p134 = scmp.ne.s32.totalorder %s122, %s123
      %p135 = scmp.eq.s32.totalorder %s24, 1
      %p136 = por %p134, %p135
      %p138 = scmp.ne.s32.totalorder %s123, %s137
      %p139 = scmp.eq.s32.totalorder %s24, 0
      %p140 = por %p138, %p139
      %s142 = sadd.s32 %s141, 1
      %p145 = scmp.eq.s32.totalorder %s18, 1
      %p146 = scmp.ne.s32.totalorder %s141, %s143
      %p147 = scmp.eq.s32.totalorder %s18, 0
      %p148 = por %p146, %p147
      %p149 = scmp.ne.s32.totalorder %s141, %s143
      %p150 = scmp.eq.s32.totalorder %s23, 1
      %p151 = por %p149, %p150
      %p152 = scmp.ne.s32.totalorder %s143, %s144
      %p153 = scmp.eq.s32.totalorder %s23, 0
      %p154 = por %p152, %p153
      %p155 = scmp.ne.s32.totalorder %s143, %s144
      %p156 = scmp.eq.s32.totalorder %s24, 1
      %p157 = por %p155, %p156
      %p159 = scmp.ne.s32.totalorder %s144, %s158
      %p160 = scmp.eq.s32.totalorder %s24, 0
      %p161 = por %p159, %p160
      %s163 = sadd.s32 %s162, 1
      %p166 = scmp.eq.s32.totalorder %s18, 1
      %p167 = scmp.ne.s32.totalorder %s162, %s164
      %p168 = scmp.eq.s32.totalorder %s18, 0
      %p169 = por %p167, %p168
      %p170 = scmp.ne.s32.totalorder %s162, %s164
      %p171 = scmp.eq.s32.totalorder %s23, 1
      %p172 = por %p170, %p171
      %p173 = scmp.ne.s32.totalorder %s164, %s165
      %p174 = scmp.eq.s32.totalorder %s23, 0
      %p175 = por %p173, %p174
      %p176 = scmp.ne.s32.totalorder %s164, %s165
      %p177 = scmp.eq.s32.totalorder %s24, 1
      %p178 = por %p176, %p177
      %p180 = scmp.ne.s32.totalorder %s165, %s179
      %p181 = scmp.eq.s32.totalorder %s24, 0
      %p182 = por %p180, %p181
      %s184 = sadd.s32 %s183, 1
      %p187 = scmp.eq.s32.totalorder %s18, 1
      %p188 = scmp.ne.s32.totalorder %s183, %s185
      %p189 = scmp.eq.s32.totalorder %s18, 0
      %p190 = por %p188, %p189
      %p191 = scmp.ne.s32.totalorder %s183, %s185
      %p192 = scmp.eq.s32.totalorder %s23, 1
      %p193 = por %p191, %p192
      %p194 = scmp.ne.s32.totalorder %s185, %s186
      %p195 = scmp.eq.s32.totalorder %s23, 0
      %p196 = por %p194, %p195
      %p197 = scmp.ne.s32.totalorder %s185, %s186
      %p198 = scmp.eq.s32.totalorder %s24, 1
      %p199 = por %p197, %p198
      %p201 = scmp.ne.s32.totalorder %s186, %s200
      %p202 = scmp.eq.s32.totalorder %s24, 0
      %p203 = por %p201, %p202
      %s205 = sadd.s32 %s204, 1
      %p208 = scmp.eq.s32.totalorder %s18, 1
      %p209 = scmp.ne.s32.totalorder %s204, %s206
      %p210 = scmp.eq.s32.totalorder %s18, 0
      %p211 = por %p209, %p210
      %p212 = scmp.ne.s32.totalorder %s204, %s206
      %p213 = scmp.eq.s32.totalorder %s23, 1
      %p214 = por %p212, %p213
      %p215 = scmp.ne.s32.totalorder %s206, %s207
      %p216 = scmp.eq.s32.totalorder %s23, 0
      %p217 = por %p215, %p216
      %p218 = scmp.ne.s32.totalorder %s206, %s207
      %p219 = scmp.eq.s32.totalorder %s24, 1
      %p220 = por %p218, %p219
      %p222 = scmp.ne.s32.totalorder %s207, %s221
      %p223 = scmp.eq.s32.totalorder %s24, 0
      %p224 = por %p222, %p223
      %s226 = sadd.s32 %s225, 1
      %p229 = scmp.eq.s32.totalorder %s18, 1
      %p230 = scmp.ne.s32.totalorder %s225, %s227
      %p231 = scmp.eq.s32.totalorder %s18, 0
      %p232 = por %p230, %p231
      %p233 = scmp.ne.s32.totalorder %s225, %s227
      %p234 = scmp.eq.s32.totalorder %s23, 1
      %p235 = por %p233, %p234
      %p236 = scmp.ne.s32.totalorder %s227, %s228
      %p237 = scmp.eq.s32.totalorder %s23, 0
      %p238 = por %p236, %p237
      %p239 = scmp.ne.s32.totalorder %s227, %s228
      %p240 = scmp.eq.s32.totalorder %s24, 1
      %p241 = por %p239, %p240
      %p243 = scmp.ne.s32.totalorder %s228, %s242
      %p244 = scmp.eq.s32.totalorder %s24, 0
      %p245 = por %p243, %p244
      %s246 = ssub.s32 %s18, %s25
      %p247 = scmp.eq.s32.totalorder %s246, 0
      %s249 = sadd.s32 %s248, 1
      %s250 = scalar_select %p247, %s248, %s249
      %p253 = pneg %p247
      %p254 = scmp.eq.s32.totalorder %s18, 1
      %p255 = por %p253, %p254
      %p256 = scmp.ne.s32.totalorder %s248, %s251
      %p257 = scmp.eq.s32.totalorder %s18, 0
      %p258 = por %p256, %p257
      %p259 = scmp.ne.s32.totalorder %s248, %s251
      %p260 = scmp.eq.s32.totalorder %s23, 1
      %p261 = por %p259, %p260
      %p262 = scmp.ne.s32.totalorder %s251, %s252
      %p263 = scmp.eq.s32.totalorder %s23, 0
      %p264 = por %p262, %p263
      %p265 = scmp.ne.s32.totalorder %s251, %s252
      %p266 = scmp.eq.s32.totalorder %s24, 1
      %p267 = por %p265, %p266
      %p269 = scmp.ne.s32.totalorder %s252, %s268
      %p270 = scmp.eq.s32.totalorder %s24, 0
      %p271 = por %p269, %p270
      %p272 = scmp.le.s32.totalorder 1, %s18
      %p273 = scmp.lt.s32.totalorder %s18, 3
      %p274 = pnand %p272, %p273
      %p275 = pneg %p274
      // Predicated region
      $region9: #{upconv_block_forward.1} parent=5 // pred_check
        _
      $region10: #{upconv_block_forward.1} parent=5 // pred_check_branch
        %277 = sbr.rel (%p274) target = $region12
      $region11: #{upconv_block_forward.1} parent=5 // pred_region
        %s278 = ssub.s32 %s18, 1
        // Predicated region
        $region13: #{upconv_block_forward.1} parent=11 // pred_check
          %p279 = pneg %p91
        $region14: #{upconv_block_forward.1} parent=11 // pred_check_branch
          %281 = sbr.rel (%p279) target = $region16
        $region15: #{upconv_block_forward.1} parent=11 // pred_region
          _
        $region16: #{upconv_block_forward.1} parent=11 // pred_fallthru
          _
        // Predicated region
        $region17: #{upconv_block_forward.1} parent=11 // pred_check
          %p282 = pneg %p112
        $region18: #{upconv_block_forward.1} parent=11 // pred_check_branch
          %284 = sbr.rel (%p282) target = $region20
        $region19: #{upconv_block_forward.1} parent=11 // pred_region
          _
        $region20: #{upconv_block_forward.1} parent=11 // pred_fallthru
          _
        // Predicated region
        $region21: #{upconv_block_forward.1} parent=11 // pred_check
          %p285 = pneg %p133
        $region22: #{upconv_block_forward.1} parent=11 // pred_check_branch
          %287 = sbr.rel (%p285) target = $region24
        $region23: #{upconv_block_forward.1} parent=11 // pred_region
          _
        $region24: #{upconv_block_forward.1} parent=11 // pred_fallthru
          _
        // Predicated region
        $region25: #{upconv_block_forward.1} parent=11 // pred_check
          %p288 = pneg %p154
        $region26: #{upconv_block_forward.1} parent=11 // pred_check_branch
          %290 = sbr.rel (%p288) target = $region28
        $region27: #{upconv_block_forward.1} parent=11 // pred_region
          _
        $region28: #{upconv_block_forward.1} parent=11 // pred_fallthru
          _
        // Predicated region
        $region29: #{upconv_block_forward.1} parent=11 // pred_check
          %p291 = pneg %p175
        $region30: #{upconv_block_forward.1} parent=11 // pred_check_branch
          %293 = sbr.rel (%p291) target = $region32
        $region31: #{upconv_block_forward.1} parent=11 // pred_region
          _
        $region32: #{upconv_block_forward.1} parent=11 // pred_fallthru
          _
        // Predicated region
        $region33: #{upconv_block_forward.1} parent=11 // pred_check
          %p294 = pneg %p196
        $region34: #{upconv_block_forward.1} parent=11 // pred_check_branch
          %296 = sbr.rel (%p294) target = $region36
        $region35: #{upconv_block_forward.1} parent=11 // pred_region
          _
        $region36: #{upconv_block_forward.1} parent=11 // pred_fallthru
          _
        // Predicated region
        $region37: #{upconv_block_forward.1} parent=11 // pred_check
          %p297 = pneg %p217
        $region38: #{upconv_block_forward.1} parent=11 // pred_check_branch
          %299 = sbr.rel (%p297) target = $region40
        $region39: #{upconv_block_forward.1} parent=11 // pred_region
          %301 = vsyncadd [#allocation5], 0
          %s303 = sshll.u32 %s8, 4
          %s304 = int_to_ptr.vmem [resolvable:$true] %s303
          %306 = dma.vmem_to_smem %s304, 16, [#allocation4], [#allocation5]
        $region40: #{upconv_block_forward.1} parent=11 // pred_fallthru
          _
        // Predicated region
        $region41: #{upconv_block_forward.1} parent=11 // pred_check
          %p307 = pneg %p238
        $region42: #{upconv_block_forward.1} parent=11 // pred_check_branch
          %309 = sbr.rel (%p307) target = $region44
        $region43: #{upconv_block_forward.1} parent=11 // pred_region
          %311 = vsyncadd [#allocation7], 0
          %s313 = sshll.u32 %s9, 4
          %s314 = int_to_ptr.vmem [resolvable:$true] %s313
          %316 = dma.vmem_to_smem %s314, 16, [#allocation6], [#allocation7]
        $region44: #{upconv_block_forward.1} parent=11 // pred_fallthru
          _
      $region12: #{upconv_block_forward.1} parent=5 // pred_fallthru
        _
      %p317 = scmp.lt.s32.totalorder %s18, 2
      // Predicated region
      $region45: #{upconv_block_forward.1} parent=5 // pred_check
        %p318 = pneg %p317
      $region46: #{upconv_block_forward.1} parent=5 // pred_check_branch
        %320 = sbr.rel (%p318) target = $region48
      $region47: #{upconv_block_forward.1} parent=5 // pred_region
        // Predicated region
        $region49: #{upconv_block_forward.1} parent=47 // pred_check
          %p321 = pneg %p38
        $region50: #{upconv_block_forward.1} parent=47 // pred_check_branch
          %323 = sbr.rel (%p321) target = $region52
        $region51: #{upconv_block_forward.1} parent=47 // pred_region
          %p324 = scmp.lt.s32.totalorder %s18, 1
          %s325 = scalar_select %p324, %s18, 1
          %s326 = smul.addr %s325, 16
          %s327 = smul.addr %s326, 8
          %s328 = scalar_lea.vmem %s0, %s327
        $region52: #{upconv_block_forward.1} parent=47 // pred_fallthru
          _
        // Predicated region
        $region53: #{upconv_block_forward.1} parent=47 // pred_check
          %p329 = pneg %p64
        $region54: #{upconv_block_forward.1} parent=47 // pred_check_branch
          %331 = sbr.rel (%p329) target = $region56
        $region55: #{upconv_block_forward.1} parent=47 // pred_region
          %p332 = scmp.lt.s32.totalorder %s18, 1
          %s333 = scalar_select %p332, %s18, 1
          %s334 = smul.addr %s333, 16
          %s335 = smul.addr %s334, 8
          %s336 = scalar_lea.vmem %s1, %s335
        $region56: #{upconv_block_forward.1} parent=47 // pred_fallthru
          _
      $region48: #{upconv_block_forward.1} parent=5 // pred_fallthru
        _
      %p337 = scmp.le.s32.totalorder 1, %s18
      %p338 = scmp.lt.s32.totalorder %s18, 3
      %p339 = pnand %p337, %p338
      %p340 = pneg %p339
      // Predicated region
      $region57: #{upconv_block_forward.1} parent=5 // pred_check
        _
      $region58: #{upconv_block_forward.1} parent=5 // pred_check_branch
        %342 = sbr.rel (%p339) target = $region60
      $region59: #{upconv_block_forward.1} parent=5 // pred_region
        %s343 = ssub.s32 %s18, 1
        // Predicated region
        $region61: #{upconv_block_forward.1} parent=59 // pred_check
          %p344 = pneg %p217
        $region62: #{upconv_block_forward.1} parent=59 // pred_check_branch
          %346 = sbr.rel (%p344) target = $region64
        $region63: #{upconv_block_forward.1} parent=59 // pred_region
          %348 = dma.done [#allocation5], 16
        $region64: #{upconv_block_forward.1} parent=59 // pred_fallthru
          _
        // Predicated region
        $region65: #{upconv_block_forward.1} parent=59 // pred_check
          %p349 = pneg %p238
        $region66: #{upconv_block_forward.1} parent=59 // pred_check_branch
          %351 = sbr.rel (%p349) target = $region68
        $region67: #{upconv_block_forward.1} parent=59 // pred_region
          %353 = dma.done [#allocation7], 16
        $region68: #{upconv_block_forward.1} parent=59 // pred_fallthru
          _
        %354 = sfence
        %p355 = scmp.lt.s32.totalorder %s23, 1
        %s356 = scalar_select %p355, %s23, 1
        %s357 = smul.addr %s356, 16
        %s358 = smul.addr %s357, 8
        %s359 = scalar_lea.vmem %s0, %s358
        %p360 = pneg %p44
        %p361 = pneg %p41
        %p362 = scmp.lt.s32.totalorder %s23, 1
        %s363 = scalar_select %p362, %s23, 1
        %s364 = smul.addr %s363, 16
        %s365 = smul.addr %s364, 8
        %s366 = scalar_lea.vmem %s1, %s365
        %p367 = pneg %p70
        %p368 = pneg %p67
        %p369 = pneg %p91
        %p370 = pneg %p88
        %p371 = pneg %p112
        %p372 = pneg %p109
        %p373 = pneg %p133
        %p374 = pneg %p130
        %p375 = pneg %p154
        %p376 = pneg %p151
        %p377 = pneg %p175
        %p378 = pneg %p172
        %p379 = pneg %p196
        %p380 = pneg %p193
        %p381 = pneg %p217
        %p382 = pneg %p214
        %p383 = pneg %p238
        %p384 = pneg %p235
        %p385 = pneg %p264
        %p386 = pneg %p261
        %p387 = scmp.lt.s32.totalorder %s23, 1
        %s388 = scalar_select %p387, %s23, 1
        %s389 = smul.addr %s388, 4
        %s390 = smul.addr %s389, 8
        %s391 = scalar_lea.vmem %s10, %s390
        %p392 = scmp.lt.s32.totalorder %s23, 1
        %s393 = scalar_select %p392, %s23, 1
        %s394 = smul.addr %s393, 16
        %s395 = smul.addr %s394, 8
        %s396 = scalar_lea.vmem %s0, %s395
        %p397 = scmp.lt.s32.totalorder %s23, 1
        %s398 = scalar_select %p397, %s23, 1
        %s399 = smul.addr %s398, 16
        %s400 = smul.addr %s399, 8
        %s401 = scalar_lea.vmem %s1, %s400
        %p402 = scmp.lt.s32.totalorder %s23, 1
        %s403 = scalar_select %p402, %s23, 1
        %s404 = smul.addr %s403, 4
        %s405 = smul.addr %s404, 8
        %s406 = scalar_lea.vmem %s10, %s405
        %vm407 = vcmask 277504
        %408 = vst.msk [vmem:[#allocation2] sm:$0xff] %vm407, 0.0
        %409 = vst.msk [vmem:[#allocation2 + $0x8] sm:$0xff] %vm407, 0.0
        %410 = vst.msk [vmem:[#allocation2 + $0x10] sm:$0xff] %vm407, 0.0
        %411 = vst.msk [vmem:[#allocation2 + $0x18] sm:$0xff] %vm407, 0.0
        %vm412 = vcmask 271360
        %413 = vst.msk [vmem:[#allocation2 + $0x20] sm:$0x3] %vm412, 0.0
        %414 = vst.msk [vmem:[#allocation2 + $0x28] sm:$0xff] %vm407, 0.0
        %415 = vst.msk [vmem:[#allocation2 + $0x30] sm:$0xff] %vm407, 0.0
        %416 = vst.msk [vmem:[#allocation2 + $0x38] sm:$0xff] %vm407, 0.0
        %417 = vst.msk [vmem:[#allocation2 + $0x40] sm:$0xff] %vm407, 0.0
        %418 = vst.msk [vmem:[#allocation2 + $0x48] sm:$0x3] %vm412, 0.0
        %419 = vst.msk [vmem:[#allocation2 + $0x50] sm:$0xff] %vm407, 0.0
        %420 = vst.msk [vmem:[#allocation2 + $0x58] sm:$0xff] %vm407, 0.0
        %421 = vst.msk [vmem:[#allocation2 + $0x60] sm:$0xff] %vm407, 0.0
        %422 = vst.msk [vmem:[#allocation2 + $0x68] sm:$0xff] %vm407, 0.0
        %423 = vst.msk [vmem:[#allocation2 + $0x70] sm:$0x3] %vm412, 0.0
        %424 = vst.msk [vmem:[#allocation2 + $0x78] sm:$0xff] %vm407, 0.0
        %425 = vst.msk [vmem:[#allocation2 + $0x80] sm:$0xff] %vm407, 0.0
        %426 = vst.msk [vmem:[#allocation2 + $0x88] sm:$0xff] %vm407, 0.0
        %427 = vst.msk [vmem:[#allocation2 + $0x90] sm:$0xff] %vm407, 0.0
        %428 = vst.msk [vmem:[#allocation2 + $0x98] sm:$0x3] %vm412, 0.0
        %429 = vst.msk [vmem:[#allocation2 + $0xa0] sm:$0xff] %vm407, 0.0
        %430 = vst.msk [vmem:[#allocation2 + $0xa8] sm:$0xff] %vm407, 0.0
        %431 = vst.msk [vmem:[#allocation2 + $0xb0] sm:$0xff] %vm407, 0.0
        %432 = vst.msk [vmem:[#allocation2 + $0xb8] sm:$0xff] %vm407, 0.0
        %433 = vst.msk [vmem:[#allocation2 + $0xc0] sm:$0x3] %vm412, 0.0
        %434 = vst.msk [vmem:[#allocation2 + $0xc8] sm:$0xff] %vm407, 0.0
        %435 = vst.msk [vmem:[#allocation2 + $0xd0] sm:$0xff] %vm407, 0.0
        %436 = vst.msk [vmem:[#allocation2 + $0xd8] sm:$0xff] %vm407, 0.0
        %437 = vst.msk [vmem:[#allocation2 + $0xe0] sm:$0xff] %vm407, 0.0
        %438 = vst.msk [vmem:[#allocation2 + $0xe8] sm:$0x3] %vm412, 0.0
        %439 = vst.msk [vmem:[#allocation2 + $0xf0] sm:$0xff] %vm407, 0.0
        %440 = vst.msk [vmem:[#allocation2 + $0xf8] sm:$0xff] %vm407, 0.0
        %441 = vst.msk [vmem:[#allocation2 + $0x100] sm:$0xff] %vm407, 0.0
        %442 = vst.msk [vmem:[#allocation2 + $0x108] sm:$0xff] %vm407, 0.0
        %443 = vst.msk [vmem:[#allocation2 + $0x110] sm:$0x3] %vm412, 0.0
        %444 = vst.msk [vmem:[#allocation2 + $0x118] sm:$0xff] %vm407, 0.0
        %445 = vst.msk [vmem:[#allocation2 + $0x120] sm:$0xff] %vm407, 0.0
        %446 = vst.msk [vmem:[#allocation2 + $0x128] sm:$0xff] %vm407, 0.0
        %447 = vst.msk [vmem:[#allocation2 + $0x130] sm:$0xff] %vm407, 0.0
        %448 = vst.msk [vmem:[#allocation2 + $0x138] sm:$0x3] %vm412, 0.0
        %449 = vst.msk [vmem:[#allocation3] sm:$0xff] %vm407, 0.0
        %450 = vst.msk [vmem:[#allocation3 + $0x8] sm:$0xff] %vm407, 0.0
        %451 = vst.msk [vmem:[#allocation3 + $0x10] sm:$0xff] %vm407, 0.0
        %452 = vst.msk [vmem:[#allocation3 + $0x18] sm:$0xff] %vm407, 0.0
        %453 = vst.msk [vmem:[#allocation3 + $0x20] sm:$0x3] %vm412, 0.0
        %454 = vst.msk [vmem:[#allocation3 + $0x28] sm:$0xff] %vm407, 0.0
        %455 = vst.msk [vmem:[#allocation3 + $0x30] sm:$0xff] %vm407, 0.0
        %456 = vst.msk [vmem:[#allocation3 + $0x38] sm:$0xff] %vm407, 0.0
        %457 = vst.msk [vmem:[#allocation3 + $0x40] sm:$0xff] %vm407, 0.0
        %458 = vst.msk [vmem:[#allocation3 + $0x48] sm:$0x3] %vm412, 0.0
        %459 = vst.msk [vmem:[#allocation3 + $0x50] sm:$0xff] %vm407, 0.0
        %460 = vst.msk [vmem:[#allocation3 + $0x58] sm:$0xff] %vm407, 0.0
        %461 = vst.msk [vmem:[#allocation3 + $0x60] sm:$0xff] %vm407, 0.0
        %462 = vst.msk [vmem:[#allocation3 + $0x68] sm:$0xff] %vm407, 0.0
        %463 = vst.msk [vmem:[#allocation3 + $0x70] sm:$0x3] %vm412, 0.0
        %464 = vst.msk [vmem:[#allocation3 + $0x78] sm:$0xff] %vm407, 0.0
        %465 = vst.msk [vmem:[#allocation3 + $0x80] sm:$0xff] %vm407, 0.0
        %466 = vst.msk [vmem:[#allocation3 + $0x88] sm:$0xff] %vm407, 0.0
        %467 = vst.msk [vmem:[#allocation3 + $0x90] sm:$0xff] %vm407, 0.0
        %468 = vst.msk [vmem:[#allocation3 + $0x98] sm:$0x3] %vm412, 0.0
        %v469 = vld [vmem:[%s2] sm:$0xff]
        %v470 = vld [vmem:[%s2 + $0x8] sm:$0xff]
        %v471 = vld [vmem:[%s2 + $0x10] sm:$0xff]
        %v472 = vld [vmem:[%s2 + $0x18] sm:$0xff]
        %v473 = vld [vmem:[%s2 + $0x20] sm:$0x3]
        %v474 = vld [vmem:[%s3] sm:$0xff]
        %v475 = vld [vmem:[%s3 + $0x8] sm:$0xff]
        %s476 = sld [smem:[#allocation6]]
        %v477 = vstv %s476
        %v478 = vadd.f32 %v477, 0.0
        %s479 = sld [smem:[#allocation4]]
        %v480 = vld [vmem:[%s396] sm:$0xff]
        %v481 = vld [vmem:[%s396 + $0x8] sm:$0xff]
        %v482 = vstv %s479
        %v483 = vmul.f32 %v482, %v480
        %v484 = vmul.f32 %v482, %v481
        %v485 = vadd.f32 %v478, %v483
        %v486 = vadd.f32 %v478, %v484
        %s487 = sld [smem:[#allocation4 + $0x1]]
        %s488 = scalar_lea.vmem %s396, 16
        %v489 = vld [vmem:[%s488] sm:$0xff]
        %v490 = vld [vmem:[%s488 + $0x8] sm:$0xff]
        %v491 = vstv %s487
        %v492 = vmul.f32 %v491, %v489
        %v493 = vmul.f32 %v491, %v490
        %v494 = vadd.f32 %v485, %v492
        %v495 = vadd.f32 %v486, %v493
        %s496 = sld [smem:[#allocation4 + $0x2]]
        %s497 = scalar_lea.vmem %s396, 32
        %v498 = vld [vmem:[%s497] sm:$0xff]
        %v499 = vld [vmem:[%s497 + $0x8] sm:$0xff]
        %v500 = vstv %s496
        %v501 = vmul.f32 %v500, %v498
        %v502 = vmul.f32 %v500, %v499
        %v503 = vadd.f32 %v494, %v501
        %v504 = vadd.f32 %v495, %v502
        %s505 = sld [smem:[#allocation4 + $0x3]]
        %s506 = scalar_lea.vmem %s396, 48
        %v507 = vld [vmem:[%s506] sm:$0xff]
        %v508 = vld [vmem:[%s506 + $0x8] sm:$0xff]
        %v509 = vstv %s505
        %v510 = vmul.f32 %v509, %v507
        %v511 = vmul.f32 %v509, %v508
        %v512 = vadd.f32 %v503, %v510
        %v513 = vadd.f32 %v504, %v511
        %s514 = sld [smem:[#allocation4 + $0x4]]
        %s515 = scalar_lea.vmem %s396, 64
        %v516 = vld [vmem:[%s515] sm:$0xff]
        %v517 = vld [vmem:[%s515 + $0x8] sm:$0xff]
        %v518 = vstv %s514
        %v519 = vmul.f32 %v518, %v516
        %v520 = vmul.f32 %v518, %v517
        %v521 = vadd.f32 %v512, %v519
        %v522 = vadd.f32 %v513, %v520
        %s523 = sld [smem:[#allocation4 + $0x5]]
        %s524 = scalar_lea.vmem %s396, 80
        %v525 = vld [vmem:[%s524] sm:$0xff]
        %v526 = vld [vmem:[%s524 + $0x8] sm:$0xff]
        %v527 = vstv %s523
        %v528 = vmul.f32 %v527, %v525
        %v529 = vmul.f32 %v527, %v526
        %v530 = vadd.f32 %v521, %v528
        %v531 = vadd.f32 %v522, %v529
        %s532 = sld [smem:[#allocation4 + $0x6]]
        %s533 = scalar_lea.vmem %s396, 96
        %v534 = vld [vmem:[%s533] sm:$0xff]
        %v535 = vld [vmem:[%s533 + $0x8] sm:$0xff]
        %v536 = vstv %s532
        %v537 = vmul.f32 %v536, %v534
        %v538 = vmul.f32 %v536, %v535
        %v539 = vadd.f32 %v530, %v537
        %v540 = vadd.f32 %v531, %v538
        %s541 = sld [smem:[#allocation4 + $0x7]]
        %s542 = scalar_lea.vmem %s396, 112
        %v543 = vld [vmem:[%s542] sm:$0xff]
        %v544 = vld [vmem:[%s542 + $0x8] sm:$0xff]
        %v545 = vstv %s541
        %v546 = vmul.f32 %v545, %v543
        %v547 = vmul.f32 %v545, %v544
        %v548 = vadd.f32 %v539, %v546
        %v549 = vadd.f32 %v540, %v547
        %vm550 = vcmask 130048
        %v552 = vsel %vm550, %v548, 0
        %v555 = vsel %vm550, %v549, 0
        %557 = vmatpush.msra.mxu0 0.0
        %558 = vmatpush.msra.mxu0 0.0
        %559 = vmatpush.msra.mxu0 0.0
        %560 = vmatpush.msra.mxu0 0.0
        %561 = vmatpush.msra.mxu0 0.0
        %562 = vmatpush.msra.mxu0 0.0
        %563 = vmatpush.msra.mxu0 0.0
        %564 = vmatpush.msra.mxu0 0.0
        %565 = vmatpush.msra.mxu0 0.0
        %566 = vmatpush.msra.mxu0 0.0
        %567 = vmatpush.msra.mxu0 0.0
        %568 = vmatpush.msra.mxu0 0.0
        %569 = vmatpush.msra.mxu0 0.0
        %570 = vmatpush.msra.mxu0 0.0
        %571 = vmatpush.msra.mxu0 %v475
        %572 = vmatpush.msra.mxu0 %v474
        %573 = vmatmul.f32.gmra.mxu0 %v552
        %v574 = vpop.f32.mrf.mxu0
        %v575 = vadd.f32 0.0, %v574
        %576 = vmatmul.f32.gmra.mxu0 %v555
        %v577 = vpop.f32.mrf.mxu0
        %v578 = vadd.f32 0.0, %v577
        %579 = vdwg.mxu0
        %v581 = vsel %vm550, %v469, 0
        %v584 = vsel %vm550, %v470, 0
        %v587 = vsel %vm550, %v471, 0
        %v590 = vsel %vm550, %v472, 0
        %v593 = vsel %vm550, %v473, 0
        %595 = vmatpush.msra.mxu0 0.0
        %596 = vmatpush.msra.mxu0 0.0
        %597 = vmatpush.msra.mxu0 0.0
        %598 = vmatpush.msra.mxu0 0.0
        %599 = vmatpush.msra.mxu0 0.0
        %600 = vmatpush.msra.mxu0 0.0
        %601 = vmatpush.msra.mxu0 0.0
        %602 = vmatpush.msra.mxu0 0.0
        %603 = vmatpush.msra.mxu0 0.0
        %604 = vmatpush.msra.mxu0 0.0
        %605 = vmatpush.msra.mxu0 0.0
        %606 = vmatpush.msra.mxu0 0.0
        %607 = vmatpush.msra.mxu0 0.0
        %608 = vmatpush.msra.mxu0 0.0
        %609 = vmatpush.msra.mxu0 %v578
        %610 = vmatpush.msra.mxu0 %v575
        %611 = vmatmul.f32.gmra.mxu0 %v581
        %v612 = vpop.f32.mrf.mxu0
        %v613 = vadd.f32 0.0, %v612
        %614 = vmatmul.f32.gmra.mxu0 %v584
        %v615 = vpop.f32.mrf.mxu0
        %v616 = vadd.f32 0.0, %v615
        %617 = vmatmul.f32.gmra.mxu0 %v587
        %v618 = vpop.f32.mrf.mxu0
        %v619 = vadd.f32 0.0, %v618
        %620 = vmatmul.f32.gmra.mxu0 %v590
        %v621 = vpop.f32.mrf.mxu0
        %v622 = vadd.f32 0.0, %v621
        %623 = vmatmul.f32.gmra.mxu0 %v593
        %v624 = vpop.f32.mrf.mxu0
        %v625 = vadd.f32 0.0, %v624
        %626 = vdwg.mxu0
        %627 = vst.msk [vmem:[#allocation2] sm:$0xff] %vm407, %v613
        %628 = vst.msk [vmem:[#allocation2 + $0x8] sm:$0xff] %vm407, %v616
        %629 = vst.msk [vmem:[#allocation2 + $0x10] sm:$0xff] %vm407, %v619
        %630 = vst.msk [vmem:[#allocation2 + $0x18] sm:$0xff] %vm407, %v622
        %631 = vst.msk [vmem:[#allocation2 + $0x20] sm:$0x3] %vm412, %v625
        %s632 = sld [smem:[#allocation6 + $0x1]]
        %v633 = vstv %s632
        %v634 = vadd.f32 %v633, 0.0
        %s635 = sld [smem:[#allocation4 + $0x8]]
        %v636 = vld [vmem:[%s396] sm:$0xff]
        %v637 = vld [vmem:[%s396 + $0x8] sm:$0xff]
        %v638 = vstv %s635
        %v639 = vmul.f32 %v638, %v636
        %v640 = vmul.f32 %v638, %v637
        %v641 = vadd.f32 %v634, %v639
        %v642 = vadd.f32 %v634, %v640
        %s643 = sld [smem:[#allocation4 + $0x9]]
        %v644 = vld [vmem:[%s488] sm:$0xff]
        %v645 = vld [vmem:[%s488 + $0x8] sm:$0xff]
        %v646 = vstv %s643
        %v647 = vmul.f32 %v646, %v644
        %v648 = vmul.f32 %v646, %v645
        %v649 = vadd.f32 %v641, %v647
        %v650 = vadd.f32 %v642, %v648
        %s651 = sld [smem:[#allocation4 + $0xa]]
        %v652 = vld [vmem:[%s497] sm:$0xff]
        %v653 = vld [vmem:[%s497 + $0x8] sm:$0xff]
        %v654 = vstv %s651
        %v655 = vmul.f32 %v654, %v652
        %v656 = vmul.f32 %v654, %v653
        %v657 = vadd.f32 %v649, %v655
        %v658 = vadd.f32 %v650, %v656
        %s659 = sld [smem:[#allocation4 + $0xb]]
        %v660 = vld [vmem:[%s506] sm:$0xff]
        %v661 = vld [vmem:[%s506 + $0x8] sm:$0xff]
        %v662 = vstv %s659
        %v663 = vmul.f32 %v662, %v660
        %v664 = vmul.f32 %v662, %v661
        %v665 = vadd.f32 %v657, %v663
        %v666 = vadd.f32 %v658, %v664
        %s667 = sld [smem:[#allocation4 + $0xc]]
        %v668 = vld [vmem:[%s515] sm:$0xff]
        %v669 = vld [vmem:[%s515 + $0x8] sm:$0xff]
        %v670 = vstv %s667
        %v671 = vmul.f32 %v670, %v668
        %v672 = vmul.f32 %v670, %v669
        %v673 = vadd.f32 %v665, %v671
        %v674 = vadd.f32 %v666, %v672
        %s675 = sld [smem:[#allocation4 + $0xd]]
        %v676 = vld [vmem:[%s524] sm:$0xff]
        %v677 = vld [vmem:[%s524 + $0x8] sm:$0xff]
        %v678 = vstv %s675
        %v679 = vmul.f32 %v678, %v676
        %v680 = vmul.f32 %v678, %v677
        %v681 = vadd.f32 %v673, %v679
        %v682 = vadd.f32 %v674, %v680
        %s683 = sld [smem:[#allocation4 + $0xe]]
        %v684 = vld [vmem:[%s533] sm:$0xff]
        %v685 = vld [vmem:[%s533 + $0x8] sm:$0xff]
        %v686 = vstv %s683
        %v687 = vmul.f32 %v686, %v684
        %v688 = vmul.f32 %v686, %v685
        %v689 = vadd.f32 %v681, %v687
        %v690 = vadd.f32 %v682, %v688
        %s691 = sld [smem:[#allocation4 + $0xf]]
        %v692 = vld [vmem:[%s542] sm:$0xff]
        %v693 = vld [vmem:[%s542 + $0x8] sm:$0xff]
        %v694 = vstv %s691
        %v695 = vmul.f32 %v694, %v692
        %v696 = vmul.f32 %v694, %v693
        %v697 = vadd.f32 %v689, %v695
        %v698 = vadd.f32 %v690, %v696
        %v700 = vsel %vm550, %v697, 0
        %v703 = vsel %vm550, %v698, 0
        %705 = vmatpush.msra.mxu0 0.0
        %706 = vmatpush.msra.mxu0 0.0
        %707 = vmatpush.msra.mxu0 0.0
        %708 = vmatpush.msra.mxu0 0.0
        %709 = vmatpush.msra.mxu0 0.0
        %710 = vmatpush.msra.mxu0 0.0
        %711 = vmatpush.msra.mxu0 0.0
        %712 = vmatpush.msra.mxu0 0.0
        %713 = vmatpush.msra.mxu0 0.0
        %714 = vmatpush.msra.mxu0 0.0
        %715 = vmatpush.msra.mxu0 0.0
        %716 = vmatpush.msra.mxu0 0.0
        %717 = vmatpush.msra.mxu0 0.0
        %718 = vmatpush.msra.mxu0 0.0
        %719 = vmatpush.msra.mxu0 %v475
        %720 = vmatpush.msra.mxu0 %v474
        %721 = vmatmul.f32.gmra.mxu0 %v700
        %v722 = vpop.f32.mrf.mxu0
        %v723 = vadd.f32 0.0, %v722
        %724 = vmatmul.f32.gmra.mxu0 %v703
        %v725 = vpop.f32.mrf.mxu0
        %v726 = vadd.f32 0.0, %v725
        %727 = vdwg.mxu0
        %728 = vmatpush.msra.mxu0 0.0
        %729 = vmatpush.msra.mxu0 0.0
        %730 = vmatpush.msra.mxu0 0.0
        %731 = vmatpush.msra.mxu0 0.0
        %732 = vmatpush.msra.mxu0 0.0
        %733 = vmatpush.msra.mxu0 0.0
        %734 = vmatpush.msra.mxu0 0.0
        %735 = vmatpush.msra.mxu0 0.0
        %736 = vmatpush.msra.mxu0 0.0
        %737 = vmatpush.msra.mxu0 0.0
        %738 = vmatpush.msra.mxu0 0.0
        %739 = vmatpush.msra.mxu0 0.0
        %740 = vmatpush.msra.mxu0 0.0
        %741 = vmatpush.msra.mxu0 0.0
        %742 = vmatpush.msra.mxu0 %v726
        %743 = vmatpush.msra.mxu0 %v723
        %744 = vmatmul.f32.gmra.mxu0 %v581
        %v745 = vpop.f32.mrf.mxu0
        %v746 = vadd.f32 0.0, %v745
        %747 = vmatmul.f32.gmra.mxu0 %v584
        %v748 = vpop.f32.mrf.mxu0
        %v749 = vadd.f32 0.0, %v748
        %750 = vmatmul.f32.gmra.mxu0 %v587
        %v751 = vpop.f32.mrf.mxu0
        %v752 = vadd.f32 0.0, %v751
        %753 = vmatmul.f32.gmra.mxu0 %v590
        %v754 = vpop.f32.mrf.mxu0
        %v755 = vadd.f32 0.0, %v754
        %756 = vmatmul.f32.gmra.mxu0 %v593
        %v757 = vpop.f32.mrf.mxu0
        %v758 = vadd.f32 0.0, %v757
        %759 = vdwg.mxu0
        %s760 = scalar_lea.vmem [#allocation2], 40
        %761 = vst.msk [vmem:[%s760] sm:$0xff] %vm407, %v746
        %762 = vst.msk [vmem:[%s760 + $0x8] sm:$0xff] %vm407, %v749
        %763 = vst.msk [vmem:[%s760 + $0x10] sm:$0xff] %vm407, %v752
        %764 = vst.msk [vmem:[%s760 + $0x18] sm:$0xff] %vm407, %v755
        %765 = vst.msk [vmem:[%s760 + $0x20] sm:$0x3] %vm412, %v758
        %s766 = sld [smem:[#allocation6 + $0x2]]
        %v767 = vstv %s766
        %v768 = vadd.f32 %v767, 0.0
        %s769 = sld [smem:[#allocation4 + $0x10]]
        %v770 = vld [vmem:[%s396] sm:$0xff]
        %v771 = vld [vmem:[%s396 + $0x8] sm:$0xff]
        %v772 = vstv %s769
        %v773 = vmul.f32 %v772, %v770
        %v774 = vmul.f32 %v772, %v771
        %v775 = vadd.f32 %v768, %v773
        %v776 = vadd.f32 %v768, %v774
        %s777 = sld [smem:[#allocation4 + $0x11]]
        %v778 = vld [vmem:[%s488] sm:$0xff]
        %v779 = vld [vmem:[%s488 + $0x8] sm:$0xff]
        %v780 = vstv %s777
        %v781 = vmul.f32 %v780, %v778
        %v782 = vmul.f32 %v780, %v779
        %v783 = vadd.f32 %v775, %v781
        %v784 = vadd.f32 %v776, %v782
        %s785 = sld [smem:[#allocation4 + $0x12]]
        %v786 = vld [vmem:[%s497] sm:$0xff]
        %v787 = vld [vmem:[%s497 + $0x8] sm:$0xff]
        %v788 = vstv %s785
        %v789 = vmul.f32 %v788, %v786
        %v790 = vmul.f32 %v788, %v787
        %v791 = vadd.f32 %v783, %v789
        %v792 = vadd.f32 %v784, %v790
        %s793 = sld [smem:[#allocation4 + $0x13]]
        %v794 = vld [vmem:[%s506] sm:$0xff]
        %v795 = vld [vmem:[%s506 + $0x8] sm:$0xff]
        %v796 = vstv %s793
        %v797 = vmul.f32 %v796, %v794
        %v798 = vmul.f32 %v796, %v795
        %v799 = vadd.f32 %v791, %v797
        %v800 = vadd.f32 %v792, %v798
        %s801 = sld [smem:[#allocation4 + $0x14]]
        %v802 = vld [vmem:[%s515] sm:$0xff]
        %v803 = vld [vmem:[%s515 + $0x8] sm:$0xff]
        %v804 = vstv %s801
        %v805 = vmul.f32 %v804, %v802
        %v806 = vmul.f32 %v804, %v803
        %v807 = vadd.f32 %v799, %v805
        %v808 = vadd.f32 %v800, %v806
        %s809 = sld [smem:[#allocation4 + $0x15]]
        %v810 = vld [vmem:[%s524] sm:$0xff]
        %v811 = vld [vmem:[%s524 + $0x8] sm:$0xff]
        %v812 = vstv %s809
        %v813 = vmul.f32 %v812, %v810
        %v814 = vmul.f32 %v812, %v811
        %v815 = vadd.f32 %v807, %v813
        %v816 = vadd.f32 %v808, %v814
        %s817 = sld [smem:[#allocation4 + $0x16]]
        %v818 = vld [vmem:[%s533] sm:$0xff]
        %v819 = vld [vmem:[%s533 + $0x8] sm:$0xff]
        %v820 = vstv %s817
        %v821 = vmul.f32 %v820, %v818
        %v822 = vmul.f32 %v820, %v819
        %v823 = vadd.f32 %v815, %v821
        %v824 = vadd.f32 %v816, %v822
        %s825 = sld [smem:[#allocation4 + $0x17]]
        %v826 = vld [vmem:[%s542] sm:$0xff]
        %v827 = vld [vmem:[%s542 + $0x8] sm:$0xff]
        %v828 = vstv %s825
        %v829 = vmul.f32 %v828, %v826
        %v830 = vmul.f32 %v828, %v827
        %v831 = vadd.f32 %v823, %v829
        %v832 = vadd.f32 %v824, %v830
        %v834 = vsel %vm550, %v831, 0
        %v837 = vsel %vm550, %v832, 0
        %839 = vmatpush.msra.mxu0 0.0
        %840 = vmatpush.msra.mxu0 0.0
        %841 = vmatpush.msra.mxu0 0.0
        %842 = vmatpush.msra.mxu0 0.0
        %843 = vmatpush.msra.mxu0 0.0
        %844 = vmatpush.msra.mxu0 0.0
        %845 = vmatpush.msra.mxu0 0.0
        %846 = vmatpush.msra.mxu0 0.0
        %847 = vmatpush.msra.mxu0 0.0
        %848 = vmatpush.msra.mxu0 0.0
        %849 = vmatpush.msra.mxu0 0.0
        %850 = vmatpush.msra.mxu0 0.0
        %851 = vmatpush.msra.mxu0 0.0
        %852 = vmatpush.msra.mxu0 0.0
        %853 = vmatpush.msra.mxu0 %v475
        %854 = vmatpush.msra.mxu0 %v474
        %855 = vmatmul.f32.gmra.mxu0 %v834
        %v856 = vpop.f32.mrf.mxu0
        %v857 = vadd.f32 0.0, %v856
        %858 = vmatmul.f32.gmra.mxu0 %v837
        %v859 = vpop.f32.mrf.mxu0
        %v860 = vadd.f32 0.0, %v859
        %861 = vdwg.mxu0
        %862 = vmatpush.msra.mxu0 0.0
        %863 = vmatpush.msra.mxu0 0.0
        %864 = vmatpush.msra.mxu0 0.0
        %865 = vmatpush.msra.mxu0 0.0
        %866 = vmatpush.msra.mxu0 0.0
        %867 = vmatpush.msra.mxu0 0.0
        %868 = vmatpush.msra.mxu0 0.0
        %869 = vmatpush.msra.mxu0 0.0
        %870 = vmatpush.msra.mxu0 0.0
        %871 = vmatpush.msra.mxu0 0.0
        %872 = vmatpush.msra.mxu0 0.0
        %873 = vmatpush.msra.mxu0 0.0
        %874 = vmatpush.msra.mxu0 0.0
        %875 = vmatpush.msra.mxu0 0.0
        %876 = vmatpush.msra.mxu0 %v860
        %877 = vmatpush.msra.mxu0 %v857
        %878 = vmatmul.f32.gmra.mxu0 %v581
        %v879 = vpop.f32.mrf.mxu0
        %v880 = vadd.f32 0.0, %v879
        %881 = vmatmul.f32.gmra.mxu0 %v584
        %v882 = vpop.f32.mrf.mxu0
        %v883 = vadd.f32 0.0, %v882
        %884 = vmatmul.f32.gmra.mxu0 %v587
        %v885 = vpop.f32.mrf.mxu0
        %v886 = vadd.f32 0.0, %v885
        %887 = vmatmul.f32.gmra.mxu0 %v590
        %v888 = vpop.f32.mrf.mxu0
        %v889 = vadd.f32 0.0, %v888
        %890 = vmatmul.f32.gmra.mxu0 %v593
        %v891 = vpop.f32.mrf.mxu0
        %v892 = vadd.f32 0.0, %v891
        %893 = vdwg.mxu0
        %s894 = scalar_lea.vmem [#allocation2], 80
        %895 = vst.msk [vmem:[%s894] sm:$0xff] %vm407, %v880
        %896 = vst.msk [vmem:[%s894 + $0x8] sm:$0xff] %vm407, %v883
        %897 = vst.msk [vmem:[%s894 + $0x10] sm:$0xff] %vm407, %v886
        %898 = vst.msk [vmem:[%s894 + $0x18] sm:$0xff] %vm407, %v889
        %899 = vst.msk [vmem:[%s894 + $0x20] sm:$0x3] %vm412, %v892
        %s900 = sld [smem:[#allocation6 + $0x3]]
        %v901 = vstv %s900
        %v902 = vadd.f32 %v901, 0.0
        %s903 = sld [smem:[#allocation4 + $0x18]]
        %v904 = vld [vmem:[%s396] sm:$0xff]
        %v905 = vld [vmem:[%s396 + $0x8] sm:$0xff]
        %v906 = vstv %s903
        %v907 = vmul.f32 %v906, %v904
        %v908 = vmul.f32 %v906, %v905
        %v909 = vadd.f32 %v902, %v907
        %v910 = vadd.f32 %v902, %v908
        %s911 = sld [smem:[#allocation4 + $0x19]]
        %v912 = vld [vmem:[%s488] sm:$0xff]
        %v913 = vld [vmem:[%s488 + $0x8] sm:$0xff]
        %v914 = vstv %s911
        %v915 = vmul.f32 %v914, %v912
        %v916 = vmul.f32 %v914, %v913
        %v917 = vadd.f32 %v909, %v915
        %v918 = vadd.f32 %v910, %v916
        %s919 = sld [smem:[#allocation4 + $0x1a]]
        %v920 = vld [vmem:[%s497] sm:$0xff]
        %v921 = vld [vmem:[%s497 + $0x8] sm:$0xff]
        %v922 = vstv %s919
        %v923 = vmul.f32 %v922, %v920
        %v924 = vmul.f32 %v922, %v921
        %v925 = vadd.f32 %v917, %v923
        %v926 = vadd.f32 %v918, %v924
        %s927 = sld [smem:[#allocation4 + $0x1b]]
        %v928 = vld [vmem:[%s506] sm:$0xff]
        %v929 = vld [vmem:[%s506 + $0x8] sm:$0xff]
        %v930 = vstv %s927
        %v931 = vmul.f32 %v930, %v928
        %v932 = vmul.f32 %v930, %v929
        %v933 = vadd.f32 %v925, %v931
        %v934 = vadd.f32 %v926, %v932
        %s935 = sld [smem:[#allocation4 + $0x1c]]
        %v936 = vld [vmem:[%s515] sm:$0xff]
        %v937 = vld [vmem:[%s515 + $0x8] sm:$0xff]
        %v938 = vstv %s935
        %v939 = vmul.f32 %v938, %v936
        %v940 = vmul.f32 %v938, %v937
        %v941 = vadd.f32 %v933, %v939
        %v942 = vadd.f32 %v934, %v940
        %s943 = sld [smem:[#allocation4 + $0x1d]]
        %v944 = vld [vmem:[%s524] sm:$0xff]
        %v945 = vld [vmem:[%s524 + $0x8] sm:$0xff]
        %v946 = vstv %s943
        %v947 = vmul.f32 %v946, %v944
        %v948 = vmul.f32 %v946, %v945
        %v949 = vadd.f32 %v941, %v947
        %v950 = vadd.f32 %v942, %v948
        %s951 = sld [smem:[#allocation4 + $0x1e]]
        %v952 = vld [vmem:[%s533] sm:$0xff]
        %v953 = vld [vmem:[%s533 + $0x8] sm:$0xff]
        %v954 = vstv %s951
        %v955 = vmul.f32 %v954, %v952
        %v956 = vmul.f32 %v954, %v953
        %v957 = vadd.f32 %v949, %v955
        %v958 = vadd.f32 %v950, %v956
        %s959 = sld [smem:[#allocation4 + $0x1f]]
        %v960 = vld [vmem:[%s542] sm:$0xff]
        %v961 = vld [vmem:[%s542 + $0x8] sm:$0xff]
        %v962 = vstv %s959
        %v963 = vmul.f32 %v962, %v960
        %v964 = vmul.f32 %v962, %v961
        %v965 = vadd.f32 %v957, %v963
        %v966 = vadd.f32 %v958, %v964
        %v968 = vsel %vm550, %v965, 0
        %v971 = vsel %vm550, %v966, 0
        %973 = vmatpush.msra.mxu0 0.0
        %974 = vmatpush.msra.mxu0 0.0
        %975 = vmatpush.msra.mxu0 0.0
        %976 = vmatpush.msra.mxu0 0.0
        %977 = vmatpush.msra.mxu0 0.0
        %978 = vmatpush.msra.mxu0 0.0
        %979 = vmatpush.msra.mxu0 0.0
        %980 = vmatpush.msra.mxu0 0.0
        %981 = vmatpush.msra.mxu0 0.0
        %982 = vmatpush.msra.mxu0 0.0
        %983 = vmatpush.msra.mxu0 0.0
        %984 = vmatpush.msra.mxu0 0.0
        %985 = vmatpush.msra.mxu0 0.0
        %986 = vmatpush.msra.mxu0 0.0
        %987 = vmatpush.msra.mxu0 %v475
        %988 = vmatpush.msra.mxu0 %v474
        %989 = vmatmul.f32.gmra.mxu0 %v968
        %v990 = vpop.f32.mrf.mxu0
        %v991 = vadd.f32 0.0, %v990
        %992 = vmatmul.f32.gmra.mxu0 %v971
        %v993 = vpop.f32.mrf.mxu0
        %v994 = vadd.f32 0.0, %v993
        %995 = vdwg.mxu0
        %996 = vmatpush.msra.mxu0 0.0
        %997 = vmatpush.msra.mxu0 0.0
        %998 = vmatpush.msra.mxu0 0.0
        %999 = vmatpush.msra.mxu0 0.0
        %1000 = vmatpush.msra.mxu0 0.0
        %1001 = vmatpush.msra.mxu0 0.0
        %1002 = vmatpush.msra.mxu0 0.0
        %1003 = vmatpush.msra.mxu0 0.0
        %1004 = vmatpush.msra.mxu0 0.0
        %1005 = vmatpush.msra.mxu0 0.0
        %1006 = vmatpush.msra.mxu0 0.0
        %1007 = vmatpush.msra.mxu0 0.0
        %1008 = vmatpush.msra.mxu0 0.0
        %1009 = vmatpush.msra.mxu0 0.0
        %1010 = vmatpush.msra.mxu0 %v994
        %1011 = vmatpush.msra.mxu0 %v991
        %1012 = vmatmul.f32.gmra.mxu0 %v581
        %v1013 = vpop.f32.mrf.mxu0
        %v1014 = vadd.f32 0.0, %v1013
        %1015 = vmatmul.f32.gmra.mxu0 %v584
        %v1016 = vpop.f32.mrf.mxu0
        %v1017 = vadd.f32 0.0, %v1016
        %1018 = vmatmul.f32.gmra.mxu0 %v587
        %v1019 = vpop.f32.mrf.mxu0
        %v1020 = vadd.f32 0.0, %v1019
        %1021 = vmatmul.f32.gmra.mxu0 %v590
        %v1022 = vpop.f32.mrf.mxu0
        %v1023 = vadd.f32 0.0, %v1022
        %1024 = vmatmul.f32.gmra.mxu0 %v593
        %v1025 = vpop.f32.mrf.mxu0
        %v1026 = vadd.f32 0.0, %v1025
        %1027 = vdwg.mxu0
        %s1028 = scalar_lea.vmem [#allocation2], 120
        %1029 = vst.msk [vmem:[%s1028] sm:$0xff] %vm407, %v1014
        %1030 = vst.msk [vmem:[%s1028 + $0x8] sm:$0xff] %vm407, %v1017
        %1031 = vst.msk [vmem:[%s1028 + $0x10] sm:$0xff] %vm407, %v1020
        %1032 = vst.msk [vmem:[%s1028 + $0x18] sm:$0xff] %vm407, %v1023
        %1033 = vst.msk [vmem:[%s1028 + $0x20] sm:$0x3] %vm412, %v1026
        %v1034 = vld [vmem:[%s401] sm:$0xff]
        %v1035 = vld [vmem:[%s401 + $0x8] sm:$0xff]
        %v1036 = vld [vmem:[%s401 + $0x10] sm:$0xff]
        %v1037 = vld [vmem:[%s401 + $0x18] sm:$0xff]
        %1042 = vrot.lane.b32.xlu0 %v1034, 1
        %v1043 = vpop.permute.xlu0 %1042
        %1044 = vrot.lane.b32.xlu0 %v1035, 1
        %v1045 = vpop.permute.xlu0 %1044
        %1046 = vrot.lane.b32.xlu0 %v1036, 1
        %v1047 = vpop.permute.xlu0 %1046
        %1048 = vrot.lane.b32.xlu0 %v1037, 1
        %v1049 = vpop.permute.xlu0 %1048
        %s1054 = scalar_lea.vmem [#allocation2], 160
        %vm1055 = vcmask 269320
        %1056 = vst.msk [vmem:[%s1054 + $0x1] sm:$0xff] %vm1055, %v1043
        %1057 = vst.msk [vmem:[%s1054 + $0x9] sm:$0xff] %vm1055, %v1045
        %1058 = vst.msk [vmem:[%s1054 + $0x11] sm:$0xff] %vm1055, %v1047
        %1059 = vst.msk [vmem:[%s1054 + $0x19] sm:$0xff] %vm1055, %v1049
        %s1060 = scalar_lea.vmem %s401, 32
        %v1061 = vld [vmem:[%s1060] sm:$0xff]
        %v1062 = vld [vmem:[%s1060 + $0x8] sm:$0xff]
        %v1063 = vld [vmem:[%s1060 + $0x10] sm:$0xff]
        %v1064 = vld [vmem:[%s1060 + $0x18] sm:$0xff]
        %1069 = vrot.lane.b32.xlu0 %v1061, 1
        %v1070 = vpop.permute.xlu0 %1069
        %1071 = vrot.lane.b32.xlu0 %v1062, 1
        %v1072 = vpop.permute.xlu0 %1071
        %1073 = vrot.lane.b32.xlu0 %v1063, 1
        %v1074 = vpop.permute.xlu0 %1073
        %1075 = vrot.lane.b32.xlu0 %v1064, 1
        %v1076 = vpop.permute.xlu0 %1075
        %s1081 = scalar_lea.vmem [#allocation2], 200
        %1082 = vst.msk [vmem:[%s1081 + $0x1] sm:$0xff] %vm1055, %v1070
        %1083 = vst.msk [vmem:[%s1081 + $0x9] sm:$0xff] %vm1055, %v1072
        %1084 = vst.msk [vmem:[%s1081 + $0x11] sm:$0xff] %vm1055, %v1074
        %1085 = vst.msk [vmem:[%s1081 + $0x19] sm:$0xff] %vm1055, %v1076
        %s1086 = scalar_lea.vmem %s401, 64
        %v1087 = vld [vmem:[%s1086] sm:$0xff]
        %v1088 = vld [vmem:[%s1086 + $0x8] sm:$0xff]
        %v1089 = vld [vmem:[%s1086 + $0x10] sm:$0xff]
        %v1090 = vld [vmem:[%s1086 + $0x18] sm:$0xff]
        %1095 = vrot.lane.b32.xlu0 %v1087, 1
        %v1096 = vpop.permute.xlu0 %1095
        %1097 = vrot.lane.b32.xlu0 %v1088, 1
        %v1098 = vpop.permute.xlu0 %1097
        %1099 = vrot.lane.b32.xlu0 %v1089, 1
        %v1100 = vpop.permute.xlu0 %1099
        %1101 = vrot.lane.b32.xlu0 %v1090, 1
        %v1102 = vpop.permute.xlu0 %1101
        %s1107 = scalar_lea.vmem [#allocation2], 240
        %1108 = vst.msk [vmem:[%s1107 + $0x1] sm:$0xff] %vm1055, %v1096
        %1109 = vst.msk [vmem:[%s1107 + $0x9] sm:$0xff] %vm1055, %v1098
        %1110 = vst.msk [vmem:[%s1107 + $0x11] sm:$0xff] %vm1055, %v1100
        %1111 = vst.msk [vmem:[%s1107 + $0x19] sm:$0xff] %vm1055, %v1102
        %s1112 = scalar_lea.vmem %s401, 96
        %v1113 = vld [vmem:[%s1112] sm:$0xff]
        %v1114 = vld [vmem:[%s1112 + $0x8] sm:$0xff]
        %v1115 = vld [vmem:[%s1112 + $0x10] sm:$0xff]
        %v1116 = vld [vmem:[%s1112 + $0x18] sm:$0xff]
        %1121 = vrot.lane.b32.xlu0 %v1113, 1
        %v1122 = vpop.permute.xlu0 %1121
        %1123 = vrot.lane.b32.xlu0 %v1114, 1
        %v1124 = vpop.permute.xlu0 %1123
        %1125 = vrot.lane.b32.xlu0 %v1115, 1
        %v1126 = vpop.permute.xlu0 %1125
        %1127 = vrot.lane.b32.xlu0 %v1116, 1
        %v1128 = vpop.permute.xlu0 %1127
        %s1133 = scalar_lea.vmem [#allocation2], 280
        %1134 = vst.msk [vmem:[%s1133 + $0x1] sm:$0xff] %vm1055, %v1122
        %1135 = vst.msk [vmem:[%s1133 + $0x9] sm:$0xff] %vm1055, %v1124
        %1136 = vst.msk [vmem:[%s1133 + $0x11] sm:$0xff] %vm1055, %v1126
        %1137 = vst.msk [vmem:[%s1133 + $0x19] sm:$0xff] %vm1055, %v1128
        %v1138 = vld [vmem:[%s5] sm:$0x1]
        %v1139 = vld [vmem:[%s5 + $0x1] sm:$0x1]
        %v1140 = vld [vmem:[%s5 + $0x2] sm:$0x1]
        %v1141 = vperm.slane %v1138, 0
        %v1142 = vadd.f32 %v1141, 0.0
        %v1143 = vld [vmem:[#allocation2] sm:$0xff]
        %v1144 = vld [vmem:[#allocation2 + $0x8] sm:$0xff]
        %v1145 = vld [vmem:[#allocation2 + $0x10] sm:$0xff]
        %v1146 = vld [vmem:[#allocation2 + $0x18] sm:$0xff]
        %v1147 = vld [vmem:[#allocation2 + $0x20] sm:$0x3]
        %1153 = vrot.lane.b32.xlu0 %v1143, 32
        %v1154 = vpop.permute.xlu0 %1153
        %1155 = vrot.lane.b32.xlu0 %v1144, 32
        %v1156 = vpop.permute.xlu0 %1155
        %1157 = vrot.lane.b32.xlu0 %v1145, 32
        %v1158 = vpop.permute.xlu0 %1157
        %1159 = vrot.lane.b32.xlu0 %v1146, 32
        %v1160 = vpop.permute.xlu0 %1159
        %1161 = vrot.lane.b32.xlu0 %v1147, 32
        %v1162 = vpop.permute.xlu0 %1161
        %1168 = vrot.lane.b32.xlu0 %v1143, 64
        %v1169 = vpop.permute.xlu0 %1168
        %1170 = vrot.lane.b32.xlu0 %v1144, 64
        %v1171 = vpop.permute.xlu0 %1170
        %1172 = vrot.lane.b32.xlu0 %v1145, 64
        %v1173 = vpop.permute.xlu0 %1172
        %1174 = vrot.lane.b32.xlu0 %v1146, 64
        %v1175 = vpop.permute.xlu0 %1174
        %1176 = vrot.lane.b32.xlu0 %v1147, 64
        %v1177 = vpop.permute.xlu0 %1176
        %1183 = vrot.lane.b32.xlu0 %v1143, 96
        %v1184 = vpop.permute.xlu0 %1183
        %1185 = vrot.lane.b32.xlu0 %v1144, 96
        %v1186 = vpop.permute.xlu0 %1185
        %1187 = vrot.lane.b32.xlu0 %v1145, 96
        %v1188 = vpop.permute.xlu0 %1187
        %1189 = vrot.lane.b32.xlu0 %v1146, 96
        %v1190 = vpop.permute.xlu0 %1189
        %1191 = vrot.lane.b32.xlu0 %v1147, 96
        %v1192 = vpop.permute.xlu0 %1191
        %vm1198 = vcmask 261120
        %v1199 = vsel %vm1198, %v1143, %v1154
        %v1200 = vsel %vm1198, %v1144, %v1156
        %v1201 = vsel %vm1198, %v1145, %v1158
        %v1202 = vsel %vm1198, %v1146, %v1160
        %v1203 = vsel %vm1198, %v1147, %v1162
        %vm1204 = vcmask 523264
        %v1205 = vsel %vm1204, %v1199, %v1169
        %v1206 = vsel %vm1204, %v1200, %v1171
        %v1207 = vsel %vm1204, %v1201, %v1173
        %v1208 = vsel %vm1204, %v1202, %v1175
        %v1209 = vsel %vm1204, %v1203, %v1177
        %vm1210 = vcmask 785408
        %v1211 = vsel %vm1210, %v1205, %v1184
        %v1212 = vsel %vm1210, %v1206, %v1186
        %v1213 = vsel %vm1210, %v1207, %v1188
        %v1214 = vsel %vm1210, %v1208, %v1190
        %v1215 = vsel %vm1210, %v1209, %v1192
        %v1216 = vld [vmem:[%s4] sm:$0x1]
        %v1217 = vperm.slane %v1216, 0
        %v1218 = vmul.f32 %v1217, %v1211
        %v1219 = vmul.f32 %v1217, %v1212
        %v1220 = vmul.f32 %v1217, %v1213
        %v1221 = vmul.f32 %v1217, %v1214
        %v1222 = vadd.f32 %v1142, %v1218
        %v1223 = vadd.f32 %v1142, %v1219
        %v1224 = vadd.f32 %v1142, %v1220
        %v1225 = vadd.f32 %v1142, %v1221
        %v1226 = vld [vmem:[%s4 + $0x3] sm:$0x1]
        %v1227 = vperm.slane %v1226, 0
        %v1228 = vmul.f32 %v1227, %v1211
        %v1229 = vmul.f32 %v1227, %v1212
        %v1230 = vmul.f32 %v1227, %v1213
        %v1231 = vmul.f32 %v1227, %v1214
        %v1232 = vmul.f32 %v1227, %v1215
        %vm1238 = vcmask 1046528
        %v1239 = vrot.slane %v1228, 1
        %v1240 = vrot.slane %v1229, 1
        %v1241 = vsel %vm1238, %v1239, %v1240
        %v1242 = vrot.slane %v1230, 1
        %v1243 = vsel %vm1238, %v1240, %v1242
        %v1244 = vrot.slane %v1231, 1
        %v1245 = vsel %vm1238, %v1242, %v1244
        %v1246 = vrot.slane %v1232, 1
        %v1247 = vsel %vm1238, %v1244, %v1246
        %v1252 = vadd.f32 %v1222, %v1241
        %v1253 = vadd.f32 %v1223, %v1243
        %v1254 = vadd.f32 %v1224, %v1245
        %v1255 = vadd.f32 %v1225, %v1247
        %v1256 = vld [vmem:[%s4 + $0x6] sm:$0x1]
        %v1257 = vperm.slane %v1256, 0
        %v1258 = vmul.f32 %v1257, %v1211
        %v1259 = vmul.f32 %v1257, %v1212
        %v1260 = vmul.f32 %v1257, %v1213
        %v1261 = vmul.f32 %v1257, %v1214
        %v1262 = vmul.f32 %v1257, %v1215
        %vm1268 = vcmask 1045504
        %v1269 = vrot.slane %v1258, 2
        %v1270 = vrot.slane %v1259, 2
        %v1271 = vsel %vm1268, %v1269, %v1270
        %v1272 = vrot.slane %v1260, 2
        %v1273 = vsel %vm1268, %v1270, %v1272
        %v1274 = vrot.slane %v1261, 2
        %v1275 = vsel %vm1268, %v1272, %v1274
        %v1276 = vrot.slane %v1262, 2
        %v1277 = vsel %vm1268, %v1274, %v1276
        %v1282 = vadd.f32 %v1252, %v1271
        %v1283 = vadd.f32 %v1253, %v1273
        %v1284 = vadd.f32 %v1254, %v1275
        %v1285 = vadd.f32 %v1255, %v1277
        %1286 = vrot.lane.b32.xlu0 %v1143, 127
        %v1287 = vpop.permute.xlu0 %1286
        %1288 = vrot.lane.b32.xlu0 %v1144, 127
        %v1289 = vpop.permute.xlu0 %1288
        %1290 = vrot.lane.b32.xlu0 %v1145, 127
        %v1291 = vpop.permute.xlu0 %1290
        %1292 = vrot.lane.b32.xlu0 %v1146, 127
        %v1293 = vpop.permute.xlu0 %1292
        %1294 = vrot.lane.b32.xlu0 %v1147, 127
        %v1295 = vpop.permute.xlu0 %1294
        %1301 = vrot.lane.b32.xlu0 %v1143, 31
        %v1302 = vpop.permute.xlu0 %1301
        %1303 = vrot.lane.b32.xlu0 %v1144, 31
        %v1304 = vpop.permute.xlu0 %1303
        %1305 = vrot.lane.b32.xlu0 %v1145, 31
        %v1306 = vpop.permute.xlu0 %1305
        %1307 = vrot.lane.b32.xlu0 %v1146, 31
        %v1308 = vpop.permute.xlu0 %1307
        %1309 = vrot.lane.b32.xlu0 %v1147, 31
        %v1310 = vpop.permute.xlu0 %1309
        %1316 = vrot.lane.b32.xlu0 %v1143, 63
        %v1317 = vpop.permute.xlu0 %1316
        %1318 = vrot.lane.b32.xlu0 %v1144, 63
        %v1319 = vpop.permute.xlu0 %1318
        %1320 = vrot.lane.b32.xlu0 %v1145, 63
        %v1321 = vpop.permute.xlu0 %1320
        %1322 = vrot.lane.b32.xlu0 %v1146, 63
        %v1323 = vpop.permute.xlu0 %1322
        %1324 = vrot.lane.b32.xlu0 %v1147, 63
        %v1325 = vpop.permute.xlu0 %1324
        %1331 = vrot.lane.b32.xlu0 %v1143, 95
        %v1332 = vpop.permute.xlu0 %1331
        %1333 = vrot.lane.b32.xlu0 %v1144, 95
        %v1334 = vpop.permute.xlu0 %1333
        %1335 = vrot.lane.b32.xlu0 %v1145, 95
        %v1336 = vpop.permute.xlu0 %1335
        %1337 = vrot.lane.b32.xlu0 %v1146, 95
        %v1338 = vpop.permute.xlu0 %1337
        %1339 = vrot.lane.b32.xlu0 %v1147, 95
        %v1340 = vpop.permute.xlu0 %1339
        %v1346 = vsel %vm1198, %v1287, %v1302
        %v1347 = vsel %vm1198, %v1289, %v1304
        %v1348 = vsel %vm1198, %v1291, %v1306
        %v1349 = vsel %vm1198, %v1293, %v1308
        %v1350 = vsel %vm1198, %v1295, %v1310
        %v1351 = vsel %vm1204, %v1346, %v1317
        %v1352 = vsel %vm1204, %v1347, %v1319
        %v1353 = vsel %vm1204, %v1348, %v1321
        %v1354 = vsel %vm1204, %v1349, %v1323
        %v1355 = vsel %vm1204, %v1350, %v1325
        %v1356 = vsel %vm1210, %v1351, %v1332
        %v1357 = vsel %vm1210, %v1352, %v1334
        %v1358 = vsel %vm1210, %v1353, %v1336
        %v1359 = vsel %vm1210, %v1354, %v1338
        %v1360 = vsel %vm1210, %v1355, %v1340
        %v1361 = vld [vmem:[%s4 + $0x1] sm:$0x1]
        %v1362 = vperm.slane %v1361, 0
        %v1363 = vmul.f32 %v1362, %v1356
        %v1364 = vmul.f32 %v1362, %v1357
        %v1365 = vmul.f32 %v1362, %v1358
        %v1366 = vmul.f32 %v1362, %v1359
        %v1367 = vadd.f32 %v1282, %v1363
        %v1368 = vadd.f32 %v1283, %v1364
        %v1369 = vadd.f32 %v1284, %v1365
        %v1370 = vadd.f32 %v1285, %v1366
        %v1371 = vld [vmem:[%s4 + $0x4] sm:$0x1]
        %v1372 = vperm.slane %v1371, 0
        %v1373 = vmul.f32 %v1372, %v1356
        %v1374 = vmul.f32 %v1372, %v1357
        %v1375 = vmul.f32 %v1372, %v1358
        %v1376 = vmul.f32 %v1372, %v1359
        %v1377 = vmul.f32 %v1372, %v1360
        %v1383 = vrot.slane %v1373, 1
        %v1384 = vrot.slane %v1374, 1
        %v1385 = vsel %vm1238, %v1383, %v1384
        %v1386 = vrot.slane %v1375, 1
        %v1387 = vsel %vm1238, %v1384, %v1386
        %v1388 = vrot.slane %v1376, 1
        %v1389 = vsel %vm1238, %v1386, %v1388
        %v1390 = vrot.slane %v1377, 1
        %v1391 = vsel %vm1238, %v1388, %v1390
        %v1396 = vadd.f32 %v1367, %v1385
        %v1397 = vadd.f32 %v1368, %v1387
        %v1398 = vadd.f32 %v1369, %v1389
        %v1399 = vadd.f32 %v1370, %v1391
        %v1400 = vld [vmem:[%s4 + $0x7] sm:$0x1]
        %v1401 = vperm.slane %v1400, 0
        %v1402 = vmul.f32 %v1401, %v1356
        %v1403 = vmul.f32 %v1401, %v1357
        %v1404 = vmul.f32 %v1401, %v1358
        %v1405 = vmul.f32 %v1401, %v1359
        %v1406 = vmul.f32 %v1401, %v1360
        %v1412 = vrot.slane %v1402, 2
        %v1413 = vrot.slane %v1403, 2
        %v1414 = vsel %vm1268, %v1412, %v1413
        %v1415 = vrot.slane %v1404, 2
        %v1416 = vsel %vm1268, %v1413, %v1415
        %v1417 = vrot.slane %v1405, 2
        %v1418 = vsel %vm1268, %v1415, %v1417
        %v1419 = vrot.slane %v1406, 2
        %v1420 = vsel %vm1268, %v1417, %v1419
        %v1425 = vadd.f32 %v1396, %v1414
        %v1426 = vadd.f32 %v1397, %v1416
        %v1427 = vadd.f32 %v1398, %v1418
        %v1428 = vadd.f32 %v1399, %v1420
        %1429 = vrot.lane.b32.xlu0 %v1143, 126
        %v1430 = vpop.permute.xlu0 %1429
        %1431 = vrot.lane.b32.xlu0 %v1144, 126
        %v1432 = vpop.permute.xlu0 %1431
        %1433 = vrot.lane.b32.xlu0 %v1145, 126
        %v1434 = vpop.permute.xlu0 %1433
        %1435 = vrot.lane.b32.xlu0 %v1146, 126
        %v1436 = vpop.permute.xlu0 %1435
        %1437 = vrot.lane.b32.xlu0 %v1147, 126
        %v1438 = vpop.permute.xlu0 %1437
        %1444 = vrot.lane.b32.xlu0 %v1143, 30
        %v1445 = vpop.permute.xlu0 %1444
        %1446 = vrot.lane.b32.xlu0 %v1144, 30
        %v1447 = vpop.permute.xlu0 %1446
        %1448 = vrot.lane.b32.xlu0 %v1145, 30
        %v1449 = vpop.permute.xlu0 %1448
        %1450 = vrot.lane.b32.xlu0 %v1146, 30
        %v1451 = vpop.permute.xlu0 %1450
        %1452 = vrot.lane.b32.xlu0 %v1147, 30
        %v1453 = vpop.permute.xlu0 %1452
        %1459 = vrot.lane.b32.xlu0 %v1143, 62
        %v1460 = vpop.permute.xlu0 %1459
        %1461 = vrot.lane.b32.xlu0 %v1144, 62
        %v1462 = vpop.permute.xlu0 %1461
        %1463 = vrot.lane.b32.xlu0 %v1145, 62
        %v1464 = vpop.permute.xlu0 %1463
        %1465 = vrot.lane.b32.xlu0 %v1146, 62
        %v1466 = vpop.permute.xlu0 %1465
        %1467 = vrot.lane.b32.xlu0 %v1147, 62
        %v1468 = vpop.permute.xlu0 %1467
        %1474 = vrot.lane.b32.xlu0 %v1143, 94
        %v1475 = vpop.permute.xlu0 %1474
        %1476 = vrot.lane.b32.xlu0 %v1144, 94
        %v1477 = vpop.permute.xlu0 %1476
        %1478 = vrot.lane.b32.xlu0 %v1145, 94
        %v1479 = vpop.permute.xlu0 %1478
        %1480 = vrot.lane.b32.xlu0 %v1146, 94
        %v1481 = vpop.permute.xlu0 %1480
        %1482 = vrot.lane.b32.xlu0 %v1147, 94
        %v1483 = vpop.permute.xlu0 %1482
        %v1489 = vsel %vm1198, %v1430, %v1445
        %v1490 = vsel %vm1198, %v1432, %v1447
        %v1491 = vsel %vm1198, %v1434, %v1449
        %v1492 = vsel %vm1198, %v1436, %v1451
        %v1493 = vsel %vm1198, %v1438, %v1453
        %v1494 = vsel %vm1204, %v1489, %v1460
        %v1495 = vsel %vm1204, %v1490, %v1462
        %v1496 = vsel %vm1204, %v1491, %v1464
        %v1497 = vsel %vm1204, %v1492, %v1466
        %v1498 = vsel %vm1204, %v1493, %v1468
        %v1499 = vsel %vm1210, %v1494, %v1475
        %v1500 = vsel %vm1210, %v1495, %v1477
        %v1501 = vsel %vm1210, %v1496, %v1479
        %v1502 = vsel %vm1210, %v1497, %v1481
        %v1503 = vsel %vm1210, %v1498, %v1483
        %v1504 = vld [vmem:[%s4 + $0x2] sm:$0x1]
        %v1505 = vperm.slane %v1504, 0
        %v1506 = vmul.f32 %v1505, %v1499
        %v1507 = vmul.f32 %v1505, %v1500
        %v1508 = vmul.f32 %v1505, %v1501
        %v1509 = vmul.f32 %v1505, %v1502
        %v1510 = vadd.f32 %v1425, %v1506
        %v1511 = vadd.f32 %v1426, %v1507
        %v1512 = vadd.f32 %v1427, %v1508
        %v1513 = vadd.f32 %v1428, %v1509
        %v1514 = vld [vmem:[%s4 + $0x5] sm:$0x1]
        %v1515 = vperm.slane %v1514, 0
        %v1516 = vmul.f32 %v1515, %v1499
        %v1517 = vmul.f32 %v1515, %v1500
        %v1518 = vmul.f32 %v1515, %v1501
        %v1519 = vmul.f32 %v1515, %v1502
        %v1520 = vmul.f32 %v1515, %v1503
        %v1526 = vrot.slane %v1516, 1
        %v1527 = vrot.slane %v1517, 1
        %v1528 = vsel %vm1238, %v1526, %v1527
        %v1529 = vrot.slane %v1518, 1
        %v1530 = vsel %vm1238, %v1527, %v1529
        %v1531 = vrot.slane %v1519, 1
        %v1532 = vsel %vm1238, %v1529, %v1531
        %v1533 = vrot.slane %v1520, 1
        %v1534 = vsel %vm1238, %v1531, %v1533
        %v1539 = vadd.f32 %v1510, %v1528
        %v1540 = vadd.f32 %v1511, %v1530
        %v1541 = vadd.f32 %v1512, %v1532
        %v1542 = vadd.f32 %v1513, %v1534
        %v1543 = vld [vmem:[%s4 + $0x8] sm:$0x1]
        %v1544 = vperm.slane %v1543, 0
        %v1545 = vmul.f32 %v1544, %v1499
        %v1546 = vmul.f32 %v1544, %v1500
        %v1547 = vmul.f32 %v1544, %v1501
        %v1548 = vmul.f32 %v1544, %v1502
        %v1549 = vmul.f32 %v1544, %v1503
        %v1555 = vrot.slane %v1545, 2
        %v1556 = vrot.slane %v1546, 2
        %v1557 = vsel %vm1268, %v1555, %v1556
        %v1558 = vrot.slane %v1547, 2
        %v1559 = vsel %vm1268, %v1556, %v1558
        %v1560 = vrot.slane %v1548, 2
        %v1561 = vsel %vm1268, %v1558, %v1560
        %v1562 = vrot.slane %v1549, 2
        %v1563 = vsel %vm1268, %v1560, %v1562
        %v1568 = vadd.f32 %v1539, %v1557
        %v1569 = vadd.f32 %v1540, %v1559
        %v1570 = vadd.f32 %v1541, %v1561
        %v1571 = vadd.f32 %v1542, %v1563
        %v1572 = vld [vmem:[%s760] sm:$0xff]
        %v1573 = vld [vmem:[%s760 + $0x8] sm:$0xff]
        %v1574 = vld [vmem:[%s760 + $0x10] sm:$0xff]
        %v1575 = vld [vmem:[%s760 + $0x18] sm:$0xff]
        %v1576 = vld [vmem:[%s760 + $0x20] sm:$0x3]
        %1582 = vrot.lane.b32.xlu0 %v1572, 32
        %v1583 = vpop.permute.xlu0 %1582
        %1584 = vrot.lane.b32.xlu0 %v1573, 32
        %v1585 = vpop.permute.xlu0 %1584
        %1586 = vrot.lane.b32.xlu0 %v1574, 32
        %v1587 = vpop.permute.xlu0 %1586
        %1588 = vrot.lane.b32.xlu0 %v1575, 32
        %v1589 = vpop.permute.xlu0 %1588
        %1590 = vrot.lane.b32.xlu0 %v1576, 32
        %v1591 = vpop.permute.xlu0 %1590
        %1597 = vrot.lane.b32.xlu0 %v1572, 64
        %v1598 = vpop.permute.xlu0 %1597
        %1599 = vrot.lane.b32.xlu0 %v1573, 64
        %v1600 = vpop.permute.xlu0 %1599
        %1601 = vrot.lane.b32.xlu0 %v1574, 64
        %v1602 = vpop.permute.xlu0 %1601
        %1603 = vrot.lane.b32.xlu0 %v1575, 64
        %v1604 = vpop.permute.xlu0 %1603
        %1605 = vrot.lane.b32.xlu0 %v1576, 64
        %v1606 = vpop.permute.xlu0 %1605
        %1612 = vrot.lane.b32.xlu0 %v1572, 96
        %v1613 = vpop.permute.xlu0 %1612
        %1614 = vrot.lane.b32.xlu0 %v1573, 96
        %v1615 = vpop.permute.xlu0 %1614
        %1616 = vrot.lane.b32.xlu0 %v1574, 96
        %v1617 = vpop.permute.xlu0 %1616
        %1618 = vrot.lane.b32.xlu0 %v1575, 96
        %v1619 = vpop.permute.xlu0 %1618
        %1620 = vrot.lane.b32.xlu0 %v1576, 96
        %v1621 = vpop.permute.xlu0 %1620
        %v1627 = vsel %vm1198, %v1572, %v1583
        %v1628 = vsel %vm1198, %v1573, %v1585
        %v1629 = vsel %vm1198, %v1574, %v1587
        %v1630 = vsel %vm1198, %v1575, %v1589
        %v1631 = vsel %vm1198, %v1576, %v1591
        %v1632 = vsel %vm1204, %v1627, %v1598
        %v1633 = vsel %vm1204, %v1628, %v1600
        %v1634 = vsel %vm1204, %v1629, %v1602
        %v1635 = vsel %vm1204, %v1630, %v1604
        %v1636 = vsel %vm1204, %v1631, %v1606
        %v1637 = vsel %vm1210, %v1632, %v1613
        %v1638 = vsel %vm1210, %v1633, %v1615
        %v1639 = vsel %vm1210, %v1634, %v1617
        %v1640 = vsel %vm1210, %v1635, %v1619
        %v1641 = vsel %vm1210, %v1636, %v1621
        %v1642 = vld [vmem:[%s4 + $0x9] sm:$0x1]
        %v1643 = vperm.slane %v1642, 0
        %v1644 = vmul.f32 %v1643, %v1637
        %v1645 = vmul.f32 %v1643, %v1638
        %v1646 = vmul.f32 %v1643, %v1639
        %v1647 = vmul.f32 %v1643, %v1640
        %v1648 = vadd.f32 %v1568, %v1644
        %v1649 = vadd.f32 %v1569, %v1645
        %v1650 = vadd.f32 %v1570, %v1646
        %v1651 = vadd.f32 %v1571, %v1647
        %v1652 = vld [vmem:[%s4 + $0xc] sm:$0x1]
        %v1653 = vperm.slane %v1652, 0
        %v1654 = vmul.f32 %v1653, %v1637
        %v1655 = vmul.f32 %v1653, %v1638
        %v1656 = vmul.f32 %v1653, %v1639
        %v1657 = vmul.f32 %v1653, %v1640
        %v1658 = vmul.f32 %v1653, %v1641
        %v1664 = vrot.slane %v1654, 1
        %v1665 = vrot.slane %v1655, 1
        %v1666 = vsel %vm1238, %v1664, %v1665
        %v1667 = vrot.slane %v1656, 1
        %v1668 = vsel %vm1238, %v1665, %v1667
        %v1669 = vrot.slane %v1657, 1
        %v1670 = vsel %vm1238, %v1667, %v1669
        %v1671 = vrot.slane %v1658, 1
        %v1672 = vsel %vm1238, %v1669, %v1671
        %v1677 = vadd.f32 %v1648, %v1666
        %v1678 = vadd.f32 %v1649, %v1668
        %v1679 = vadd.f32 %v1650, %v1670
        %v1680 = vadd.f32 %v1651, %v1672
        %v1681 = vld [vmem:[%s4 + $0xf] sm:$0x1]
        %v1682 = vperm.slane %v1681, 0
        %v1683 = vmul.f32 %v1682, %v1637
        %v1684 = vmul.f32 %v1682, %v1638
        %v1685 = vmul.f32 %v1682, %v1639
        %v1686 = vmul.f32 %v1682, %v1640
        %v1687 = vmul.f32 %v1682, %v1641
        %v1693 = vrot.slane %v1683, 2
        %v1694 = vrot.slane %v1684, 2
        %v1695 = vsel %vm1268, %v1693, %v1694
        %v1696 = vrot.slane %v1685, 2
        %v1697 = vsel %vm1268, %v1694, %v1696
        %v1698 = vrot.slane %v1686, 2
        %v1699 = vsel %vm1268, %v1696, %v1698
        %v1700 = vrot.slane %v1687, 2
        %v1701 = vsel %vm1268, %v1698, %v1700
        %v1706 = vadd.f32 %v1677, %v1695
        %v1707 = vadd.f32 %v1678, %v1697
        %v1708 = vadd.f32 %v1679, %v1699
        %v1709 = vadd.f32 %v1680, %v1701
        %1710 = vrot.lane.b32.xlu0 %v1572, 127
        %v1711 = vpop.permute.xlu0 %1710
        %1712 = vrot.lane.b32.xlu0 %v1573, 127
        %v1713 = vpop.permute.xlu0 %1712
        %1714 = vrot.lane.b32.xlu0 %v1574, 127
        %v1715 = vpop.permute.xlu0 %1714
        %1716 = vrot.lane.b32.xlu0 %v1575, 127
        %v1717 = vpop.permute.xlu0 %1716
        %1718 = vrot.lane.b32.xlu0 %v1576, 127
        %v1719 = vpop.permute.xlu0 %1718
        %1725 = vrot.lane.b32.xlu0 %v1572, 31
        %v1726 = vpop.permute.xlu0 %1725
        %1727 = vrot.lane.b32.xlu0 %v1573, 31
        %v1728 = vpop.permute.xlu0 %1727
        %1729 = vrot.lane.b32.xlu0 %v1574, 31
        %v1730 = vpop.permute.xlu0 %1729
        %1731 = vrot.lane.b32.xlu0 %v1575, 31
        %v1732 = vpop.permute.xlu0 %1731
        %1733 = vrot.lane.b32.xlu0 %v1576, 31
        %v1734 = vpop.permute.xlu0 %1733
        %1740 = vrot.lane.b32.xlu0 %v1572, 63
        %v1741 = vpop.permute.xlu0 %1740
        %1742 = vrot.lane.b32.xlu0 %v1573, 63
        %v1743 = vpop.permute.xlu0 %1742
        %1744 = vrot.lane.b32.xlu0 %v1574, 63
        %v1745 = vpop.permute.xlu0 %1744
        %1746 = vrot.lane.b32.xlu0 %v1575, 63
        %v1747 = vpop.permute.xlu0 %1746
        %1748 = vrot.lane.b32.xlu0 %v1576, 63
        %v1749 = vpop.permute.xlu0 %1748
        %1755 = vrot.lane.b32.xlu0 %v1572, 95
        %v1756 = vpop.permute.xlu0 %1755
        %1757 = vrot.lane.b32.xlu0 %v1573, 95
        %v1758 = vpop.permute.xlu0 %1757
        %1759 = vrot.lane.b32.xlu0 %v1574, 95
        %v1760 = vpop.permute.xlu0 %1759
        %1761 = vrot.lane.b32.xlu0 %v1575, 95
        %v1762 = vpop.permute.xlu0 %1761
        %1763 = vrot.lane.b32.xlu0 %v1576, 95
        %v1764 = vpop.permute.xlu0 %1763
        %v1770 = vsel %vm1198, %v1711, %v1726
        %v1771 = vsel %vm1198, %v1713, %v1728
        %v1772 = vsel %vm1198, %v1715, %v1730
        %v1773 = vsel %vm1198, %v1717, %v1732
        %v1774 = vsel %vm1198, %v1719, %v1734
        %v1775 = vsel %vm1204, %v1770, %v1741
        %v1776 = vsel %vm1204, %v1771, %v1743
        %v1777 = vsel %vm1204, %v1772, %v1745
        %v1778 = vsel %vm1204, %v1773, %v1747
        %v1779 = vsel %vm1204, %v1774, %v1749
        %v1780 = vsel %vm1210, %v1775, %v1756
        %v1781 = vsel %vm1210, %v1776, %v1758
        %v1782 = vsel %vm1210, %v1777, %v1760
        %v1783 = vsel %vm1210, %v1778, %v1762
        %v1784 = vsel %vm1210, %v1779, %v1764
        %v1785 = vld [vmem:[%s4 + $0xa] sm:$0x1]
        %v1786 = vperm.slane %v1785, 0
        %v1787 = vmul.f32 %v1786, %v1780
        %v1788 = vmul.f32 %v1786, %v1781
        %v1789 = vmul.f32 %v1786, %v1782
        %v1790 = vmul.f32 %v1786, %v1783
        %v1791 = vadd.f32 %v1706, %v1787
        %v1792 = vadd.f32 %v1707, %v1788
        %v1793 = vadd.f32 %v1708, %v1789
        %v1794 = vadd.f32 %v1709, %v1790
        %v1795 = vld [vmem:[%s4 + $0xd] sm:$0x1]
        %v1796 = vperm.slane %v1795, 0
        %v1797 = vmul.f32 %v1796, %v1780
        %v1798 = vmul.f32 %v1796, %v1781
        %v1799 = vmul.f32 %v1796, %v1782
        %v1800 = vmul.f32 %v1796, %v1783
        %v1801 = vmul.f32 %v1796, %v1784
        %v1807 = vrot.slane %v1797, 1
        %v1808 = vrot.slane %v1798, 1
        %v1809 = vsel %vm1238, %v1807, %v1808
        %v1810 = vrot.slane %v1799, 1
        %v1811 = vsel %vm1238, %v1808, %v1810
        %v1812 = vrot.slane %v1800, 1
        %v1813 = vsel %vm1238, %v1810, %v1812
        %v1814 = vrot.slane %v1801, 1
        %v1815 = vsel %vm1238, %v1812, %v1814
        %v1820 = vadd.f32 %v1791, %v1809
        %v1821 = vadd.f32 %v1792, %v1811
        %v1822 = vadd.f32 %v1793, %v1813
        %v1823 = vadd.f32 %v1794, %v1815
        %v1824 = vld [vmem:[%s4 + $0x10] sm:$0x1]
        %v1825 = vperm.slane %v1824, 0
        %v1826 = vmul.f32 %v1825, %v1780
        %v1827 = vmul.f32 %v1825, %v1781
        %v1828 = vmul.f32 %v1825, %v1782
        %v1829 = vmul.f32 %v1825, %v1783
        %v1830 = vmul.f32 %v1825, %v1784
        %v1836 = vrot.slane %v1826, 2
        %v1837 = vrot.slane %v1827, 2
        %v1838 = vsel %vm1268, %v1836, %v1837
        %v1839 = vrot.slane %v1828, 2
        %v1840 = vsel %vm1268, %v1837, %v1839
        %v1841 = vrot.slane %v1829, 2
        %v1842 = vsel %vm1268, %v1839, %v1841
        %v1843 = vrot.slane %v1830, 2
        %v1844 = vsel %vm1268, %v1841, %v1843
        %v1849 = vadd.f32 %v1820, %v1838
        %v1850 = vadd.f32 %v1821, %v1840
        %v1851 = vadd.f32 %v1822, %v1842
        %v1852 = vadd.f32 %v1823, %v1844
        %1853 = vrot.lane.b32.xlu0 %v1572, 126
        %v1854 = vpop.permute.xlu0 %1853
        %1855 = vrot.lane.b32.xlu0 %v1573, 126
        %v1856 = vpop.permute.xlu0 %1855
        %1857 = vrot.lane.b32.xlu0 %v1574, 126
        %v1858 = vpop.permute.xlu0 %1857
        %1859 = vrot.lane.b32.xlu0 %v1575, 126
        %v1860 = vpop.permute.xlu0 %1859
        %1861 = vrot.lane.b32.xlu0 %v1576, 126
        %v1862 = vpop.permute.xlu0 %1861
        %1868 = vrot.lane.b32.xlu0 %v1572, 30
        %v1869 = vpop.permute.xlu0 %1868
        %1870 = vrot.lane.b32.xlu0 %v1573, 30
        %v1871 = vpop.permute.xlu0 %1870
        %1872 = vrot.lane.b32.xlu0 %v1574, 30
        %v1873 = vpop.permute.xlu0 %1872
        %1874 = vrot.lane.b32.xlu0 %v1575, 30
        %v1875 = vpop.permute.xlu0 %1874
        %1876 = vrot.lane.b32.xlu0 %v1576, 30
        %v1877 = vpop.permute.xlu0 %1876
        %1883 = vrot.lane.b32.xlu0 %v1572, 62
        %v1884 = vpop.permute.xlu0 %1883
        %1885 = vrot.lane.b32.xlu0 %v1573, 62
        %v1886 = vpop.permute.xlu0 %1885
        %1887 = vrot.lane.b32.xlu0 %v1574, 62
        %v1888 = vpop.permute.xlu0 %1887
        %1889 = vrot.lane.b32.xlu0 %v1575, 62
        %v1890 = vpop.permute.xlu0 %1889
        %1891 = vrot.lane.b32.xlu0 %v1576, 62
        %v1892 = vpop.permute.xlu0 %1891
        %1898 = vrot.lane.b32.xlu0 %v1572, 94
        %v1899 = vpop.permute.xlu0 %1898
        %1900 = vrot.lane.b32.xlu0 %v1573, 94
        %v1901 = vpop.permute.xlu0 %1900
        %1902 = vrot.lane.b32.xlu0 %v1574, 94
        %v1903 = vpop.permute.xlu0 %1902
        %1904 = vrot.lane.b32.xlu0 %v1575, 94
        %v1905 = vpop.permute.xlu0 %1904
        %1906 = vrot.lane.b32.xlu0 %v1576, 94
        %v1907 = vpop.permute.xlu0 %1906
        %v1913 = vsel %vm1198, %v1854, %v1869
        %v1914 = vsel %vm1198, %v1856, %v1871
        %v1915 = vsel %vm1198, %v1858, %v1873
        %v1916 = vsel %vm1198, %v1860, %v1875
        %v1917 = vsel %vm1198, %v1862, %v1877
        %v1918 = vsel %vm1204, %v1913, %v1884
        %v1919 = vsel %vm1204, %v1914, %v1886
        %v1920 = vsel %vm1204, %v1915, %v1888
        %v1921 = vsel %vm1204, %v1916, %v1890
        %v1922 = vsel %vm1204, %v1917, %v1892
        %v1923 = vsel %vm1210, %v1918, %v1899
        %v1924 = vsel %vm1210, %v1919, %v1901
        %v1925 = vsel %vm1210, %v1920, %v1903
        %v1926 = vsel %vm1210, %v1921, %v1905
        %v1927 = vsel %vm1210, %v1922, %v1907
        %v1928 = vld [vmem:[%s4 + $0xb] sm:$0x1]
        %v1929 = vperm.slane %v1928, 0
        %v1930 = vmul.f32 %v1929, %v1923
        %v1931 = vmul.f32 %v1929, %v1924
        %v1932 = vmul.f32 %v1929, %v1925
        %v1933 = vmul.f32 %v1929, %v1926
        %v1934 = vadd.f32 %v1849, %v1930
        %v1935 = vadd.f32 %v1850, %v1931
        %v1936 = vadd.f32 %v1851, %v1932
        %v1937 = vadd.f32 %v1852, %v1933
        %v1938 = vld [vmem:[%s4 + $0xe] sm:$0x1]
        %v1939 = vperm.slane %v1938, 0
        %v1940 = vmul.f32 %v1939, %v1923
        %v1941 = vmul.f32 %v1939, %v1924
        %v1942 = vmul.f32 %v1939, %v1925
        %v1943 = vmul.f32 %v1939, %v1926
        %v1944 = vmul.f32 %v1939, %v1927
        %v1950 = vrot.slane %v1940, 1
        %v1951 = vrot.slane %v1941, 1
        %v1952 = vsel %vm1238, %v1950, %v1951
        %v1953 = vrot.slane %v1942, 1
        %v1954 = vsel %vm1238, %v1951, %v1953
        %v1955 = vrot.slane %v1943, 1
        %v1956 = vsel %vm1238, %v1953, %v1955
        %v1957 = vrot.slane %v1944, 1
        %v1958 = vsel %vm1238, %v1955, %v1957
        %v1963 = vadd.f32 %v1934, %v1952
        %v1964 = vadd.f32 %v1935, %v1954
        %v1965 = vadd.f32 %v1936, %v1956
        %v1966 = vadd.f32 %v1937, %v1958
        %v1967 = vld [vmem:[%s4 + $0x11] sm:$0x1]
        %v1968 = vperm.slane %v1967, 0
        %v1969 = vmul.f32 %v1968, %v1923
        %v1970 = vmul.f32 %v1968, %v1924
        %v1971 = vmul.f32 %v1968, %v1925
        %v1972 = vmul.f32 %v1968, %v1926
        %v1973 = vmul.f32 %v1968, %v1927
        %v1979 = vrot.slane %v1969, 2
        %v1980 = vrot.slane %v1970, 2
        %v1981 = vsel %vm1268, %v1979, %v1980
        %v1982 = vrot.slane %v1971, 2
        %v1983 = vsel %vm1268, %v1980, %v1982
        %v1984 = vrot.slane %v1972, 2
        %v1985 = vsel %vm1268, %v1982, %v1984
        %v1986 = vrot.slane %v1973, 2
        %v1987 = vsel %vm1268, %v1984, %v1986
        %v1992 = vadd.f32 %v1963, %v1981
        %v1993 = vadd.f32 %v1964, %v1983
        %v1994 = vadd.f32 %v1965, %v1985
        %v1995 = vadd.f32 %v1966, %v1987
        %v1996 = vld [vmem:[%s894] sm:$0xff]
        %v1997 = vld [vmem:[%s894 + $0x8] sm:$0xff]
        %v1998 = vld [vmem:[%s894 + $0x10] sm:$0xff]
        %v1999 = vld [vmem:[%s894 + $0x18] sm:$0xff]
        %v2000 = vld [vmem:[%s894 + $0x20] sm:$0x3]
        %2006 = vrot.lane.b32.xlu0 %v1996, 32
        %v2007 = vpop.permute.xlu0 %2006
        %2008 = vrot.lane.b32.xlu0 %v1997, 32
        %v2009 = vpop.permute.xlu0 %2008
        %2010 = vrot.lane.b32.xlu0 %v1998, 32
        %v2011 = vpop.permute.xlu0 %2010
        %2012 = vrot.lane.b32.xlu0 %v1999, 32
        %v2013 = vpop.permute.xlu0 %2012
        %2014 = vrot.lane.b32.xlu0 %v2000, 32
        %v2015 = vpop.permute.xlu0 %2014
        %2021 = vrot.lane.b32.xlu0 %v1996, 64
        %v2022 = vpop.permute.xlu0 %2021
        %2023 = vrot.lane.b32.xlu0 %v1997, 64
        %v2024 = vpop.permute.xlu0 %2023
        %2025 = vrot.lane.b32.xlu0 %v1998, 64
        %v2026 = vpop.permute.xlu0 %2025
        %2027 = vrot.lane.b32.xlu0 %v1999, 64
        %v2028 = vpop.permute.xlu0 %2027
        %2029 = vrot.lane.b32.xlu0 %v2000, 64
        %v2030 = vpop.permute.xlu0 %2029
        %2036 = vrot.lane.b32.xlu0 %v1996, 96
        %v2037 = vpop.permute.xlu0 %2036
        %2038 = vrot.lane.b32.xlu0 %v1997, 96
        %v2039 = vpop.permute.xlu0 %2038
        %2040 = vrot.lane.b32.xlu0 %v1998, 96
        %v2041 = vpop.permute.xlu0 %2040
        %2042 = vrot.lane.b32.xlu0 %v1999, 96
        %v2043 = vpop.permute.xlu0 %2042
        %2044 = vrot.lane.b32.xlu0 %v2000, 96
        %v2045 = vpop.permute.xlu0 %2044
        %v2051 = vsel %vm1198, %v1996, %v2007
        %v2052 = vsel %vm1198, %v1997, %v2009
        %v2053 = vsel %vm1198, %v1998, %v2011
        %v2054 = vsel %vm1198, %v1999, %v2013
        %v2055 = vsel %vm1198, %v2000, %v2015
        %v2056 = vsel %vm1204, %v2051, %v2022
        %v2057 = vsel %vm1204, %v2052, %v2024
        %v2058 = vsel %vm1204, %v2053, %v2026
        %v2059 = vsel %vm1204, %v2054, %v2028
        %v2060 = vsel %vm1204, %v2055, %v2030
        %v2061 = vsel %vm1210, %v2056, %v2037
        %v2062 = vsel %vm1210, %v2057, %v2039
        %v2063 = vsel %vm1210, %v2058, %v2041
        %v2064 = vsel %vm1210, %v2059, %v2043
        %v2065 = vsel %vm1210, %v2060, %v2045
        %v2066 = vld [vmem:[%s4 + $0x12] sm:$0x1]
        %v2067 = vperm.slane %v2066, 0
        %v2068 = vmul.f32 %v2067, %v2061
        %v2069 = vmul.f32 %v2067, %v2062
        %v2070 = vmul.f32 %v2067, %v2063
        %v2071 = vmul.f32 %v2067, %v2064
        %v2072 = vadd.f32 %v1992, %v2068
        %v2073 = vadd.f32 %v1993, %v2069
        %v2074 = vadd.f32 %v1994, %v2070
        %v2075 = vadd.f32 %v1995, %v2071
        %v2076 = vld [vmem:[%s4 + $0x15] sm:$0x1]
        %v2077 = vperm.slane %v2076, 0
        %v2078 = vmul.f32 %v2077, %v2061
        %v2079 = vmul.f32 %v2077, %v2062
        %v2080 = vmul.f32 %v2077, %v2063
        %v2081 = vmul.f32 %v2077, %v2064
        %v2082 = vmul.f32 %v2077, %v2065
        %v2088 = vrot.slane %v2078, 1
        %v2089 = vrot.slane %v2079, 1
        %v2090 = vsel %vm1238, %v2088, %v2089
        %v2091 = vrot.slane %v2080, 1
        %v2092 = vsel %vm1238, %v2089, %v2091
        %v2093 = vrot.slane %v2081, 1
        %v2094 = vsel %vm1238, %v2091, %v2093
        %v2095 = vrot.slane %v2082, 1
        %v2096 = vsel %vm1238, %v2093, %v2095
        %v2101 = vadd.f32 %v2072, %v2090
        %v2102 = vadd.f32 %v2073, %v2092
        %v2103 = vadd.f32 %v2074, %v2094
        %v2104 = vadd.f32 %v2075, %v2096
        %v2105 = vld [vmem:[%s4 + $0x18] sm:$0x1]
        %v2106 = vperm.slane %v2105, 0
        %v2107 = vmul.f32 %v2106, %v2061
        %v2108 = vmul.f32 %v2106, %v2062
        %v2109 = vmul.f32 %v2106, %v2063
        %v2110 = vmul.f32 %v2106, %v2064
        %v2111 = vmul.f32 %v2106, %v2065
        %v2117 = vrot.slane %v2107, 2
        %v2118 = vrot.slane %v2108, 2
        %v2119 = vsel %vm1268, %v2117, %v2118
        %v2120 = vrot.slane %v2109, 2
        %v2121 = vsel %vm1268, %v2118, %v2120
        %v2122 = vrot.slane %v2110, 2
        %v2123 = vsel %vm1268, %v2120, %v2122
        %v2124 = vrot.slane %v2111, 2
        %v2125 = vsel %vm1268, %v2122, %v2124
        %v2130 = vadd.f32 %v2101, %v2119
        %v2131 = vadd.f32 %v2102, %v2121
        %v2132 = vadd.f32 %v2103, %v2123
        %v2133 = vadd.f32 %v2104, %v2125
        %2134 = vrot.lane.b32.xlu0 %v1996, 127
        %v2135 = vpop.permute.xlu0 %2134
        %2136 = vrot.lane.b32.xlu0 %v1997, 127
        %v2137 = vpop.permute.xlu0 %2136
        %2138 = vrot.lane.b32.xlu0 %v1998, 127
        %v2139 = vpop.permute.xlu0 %2138
        %2140 = vrot.lane.b32.xlu0 %v1999, 127
        %v2141 = vpop.permute.xlu0 %2140
        %2142 = vrot.lane.b32.xlu0 %v2000, 127
        %v2143 = vpop.permute.xlu0 %2142
        %2149 = vrot.lane.b32.xlu0 %v1996, 31
        %v2150 = vpop.permute.xlu0 %2149
        %2151 = vrot.lane.b32.xlu0 %v1997, 31
        %v2152 = vpop.permute.xlu0 %2151
        %2153 = vrot.lane.b32.xlu0 %v1998, 31
        %v2154 = vpop.permute.xlu0 %2153
        %2155 = vrot.lane.b32.xlu0 %v1999, 31
        %v2156 = vpop.permute.xlu0 %2155
        %2157 = vrot.lane.b32.xlu0 %v2000, 31
        %v2158 = vpop.permute.xlu0 %2157
        %2164 = vrot.lane.b32.xlu0 %v1996, 63
        %v2165 = vpop.permute.xlu0 %2164
        %2166 = vrot.lane.b32.xlu0 %v1997, 63
        %v2167 = vpop.permute.xlu0 %2166
        %2168 = vrot.lane.b32.xlu0 %v1998, 63
        %v2169 = vpop.permute.xlu0 %2168
        %2170 = vrot.lane.b32.xlu0 %v1999, 63
        %v2171 = vpop.permute.xlu0 %2170
        %2172 = vrot.lane.b32.xlu0 %v2000, 63
        %v2173 = vpop.permute.xlu0 %2172
        %2179 = vrot.lane.b32.xlu0 %v1996, 95
        %v2180 = vpop.permute.xlu0 %2179
        %2181 = vrot.lane.b32.xlu0 %v1997, 95
        %v2182 = vpop.permute.xlu0 %2181
        %2183 = vrot.lane.b32.xlu0 %v1998, 95
        %v2184 = vpop.permute.xlu0 %2183
        %2185 = vrot.lane.b32.xlu0 %v1999, 95
        %v2186 = vpop.permute.xlu0 %2185
        %2187 = vrot.lane.b32.xlu0 %v2000, 95
        %v2188 = vpop.permute.xlu0 %2187
        %v2194 = vsel %vm1198, %v2135, %v2150
        %v2195 = vsel %vm1198, %v2137, %v2152
        %v2196 = vsel %vm1198, %v2139, %v2154
        %v2197 = vsel %vm1198, %v2141, %v2156
        %v2198 = vsel %vm1198, %v2143, %v2158
        %v2199 = vsel %vm1204, %v2194, %v2165
        %v2200 = vsel %vm1204, %v2195, %v2167
        %v2201 = vsel %vm1204, %v2196, %v2169
        %v2202 = vsel %vm1204, %v2197, %v2171
        %v2203 = vsel %vm1204, %v2198, %v2173
        %v2204 = vsel %vm1210, %v2199, %v2180
        %v2205 = vsel %vm1210, %v2200, %v2182
        %v2206 = vsel %vm1210, %v2201, %v2184
        %v2207 = vsel %vm1210, %v2202, %v2186
        %v2208 = vsel %vm1210, %v2203, %v2188
        %v2209 = vld [vmem:[%s4 + $0x13] sm:$0x1]
        %v2210 = vperm.slane %v2209, 0
        %v2211 = vmul.f32 %v2210, %v2204
        %v2212 = vmul.f32 %v2210, %v2205
        %v2213 = vmul.f32 %v2210, %v2206
        %v2214 = vmul.f32 %v2210, %v2207
        %v2215 = vadd.f32 %v2130, %v2211
        %v2216 = vadd.f32 %v2131, %v2212
        %v2217 = vadd.f32 %v2132, %v2213
        %v2218 = vadd.f32 %v2133, %v2214
        %v2219 = vld [vmem:[%s4 + $0x16] sm:$0x1]
        %v2220 = vperm.slane %v2219, 0
        %v2221 = vmul.f32 %v2220, %v2204
        %v2222 = vmul.f32 %v2220, %v2205
        %v2223 = vmul.f32 %v2220, %v2206
        %v2224 = vmul.f32 %v2220, %v2207
        %v2225 = vmul.f32 %v2220, %v2208
        %v2231 = vrot.slane %v2221, 1
        %v2232 = vrot.slane %v2222, 1
        %v2233 = vsel %vm1238, %v2231, %v2232
        %v2234 = vrot.slane %v2223, 1
        %v2235 = vsel %vm1238, %v2232, %v2234
        %v2236 = vrot.slane %v2224, 1
        %v2237 = vsel %vm1238, %v2234, %v2236
        %v2238 = vrot.slane %v2225, 1
        %v2239 = vsel %vm1238, %v2236, %v2238
        %v2244 = vadd.f32 %v2215, %v2233
        %v2245 = vadd.f32 %v2216, %v2235
        %v2246 = vadd.f32 %v2217, %v2237
        %v2247 = vadd.f32 %v2218, %v2239
        %v2248 = vld [vmem:[%s4 + $0x19] sm:$0x1]
        %v2249 = vperm.slane %v2248, 0
        %v2250 = vmul.f32 %v2249, %v2204
        %v2251 = vmul.f32 %v2249, %v2205
        %v2252 = vmul.f32 %v2249, %v2206
        %v2253 = vmul.f32 %v2249, %v2207
        %v2254 = vmul.f32 %v2249, %v2208
        %v2260 = vrot.slane %v2250, 2
        %v2261 = vrot.slane %v2251, 2
        %v2262 = vsel %vm1268, %v2260, %v2261
        %v2263 = vrot.slane %v2252, 2
        %v2264 = vsel %vm1268, %v2261, %v2263
        %v2265 = vrot.slane %v2253, 2
        %v2266 = vsel %vm1268, %v2263, %v2265
        %v2267 = vrot.slane %v2254, 2
        %v2268 = vsel %vm1268, %v2265, %v2267
        %v2273 = vadd.f32 %v2244, %v2262
        %v2274 = vadd.f32 %v2245, %v2264
        %v2275 = vadd.f32 %v2246, %v2266
        %v2276 = vadd.f32 %v2247, %v2268
        %2277 = vrot.lane.b32.xlu0 %v1996, 126
        %v2278 = vpop.permute.xlu0 %2277
        %2279 = vrot.lane.b32.xlu0 %v1997, 126
        %v2280 = vpop.permute.xlu0 %2279
        %2281 = vrot.lane.b32.xlu0 %v1998, 126
        %v2282 = vpop.permute.xlu0 %2281
        %2283 = vrot.lane.b32.xlu0 %v1999, 126
        %v2284 = vpop.permute.xlu0 %2283
        %2285 = vrot.lane.b32.xlu0 %v2000, 126
        %v2286 = vpop.permute.xlu0 %2285
        %2292 = vrot.lane.b32.xlu0 %v1996, 30
        %v2293 = vpop.permute.xlu0 %2292
        %2294 = vrot.lane.b32.xlu0 %v1997, 30
        %v2295 = vpop.permute.xlu0 %2294
        %2296 = vrot.lane.b32.xlu0 %v1998, 30
        %v2297 = vpop.permute.xlu0 %2296
        %2298 = vrot.lane.b32.xlu0 %v1999, 30
        %v2299 = vpop.permute.xlu0 %2298
        %2300 = vrot.lane.b32.xlu0 %v2000, 30
        %v2301 = vpop.permute.xlu0 %2300
        %2307 = vrot.lane.b32.xlu0 %v1996, 62
        %v2308 = vpop.permute.xlu0 %2307
        %2309 = vrot.lane.b32.xlu0 %v1997, 62
        %v2310 = vpop.permute.xlu0 %2309
        %2311 = vrot.lane.b32.xlu0 %v1998, 62
        %v2312 = vpop.permute.xlu0 %2311
        %2313 = vrot.lane.b32.xlu0 %v1999, 62
        %v2314 = vpop.permute.xlu0 %2313
        %2315 = vrot.lane.b32.xlu0 %v2000, 62
        %v2316 = vpop.permute.xlu0 %2315
        %2322 = vrot.lane.b32.xlu0 %v1996, 94
        %v2323 = vpop.permute.xlu0 %2322
        %2324 = vrot.lane.b32.xlu0 %v1997, 94
        %v2325 = vpop.permute.xlu0 %2324
        %2326 = vrot.lane.b32.xlu0 %v1998, 94
        %v2327 = vpop.permute.xlu0 %2326
        %2328 = vrot.lane.b32.xlu0 %v1999, 94
        %v2329 = vpop.permute.xlu0 %2328
        %2330 = vrot.lane.b32.xlu0 %v2000, 94
        %v2331 = vpop.permute.xlu0 %2330
        %v2337 = vsel %vm1198, %v2278, %v2293
        %v2338 = vsel %vm1198, %v2280, %v2295
        %v2339 = vsel %vm1198, %v2282, %v2297
        %v2340 = vsel %vm1198, %v2284, %v2299
        %v2341 = vsel %vm1198, %v2286, %v2301
        %v2342 = vsel %vm1204, %v2337, %v2308
        %v2343 = vsel %vm1204, %v2338, %v2310
        %v2344 = vsel %vm1204, %v2339, %v2312
        %v2345 = vsel %vm1204, %v2340, %v2314
        %v2346 = vsel %vm1204, %v2341, %v2316
        %v2347 = vsel %vm1210, %v2342, %v2323
        %v2348 = vsel %vm1210, %v2343, %v2325
        %v2349 = vsel %vm1210, %v2344, %v2327
        %v2350 = vsel %vm1210, %v2345, %v2329
        %v2351 = vsel %vm1210, %v2346, %v2331
        %v2352 = vld [vmem:[%s4 + $0x14] sm:$0x1]
        %v2353 = vperm.slane %v2352, 0
        %v2354 = vmul.f32 %v2353, %v2347
        %v2355 = vmul.f32 %v2353, %v2348
        %v2356 = vmul.f32 %v2353, %v2349
        %v2357 = vmul.f32 %v2353, %v2350
        %v2358 = vadd.f32 %v2273, %v2354
        %v2359 = vadd.f32 %v2274, %v2355
        %v2360 = vadd.f32 %v2275, %v2356
        %v2361 = vadd.f32 %v2276, %v2357
        %v2362 = vld [vmem:[%s4 + $0x17] sm:$0x1]
        %v2363 = vperm.slane %v2362, 0
        %v2364 = vmul.f32 %v2363, %v2347
        %v2365 = vmul.f32 %v2363, %v2348
        %v2366 = vmul.f32 %v2363, %v2349
        %v2367 = vmul.f32 %v2363, %v2350
        %v2368 = vmul.f32 %v2363, %v2351
        %v2374 = vrot.slane %v2364, 1
        %v2375 = vrot.slane %v2365, 1
        %v2376 = vsel %vm1238, %v2374, %v2375
        %v2377 = vrot.slane %v2366, 1
        %v2378 = vsel %vm1238, %v2375, %v2377
        %v2379 = vrot.slane %v2367, 1
        %v2380 = vsel %vm1238, %v2377, %v2379
        %v2381 = vrot.slane %v2368, 1
        %v2382 = vsel %vm1238, %v2379, %v2381
        %v2387 = vadd.f32 %v2358, %v2376
        %v2388 = vadd.f32 %v2359, %v2378
        %v2389 = vadd.f32 %v2360, %v2380
        %v2390 = vadd.f32 %v2361, %v2382
        %v2391 = vld [vmem:[%s4 + $0x1a] sm:$0x1]
        %v2392 = vperm.slane %v2391, 0
        %v2393 = vmul.f32 %v2392, %v2347
        %v2394 = vmul.f32 %v2392, %v2348
        %v2395 = vmul.f32 %v2392, %v2349
        %v2396 = vmul.f32 %v2392, %v2350
        %v2397 = vmul.f32 %v2392, %v2351
        %v2403 = vrot.slane %v2393, 2
        %v2404 = vrot.slane %v2394, 2
        %v2405 = vsel %vm1268, %v2403, %v2404
        %v2406 = vrot.slane %v2395, 2
        %v2407 = vsel %vm1268, %v2404, %v2406
        %v2408 = vrot.slane %v2396, 2
        %v2409 = vsel %vm1268, %v2406, %v2408
        %v2410 = vrot.slane %v2397, 2
        %v2411 = vsel %vm1268, %v2408, %v2410
        %v2416 = vadd.f32 %v2387, %v2405
        %v2417 = vadd.f32 %v2388, %v2407
        %v2418 = vadd.f32 %v2389, %v2409
        %v2419 = vadd.f32 %v2390, %v2411
        %v2420 = vld [vmem:[%s1028] sm:$0xff]
        %v2421 = vld [vmem:[%s1028 + $0x8] sm:$0xff]
        %v2422 = vld [vmem:[%s1028 + $0x10] sm:$0xff]
        %v2423 = vld [vmem:[%s1028 + $0x18] sm:$0xff]
        %v2424 = vld [vmem:[%s1028 + $0x20] sm:$0x3]
        %2430 = vrot.lane.b32.xlu0 %v2420, 32
        %v2431 = vpop.permute.xlu0 %2430
        %2432 = vrot.lane.b32.xlu0 %v2421, 32
        %v2433 = vpop.permute.xlu0 %2432
        %2434 = vrot.lane.b32.xlu0 %v2422, 32
        %v2435 = vpop.permute.xlu0 %2434
        %2436 = vrot.lane.b32.xlu0 %v2423, 32
        %v2437 = vpop.permute.xlu0 %2436
        %2438 = vrot.lane.b32.xlu0 %v2424, 32
        %v2439 = vpop.permute.xlu0 %2438
        %2445 = vrot.lane.b32.xlu0 %v2420, 64
        %v2446 = vpop.permute.xlu0 %2445
        %2447 = vrot.lane.b32.xlu0 %v2421, 64
        %v2448 = vpop.permute.xlu0 %2447
        %2449 = vrot.lane.b32.xlu0 %v2422, 64
        %v2450 = vpop.permute.xlu0 %2449
        %2451 = vrot.lane.b32.xlu0 %v2423, 64
        %v2452 = vpop.permute.xlu0 %2451
        %2453 = vrot.lane.b32.xlu0 %v2424, 64
        %v2454 = vpop.permute.xlu0 %2453
        %2460 = vrot.lane.b32.xlu0 %v2420, 96
        %v2461 = vpop.permute.xlu0 %2460
        %2462 = vrot.lane.b32.xlu0 %v2421, 96
        %v2463 = vpop.permute.xlu0 %2462
        %2464 = vrot.lane.b32.xlu0 %v2422, 96
        %v2465 = vpop.permute.xlu0 %2464
        %2466 = vrot.lane.b32.xlu0 %v2423, 96
        %v2467 = vpop.permute.xlu0 %2466
        %2468 = vrot.lane.b32.xlu0 %v2424, 96
        %v2469 = vpop.permute.xlu0 %2468
        %v2475 = vsel %vm1198, %v2420, %v2431
        %v2476 = vsel %vm1198, %v2421, %v2433
        %v2477 = vsel %vm1198, %v2422, %v2435
        %v2478 = vsel %vm1198, %v2423, %v2437
        %v2479 = vsel %vm1198, %v2424, %v2439
        %v2480 = vsel %vm1204, %v2475, %v2446
        %v2481 = vsel %vm1204, %v2476, %v2448
        %v2482 = vsel %vm1204, %v2477, %v2450
        %v2483 = vsel %vm1204, %v2478, %v2452
        %v2484 = vsel %vm1204, %v2479, %v2454
        %v2485 = vsel %vm1210, %v2480, %v2461
        %v2486 = vsel %vm1210, %v2481, %v2463
        %v2487 = vsel %vm1210, %v2482, %v2465
        %v2488 = vsel %vm1210, %v2483, %v2467
        %v2489 = vsel %vm1210, %v2484, %v2469
        %v2490 = vld [vmem:[%s4 + $0x1b] sm:$0x1]
        %v2491 = vperm.slane %v2490, 0
        %v2492 = vmul.f32 %v2491, %v2485
        %v2493 = vmul.f32 %v2491, %v2486
        %v2494 = vmul.f32 %v2491, %v2487
        %v2495 = vmul.f32 %v2491, %v2488
        %v2496 = vadd.f32 %v2416, %v2492
        %v2497 = vadd.f32 %v2417, %v2493
        %v2498 = vadd.f32 %v2418, %v2494
        %v2499 = vadd.f32 %v2419, %v2495
        %v2500 = vld [vmem:[%s4 + $0x1e] sm:$0x1]
        %v2501 = vperm.slane %v2500, 0
        %v2502 = vmul.f32 %v2501, %v2485
        %v2503 = vmul.f32 %v2501, %v2486
        %v2504 = vmul.f32 %v2501, %v2487
        %v2505 = vmul.f32 %v2501, %v2488
        %v2506 = vmul.f32 %v2501, %v2489
        %v2512 = vrot.slane %v2502, 1
        %v2513 = vrot.slane %v2503, 1
        %v2514 = vsel %vm1238, %v2512, %v2513
        %v2515 = vrot.slane %v2504, 1
        %v2516 = vsel %vm1238, %v2513, %v2515
        %v2517 = vrot.slane %v2505, 1
        %v2518 = vsel %vm1238, %v2515, %v2517
        %v2519 = vrot.slane %v2506, 1
        %v2520 = vsel %vm1238, %v2517, %v2519
        %v2525 = vadd.f32 %v2496, %v2514
        %v2526 = vadd.f32 %v2497, %v2516
        %v2527 = vadd.f32 %v2498, %v2518
        %v2528 = vadd.f32 %v2499, %v2520
        %v2529 = vld [vmem:[%s4 + $0x21] sm:$0x1]
        %v2530 = vperm.slane %v2529, 0
        %v2531 = vmul.f32 %v2530, %v2485
        %v2532 = vmul.f32 %v2530, %v2486
        %v2533 = vmul.f32 %v2530, %v2487
        %v2534 = vmul.f32 %v2530, %v2488
        %v2535 = vmul.f32 %v2530, %v2489
        %v2541 = vrot.slane %v2531, 2
        %v2542 = vrot.slane %v2532, 2
        %v2543 = vsel %vm1268, %v2541, %v2542
        %v2544 = vrot.slane %v2533, 2
        %v2545 = vsel %vm1268, %v2542, %v2544
        %v2546 = vrot.slane %v2534, 2
        %v2547 = vsel %vm1268, %v2544, %v2546
        %v2548 = vrot.slane %v2535, 2
        %v2549 = vsel %vm1268, %v2546, %v2548
        %v2554 = vadd.f32 %v2525, %v2543
        %v2555 = vadd.f32 %v2526, %v2545
        %v2556 = vadd.f32 %v2527, %v2547
        %v2557 = vadd.f32 %v2528, %v2549
        %2558 = vrot.lane.b32.xlu0 %v2420, 127
        %v2559 = vpop.permute.xlu0 %2558
        %2560 = vrot.lane.b32.xlu0 %v2421, 127
        %v2561 = vpop.permute.xlu0 %2560
        %2562 = vrot.lane.b32.xlu0 %v2422, 127
        %v2563 = vpop.permute.xlu0 %2562
        %2564 = vrot.lane.b32.xlu0 %v2423, 127
        %v2565 = vpop.permute.xlu0 %2564
        %2566 = vrot.lane.b32.xlu0 %v2424, 127
        %v2567 = vpop.permute.xlu0 %2566
        %2573 = vrot.lane.b32.xlu0 %v2420, 31
        %v2574 = vpop.permute.xlu0 %2573
        %2575 = vrot.lane.b32.xlu0 %v2421, 31
        %v2576 = vpop.permute.xlu0 %2575
        %2577 = vrot.lane.b32.xlu0 %v2422, 31
        %v2578 = vpop.permute.xlu0 %2577
        %2579 = vrot.lane.b32.xlu0 %v2423, 31
        %v2580 = vpop.permute.xlu0 %2579
        %2581 = vrot.lane.b32.xlu0 %v2424, 31
        %v2582 = vpop.permute.xlu0 %2581
        %2588 = vrot.lane.b32.xlu0 %v2420, 63
        %v2589 = vpop.permute.xlu0 %2588
        %2590 = vrot.lane.b32.xlu0 %v2421, 63
        %v2591 = vpop.permute.xlu0 %2590
        %2592 = vrot.lane.b32.xlu0 %v2422, 63
        %v2593 = vpop.permute.xlu0 %2592
        %2594 = vrot.lane.b32.xlu0 %v2423, 63
        %v2595 = vpop.permute.xlu0 %2594
        %2596 = vrot.lane.b32.xlu0 %v2424, 63
        %v2597 = vpop.permute.xlu0 %2596
        %2603 = vrot.lane.b32.xlu0 %v2420, 95
        %v2604 = vpop.permute.xlu0 %2603
        %2605 = vrot.lane.b32.xlu0 %v2421, 95
        %v2606 = vpop.permute.xlu0 %2605
        %2607 = vrot.lane.b32.xlu0 %v2422, 95
        %v2608 = vpop.permute.xlu0 %2607
        %2609 = vrot.lane.b32.xlu0 %v2423, 95
        %v2610 = vpop.permute.xlu0 %2609
        %2611 = vrot.lane.b32.xlu0 %v2424, 95
        %v2612 = vpop.permute.xlu0 %2611
        %v2618 = vsel %vm1198, %v2559, %v2574
        %v2619 = vsel %vm1198, %v2561, %v2576
        %v2620 = vsel %vm1198, %v2563, %v2578
        %v2621 = vsel %vm1198, %v2565, %v2580
        %v2622 = vsel %vm1198, %v2567, %v2582
        %v2623 = vsel %vm1204, %v2618, %v2589
        %v2624 = vsel %vm1204, %v2619, %v2591
        %v2625 = vsel %vm1204, %v2620, %v2593
        %v2626 = vsel %vm1204, %v2621, %v2595
        %v2627 = vsel %vm1204, %v2622, %v2597
        %v2628 = vsel %vm1210, %v2623, %v2604
        %v2629 = vsel %vm1210, %v2624, %v2606
        %v2630 = vsel %vm1210, %v2625, %v2608
        %v2631 = vsel %vm1210, %v2626, %v2610
        %v2632 = vsel %vm1210, %v2627, %v2612
        %v2633 = vld [vmem:[%s4 + $0x1c] sm:$0x1]
        %v2634 = vperm.slane %v2633, 0
        %v2635 = vmul.f32 %v2634, %v2628
        %v2636 = vmul.f32 %v2634, %v2629
        %v2637 = vmul.f32 %v2634, %v2630
        %v2638 = vmul.f32 %v2634, %v2631
        %v2639 = vadd.f32 %v2554, %v2635
        %v2640 = vadd.f32 %v2555, %v2636
        %v2641 = vadd.f32 %v2556, %v2637
        %v2642 = vadd.f32 %v2557, %v2638
        %v2643 = vld [vmem:[%s4 + $0x1f] sm:$0x1]
        %v2644 = vperm.slane %v2643, 0
        %v2645 = vmul.f32 %v2644, %v2628
        %v2646 = vmul.f32 %v2644, %v2629
        %v2647 = vmul.f32 %v2644, %v2630
        %v2648 = vmul.f32 %v2644, %v2631
        %v2649 = vmul.f32 %v2644, %v2632
        %v2655 = vrot.slane %v2645, 1
        %v2656 = vrot.slane %v2646, 1
        %v2657 = vsel %vm1238, %v2655, %v2656
        %v2658 = vrot.slane %v2647, 1
        %v2659 = vsel %vm1238, %v2656, %v2658
        %v2660 = vrot.slane %v2648, 1
        %v2661 = vsel %vm1238, %v2658, %v2660
        %v2662 = vrot.slane %v2649, 1
        %v2663 = vsel %vm1238, %v2660, %v2662
        %v2668 = vadd.f32 %v2639, %v2657
        %v2669 = vadd.f32 %v2640, %v2659
        %v2670 = vadd.f32 %v2641, %v2661
        %v2671 = vadd.f32 %v2642, %v2663
        %v2672 = vld [vmem:[%s4 + $0x22] sm:$0x1]
        %v2673 = vperm.slane %v2672, 0
        %v2674 = vmul.f32 %v2673, %v2628
        %v2675 = vmul.f32 %v2673, %v2629
        %v2676 = vmul.f32 %v2673, %v2630
        %v2677 = vmul.f32 %v2673, %v2631
        %v2678 = vmul.f32 %v2673, %v2632
        %v2684 = vrot.slane %v2674, 2
        %v2685 = vrot.slane %v2675, 2
        %v2686 = vsel %vm1268, %v2684, %v2685
        %v2687 = vrot.slane %v2676, 2
        %v2688 = vsel %vm1268, %v2685, %v2687
        %v2689 = vrot.slane %v2677, 2
        %v2690 = vsel %vm1268, %v2687, %v2689
        %v2691 = vrot.slane %v2678, 2
        %v2692 = vsel %vm1268, %v2689, %v2691
        %v2697 = vadd.f32 %v2668, %v2686
        %v2698 = vadd.f32 %v2669, %v2688
        %v2699 = vadd.f32 %v2670, %v2690
        %v2700 = vadd.f32 %v2671, %v2692
        %2701 = vrot.lane.b32.xlu0 %v2420, 126
        %v2702 = vpop.permute.xlu0 %2701
        %2703 = vrot.lane.b32.xlu0 %v2421, 126
        %v2704 = vpop.permute.xlu0 %2703
        %2705 = vrot.lane.b32.xlu0 %v2422, 126
        %v2706 = vpop.permute.xlu0 %2705
        %2707 = vrot.lane.b32.xlu0 %v2423, 126
        %v2708 = vpop.permute.xlu0 %2707
        %2709 = vrot.lane.b32.xlu0 %v2424, 126
        %v2710 = vpop.permute.xlu0 %2709
        %2716 = vrot.lane.b32.xlu0 %v2420, 30
        %v2717 = vpop.permute.xlu0 %2716
        %2718 = vrot.lane.b32.xlu0 %v2421, 30
        %v2719 = vpop.permute.xlu0 %2718
        %2720 = vrot.lane.b32.xlu0 %v2422, 30
        %v2721 = vpop.permute.xlu0 %2720
        %2722 = vrot.lane.b32.xlu0 %v2423, 30
        %v2723 = vpop.permute.xlu0 %2722
        %2724 = vrot.lane.b32.xlu0 %v2424, 30
        %v2725 = vpop.permute.xlu0 %2724
        %2731 = vrot.lane.b32.xlu0 %v2420, 62
        %v2732 = vpop.permute.xlu0 %2731
        %2733 = vrot.lane.b32.xlu0 %v2421, 62
        %v2734 = vpop.permute.xlu0 %2733
        %2735 = vrot.lane.b32.xlu0 %v2422, 62
        %v2736 = vpop.permute.xlu0 %2735
        %2737 = vrot.lane.b32.xlu0 %v2423, 62
        %v2738 = vpop.permute.xlu0 %2737
        %2739 = vrot.lane.b32.xlu0 %v2424, 62
        %v2740 = vpop.permute.xlu0 %2739
        %2746 = vrot.lane.b32.xlu0 %v2420, 94
        %v2747 = vpop.permute.xlu0 %2746
        %2748 = vrot.lane.b32.xlu0 %v2421, 94
        %v2749 = vpop.permute.xlu0 %2748
        %2750 = vrot.lane.b32.xlu0 %v2422, 94
        %v2751 = vpop.permute.xlu0 %2750
        %2752 = vrot.lane.b32.xlu0 %v2423, 94
        %v2753 = vpop.permute.xlu0 %2752
        %2754 = vrot.lane.b32.xlu0 %v2424, 94
        %v2755 = vpop.permute.xlu0 %2754
        %v2761 = vsel %vm1198, %v2702, %v2717
        %v2762 = vsel %vm1198, %v2704, %v2719
        %v2763 = vsel %vm1198, %v2706, %v2721
        %v2764 = vsel %vm1198, %v2708, %v2723
        %v2765 = vsel %vm1198, %v2710, %v2725
        %v2766 = vsel %vm1204, %v2761, %v2732
        %v2767 = vsel %vm1204, %v2762, %v2734
        %v2768 = vsel %vm1204, %v2763, %v2736
        %v2769 = vsel %vm1204, %v2764, %v2738
        %v2770 = vsel %vm1204, %v2765, %v2740
        %v2771 = vsel %vm1210, %v2766, %v2747
        %v2772 = vsel %vm1210, %v2767, %v2749
        %v2773 = vsel %vm1210, %v2768, %v2751
        %v2774 = vsel %vm1210, %v2769, %v2753
        %v2775 = vsel %vm1210, %v2770, %v2755
        %v2776 = vld [vmem:[%s4 + $0x1d] sm:$0x1]
        %v2777 = vperm.slane %v2776, 0
        %v2778 = vmul.f32 %v2777, %v2771
        %v2779 = vmul.f32 %v2777, %v2772
        %v2780 = vmul.f32 %v2777, %v2773
        %v2781 = vmul.f32 %v2777, %v2774
        %v2782 = vadd.f32 %v2697, %v2778
        %v2783 = vadd.f32 %v2698, %v2779
        %v2784 = vadd.f32 %v2699, %v2780
        %v2785 = vadd.f32 %v2700, %v2781
        %v2786 = vld [vmem:[%s4 + $0x20] sm:$0x1]
        %v2787 = vperm.slane %v2786, 0
        %v2788 = vmul.f32 %v2787, %v2771
        %v2789 = vmul.f32 %v2787, %v2772
        %v2790 = vmul.f32 %v2787, %v2773
        %v2791 = vmul.f32 %v2787, %v2774
        %v2792 = vmul.f32 %v2787, %v2775
        %v2798 = vrot.slane %v2788, 1
        %v2799 = vrot.slane %v2789, 1
        %v2800 = vsel %vm1238, %v2798, %v2799
        %v2801 = vrot.slane %v2790, 1
        %v2802 = vsel %vm1238, %v2799, %v2801
        %v2803 = vrot.slane %v2791, 1
        %v2804 = vsel %vm1238, %v2801, %v2803
        %v2805 = vrot.slane %v2792, 1
        %v2806 = vsel %vm1238, %v2803, %v2805
        %v2811 = vadd.f32 %v2782, %v2800
        %v2812 = vadd.f32 %v2783, %v2802
        %v2813 = vadd.f32 %v2784, %v2804
        %v2814 = vadd.f32 %v2785, %v2806
        %v2815 = vld [vmem:[%s4 + $0x23] sm:$0x1]
        %v2816 = vperm.slane %v2815, 0
        %v2817 = vmul.f32 %v2816, %v2771
        %v2818 = vmul.f32 %v2816, %v2772
        %v2819 = vmul.f32 %v2816, %v2773
        %v2820 = vmul.f32 %v2816, %v2774
        %v2821 = vmul.f32 %v2816, %v2775
        %v2827 = vrot.slane %v2817, 2
        %v2828 = vrot.slane %v2818, 2
        %v2829 = vsel %vm1268, %v2827, %v2828
        %v2830 = vrot.slane %v2819, 2
        %v2831 = vsel %vm1268, %v2828, %v2830
        %v2832 = vrot.slane %v2820, 2
        %v2833 = vsel %vm1268, %v2830, %v2832
        %v2834 = vrot.slane %v2821, 2
        %v2835 = vsel %vm1268, %v2832, %v2834
        %v2840 = vadd.f32 %v2811, %v2829
        %v2841 = vadd.f32 %v2812, %v2831
        %v2842 = vadd.f32 %v2813, %v2833
        %v2843 = vadd.f32 %v2814, %v2835
        %v2844 = vld [vmem:[%s1054] sm:$0xff]
        %v2845 = vld [vmem:[%s1054 + $0x8] sm:$0xff]
        %v2846 = vld [vmem:[%s1054 + $0x10] sm:$0xff]
        %v2847 = vld [vmem:[%s1054 + $0x18] sm:$0xff]
        %v2848 = vld [vmem:[%s1054 + $0x20] sm:$0x3]
        %2854 = vrot.lane.b32.xlu0 %v2844, 32
        %v2855 = vpop.permute.xlu0 %2854
        %2856 = vrot.lane.b32.xlu0 %v2845, 32
        %v2857 = vpop.permute.xlu0 %2856
        %2858 = vrot.lane.b32.xlu0 %v2846, 32
        %v2859 = vpop.permute.xlu0 %2858
        %2860 = vrot.lane.b32.xlu0 %v2847, 32
        %v2861 = vpop.permute.xlu0 %2860
        %2862 = vrot.lane.b32.xlu0 %v2848, 32
        %v2863 = vpop.permute.xlu0 %2862
        %2869 = vrot.lane.b32.xlu0 %v2844, 64
        %v2870 = vpop.permute.xlu0 %2869
        %2871 = vrot.lane.b32.xlu0 %v2845, 64
        %v2872 = vpop.permute.xlu0 %2871
        %2873 = vrot.lane.b32.xlu0 %v2846, 64
        %v2874 = vpop.permute.xlu0 %2873
        %2875 = vrot.lane.b32.xlu0 %v2847, 64
        %v2876 = vpop.permute.xlu0 %2875
        %2877 = vrot.lane.b32.xlu0 %v2848, 64
        %v2878 = vpop.permute.xlu0 %2877
        %2884 = vrot.lane.b32.xlu0 %v2844, 96
        %v2885 = vpop.permute.xlu0 %2884
        %2886 = vrot.lane.b32.xlu0 %v2845, 96
        %v2887 = vpop.permute.xlu0 %2886
        %2888 = vrot.lane.b32.xlu0 %v2846, 96
        %v2889 = vpop.permute.xlu0 %2888
        %2890 = vrot.lane.b32.xlu0 %v2847, 96
        %v2891 = vpop.permute.xlu0 %2890
        %2892 = vrot.lane.b32.xlu0 %v2848, 96
        %v2893 = vpop.permute.xlu0 %2892
        %v2899 = vsel %vm1198, %v2844, %v2855
        %v2900 = vsel %vm1198, %v2845, %v2857
        %v2901 = vsel %vm1198, %v2846, %v2859
        %v2902 = vsel %vm1198, %v2847, %v2861
        %v2903 = vsel %vm1198, %v2848, %v2863
        %v2904 = vsel %vm1204, %v2899, %v2870
        %v2905 = vsel %vm1204, %v2900, %v2872
        %v2906 = vsel %vm1204, %v2901, %v2874
        %v2907 = vsel %vm1204, %v2902, %v2876
        %v2908 = vsel %vm1204, %v2903, %v2878
        %v2909 = vsel %vm1210, %v2904, %v2885
        %v2910 = vsel %vm1210, %v2905, %v2887
        %v2911 = vsel %vm1210, %v2906, %v2889
        %v2912 = vsel %vm1210, %v2907, %v2891
        %v2913 = vsel %vm1210, %v2908, %v2893
        %v2914 = vld [vmem:[%s4 + $0x24] sm:$0x1]
        %v2915 = vperm.slane %v2914, 0
        %v2916 = vmul.f32 %v2915, %v2909
        %v2917 = vmul.f32 %v2915, %v2910
        %v2918 = vmul.f32 %v2915, %v2911
        %v2919 = vmul.f32 %v2915, %v2912
        %v2920 = vadd.f32 %v2840, %v2916
        %v2921 = vadd.f32 %v2841, %v2917
        %v2922 = vadd.f32 %v2842, %v2918
        %v2923 = vadd.f32 %v2843, %v2919
        %v2924 = vld [vmem:[%s4 + $0x27] sm:$0x1]
        %v2925 = vperm.slane %v2924, 0
        %v2926 = vmul.f32 %v2925, %v2909
        %v2927 = vmul.f32 %v2925, %v2910
        %v2928 = vmul.f32 %v2925, %v2911
        %v2929 = vmul.f32 %v2925, %v2912
        %v2930 = vmul.f32 %v2925, %v2913
        %v2936 = vrot.slane %v2926, 1
        %v2937 = vrot.slane %v2927, 1
        %v2938 = vsel %vm1238, %v2936, %v2937
        %v2939 = vrot.slane %v2928, 1
        %v2940 = vsel %vm1238, %v2937, %v2939
        %v2941 = vrot.slane %v2929, 1
        %v2942 = vsel %vm1238, %v2939, %v2941
        %v2943 = vrot.slane %v2930, 1
        %v2944 = vsel %vm1238, %v2941, %v2943
        %v2949 = vadd.f32 %v2920, %v2938
        %v2950 = vadd.f32 %v2921, %v2940
        %v2951 = vadd.f32 %v2922, %v2942
        %v2952 = vadd.f32 %v2923, %v2944
        %v2953 = vld [vmem:[%s4 + $0x2a] sm:$0x1]
        %v2954 = vperm.slane %v2953, 0
        %v2955 = vmul.f32 %v2954, %v2909
        %v2956 = vmul.f32 %v2954, %v2910
        %v2957 = vmul.f32 %v2954, %v2911
        %v2958 = vmul.f32 %v2954, %v2912
        %v2959 = vmul.f32 %v2954, %v2913
        %v2965 = vrot.slane %v2955, 2
        %v2966 = vrot.slane %v2956, 2
        %v2967 = vsel %vm1268, %v2965, %v2966
        %v2968 = vrot.slane %v2957, 2
        %v2969 = vsel %vm1268, %v2966, %v2968
        %v2970 = vrot.slane %v2958, 2
        %v2971 = vsel %vm1268, %v2968, %v2970
        %v2972 = vrot.slane %v2959, 2
        %v2973 = vsel %vm1268, %v2970, %v2972
        %v2978 = vadd.f32 %v2949, %v2967
        %v2979 = vadd.f32 %v2950, %v2969
        %v2980 = vadd.f32 %v2951, %v2971
        %v2981 = vadd.f32 %v2952, %v2973
        %2982 = vrot.lane.b32.xlu0 %v2844, 127
        %v2983 = vpop.permute.xlu0 %2982
        %2984 = vrot.lane.b32.xlu0 %v2845, 127
        %v2985 = vpop.permute.xlu0 %2984
        %2986 = vrot.lane.b32.xlu0 %v2846, 127
        %v2987 = vpop.permute.xlu0 %2986
        %2988 = vrot.lane.b32.xlu0 %v2847, 127
        %v2989 = vpop.permute.xlu0 %2988
        %2990 = vrot.lane.b32.xlu0 %v2848, 127
        %v2991 = vpop.permute.xlu0 %2990
        %2997 = vrot.lane.b32.xlu0 %v2844, 31
        %v2998 = vpop.permute.xlu0 %2997
        %2999 = vrot.lane.b32.xlu0 %v2845, 31
        %v3000 = vpop.permute.xlu0 %2999
        %3001 = vrot.lane.b32.xlu0 %v2846, 31
        %v3002 = vpop.permute.xlu0 %3001
        %3003 = vrot.lane.b32.xlu0 %v2847, 31
        %v3004 = vpop.permute.xlu0 %3003
        %3005 = vrot.lane.b32.xlu0 %v2848, 31
        %v3006 = vpop.permute.xlu0 %3005
        %3012 = vrot.lane.b32.xlu0 %v2844, 63
        %v3013 = vpop.permute.xlu0 %3012
        %3014 = vrot.lane.b32.xlu0 %v2845, 63
        %v3015 = vpop.permute.xlu0 %3014
        %3016 = vrot.lane.b32.xlu0 %v2846, 63
        %v3017 = vpop.permute.xlu0 %3016
        %3018 = vrot.lane.b32.xlu0 %v2847, 63
        %v3019 = vpop.permute.xlu0 %3018
        %3020 = vrot.lane.b32.xlu0 %v2848, 63
        %v3021 = vpop.permute.xlu0 %3020
        %3027 = vrot.lane.b32.xlu0 %v2844, 95
        %v3028 = vpop.permute.xlu0 %3027
        %3029 = vrot.lane.b32.xlu0 %v2845, 95
        %v3030 = vpop.permute.xlu0 %3029
        %3031 = vrot.lane.b32.xlu0 %v2846, 95
        %v3032 = vpop.permute.xlu0 %3031
        %3033 = vrot.lane.b32.xlu0 %v2847, 95
        %v3034 = vpop.permute.xlu0 %3033
        %3035 = vrot.lane.b32.xlu0 %v2848, 95
        %v3036 = vpop.permute.xlu0 %3035
        %v3042 = vsel %vm1198, %v2983, %v2998
        %v3043 = vsel %vm1198, %v2985, %v3000
        %v3044 = vsel %vm1198, %v2987, %v3002
        %v3045 = vsel %vm1198, %v2989, %v3004
        %v3046 = vsel %vm1198, %v2991, %v3006
        %v3047 = vsel %vm1204, %v3042, %v3013
        %v3048 = vsel %vm1204, %v3043, %v3015
        %v3049 = vsel %vm1204, %v3044, %v3017
        %v3050 = vsel %vm1204, %v3045, %v3019
        %v3051 = vsel %vm1204, %v3046, %v3021
        %v3052 = vsel %vm1210, %v3047, %v3028
        %v3053 = vsel %vm1210, %v3048, %v3030
        %v3054 = vsel %vm1210, %v3049, %v3032
        %v3055 = vsel %vm1210, %v3050, %v3034
        %v3056 = vsel %vm1210, %v3051, %v3036
        %v3057 = vld [vmem:[%s4 + $0x25] sm:$0x1]
        %v3058 = vperm.slane %v3057, 0
        %v3059 = vmul.f32 %v3058, %v3052
        %v3060 = vmul.f32 %v3058, %v3053
        %v3061 = vmul.f32 %v3058, %v3054
        %v3062 = vmul.f32 %v3058, %v3055
        %v3063 = vadd.f32 %v2978, %v3059
        %v3064 = vadd.f32 %v2979, %v3060
        %v3065 = vadd.f32 %v2980, %v3061
        %v3066 = vadd.f32 %v2981, %v3062
        %v3067 = vld [vmem:[%s4 + $0x28] sm:$0x1]
        %v3068 = vperm.slane %v3067, 0
        %v3069 = vmul.f32 %v3068, %v3052
        %v3070 = vmul.f32 %v3068, %v3053
        %v3071 = vmul.f32 %v3068, %v3054
        %v3072 = vmul.f32 %v3068, %v3055
        %v3073 = vmul.f32 %v3068, %v3056
        %v3079 = vrot.slane %v3069, 1
        %v3080 = vrot.slane %v3070, 1
        %v3081 = vsel %vm1238, %v3079, %v3080
        %v3082 = vrot.slane %v3071, 1
        %v3083 = vsel %vm1238, %v3080, %v3082
        %v3084 = vrot.slane %v3072, 1
        %v3085 = vsel %vm1238, %v3082, %v3084
        %v3086 = vrot.slane %v3073, 1
        %v3087 = vsel %vm1238, %v3084, %v3086
        %v3092 = vadd.f32 %v3063, %v3081
        %v3093 = vadd.f32 %v3064, %v3083
        %v3094 = vadd.f32 %v3065, %v3085
        %v3095 = vadd.f32 %v3066, %v3087
        %v3096 = vld [vmem:[%s4 + $0x2b] sm:$0x1]
        %v3097 = vperm.slane %v3096, 0
        %v3098 = vmul.f32 %v3097, %v3052
        %v3099 = vmul.f32 %v3097, %v3053
        %v3100 = vmul.f32 %v3097, %v3054
        %v3101 = vmul.f32 %v3097, %v3055
        %v3102 = vmul.f32 %v3097, %v3056
        %v3108 = vrot.slane %v3098, 2
        %v3109 = vrot.slane %v3099, 2
        %v3110 = vsel %vm1268, %v3108, %v3109
        %v3111 = vrot.slane %v3100, 2
        %v3112 = vsel %vm1268, %v3109, %v3111
        %v3113 = vrot.slane %v3101, 2
        %v3114 = vsel %vm1268, %v3111, %v3113
        %v3115 = vrot.slane %v3102, 2
        %v3116 = vsel %vm1268, %v3113, %v3115
        %v3121 = vadd.f32 %v3092, %v3110
        %v3122 = vadd.f32 %v3093, %v3112
        %v3123 = vadd.f32 %v3094, %v3114
        %v3124 = vadd.f32 %v3095, %v3116
        %3125 = vrot.lane.b32.xlu0 %v2844, 126
        %v3126 = vpop.permute.xlu0 %3125
        %3127 = vrot.lane.b32.xlu0 %v2845, 126
        %v3128 = vpop.permute.xlu0 %3127
        %3129 = vrot.lane.b32.xlu0 %v2846, 126
        %v3130 = vpop.permute.xlu0 %3129
        %3131 = vrot.lane.b32.xlu0 %v2847, 126
        %v3132 = vpop.permute.xlu0 %3131
        %3133 = vrot.lane.b32.xlu0 %v2848, 126
        %v3134 = vpop.permute.xlu0 %3133
        %3140 = vrot.lane.b32.xlu0 %v2844, 30
        %v3141 = vpop.permute.xlu0 %3140
        %3142 = vrot.lane.b32.xlu0 %v2845, 30
        %v3143 = vpop.permute.xlu0 %3142
        %3144 = vrot.lane.b32.xlu0 %v2846, 30
        %v3145 = vpop.permute.xlu0 %3144
        %3146 = vrot.lane.b32.xlu0 %v2847, 30
        %v3147 = vpop.permute.xlu0 %3146
        %3148 = vrot.lane.b32.xlu0 %v2848, 30
        %v3149 = vpop.permute.xlu0 %3148
        %3155 = vrot.lane.b32.xlu0 %v2844, 62
        %v3156 = vpop.permute.xlu0 %3155
        %3157 = vrot.lane.b32.xlu0 %v2845, 62
        %v3158 = vpop.permute.xlu0 %3157
        %3159 = vrot.lane.b32.xlu0 %v2846, 62
        %v3160 = vpop.permute.xlu0 %3159
        %3161 = vrot.lane.b32.xlu0 %v2847, 62
        %v3162 = vpop.permute.xlu0 %3161
        %3163 = vrot.lane.b32.xlu0 %v2848, 62
        %v3164 = vpop.permute.xlu0 %3163
        %3170 = vrot.lane.b32.xlu0 %v2844, 94
        %v3171 = vpop.permute.xlu0 %3170
        %3172 = vrot.lane.b32.xlu0 %v2845, 94
        %v3173 = vpop.permute.xlu0 %3172
        %3174 = vrot.lane.b32.xlu0 %v2846, 94
        %v3175 = vpop.permute.xlu0 %3174
        %3176 = vrot.lane.b32.xlu0 %v2847, 94
        %v3177 = vpop.permute.xlu0 %3176
        %3178 = vrot.lane.b32.xlu0 %v2848, 94
        %v3179 = vpop.permute.xlu0 %3178
        %v3185 = vsel %vm1198, %v3126, %v3141
        %v3186 = vsel %vm1198, %v3128, %v3143
        %v3187 = vsel %vm1198, %v3130, %v3145
        %v3188 = vsel %vm1198, %v3132, %v3147
        %v3189 = vsel %vm1198, %v3134, %v3149
        %v3190 = vsel %vm1204, %v3185, %v3156
        %v3191 = vsel %vm1204, %v3186, %v3158
        %v3192 = vsel %vm1204, %v3187, %v3160
        %v3193 = vsel %vm1204, %v3188, %v3162
        %v3194 = vsel %vm1204, %v3189, %v3164
        %v3195 = vsel %vm1210, %v3190, %v3171
        %v3196 = vsel %vm1210, %v3191, %v3173
        %v3197 = vsel %vm1210, %v3192, %v3175
        %v3198 = vsel %vm1210, %v3193, %v3177
        %v3199 = vsel %vm1210, %v3194, %v3179
        %v3200 = vld [vmem:[%s4 + $0x26] sm:$0x1]
        %v3201 = vperm.slane %v3200, 0
        %v3202 = vmul.f32 %v3201, %v3195
        %v3203 = vmul.f32 %v3201, %v3196
        %v3204 = vmul.f32 %v3201, %v3197
        %v3205 = vmul.f32 %v3201, %v3198
        %v3206 = vadd.f32 %v3121, %v3202
        %v3207 = vadd.f32 %v3122, %v3203
        %v3208 = vadd.f32 %v3123, %v3204
        %v3209 = vadd.f32 %v3124, %v3205
        %v3210 = vld [vmem:[%s4 + $0x29] sm:$0x1]
        %v3211 = vperm.slane %v3210, 0
        %v3212 = vmul.f32 %v3211, %v3195
        %v3213 = vmul.f32 %v3211, %v3196
        %v3214 = vmul.f32 %v3211, %v3197
        %v3215 = vmul.f32 %v3211, %v3198
        %v3216 = vmul.f32 %v3211, %v3199
        %v3222 = vrot.slane %v3212, 1
        %v3223 = vrot.slane %v3213, 1
        %v3224 = vsel %vm1238, %v3222, %v3223
        %v3225 = vrot.slane %v3214, 1
        %v3226 = vsel %vm1238, %v3223, %v3225
        %v3227 = vrot.slane %v3215, 1
        %v3228 = vsel %vm1238, %v3225, %v3227
        %v3229 = vrot.slane %v3216, 1
        %v3230 = vsel %vm1238, %v3227, %v3229
        %v3235 = vadd.f32 %v3206, %v3224
        %v3236 = vadd.f32 %v3207, %v3226
        %v3237 = vadd.f32 %v3208, %v3228
        %v3238 = vadd.f32 %v3209, %v3230
        %v3239 = vld [vmem:[%s4 + $0x2c] sm:$0x1]
        %v3240 = vperm.slane %v3239, 0
        %v3241 = vmul.f32 %v3240, %v3195
        %v3242 = vmul.f32 %v3240, %v3196
        %v3243 = vmul.f32 %v3240, %v3197
        %v3244 = vmul.f32 %v3240, %v3198
        %v3245 = vmul.f32 %v3240, %v3199
        %v3251 = vrot.slane %v3241, 2
        %v3252 = vrot.slane %v3242, 2
        %v3253 = vsel %vm1268, %v3251, %v3252
        %v3254 = vrot.slane %v3243, 2
        %v3255 = vsel %vm1268, %v3252, %v3254
        %v3256 = vrot.slane %v3244, 2
        %v3257 = vsel %vm1268, %v3254, %v3256
        %v3258 = vrot.slane %v3245, 2
        %v3259 = vsel %vm1268, %v3256, %v3258
        %v3264 = vadd.f32 %v3235, %v3253
        %v3265 = vadd.f32 %v3236, %v3255
        %v3266 = vadd.f32 %v3237, %v3257
        %v3267 = vadd.f32 %v3238, %v3259
        %v3268 = vld [vmem:[%s1081] sm:$0xff]
        %v3269 = vld [vmem:[%s1081 + $0x8] sm:$0xff]
        %v3270 = vld [vmem:[%s1081 + $0x10] sm:$0xff]
        %v3271 = vld [vmem:[%s1081 + $0x18] sm:$0xff]
        %v3272 = vld [vmem:[%s1081 + $0x20] sm:$0x3]
        %3278 = vrot.lane.b32.xlu0 %v3268, 32
        %v3279 = vpop.permute.xlu0 %3278
        %3280 = vrot.lane.b32.xlu0 %v3269, 32
        %v3281 = vpop.permute.xlu0 %3280
        %3282 = vrot.lane.b32.xlu0 %v3270, 32
        %v3283 = vpop.permute.xlu0 %3282
        %3284 = vrot.lane.b32.xlu0 %v3271, 32
        %v3285 = vpop.permute.xlu0 %3284
        %3286 = vrot.lane.b32.xlu0 %v3272, 32
        %v3287 = vpop.permute.xlu0 %3286
        %3293 = vrot.lane.b32.xlu0 %v3268, 64
        %v3294 = vpop.permute.xlu0 %3293
        %3295 = vrot.lane.b32.xlu0 %v3269, 64
        %v3296 = vpop.permute.xlu0 %3295
        %3297 = vrot.lane.b32.xlu0 %v3270, 64
        %v3298 = vpop.permute.xlu0 %3297
        %3299 = vrot.lane.b32.xlu0 %v3271, 64
        %v3300 = vpop.permute.xlu0 %3299
        %3301 = vrot.lane.b32.xlu0 %v3272, 64
        %v3302 = vpop.permute.xlu0 %3301
        %3308 = vrot.lane.b32.xlu0 %v3268, 96
        %v3309 = vpop.permute.xlu0 %3308
        %3310 = vrot.lane.b32.xlu0 %v3269, 96
        %v3311 = vpop.permute.xlu0 %3310
        %3312 = vrot.lane.b32.xlu0 %v3270, 96
        %v3313 = vpop.permute.xlu0 %3312
        %3314 = vrot.lane.b32.xlu0 %v3271, 96
        %v3315 = vpop.permute.xlu0 %3314
        %3316 = vrot.lane.b32.xlu0 %v3272, 96
        %v3317 = vpop.permute.xlu0 %3316
        %v3323 = vsel %vm1198, %v3268, %v3279
        %v3324 = vsel %vm1198, %v3269, %v3281
        %v3325 = vsel %vm1198, %v3270, %v3283
        %v3326 = vsel %vm1198, %v3271, %v3285
        %v3327 = vsel %vm1198, %v3272, %v3287
        %v3328 = vsel %vm1204, %v3323, %v3294
        %v3329 = vsel %vm1204, %v3324, %v3296
        %v3330 = vsel %vm1204, %v3325, %v3298
        %v3331 = vsel %vm1204, %v3326, %v3300
        %v3332 = vsel %vm1204, %v3327, %v3302
        %v3333 = vsel %vm1210, %v3328, %v3309
        %v3334 = vsel %vm1210, %v3329, %v3311
        %v3335 = vsel %vm1210, %v3330, %v3313
        %v3336 = vsel %vm1210, %v3331, %v3315
        %v3337 = vsel %vm1210, %v3332, %v3317
        %v3338 = vld [vmem:[%s4 + $0x2d] sm:$0x1]
        %v3339 = vperm.slane %v3338, 0
        %v3340 = vmul.f32 %v3339, %v3333
        %v3341 = vmul.f32 %v3339, %v3334
        %v3342 = vmul.f32 %v3339, %v3335
        %v3343 = vmul.f32 %v3339, %v3336
        %v3344 = vadd.f32 %v3264, %v3340
        %v3345 = vadd.f32 %v3265, %v3341
        %v3346 = vadd.f32 %v3266, %v3342
        %v3347 = vadd.f32 %v3267, %v3343
        %v3348 = vld [vmem:[%s4 + $0x30] sm:$0x1]
        %v3349 = vperm.slane %v3348, 0
        %v3350 = vmul.f32 %v3349, %v3333
        %v3351 = vmul.f32 %v3349, %v3334
        %v3352 = vmul.f32 %v3349, %v3335
        %v3353 = vmul.f32 %v3349, %v3336
        %v3354 = vmul.f32 %v3349, %v3337
        %v3360 = vrot.slane %v3350, 1
        %v3361 = vrot.slane %v3351, 1
        %v3362 = vsel %vm1238, %v3360, %v3361
        %v3363 = vrot.slane %v3352, 1
        %v3364 = vsel %vm1238, %v3361, %v3363
        %v3365 = vrot.slane %v3353, 1
        %v3366 = vsel %vm1238, %v3363, %v3365
        %v3367 = vrot.slane %v3354, 1
        %v3368 = vsel %vm1238, %v3365, %v3367
        %v3373 = vadd.f32 %v3344, %v3362
        %v3374 = vadd.f32 %v3345, %v3364
        %v3375 = vadd.f32 %v3346, %v3366
        %v3376 = vadd.f32 %v3347, %v3368
        %v3377 = vld [vmem:[%s4 + $0x33] sm:$0x1]
        %v3378 = vperm.slane %v3377, 0
        %v3379 = vmul.f32 %v3378, %v3333
        %v3380 = vmul.f32 %v3378, %v3334
        %v3381 = vmul.f32 %v3378, %v3335
        %v3382 = vmul.f32 %v3378, %v3336
        %v3383 = vmul.f32 %v3378, %v3337
        %v3389 = vrot.slane %v3379, 2
        %v3390 = vrot.slane %v3380, 2
        %v3391 = vsel %vm1268, %v3389, %v3390
        %v3392 = vrot.slane %v3381, 2
        %v3393 = vsel %vm1268, %v3390, %v3392
        %v3394 = vrot.slane %v3382, 2
        %v3395 = vsel %vm1268, %v3392, %v3394
        %v3396 = vrot.slane %v3383, 2
        %v3397 = vsel %vm1268, %v3394, %v3396
        %v3402 = vadd.f32 %v3373, %v3391
        %v3403 = vadd.f32 %v3374, %v3393
        %v3404 = vadd.f32 %v3375, %v3395
        %v3405 = vadd.f32 %v3376, %v3397
        %3406 = vrot.lane.b32.xlu0 %v3268, 127
        %v3407 = vpop.permute.xlu0 %3406
        %3408 = vrot.lane.b32.xlu0 %v3269, 127
        %v3409 = vpop.permute.xlu0 %3408
        %3410 = vrot.lane.b32.xlu0 %v3270, 127
        %v3411 = vpop.permute.xlu0 %3410
        %3412 = vrot.lane.b32.xlu0 %v3271, 127
        %v3413 = vpop.permute.xlu0 %3412
        %3414 = vrot.lane.b32.xlu0 %v3272, 127
        %v3415 = vpop.permute.xlu0 %3414
        %3421 = vrot.lane.b32.xlu0 %v3268, 31
        %v3422 = vpop.permute.xlu0 %3421
        %3423 = vrot.lane.b32.xlu0 %v3269, 31
        %v3424 = vpop.permute.xlu0 %3423
        %3425 = vrot.lane.b32.xlu0 %v3270, 31
        %v3426 = vpop.permute.xlu0 %3425
        %3427 = vrot.lane.b32.xlu0 %v3271, 31
        %v3428 = vpop.permute.xlu0 %3427
        %3429 = vrot.lane.b32.xlu0 %v3272, 31
        %v3430 = vpop.permute.xlu0 %3429
        %3436 = vrot.lane.b32.xlu0 %v3268, 63
        %v3437 = vpop.permute.xlu0 %3436
        %3438 = vrot.lane.b32.xlu0 %v3269, 63
        %v3439 = vpop.permute.xlu0 %3438
        %3440 = vrot.lane.b32.xlu0 %v3270, 63
        %v3441 = vpop.permute.xlu0 %3440
        %3442 = vrot.lane.b32.xlu0 %v3271, 63
        %v3443 = vpop.permute.xlu0 %3442
        %3444 = vrot.lane.b32.xlu0 %v3272, 63
        %v3445 = vpop.permute.xlu0 %3444
        %3451 = vrot.lane.b32.xlu0 %v3268, 95
        %v3452 = vpop.permute.xlu0 %3451
        %3453 = vrot.lane.b32.xlu0 %v3269, 95
        %v3454 = vpop.permute.xlu0 %3453
        %3455 = vrot.lane.b32.xlu0 %v3270, 95
        %v3456 = vpop.permute.xlu0 %3455
        %3457 = vrot.lane.b32.xlu0 %v3271, 95
        %v3458 = vpop.permute.xlu0 %3457
        %3459 = vrot.lane.b32.xlu0 %v3272, 95
        %v3460 = vpop.permute.xlu0 %3459
        %v3466 = vsel %vm1198, %v3407, %v3422
        %v3467 = vsel %vm1198, %v3409, %v3424
        %v3468 = vsel %vm1198, %v3411, %v3426
        %v3469 = vsel %vm1198, %v3413, %v3428
        %v3470 = vsel %vm1198, %v3415, %v3430
        %v3471 = vsel %vm1204, %v3466, %v3437
        %v3472 = vsel %vm1204, %v3467, %v3439
        %v3473 = vsel %vm1204, %v3468, %v3441
        %v3474 = vsel %vm1204, %v3469, %v3443
        %v3475 = vsel %vm1204, %v3470, %v3445
        %v3476 = vsel %vm1210, %v3471, %v3452
        %v3477 = vsel %vm1210, %v3472, %v3454
        %v3478 = vsel %vm1210, %v3473, %v3456
        %v3479 = vsel %vm1210, %v3474, %v3458
        %v3480 = vsel %vm1210, %v3475, %v3460
        %v3481 = vld [vmem:[%s4 + $0x2e] sm:$0x1]
        %v3482 = vperm.slane %v3481, 0
        %v3483 = vmul.f32 %v3482, %v3476
        %v3484 = vmul.f32 %v3482, %v3477
        %v3485 = vmul.f32 %v3482, %v3478
        %v3486 = vmul.f32 %v3482, %v3479
        %v3487 = vadd.f32 %v3402, %v3483
        %v3488 = vadd.f32 %v3403, %v3484
        %v3489 = vadd.f32 %v3404, %v3485
        %v3490 = vadd.f32 %v3405, %v3486
        %v3491 = vld [vmem:[%s4 + $0x31] sm:$0x1]
        %v3492 = vperm.slane %v3491, 0
        %v3493 = vmul.f32 %v3492, %v3476
        %v3494 = vmul.f32 %v3492, %v3477
        %v3495 = vmul.f32 %v3492, %v3478
        %v3496 = vmul.f32 %v3492, %v3479
        %v3497 = vmul.f32 %v3492, %v3480
        %v3503 = vrot.slane %v3493, 1
        %v3504 = vrot.slane %v3494, 1
        %v3505 = vsel %vm1238, %v3503, %v3504
        %v3506 = vrot.slane %v3495, 1
        %v3507 = vsel %vm1238, %v3504, %v3506
        %v3508 = vrot.slane %v3496, 1
        %v3509 = vsel %vm1238, %v3506, %v3508
        %v3510 = vrot.slane %v3497, 1
        %v3511 = vsel %vm1238, %v3508, %v3510
        %v3516 = vadd.f32 %v3487, %v3505
        %v3517 = vadd.f32 %v3488, %v3507
        %v3518 = vadd.f32 %v3489, %v3509
        %v3519 = vadd.f32 %v3490, %v3511
        %v3520 = vld [vmem:[%s4 + $0x34] sm:$0x1]
        %v3521 = vperm.slane %v3520, 0
        %v3522 = vmul.f32 %v3521, %v3476
        %v3523 = vmul.f32 %v3521, %v3477
        %v3524 = vmul.f32 %v3521, %v3478
        %v3525 = vmul.f32 %v3521, %v3479
        %v3526 = vmul.f32 %v3521, %v3480
        %v3532 = vrot.slane %v3522, 2
        %v3533 = vrot.slane %v3523, 2
        %v3534 = vsel %vm1268, %v3532, %v3533
        %v3535 = vrot.slane %v3524, 2
        %v3536 = vsel %vm1268, %v3533, %v3535
        %v3537 = vrot.slane %v3525, 2
        %v3538 = vsel %vm1268, %v3535, %v3537
        %v3539 = vrot.slane %v3526, 2
        %v3540 = vsel %vm1268, %v3537, %v3539
        %v3545 = vadd.f32 %v3516, %v3534
        %v3546 = vadd.f32 %v3517, %v3536
        %v3547 = vadd.f32 %v3518, %v3538
        %v3548 = vadd.f32 %v3519, %v3540
        %3549 = vrot.lane.b32.xlu0 %v3268, 126
        %v3550 = vpop.permute.xlu0 %3549
        %3551 = vrot.lane.b32.xlu0 %v3269, 126
        %v3552 = vpop.permute.xlu0 %3551
        %3553 = vrot.lane.b32.xlu0 %v3270, 126
        %v3554 = vpop.permute.xlu0 %3553
        %3555 = vrot.lane.b32.xlu0 %v3271, 126
        %v3556 = vpop.permute.xlu0 %3555
        %3557 = vrot.lane.b32.xlu0 %v3272, 126
        %v3558 = vpop.permute.xlu0 %3557
        %3564 = vrot.lane.b32.xlu0 %v3268, 30
        %v3565 = vpop.permute.xlu0 %3564
        %3566 = vrot.lane.b32.xlu0 %v3269, 30
        %v3567 = vpop.permute.xlu0 %3566
        %3568 = vrot.lane.b32.xlu0 %v3270, 30
        %v3569 = vpop.permute.xlu0 %3568
        %3570 = vrot.lane.b32.xlu0 %v3271, 30
        %v3571 = vpop.permute.xlu0 %3570
        %3572 = vrot.lane.b32.xlu0 %v3272, 30
        %v3573 = vpop.permute.xlu0 %3572
        %3579 = vrot.lane.b32.xlu0 %v3268, 62
        %v3580 = vpop.permute.xlu0 %3579
        %3581 = vrot.lane.b32.xlu0 %v3269, 62
        %v3582 = vpop.permute.xlu0 %3581
        %3583 = vrot.lane.b32.xlu0 %v3270, 62
        %v3584 = vpop.permute.xlu0 %3583
        %3585 = vrot.lane.b32.xlu0 %v3271, 62
        %v3586 = vpop.permute.xlu0 %3585
        %3587 = vrot.lane.b32.xlu0 %v3272, 62
        %v3588 = vpop.permute.xlu0 %3587
        %3594 = vrot.lane.b32.xlu0 %v3268, 94
        %v3595 = vpop.permute.xlu0 %3594
        %3596 = vrot.lane.b32.xlu0 %v3269, 94
        %v3597 = vpop.permute.xlu0 %3596
        %3598 = vrot.lane.b32.xlu0 %v3270, 94
        %v3599 = vpop.permute.xlu0 %3598
        %3600 = vrot.lane.b32.xlu0 %v3271, 94
        %v3601 = vpop.permute.xlu0 %3600
        %3602 = vrot.lane.b32.xlu0 %v3272, 94
        %v3603 = vpop.permute.xlu0 %3602
        %v3609 = vsel %vm1198, %v3550, %v3565
        %v3610 = vsel %vm1198, %v3552, %v3567
        %v3611 = vsel %vm1198, %v3554, %v3569
        %v3612 = vsel %vm1198, %v3556, %v3571
        %v3613 = vsel %vm1198, %v3558, %v3573
        %v3614 = vsel %vm1204, %v3609, %v3580
        %v3615 = vsel %vm1204, %v3610, %v3582
        %v3616 = vsel %vm1204, %v3611, %v3584
        %v3617 = vsel %vm1204, %v3612, %v3586
        %v3618 = vsel %vm1204, %v3613, %v3588
        %v3619 = vsel %vm1210, %v3614, %v3595
        %v3620 = vsel %vm1210, %v3615, %v3597
        %v3621 = vsel %vm1210, %v3616, %v3599
        %v3622 = vsel %vm1210, %v3617, %v3601
        %v3623 = vsel %vm1210, %v3618, %v3603
        %v3624 = vld [vmem:[%s4 + $0x2f] sm:$0x1]
        %v3625 = vperm.slane %v3624, 0
        %v3626 = vmul.f32 %v3625, %v3619
        %v3627 = vmul.f32 %v3625, %v3620
        %v3628 = vmul.f32 %v3625, %v3621
        %v3629 = vmul.f32 %v3625, %v3622
        %v3630 = vadd.f32 %v3545, %v3626
        %v3631 = vadd.f32 %v3546, %v3627
        %v3632 = vadd.f32 %v3547, %v3628
        %v3633 = vadd.f32 %v3548, %v3629
        %v3634 = vld [vmem:[%s4 + $0x32] sm:$0x1]
        %v3635 = vperm.slane %v3634, 0
        %v3636 = vmul.f32 %v3635, %v3619
        %v3637 = vmul.f32 %v3635, %v3620
        %v3638 = vmul.f32 %v3635, %v3621
        %v3639 = vmul.f32 %v3635, %v3622
        %v3640 = vmul.f32 %v3635, %v3623
        %v3646 = vrot.slane %v3636, 1
        %v3647 = vrot.slane %v3637, 1
        %v3648 = vsel %vm1238, %v3646, %v3647
        %v3649 = vrot.slane %v3638, 1
        %v3650 = vsel %vm1238, %v3647, %v3649
        %v3651 = vrot.slane %v3639, 1
        %v3652 = vsel %vm1238, %v3649, %v3651
        %v3653 = vrot.slane %v3640, 1
        %v3654 = vsel %vm1238, %v3651, %v3653
        %v3659 = vadd.f32 %v3630, %v3648
        %v3660 = vadd.f32 %v3631, %v3650
        %v3661 = vadd.f32 %v3632, %v3652
        %v3662 = vadd.f32 %v3633, %v3654
        %v3663 = vld [vmem:[%s4 + $0x35] sm:$0x1]
        %v3664 = vperm.slane %v3663, 0
        %v3665 = vmul.f32 %v3664, %v3619
        %v3666 = vmul.f32 %v3664, %v3620
        %v3667 = vmul.f32 %v3664, %v3621
        %v3668 = vmul.f32 %v3664, %v3622
        %v3669 = vmul.f32 %v3664, %v3623
        %v3675 = vrot.slane %v3665, 2
        %v3676 = vrot.slane %v3666, 2
        %v3677 = vsel %vm1268, %v3675, %v3676
        %v3678 = vrot.slane %v3667, 2
        %v3679 = vsel %vm1268, %v3676, %v3678
        %v3680 = vrot.slane %v3668, 2
        %v3681 = vsel %vm1268, %v3678, %v3680
        %v3682 = vrot.slane %v3669, 2
        %v3683 = vsel %vm1268, %v3680, %v3682
        %v3688 = vadd.f32 %v3659, %v3677
        %v3689 = vadd.f32 %v3660, %v3679
        %v3690 = vadd.f32 %v3661, %v3681
        %v3691 = vadd.f32 %v3662, %v3683
        %v3692 = vld [vmem:[%s1107] sm:$0xff]
        %v3693 = vld [vmem:[%s1107 + $0x8] sm:$0xff]
        %v3694 = vld [vmem:[%s1107 + $0x10] sm:$0xff]
        %v3695 = vld [vmem:[%s1107 + $0x18] sm:$0xff]
        %v3696 = vld [vmem:[%s1107 + $0x20] sm:$0x3]
        %3702 = vrot.lane.b32.xlu0 %v3692, 32
        %v3703 = vpop.permute.xlu0 %3702
        %3704 = vrot.lane.b32.xlu0 %v3693, 32
        %v3705 = vpop.permute.xlu0 %3704
        %3706 = vrot.lane.b32.xlu0 %v3694, 32
        %v3707 = vpop.permute.xlu0 %3706
        %3708 = vrot.lane.b32.xlu0 %v3695, 32
        %v3709 = vpop.permute.xlu0 %3708
        %3710 = vrot.lane.b32.xlu0 %v3696, 32
        %v3711 = vpop.permute.xlu0 %3710
        %3717 = vrot.lane.b32.xlu0 %v3692, 64
        %v3718 = vpop.permute.xlu0 %3717
        %3719 = vrot.lane.b32.xlu0 %v3693, 64
        %v3720 = vpop.permute.xlu0 %3719
        %3721 = vrot.lane.b32.xlu0 %v3694, 64
        %v3722 = vpop.permute.xlu0 %3721
        %3723 = vrot.lane.b32.xlu0 %v3695, 64
        %v3724 = vpop.permute.xlu0 %3723
        %3725 = vrot.lane.b32.xlu0 %v3696, 64
        %v3726 = vpop.permute.xlu0 %3725
        %3732 = vrot.lane.b32.xlu0 %v3692, 96
        %v3733 = vpop.permute.xlu0 %3732
        %3734 = vrot.lane.b32.xlu0 %v3693, 96
        %v3735 = vpop.permute.xlu0 %3734
        %3736 = vrot.lane.b32.xlu0 %v3694, 96
        %v3737 = vpop.permute.xlu0 %3736
        %3738 = vrot.lane.b32.xlu0 %v3695, 96
        %v3739 = vpop.permute.xlu0 %3738
        %3740 = vrot.lane.b32.xlu0 %v3696, 96
        %v3741 = vpop.permute.xlu0 %3740
        %v3747 = vsel %vm1198, %v3692, %v3703
        %v3748 = vsel %vm1198, %v3693, %v3705
        %v3749 = vsel %vm1198, %v3694, %v3707
        %v3750 = vsel %vm1198, %v3695, %v3709
        %v3751 = vsel %vm1198, %v3696, %v3711
        %v3752 = vsel %vm1204, %v3747, %v3718
        %v3753 = vsel %vm1204, %v3748, %v3720
        %v3754 = vsel %vm1204, %v3749, %v3722
        %v3755 = vsel %vm1204, %v3750, %v3724
        %v3756 = vsel %vm1204, %v3751, %v3726
        %v3757 = vsel %vm1210, %v3752, %v3733
        %v3758 = vsel %vm1210, %v3753, %v3735
        %v3759 = vsel %vm1210, %v3754, %v3737
        %v3760 = vsel %vm1210, %v3755, %v3739
        %v3761 = vsel %vm1210, %v3756, %v3741
        %v3762 = vld [vmem:[%s4 + $0x36] sm:$0x1]
        %v3763 = vperm.slane %v3762, 0
        %v3764 = vmul.f32 %v3763, %v3757
        %v3765 = vmul.f32 %v3763, %v3758
        %v3766 = vmul.f32 %v3763, %v3759
        %v3767 = vmul.f32 %v3763, %v3760
        %v3768 = vadd.f32 %v3688, %v3764
        %v3769 = vadd.f32 %v3689, %v3765
        %v3770 = vadd.f32 %v3690, %v3766
        %v3771 = vadd.f32 %v3691, %v3767
        %v3772 = vld [vmem:[%s4 + $0x39] sm:$0x1]
        %v3773 = vperm.slane %v3772, 0
        %v3774 = vmul.f32 %v3773, %v3757
        %v3775 = vmul.f32 %v3773, %v3758
        %v3776 = vmul.f32 %v3773, %v3759
        %v3777 = vmul.f32 %v3773, %v3760
        %v3778 = vmul.f32 %v3773, %v3761
        %v3784 = vrot.slane %v3774, 1
        %v3785 = vrot.slane %v3775, 1
        %v3786 = vsel %vm1238, %v3784, %v3785
        %v3787 = vrot.slane %v3776, 1
        %v3788 = vsel %vm1238, %v3785, %v3787
        %v3789 = vrot.slane %v3777, 1
        %v3790 = vsel %vm1238, %v3787, %v3789
        %v3791 = vrot.slane %v3778, 1
        %v3792 = vsel %vm1238, %v3789, %v3791
        %v3797 = vadd.f32 %v3768, %v3786
        %v3798 = vadd.f32 %v3769, %v3788
        %v3799 = vadd.f32 %v3770, %v3790
        %v3800 = vadd.f32 %v3771, %v3792
        %v3801 = vld [vmem:[%s4 + $0x3c] sm:$0x1]
        %v3802 = vperm.slane %v3801, 0
        %v3803 = vmul.f32 %v3802, %v3757
        %v3804 = vmul.f32 %v3802, %v3758
        %v3805 = vmul.f32 %v3802, %v3759
        %v3806 = vmul.f32 %v3802, %v3760
        %v3807 = vmul.f32 %v3802, %v3761
        %v3813 = vrot.slane %v3803, 2
        %v3814 = vrot.slane %v3804, 2
        %v3815 = vsel %vm1268, %v3813, %v3814
        %v3816 = vrot.slane %v3805, 2
        %v3817 = vsel %vm1268, %v3814, %v3816
        %v3818 = vrot.slane %v3806, 2
        %v3819 = vsel %vm1268, %v3816, %v3818
        %v3820 = vrot.slane %v3807, 2
        %v3821 = vsel %vm1268, %v3818, %v3820
        %v3826 = vadd.f32 %v3797, %v3815
        %v3827 = vadd.f32 %v3798, %v3817
        %v3828 = vadd.f32 %v3799, %v3819
        %v3829 = vadd.f32 %v3800, %v3821
        %3830 = vrot.lane.b32.xlu0 %v3692, 127
        %v3831 = vpop.permute.xlu0 %3830
        %3832 = vrot.lane.b32.xlu0 %v3693, 127
        %v3833 = vpop.permute.xlu0 %3832
        %3834 = vrot.lane.b32.xlu0 %v3694, 127
        %v3835 = vpop.permute.xlu0 %3834
        %3836 = vrot.lane.b32.xlu0 %v3695, 127
        %v3837 = vpop.permute.xlu0 %3836
        %3838 = vrot.lane.b32.xlu0 %v3696, 127
        %v3839 = vpop.permute.xlu0 %3838
        %3845 = vrot.lane.b32.xlu0 %v3692, 31
        %v3846 = vpop.permute.xlu0 %3845
        %3847 = vrot.lane.b32.xlu0 %v3693, 31
        %v3848 = vpop.permute.xlu0 %3847
        %3849 = vrot.lane.b32.xlu0 %v3694, 31
        %v3850 = vpop.permute.xlu0 %3849
        %3851 = vrot.lane.b32.xlu0 %v3695, 31
        %v3852 = vpop.permute.xlu0 %3851
        %3853 = vrot.lane.b32.xlu0 %v3696, 31
        %v3854 = vpop.permute.xlu0 %3853
        %3860 = vrot.lane.b32.xlu0 %v3692, 63
        %v3861 = vpop.permute.xlu0 %3860
        %3862 = vrot.lane.b32.xlu0 %v3693, 63
        %v3863 = vpop.permute.xlu0 %3862
        %3864 = vrot.lane.b32.xlu0 %v3694, 63
        %v3865 = vpop.permute.xlu0 %3864
        %3866 = vrot.lane.b32.xlu0 %v3695, 63
        %v3867 = vpop.permute.xlu0 %3866
        %3868 = vrot.lane.b32.xlu0 %v3696, 63
        %v3869 = vpop.permute.xlu0 %3868
        %3875 = vrot.lane.b32.xlu0 %v3692, 95
        %v3876 = vpop.permute.xlu0 %3875
        %3877 = vrot.lane.b32.xlu0 %v3693, 95
        %v3878 = vpop.permute.xlu0 %3877
        %3879 = vrot.lane.b32.xlu0 %v3694, 95
        %v3880 = vpop.permute.xlu0 %3879
        %3881 = vrot.lane.b32.xlu0 %v3695, 95
        %v3882 = vpop.permute.xlu0 %3881
        %3883 = vrot.lane.b32.xlu0 %v3696, 95
        %v3884 = vpop.permute.xlu0 %3883
        %v3890 = vsel %vm1198, %v3831, %v3846
        %v3891 = vsel %vm1198, %v3833, %v3848
        %v3892 = vsel %vm1198, %v3835, %v3850
        %v3893 = vsel %vm1198, %v3837, %v3852
        %v3894 = vsel %vm1198, %v3839, %v3854
        %v3895 = vsel %vm1204, %v3890, %v3861
        %v3896 = vsel %vm1204, %v3891, %v3863
        %v3897 = vsel %vm1204, %v3892, %v3865
        %v3898 = vsel %vm1204, %v3893, %v3867
        %v3899 = vsel %vm1204, %v3894, %v3869
        %v3900 = vsel %vm1210, %v3895, %v3876
        %v3901 = vsel %vm1210, %v3896, %v3878
        %v3902 = vsel %vm1210, %v3897, %v3880
        %v3903 = vsel %vm1210, %v3898, %v3882
        %v3904 = vsel %vm1210, %v3899, %v3884
        %v3905 = vld [vmem:[%s4 + $0x37] sm:$0x1]
        %v3906 = vperm.slane %v3905, 0
        %v3907 = vmul.f32 %v3906, %v3900
        %v3908 = vmul.f32 %v3906, %v3901
        %v3909 = vmul.f32 %v3906, %v3902
        %v3910 = vmul.f32 %v3906, %v3903
        %v3911 = vadd.f32 %v3826, %v3907
        %v3912 = vadd.f32 %v3827, %v3908
        %v3913 = vadd.f32 %v3828, %v3909
        %v3914 = vadd.f32 %v3829, %v3910
        %v3915 = vld [vmem:[%s4 + $0x3a] sm:$0x1]
        %v3916 = vperm.slane %v3915, 0
        %v3917 = vmul.f32 %v3916, %v3900
        %v3918 = vmul.f32 %v3916, %v3901
        %v3919 = vmul.f32 %v3916, %v3902
        %v3920 = vmul.f32 %v3916, %v3903
        %v3921 = vmul.f32 %v3916, %v3904
        %v3927 = vrot.slane %v3917, 1
        %v3928 = vrot.slane %v3918, 1
        %v3929 = vsel %vm1238, %v3927, %v3928
        %v3930 = vrot.slane %v3919, 1
        %v3931 = vsel %vm1238, %v3928, %v3930
        %v3932 = vrot.slane %v3920, 1
        %v3933 = vsel %vm1238, %v3930, %v3932
        %v3934 = vrot.slane %v3921, 1
        %v3935 = vsel %vm1238, %v3932, %v3934
        %v3940 = vadd.f32 %v3911, %v3929
        %v3941 = vadd.f32 %v3912, %v3931
        %v3942 = vadd.f32 %v3913, %v3933
        %v3943 = vadd.f32 %v3914, %v3935
        %v3944 = vld [vmem:[%s4 + $0x3d] sm:$0x1]
        %v3945 = vperm.slane %v3944, 0
        %v3946 = vmul.f32 %v3945, %v3900
        %v3947 = vmul.f32 %v3945, %v3901
        %v3948 = vmul.f32 %v3945, %v3902
        %v3949 = vmul.f32 %v3945, %v3903
        %v3950 = vmul.f32 %v3945, %v3904
        %v3956 = vrot.slane %v3946, 2
        %v3957 = vrot.slane %v3947, 2
        %v3958 = vsel %vm1268, %v3956, %v3957
        %v3959 = vrot.slane %v3948, 2
        %v3960 = vsel %vm1268, %v3957, %v3959
        %v3961 = vrot.slane %v3949, 2
        %v3962 = vsel %vm1268, %v3959, %v3961
        %v3963 = vrot.slane %v3950, 2
        %v3964 = vsel %vm1268, %v3961, %v3963
        %v3969 = vadd.f32 %v3940, %v3958
        %v3970 = vadd.f32 %v3941, %v3960
        %v3971 = vadd.f32 %v3942, %v3962
        %v3972 = vadd.f32 %v3943, %v3964
        %3973 = vrot.lane.b32.xlu0 %v3692, 126
        %v3974 = vpop.permute.xlu0 %3973
        %3975 = vrot.lane.b32.xlu0 %v3693, 126
        %v3976 = vpop.permute.xlu0 %3975
        %3977 = vrot.lane.b32.xlu0 %v3694, 126
        %v3978 = vpop.permute.xlu0 %3977
        %3979 = vrot.lane.b32.xlu0 %v3695, 126
        %v3980 = vpop.permute.xlu0 %3979
        %3981 = vrot.lane.b32.xlu0 %v3696, 126
        %v3982 = vpop.permute.xlu0 %3981
        %3988 = vrot.lane.b32.xlu0 %v3692, 30
        %v3989 = vpop.permute.xlu0 %3988
        %3990 = vrot.lane.b32.xlu0 %v3693, 30
        %v3991 = vpop.permute.xlu0 %3990
        %3992 = vrot.lane.b32.xlu0 %v3694, 30
        %v3993 = vpop.permute.xlu0 %3992
        %3994 = vrot.lane.b32.xlu0 %v3695, 30
        %v3995 = vpop.permute.xlu0 %3994
        %3996 = vrot.lane.b32.xlu0 %v3696, 30
        %v3997 = vpop.permute.xlu0 %3996
        %4003 = vrot.lane.b32.xlu0 %v3692, 62
        %v4004 = vpop.permute.xlu0 %4003
        %4005 = vrot.lane.b32.xlu0 %v3693, 62
        %v4006 = vpop.permute.xlu0 %4005
        %4007 = vrot.lane.b32.xlu0 %v3694, 62
        %v4008 = vpop.permute.xlu0 %4007
        %4009 = vrot.lane.b32.xlu0 %v3695, 62
        %v4010 = vpop.permute.xlu0 %4009
        %4011 = vrot.lane.b32.xlu0 %v3696, 62
        %v4012 = vpop.permute.xlu0 %4011
        %4018 = vrot.lane.b32.xlu0 %v3692, 94
        %v4019 = vpop.permute.xlu0 %4018
        %4020 = vrot.lane.b32.xlu0 %v3693, 94
        %v4021 = vpop.permute.xlu0 %4020
        %4022 = vrot.lane.b32.xlu0 %v3694, 94
        %v4023 = vpop.permute.xlu0 %4022
        %4024 = vrot.lane.b32.xlu0 %v3695, 94
        %v4025 = vpop.permute.xlu0 %4024
        %4026 = vrot.lane.b32.xlu0 %v3696, 94
        %v4027 = vpop.permute.xlu0 %4026
        %v4033 = vsel %vm1198, %v3974, %v3989
        %v4034 = vsel %vm1198, %v3976, %v3991
        %v4035 = vsel %vm1198, %v3978, %v3993
        %v4036 = vsel %vm1198, %v3980, %v3995
        %v4037 = vsel %vm1198, %v3982, %v3997
        %v4038 = vsel %vm1204, %v4033, %v4004
        %v4039 = vsel %vm1204, %v4034, %v4006
        %v4040 = vsel %vm1204, %v4035, %v4008
        %v4041 = vsel %vm1204, %v4036, %v4010
        %v4042 = vsel %vm1204, %v4037, %v4012
        %v4043 = vsel %vm1210, %v4038, %v4019
        %v4044 = vsel %vm1210, %v4039, %v4021
        %v4045 = vsel %vm1210, %v4040, %v4023
        %v4046 = vsel %vm1210, %v4041, %v4025
        %v4047 = vsel %vm1210, %v4042, %v4027
        %v4048 = vld [vmem:[%s4 + $0x38] sm:$0x1]
        %v4049 = vperm.slane %v4048, 0
        %v4050 = vmul.f32 %v4049, %v4043
        %v4051 = vmul.f32 %v4049, %v4044
        %v4052 = vmul.f32 %v4049, %v4045
        %v4053 = vmul.f32 %v4049, %v4046
        %v4054 = vadd.f32 %v3969, %v4050
        %v4055 = vadd.f32 %v3970, %v4051
        %v4056 = vadd.f32 %v3971, %v4052
        %v4057 = vadd.f32 %v3972, %v4053
        %v4058 = vld [vmem:[%s4 + $0x3b] sm:$0x1]
        %v4059 = vperm.slane %v4058, 0
        %v4060 = vmul.f32 %v4059, %v4043
        %v4061 = vmul.f32 %v4059, %v4044
        %v4062 = vmul.f32 %v4059, %v4045
        %v4063 = vmul.f32 %v4059, %v4046
        %v4064 = vmul.f32 %v4059, %v4047
        %v4070 = vrot.slane %v4060, 1
        %v4071 = vrot.slane %v4061, 1
        %v4072 = vsel %vm1238, %v4070, %v4071
        %v4073 = vrot.slane %v4062, 1
        %v4074 = vsel %vm1238, %v4071, %v4073
        %v4075 = vrot.slane %v4063, 1
        %v4076 = vsel %vm1238, %v4073, %v4075
        %v4077 = vrot.slane %v4064, 1
        %v4078 = vsel %vm1238, %v4075, %v4077
        %v4083 = vadd.f32 %v4054, %v4072
        %v4084 = vadd.f32 %v4055, %v4074
        %v4085 = vadd.f32 %v4056, %v4076
        %v4086 = vadd.f32 %v4057, %v4078
        %v4087 = vld [vmem:[%s4 + $0x3e] sm:$0x1]
        %v4088 = vperm.slane %v4087, 0
        %v4089 = vmul.f32 %v4088, %v4043
        %v4090 = vmul.f32 %v4088, %v4044
        %v4091 = vmul.f32 %v4088, %v4045
        %v4092 = vmul.f32 %v4088, %v4046
        %v4093 = vmul.f32 %v4088, %v4047
        %v4099 = vrot.slane %v4089, 2
        %v4100 = vrot.slane %v4090, 2
        %v4101 = vsel %vm1268, %v4099, %v4100
        %v4102 = vrot.slane %v4091, 2
        %v4103 = vsel %vm1268, %v4100, %v4102
        %v4104 = vrot.slane %v4092, 2
        %v4105 = vsel %vm1268, %v4102, %v4104
        %v4106 = vrot.slane %v4093, 2
        %v4107 = vsel %vm1268, %v4104, %v4106
        %v4112 = vadd.f32 %v4083, %v4101
        %v4113 = vadd.f32 %v4084, %v4103
        %v4114 = vadd.f32 %v4085, %v4105
        %v4115 = vadd.f32 %v4086, %v4107
        %v4116 = vld [vmem:[%s1133] sm:$0xff]
        %v4117 = vld [vmem:[%s1133 + $0x8] sm:$0xff]
        %v4118 = vld [vmem:[%s1133 + $0x10] sm:$0xff]
        %v4119 = vld [vmem:[%s1133 + $0x18] sm:$0xff]
        %v4120 = vld [vmem:[%s1133 + $0x20] sm:$0x3]
        %4126 = vrot.lane.b32.xlu0 %v4116, 32
        %v4127 = vpop.permute.xlu0 %4126
        %4128 = vrot.lane.b32.xlu0 %v4117, 32
        %v4129 = vpop.permute.xlu0 %4128
        %4130 = vrot.lane.b32.xlu0 %v4118, 32
        %v4131 = vpop.permute.xlu0 %4130
        %4132 = vrot.lane.b32.xlu0 %v4119, 32
        %v4133 = vpop.permute.xlu0 %4132
        %4134 = vrot.lane.b32.xlu0 %v4120, 32
        %v4135 = vpop.permute.xlu0 %4134
        %4141 = vrot.lane.b32.xlu0 %v4116, 64
        %v4142 = vpop.permute.xlu0 %4141
        %4143 = vrot.lane.b32.xlu0 %v4117, 64
        %v4144 = vpop.permute.xlu0 %4143
        %4145 = vrot.lane.b32.xlu0 %v4118, 64
        %v4146 = vpop.permute.xlu0 %4145
        %4147 = vrot.lane.b32.xlu0 %v4119, 64
        %v4148 = vpop.permute.xlu0 %4147
        %4149 = vrot.lane.b32.xlu0 %v4120, 64
        %v4150 = vpop.permute.xlu0 %4149
        %4156 = vrot.lane.b32.xlu0 %v4116, 96
        %v4157 = vpop.permute.xlu0 %4156
        %4158 = vrot.lane.b32.xlu0 %v4117, 96
        %v4159 = vpop.permute.xlu0 %4158
        %4160 = vrot.lane.b32.xlu0 %v4118, 96
        %v4161 = vpop.permute.xlu0 %4160
        %4162 = vrot.lane.b32.xlu0 %v4119, 96
        %v4163 = vpop.permute.xlu0 %4162
        %4164 = vrot.lane.b32.xlu0 %v4120, 96
        %v4165 = vpop.permute.xlu0 %4164
        %v4171 = vsel %vm1198, %v4116, %v4127
        %v4172 = vsel %vm1198, %v4117, %v4129
        %v4173 = vsel %vm1198, %v4118, %v4131
        %v4174 = vsel %vm1198, %v4119, %v4133
        %v4175 = vsel %vm1198, %v4120, %v4135
        %v4176 = vsel %vm1204, %v4171, %v4142
        %v4177 = vsel %vm1204, %v4172, %v4144
        %v4178 = vsel %vm1204, %v4173, %v4146
        %v4179 = vsel %vm1204, %v4174, %v4148
        %v4180 = vsel %vm1204, %v4175, %v4150
        %v4181 = vsel %vm1210, %v4176, %v4157
        %v4182 = vsel %vm1210, %v4177, %v4159
        %v4183 = vsel %vm1210, %v4178, %v4161
        %v4184 = vsel %vm1210, %v4179, %v4163
        %v4185 = vsel %vm1210, %v4180, %v4165
        %v4186 = vld [vmem:[%s4 + $0x3f] sm:$0x1]
        %v4187 = vperm.slane %v4186, 0
        %v4188 = vmul.f32 %v4187, %v4181
        %v4189 = vmul.f32 %v4187, %v4182
        %v4190 = vmul.f32 %v4187, %v4183
        %v4191 = vmul.f32 %v4187, %v4184
        %v4192 = vadd.f32 %v4112, %v4188
        %v4193 = vadd.f32 %v4113, %v4189
        %v4194 = vadd.f32 %v4114, %v4190
        %v4195 = vadd.f32 %v4115, %v4191
        %v4196 = vld [vmem:[%s4 + $0x42] sm:$0x1]
        %v4197 = vperm.slane %v4196, 0
        %v4198 = vmul.f32 %v4197, %v4181
        %v4199 = vmul.f32 %v4197, %v4182
        %v4200 = vmul.f32 %v4197, %v4183
        %v4201 = vmul.f32 %v4197, %v4184
        %v4202 = vmul.f32 %v4197, %v4185
        %v4208 = vrot.slane %v4198, 1
        %v4209 = vrot.slane %v4199, 1
        %v4210 = vsel %vm1238, %v4208, %v4209
        %v4211 = vrot.slane %v4200, 1
        %v4212 = vsel %vm1238, %v4209, %v4211
        %v4213 = vrot.slane %v4201, 1
        %v4214 = vsel %vm1238, %v4211, %v4213
        %v4215 = vrot.slane %v4202, 1
        %v4216 = vsel %vm1238, %v4213, %v4215
        %v4221 = vadd.f32 %v4192, %v4210
        %v4222 = vadd.f32 %v4193, %v4212
        %v4223 = vadd.f32 %v4194, %v4214
        %v4224 = vadd.f32 %v4195, %v4216
        %v4225 = vld [vmem:[%s4 + $0x45] sm:$0x1]
        %v4226 = vperm.slane %v4225, 0
        %v4227 = vmul.f32 %v4226, %v4181
        %v4228 = vmul.f32 %v4226, %v4182
        %v4229 = vmul.f32 %v4226, %v4183
        %v4230 = vmul.f32 %v4226, %v4184
        %v4231 = vmul.f32 %v4226, %v4185
        %v4237 = vrot.slane %v4227, 2
        %v4238 = vrot.slane %v4228, 2
        %v4239 = vsel %vm1268, %v4237, %v4238
        %v4240 = vrot.slane %v4229, 2
        %v4241 = vsel %vm1268, %v4238, %v4240
        %v4242 = vrot.slane %v4230, 2
        %v4243 = vsel %vm1268, %v4240, %v4242
        %v4244 = vrot.slane %v4231, 2
        %v4245 = vsel %vm1268, %v4242, %v4244
        %v4250 = vadd.f32 %v4221, %v4239
        %v4251 = vadd.f32 %v4222, %v4241
        %v4252 = vadd.f32 %v4223, %v4243
        %v4253 = vadd.f32 %v4224, %v4245
        %4254 = vrot.lane.b32.xlu0 %v4116, 127
        %v4255 = vpop.permute.xlu0 %4254
        %4256 = vrot.lane.b32.xlu0 %v4117, 127
        %v4257 = vpop.permute.xlu0 %4256
        %4258 = vrot.lane.b32.xlu0 %v4118, 127
        %v4259 = vpop.permute.xlu0 %4258
        %4260 = vrot.lane.b32.xlu0 %v4119, 127
        %v4261 = vpop.permute.xlu0 %4260
        %4262 = vrot.lane.b32.xlu0 %v4120, 127
        %v4263 = vpop.permute.xlu0 %4262
        %4269 = vrot.lane.b32.xlu0 %v4116, 31
        %v4270 = vpop.permute.xlu0 %4269
        %4271 = vrot.lane.b32.xlu0 %v4117, 31
        %v4272 = vpop.permute.xlu0 %4271
        %4273 = vrot.lane.b32.xlu0 %v4118, 31
        %v4274 = vpop.permute.xlu0 %4273
        %4275 = vrot.lane.b32.xlu0 %v4119, 31
        %v4276 = vpop.permute.xlu0 %4275
        %4277 = vrot.lane.b32.xlu0 %v4120, 31
        %v4278 = vpop.permute.xlu0 %4277
        %4284 = vrot.lane.b32.xlu0 %v4116, 63
        %v4285 = vpop.permute.xlu0 %4284
        %4286 = vrot.lane.b32.xlu0 %v4117, 63
        %v4287 = vpop.permute.xlu0 %4286
        %4288 = vrot.lane.b32.xlu0 %v4118, 63
        %v4289 = vpop.permute.xlu0 %4288
        %4290 = vrot.lane.b32.xlu0 %v4119, 63
        %v4291 = vpop.permute.xlu0 %4290
        %4292 = vrot.lane.b32.xlu0 %v4120, 63
        %v4293 = vpop.permute.xlu0 %4292
        %4299 = vrot.lane.b32.xlu0 %v4116, 95
        %v4300 = vpop.permute.xlu0 %4299
        %4301 = vrot.lane.b32.xlu0 %v4117, 95
        %v4302 = vpop.permute.xlu0 %4301
        %4303 = vrot.lane.b32.xlu0 %v4118, 95
        %v4304 = vpop.permute.xlu0 %4303
        %4305 = vrot.lane.b32.xlu0 %v4119, 95
        %v4306 = vpop.permute.xlu0 %4305
        %4307 = vrot.lane.b32.xlu0 %v4120, 95
        %v4308 = vpop.permute.xlu0 %4307
        %v4314 = vsel %vm1198, %v4255, %v4270
        %v4315 = vsel %vm1198, %v4257, %v4272
        %v4316 = vsel %vm1198, %v4259, %v4274
        %v4317 = vsel %vm1198, %v4261, %v4276
        %v4318 = vsel %vm1198, %v4263, %v4278
        %v4319 = vsel %vm1204, %v4314, %v4285
        %v4320 = vsel %vm1204, %v4315, %v4287
        %v4321 = vsel %vm1204, %v4316, %v4289
        %v4322 = vsel %vm1204, %v4317, %v4291
        %v4323 = vsel %vm1204, %v4318, %v4293
        %v4324 = vsel %vm1210, %v4319, %v4300
        %v4325 = vsel %vm1210, %v4320, %v4302
        %v4326 = vsel %vm1210, %v4321, %v4304
        %v4327 = vsel %vm1210, %v4322, %v4306
        %v4328 = vsel %vm1210, %v4323, %v4308
        %v4329 = vld [vmem:[%s4 + $0x40] sm:$0x1]
        %v4330 = vperm.slane %v4329, 0
        %v4331 = vmul.f32 %v4330, %v4324
        %v4332 = vmul.f32 %v4330, %v4325
        %v4333 = vmul.f32 %v4330, %v4326
        %v4334 = vmul.f32 %v4330, %v4327
        %v4335 = vadd.f32 %v4250, %v4331
        %v4336 = vadd.f32 %v4251, %v4332
        %v4337 = vadd.f32 %v4252, %v4333
        %v4338 = vadd.f32 %v4253, %v4334
        %v4339 = vld [vmem:[%s4 + $0x43] sm:$0x1]
        %v4340 = vperm.slane %v4339, 0
        %v4341 = vmul.f32 %v4340, %v4324
        %v4342 = vmul.f32 %v4340, %v4325
        %v4343 = vmul.f32 %v4340, %v4326
        %v4344 = vmul.f32 %v4340, %v4327
        %v4345 = vmul.f32 %v4340, %v4328
        %v4351 = vrot.slane %v4341, 1
        %v4352 = vrot.slane %v4342, 1
        %v4353 = vsel %vm1238, %v4351, %v4352
        %v4354 = vrot.slane %v4343, 1
        %v4355 = vsel %vm1238, %v4352, %v4354
        %v4356 = vrot.slane %v4344, 1
        %v4357 = vsel %vm1238, %v4354, %v4356
        %v4358 = vrot.slane %v4345, 1
        %v4359 = vsel %vm1238, %v4356, %v4358
        %v4364 = vadd.f32 %v4335, %v4353
        %v4365 = vadd.f32 %v4336, %v4355
        %v4366 = vadd.f32 %v4337, %v4357
        %v4367 = vadd.f32 %v4338, %v4359
        %v4368 = vld [vmem:[%s4 + $0x46] sm:$0x1]
        %v4369 = vperm.slane %v4368, 0
        %v4370 = vmul.f32 %v4369, %v4324
        %v4371 = vmul.f32 %v4369, %v4325
        %v4372 = vmul.f32 %v4369, %v4326
        %v4373 = vmul.f32 %v4369, %v4327
        %v4374 = vmul.f32 %v4369, %v4328
        %v4380 = vrot.slane %v4370, 2
        %v4381 = vrot.slane %v4371, 2
        %v4382 = vsel %vm1268, %v4380, %v4381
        %v4383 = vrot.slane %v4372, 2
        %v4384 = vsel %vm1268, %v4381, %v4383
        %v4385 = vrot.slane %v4373, 2
        %v4386 = vsel %vm1268, %v4383, %v4385
        %v4387 = vrot.slane %v4374, 2
        %v4388 = vsel %vm1268, %v4385, %v4387
        %v4393 = vadd.f32 %v4364, %v4382
        %v4394 = vadd.f32 %v4365, %v4384
        %v4395 = vadd.f32 %v4366, %v4386
        %v4396 = vadd.f32 %v4367, %v4388
        %4397 = vrot.lane.b32.xlu0 %v4116, 126
        %v4398 = vpop.permute.xlu0 %4397
        %4399 = vrot.lane.b32.xlu0 %v4117, 126
        %v4400 = vpop.permute.xlu0 %4399
        %4401 = vrot.lane.b32.xlu0 %v4118, 126
        %v4402 = vpop.permute.xlu0 %4401
        %4403 = vrot.lane.b32.xlu0 %v4119, 126
        %v4404 = vpop.permute.xlu0 %4403
        %4405 = vrot.lane.b32.xlu0 %v4120, 126
        %v4406 = vpop.permute.xlu0 %4405
        %4412 = vrot.lane.b32.xlu0 %v4116, 30
        %v4413 = vpop.permute.xlu0 %4412
        %4414 = vrot.lane.b32.xlu0 %v4117, 30
        %v4415 = vpop.permute.xlu0 %4414
        %4416 = vrot.lane.b32.xlu0 %v4118, 30
        %v4417 = vpop.permute.xlu0 %4416
        %4418 = vrot.lane.b32.xlu0 %v4119, 30
        %v4419 = vpop.permute.xlu0 %4418
        %4420 = vrot.lane.b32.xlu0 %v4120, 30
        %v4421 = vpop.permute.xlu0 %4420
        %4427 = vrot.lane.b32.xlu0 %v4116, 62
        %v4428 = vpop.permute.xlu0 %4427
        %4429 = vrot.lane.b32.xlu0 %v4117, 62
        %v4430 = vpop.permute.xlu0 %4429
        %4431 = vrot.lane.b32.xlu0 %v4118, 62
        %v4432 = vpop.permute.xlu0 %4431
        %4433 = vrot.lane.b32.xlu0 %v4119, 62
        %v4434 = vpop.permute.xlu0 %4433
        %4435 = vrot.lane.b32.xlu0 %v4120, 62
        %v4436 = vpop.permute.xlu0 %4435
        %4442 = vrot.lane.b32.xlu0 %v4116, 94
        %v4443 = vpop.permute.xlu0 %4442
        %4444 = vrot.lane.b32.xlu0 %v4117, 94
        %v4445 = vpop.permute.xlu0 %4444
        %4446 = vrot.lane.b32.xlu0 %v4118, 94
        %v4447 = vpop.permute.xlu0 %4446
        %4448 = vrot.lane.b32.xlu0 %v4119, 94
        %v4449 = vpop.permute.xlu0 %4448
        %4450 = vrot.lane.b32.xlu0 %v4120, 94
        %v4451 = vpop.permute.xlu0 %4450
        %v4457 = vsel %vm1198, %v4398, %v4413
        %v4458 = vsel %vm1198, %v4400, %v4415
        %v4459 = vsel %vm1198, %v4402, %v4417
        %v4460 = vsel %vm1198, %v4404, %v4419
        %v4461 = vsel %vm1198, %v4406, %v4421
        %v4462 = vsel %vm1204, %v4457, %v4428
        %v4463 = vsel %vm1204, %v4458, %v4430
        %v4464 = vsel %vm1204, %v4459, %v4432
        %v4465 = vsel %vm1204, %v4460, %v4434
        %v4466 = vsel %vm1204, %v4461, %v4436
        %v4467 = vsel %vm1210, %v4462, %v4443
        %v4468 = vsel %vm1210, %v4463, %v4445
        %v4469 = vsel %vm1210, %v4464, %v4447
        %v4470 = vsel %vm1210, %v4465, %v4449
        %v4471 = vsel %vm1210, %v4466, %v4451
        %v4472 = vld [vmem:[%s4 + $0x41] sm:$0x1]
        %v4473 = vperm.slane %v4472, 0
        %v4474 = vmul.f32 %v4473, %v4467
        %v4475 = vmul.f32 %v4473, %v4468
        %v4476 = vmul.f32 %v4473, %v4469
        %v4477 = vmul.f32 %v4473, %v4470
        %v4478 = vadd.f32 %v4393, %v4474
        %v4479 = vadd.f32 %v4394, %v4475
        %v4480 = vadd.f32 %v4395, %v4476
        %v4481 = vadd.f32 %v4396, %v4477
        %v4482 = vld [vmem:[%s4 + $0x44] sm:$0x1]
        %v4483 = vperm.slane %v4482, 0
        %v4484 = vmul.f32 %v4483, %v4467
        %v4485 = vmul.f32 %v4483, %v4468
        %v4486 = vmul.f32 %v4483, %v4469
        %v4487 = vmul.f32 %v4483, %v4470
        %v4488 = vmul.f32 %v4483, %v4471
        %v4494 = vrot.slane %v4484, 1
        %v4495 = vrot.slane %v4485, 1
        %v4496 = vsel %vm1238, %v4494, %v4495
        %v4497 = vrot.slane %v4486, 1
        %v4498 = vsel %vm1238, %v4495, %v4497
        %v4499 = vrot.slane %v4487, 1
        %v4500 = vsel %vm1238, %v4497, %v4499
        %v4501 = vrot.slane %v4488, 1
        %v4502 = vsel %vm1238, %v4499, %v4501
        %v4507 = vadd.f32 %v4478, %v4496
        %v4508 = vadd.f32 %v4479, %v4498
        %v4509 = vadd.f32 %v4480, %v4500
        %v4510 = vadd.f32 %v4481, %v4502
        %v4511 = vld [vmem:[%s4 + $0x47] sm:$0x1]
        %v4512 = vperm.slane %v4511, 0
        %v4513 = vmul.f32 %v4512, %v4467
        %v4514 = vmul.f32 %v4512, %v4468
        %v4515 = vmul.f32 %v4512, %v4469
        %v4516 = vmul.f32 %v4512, %v4470
        %v4517 = vmul.f32 %v4512, %v4471
        %v4523 = vrot.slane %v4513, 2
        %v4524 = vrot.slane %v4514, 2
        %v4525 = vsel %vm1268, %v4523, %v4524
        %v4526 = vrot.slane %v4515, 2
        %v4527 = vsel %vm1268, %v4524, %v4526
        %v4528 = vrot.slane %v4516, 2
        %v4529 = vsel %vm1268, %v4526, %v4528
        %v4530 = vrot.slane %v4517, 2
        %v4531 = vsel %vm1268, %v4528, %v4530
        %v4536 = vadd.f32 %v4507, %v4525
        %v4537 = vadd.f32 %v4508, %v4527
        %v4538 = vadd.f32 %v4509, %v4529
        %v4539 = vadd.f32 %v4510, %v4531
        %v4540 = vmax.f32 %v4536, 0.0
        %v4541 = vmax.f32 %v4537, 0.0
        %v4542 = vmax.f32 %v4538, 0.0
        %v4543 = vmax.f32 %v4539, 0.0
        %v4544 = vperm.slane %v1139, 0
        %v4545 = vmul.f32 %v4540, %v4544
        %v4546 = vmul.f32 %v4541, %v4544
        %v4547 = vmul.f32 %v4542, %v4544
        %v4548 = vmul.f32 %v4543, %v4544
        %v4549 = vperm.slane %v1140, 0
        %v4550 = vadd.f32 %v4545, %v4549
        %v4551 = vadd.f32 %v4546, %v4549
        %v4552 = vadd.f32 %v4547, %v4549
        %v4553 = vadd.f32 %v4548, %v4549
        %4558 = vrot.lane.b32.xlu0 %v4550, 1
        %v4559 = vpop.permute.xlu0 %4558
        %4560 = vrot.lane.b32.xlu0 %v4551, 1
        %v4561 = vpop.permute.xlu0 %4560
        %4562 = vrot.lane.b32.xlu0 %v4552, 1
        %v4563 = vpop.permute.xlu0 %4562
        %4564 = vrot.lane.b32.xlu0 %v4553, 1
        %v4565 = vpop.permute.xlu0 %4564
        %4570 = vst.msk [vmem:[#allocation3 + $0x1] sm:$0xff] %vm1055, %v4559
        %4571 = vst.msk [vmem:[#allocation3 + $0x9] sm:$0xff] %vm1055, %v4561
        %4572 = vst.msk [vmem:[#allocation3 + $0x11] sm:$0xff] %vm1055, %v4563
        %4573 = vst.msk [vmem:[#allocation3 + $0x19] sm:$0xff] %vm1055, %v4565
        %4574 = vrot.lane.b32.xlu0 %v4550, 97
        %v4575 = vpop.permute.xlu0 %4574
        %4576 = vrot.lane.b32.xlu0 %v4551, 97
        %v4577 = vpop.permute.xlu0 %4576
        %4578 = vrot.lane.b32.xlu0 %v4552, 97
        %v4579 = vpop.permute.xlu0 %4578
        %4580 = vrot.lane.b32.xlu0 %v4553, 97
        %v4581 = vpop.permute.xlu0 %4580
        %s4586 = scalar_lea.vmem [#allocation3], 40
        %4587 = vst.msk [vmem:[%s4586 + $0x1] sm:$0xff] %vm1055, %v4575
        %4588 = vst.msk [vmem:[%s4586 + $0x9] sm:$0xff] %vm1055, %v4577
        %4589 = vst.msk [vmem:[%s4586 + $0x11] sm:$0xff] %vm1055, %v4579
        %4590 = vst.msk [vmem:[%s4586 + $0x19] sm:$0xff] %vm1055, %v4581
        %4591 = vrot.lane.b32.xlu0 %v4550, 65
        %v4592 = vpop.permute.xlu0 %4591
        %4593 = vrot.lane.b32.xlu0 %v4551, 65
        %v4594 = vpop.permute.xlu0 %4593
        %4595 = vrot.lane.b32.xlu0 %v4552, 65
        %v4596 = vpop.permute.xlu0 %4595
        %4597 = vrot.lane.b32.xlu0 %v4553, 65
        %v4598 = vpop.permute.xlu0 %4597
        %s4603 = scalar_lea.vmem [#allocation3], 80
        %4604 = vst.msk [vmem:[%s4603 + $0x1] sm:$0xff] %vm1055, %v4592
        %4605 = vst.msk [vmem:[%s4603 + $0x9] sm:$0xff] %vm1055, %v4594
        %4606 = vst.msk [vmem:[%s4603 + $0x11] sm:$0xff] %vm1055, %v4596
        %4607 = vst.msk [vmem:[%s4603 + $0x19] sm:$0xff] %vm1055, %v4598
        %4608 = vrot.lane.b32.xlu0 %v4550, 33
        %v4609 = vpop.permute.xlu0 %4608
        %4610 = vrot.lane.b32.xlu0 %v4551, 33
        %v4611 = vpop.permute.xlu0 %4610
        %4612 = vrot.lane.b32.xlu0 %v4552, 33
        %v4613 = vpop.permute.xlu0 %4612
        %4614 = vrot.lane.b32.xlu0 %v4553, 33
        %v4615 = vpop.permute.xlu0 %4614
        %s4620 = scalar_lea.vmem [#allocation3], 120
        %4621 = vst.msk [vmem:[%s4620 + $0x1] sm:$0xff] %vm1055, %v4609
        %4622 = vst.msk [vmem:[%s4620 + $0x9] sm:$0xff] %vm1055, %v4611
        %4623 = vst.msk [vmem:[%s4620 + $0x11] sm:$0xff] %vm1055, %v4613
        %4624 = vst.msk [vmem:[%s4620 + $0x19] sm:$0xff] %vm1055, %v4615
        %v4625 = vld [vmem:[%s7] sm:$0x1]
        %v4626 = vld [vmem:[%s7 + $0x1] sm:$0x1]
        %v4627 = vld [vmem:[%s7 + $0x2] sm:$0x1]
        %v4628 = vperm.slane %v4625, 0
        %v4629 = vadd.f32 %v4628, 0.0
        %v4630 = vld [vmem:[#allocation3] sm:$0xff]
        %v4631 = vld [vmem:[#allocation3 + $0x8] sm:$0xff]
        %v4632 = vld [vmem:[#allocation3 + $0x10] sm:$0xff]
        %v4633 = vld [vmem:[#allocation3 + $0x18] sm:$0xff]
        %v4634 = vld [vmem:[#allocation3 + $0x20] sm:$0x3]
        %4640 = vrot.lane.b32.xlu0 %v4630, 32
        %v4641 = vpop.permute.xlu0 %4640
        %4642 = vrot.lane.b32.xlu0 %v4631, 32
        %v4643 = vpop.permute.xlu0 %4642
        %4644 = vrot.lane.b32.xlu0 %v4632, 32
        %v4645 = vpop.permute.xlu0 %4644
        %4646 = vrot.lane.b32.xlu0 %v4633, 32
        %v4647 = vpop.permute.xlu0 %4646
        %4648 = vrot.lane.b32.xlu0 %v4634, 32
        %v4649 = vpop.permute.xlu0 %4648
        %4655 = vrot.lane.b32.xlu0 %v4630, 64
        %v4656 = vpop.permute.xlu0 %4655
        %4657 = vrot.lane.b32.xlu0 %v4631, 64
        %v4658 = vpop.permute.xlu0 %4657
        %4659 = vrot.lane.b32.xlu0 %v4632, 64
        %v4660 = vpop.permute.xlu0 %4659
        %4661 = vrot.lane.b32.xlu0 %v4633, 64
        %v4662 = vpop.permute.xlu0 %4661
        %4663 = vrot.lane.b32.xlu0 %v4634, 64
        %v4664 = vpop.permute.xlu0 %4663
        %4670 = vrot.lane.b32.xlu0 %v4630, 96
        %v4671 = vpop.permute.xlu0 %4670
        %4672 = vrot.lane.b32.xlu0 %v4631, 96
        %v4673 = vpop.permute.xlu0 %4672
        %4674 = vrot.lane.b32.xlu0 %v4632, 96
        %v4675 = vpop.permute.xlu0 %4674
        %4676 = vrot.lane.b32.xlu0 %v4633, 96
        %v4677 = vpop.permute.xlu0 %4676
        %4678 = vrot.lane.b32.xlu0 %v4634, 96
        %v4679 = vpop.permute.xlu0 %4678
        %v4685 = vsel %vm1198, %v4630, %v4641
        %v4686 = vsel %vm1198, %v4631, %v4643
        %v4687 = vsel %vm1198, %v4632, %v4645
        %v4688 = vsel %vm1198, %v4633, %v4647
        %v4689 = vsel %vm1198, %v4634, %v4649
        %v4690 = vsel %vm1204, %v4685, %v4656
        %v4691 = vsel %vm1204, %v4686, %v4658
        %v4692 = vsel %vm1204, %v4687, %v4660
        %v4693 = vsel %vm1204, %v4688, %v4662
        %v4694 = vsel %vm1204, %v4689, %v4664
        %v4695 = vsel %vm1210, %v4690, %v4671
        %v4696 = vsel %vm1210, %v4691, %v4673
        %v4697 = vsel %vm1210, %v4692, %v4675
        %v4698 = vsel %vm1210, %v4693, %v4677
        %v4699 = vsel %vm1210, %v4694, %v4679
        %v4700 = vld [vmem:[%s6] sm:$0x1]
        %v4701 = vperm.slane %v4700, 0
        %v4702 = vmul.f32 %v4701, %v4695
        %v4703 = vmul.f32 %v4701, %v4696
        %v4704 = vmul.f32 %v4701, %v4697
        %v4705 = vmul.f32 %v4701, %v4698
        %v4706 = vadd.f32 %v4629, %v4702
        %v4707 = vadd.f32 %v4629, %v4703
        %v4708 = vadd.f32 %v4629, %v4704
        %v4709 = vadd.f32 %v4629, %v4705
        %v4710 = vld [vmem:[%s6 + $0x3] sm:$0x1]
        %v4711 = vperm.slane %v4710, 0
        %v4712 = vmul.f32 %v4711, %v4695
        %v4713 = vmul.f32 %v4711, %v4696
        %v4714 = vmul.f32 %v4711, %v4697
        %v4715 = vmul.f32 %v4711, %v4698
        %v4716 = vmul.f32 %v4711, %v4699
        %v4722 = vrot.slane %v4712, 1
        %v4723 = vrot.slane %v4713, 1
        %v4724 = vsel %vm1238, %v4722, %v4723
        %v4725 = vrot.slane %v4714, 1
        %v4726 = vsel %vm1238, %v4723, %v4725
        %v4727 = vrot.slane %v4715, 1
        %v4728 = vsel %vm1238, %v4725, %v4727
        %v4729 = vrot.slane %v4716, 1
        %v4730 = vsel %vm1238, %v4727, %v4729
        %v4735 = vadd.f32 %v4706, %v4724
        %v4736 = vadd.f32 %v4707, %v4726
        %v4737 = vadd.f32 %v4708, %v4728
        %v4738 = vadd.f32 %v4709, %v4730
        %v4739 = vld [vmem:[%s6 + $0x6] sm:$0x1]
        %v4740 = vperm.slane %v4739, 0
        %v4741 = vmul.f32 %v4740, %v4695
        %v4742 = vmul.f32 %v4740, %v4696
        %v4743 = vmul.f32 %v4740, %v4697
        %v4744 = vmul.f32 %v4740, %v4698
        %v4745 = vmul.f32 %v4740, %v4699
        %v4751 = vrot.slane %v4741, 2
        %v4752 = vrot.slane %v4742, 2
        %v4753 = vsel %vm1268, %v4751, %v4752
        %v4754 = vrot.slane %v4743, 2
        %v4755 = vsel %vm1268, %v4752, %v4754
        %v4756 = vrot.slane %v4744, 2
        %v4757 = vsel %vm1268, %v4754, %v4756
        %v4758 = vrot.slane %v4745, 2
        %v4759 = vsel %vm1268, %v4756, %v4758
        %v4764 = vadd.f32 %v4735, %v4753
        %v4765 = vadd.f32 %v4736, %v4755
        %v4766 = vadd.f32 %v4737, %v4757
        %v4767 = vadd.f32 %v4738, %v4759
        %4768 = vrot.lane.b32.xlu0 %v4630, 127
        %v4769 = vpop.permute.xlu0 %4768
        %4770 = vrot.lane.b32.xlu0 %v4631, 127
        %v4771 = vpop.permute.xlu0 %4770
        %4772 = vrot.lane.b32.xlu0 %v4632, 127
        %v4773 = vpop.permute.xlu0 %4772
        %4774 = vrot.lane.b32.xlu0 %v4633, 127
        %v4775 = vpop.permute.xlu0 %4774
        %4776 = vrot.lane.b32.xlu0 %v4634, 127
        %v4777 = vpop.permute.xlu0 %4776
        %4783 = vrot.lane.b32.xlu0 %v4630, 31
        %v4784 = vpop.permute.xlu0 %4783
        %4785 = vrot.lane.b32.xlu0 %v4631, 31
        %v4786 = vpop.permute.xlu0 %4785
        %4787 = vrot.lane.b32.xlu0 %v4632, 31
        %v4788 = vpop.permute.xlu0 %4787
        %4789 = vrot.lane.b32.xlu0 %v4633, 31
        %v4790 = vpop.permute.xlu0 %4789
        %4791 = vrot.lane.b32.xlu0 %v4634, 31
        %v4792 = vpop.permute.xlu0 %4791
        %4798 = vrot.lane.b32.xlu0 %v4630, 63
        %v4799 = vpop.permute.xlu0 %4798
        %4800 = vrot.lane.b32.xlu0 %v4631, 63
        %v4801 = vpop.permute.xlu0 %4800
        %4802 = vrot.lane.b32.xlu0 %v4632, 63
        %v4803 = vpop.permute.xlu0 %4802
        %4804 = vrot.lane.b32.xlu0 %v4633, 63
        %v4805 = vpop.permute.xlu0 %4804
        %4806 = vrot.lane.b32.xlu0 %v4634, 63
        %v4807 = vpop.permute.xlu0 %4806
        %4813 = vrot.lane.b32.xlu0 %v4630, 95
        %v4814 = vpop.permute.xlu0 %4813
        %4815 = vrot.lane.b32.xlu0 %v4631, 95
        %v4816 = vpop.permute.xlu0 %4815
        %4817 = vrot.lane.b32.xlu0 %v4632, 95
        %v4818 = vpop.permute.xlu0 %4817
        %4819 = vrot.lane.b32.xlu0 %v4633, 95
        %v4820 = vpop.permute.xlu0 %4819
        %4821 = vrot.lane.b32.xlu0 %v4634, 95
        %v4822 = vpop.permute.xlu0 %4821
        %v4828 = vsel %vm1198, %v4769, %v4784
        %v4829 = vsel %vm1198, %v4771, %v4786
        %v4830 = vsel %vm1198, %v4773, %v4788
        %v4831 = vsel %vm1198, %v4775, %v4790
        %v4832 = vsel %vm1198, %v4777, %v4792
        %v4833 = vsel %vm1204, %v4828, %v4799
        %v4834 = vsel %vm1204, %v4829, %v4801
        %v4835 = vsel %vm1204, %v4830, %v4803
        %v4836 = vsel %vm1204, %v4831, %v4805
        %v4837 = vsel %vm1204, %v4832, %v4807
        %v4838 = vsel %vm1210, %v4833, %v4814
        %v4839 = vsel %vm1210, %v4834, %v4816
        %v4840 = vsel %vm1210, %v4835, %v4818
        %v4841 = vsel %vm1210, %v4836, %v4820
        %v4842 = vsel %vm1210, %v4837, %v4822
        %v4843 = vld [vmem:[%s6 + $0x1] sm:$0x1]
        %v4844 = vperm.slane %v4843, 0
        %v4845 = vmul.f32 %v4844, %v4838
        %v4846 = vmul.f32 %v4844, %v4839
        %v4847 = vmul.f32 %v4844, %v4840
        %v4848 = vmul.f32 %v4844, %v4841
        %v4849 = vadd.f32 %v4764, %v4845
        %v4850 = vadd.f32 %v4765, %v4846
        %v4851 = vadd.f32 %v4766, %v4847
        %v4852 = vadd.f32 %v4767, %v4848
        %v4853 = vld [vmem:[%s6 + $0x4] sm:$0x1]
        %v4854 = vperm.slane %v4853, 0
        %v4855 = vmul.f32 %v4854, %v4838
        %v4856 = vmul.f32 %v4854, %v4839
        %v4857 = vmul.f32 %v4854, %v4840
        %v4858 = vmul.f32 %v4854, %v4841
        %v4859 = vmul.f32 %v4854, %v4842
        %v4865 = vrot.slane %v4855, 1
        %v4866 = vrot.slane %v4856, 1
        %v4867 = vsel %vm1238, %v4865, %v4866
        %v4868 = vrot.slane %v4857, 1
        %v4869 = vsel %vm1238, %v4866, %v4868
        %v4870 = vrot.slane %v4858, 1
        %v4871 = vsel %vm1238, %v4868, %v4870
        %v4872 = vrot.slane %v4859, 1
        %v4873 = vsel %vm1238, %v4870, %v4872
        %v4878 = vadd.f32 %v4849, %v4867
        %v4879 = vadd.f32 %v4850, %v4869
        %v4880 = vadd.f32 %v4851, %v4871
        %v4881 = vadd.f32 %v4852, %v4873
        %v4882 = vld [vmem:[%s6 + $0x7] sm:$0x1]
        %v4883 = vperm.slane %v4882, 0
        %v4884 = vmul.f32 %v4883, %v4838
        %v4885 = vmul.f32 %v4883, %v4839
        %v4886 = vmul.f32 %v4883, %v4840
        %v4887 = vmul.f32 %v4883, %v4841
        %v4888 = vmul.f32 %v4883, %v4842
        %v4894 = vrot.slane %v4884, 2
        %v4895 = vrot.slane %v4885, 2
        %v4896 = vsel %vm1268, %v4894, %v4895
        %v4897 = vrot.slane %v4886, 2
        %v4898 = vsel %vm1268, %v4895, %v4897
        %v4899 = vrot.slane %v4887, 2
        %v4900 = vsel %vm1268, %v4897, %v4899
        %v4901 = vrot.slane %v4888, 2
        %v4902 = vsel %vm1268, %v4899, %v4901
        %v4907 = vadd.f32 %v4878, %v4896
        %v4908 = vadd.f32 %v4879, %v4898
        %v4909 = vadd.f32 %v4880, %v4900
        %v4910 = vadd.f32 %v4881, %v4902
        %4911 = vrot.lane.b32.xlu0 %v4630, 126
        %v4912 = vpop.permute.xlu0 %4911
        %4913 = vrot.lane.b32.xlu0 %v4631, 126
        %v4914 = vpop.permute.xlu0 %4913
        %4915 = vrot.lane.b32.xlu0 %v4632, 126
        %v4916 = vpop.permute.xlu0 %4915
        %4917 = vrot.lane.b32.xlu0 %v4633, 126
        %v4918 = vpop.permute.xlu0 %4917
        %4919 = vrot.lane.b32.xlu0 %v4634, 126
        %v4920 = vpop.permute.xlu0 %4919
        %4926 = vrot.lane.b32.xlu0 %v4630, 30
        %v4927 = vpop.permute.xlu0 %4926
        %4928 = vrot.lane.b32.xlu0 %v4631, 30
        %v4929 = vpop.permute.xlu0 %4928
        %4930 = vrot.lane.b32.xlu0 %v4632, 30
        %v4931 = vpop.permute.xlu0 %4930
        %4932 = vrot.lane.b32.xlu0 %v4633, 30
        %v4933 = vpop.permute.xlu0 %4932
        %4934 = vrot.lane.b32.xlu0 %v4634, 30
        %v4935 = vpop.permute.xlu0 %4934
        %4941 = vrot.lane.b32.xlu0 %v4630, 62
        %v4942 = vpop.permute.xlu0 %4941
        %4943 = vrot.lane.b32.xlu0 %v4631, 62
        %v4944 = vpop.permute.xlu0 %4943
        %4945 = vrot.lane.b32.xlu0 %v4632, 62
        %v4946 = vpop.permute.xlu0 %4945
        %4947 = vrot.lane.b32.xlu0 %v4633, 62
        %v4948 = vpop.permute.xlu0 %4947
        %4949 = vrot.lane.b32.xlu0 %v4634, 62
        %v4950 = vpop.permute.xlu0 %4949
        %4956 = vrot.lane.b32.xlu0 %v4630, 94
        %v4957 = vpop.permute.xlu0 %4956
        %4958 = vrot.lane.b32.xlu0 %v4631, 94
        %v4959 = vpop.permute.xlu0 %4958
        %4960 = vrot.lane.b32.xlu0 %v4632, 94
        %v4961 = vpop.permute.xlu0 %4960
        %4962 = vrot.lane.b32.xlu0 %v4633, 94
        %v4963 = vpop.permute.xlu0 %4962
        %4964 = vrot.lane.b32.xlu0 %v4634, 94
        %v4965 = vpop.permute.xlu0 %4964
        %v4971 = vsel %vm1198, %v4912, %v4927
        %v4972 = vsel %vm1198, %v4914, %v4929
        %v4973 = vsel %vm1198, %v4916, %v4931
        %v4974 = vsel %vm1198, %v4918, %v4933
        %v4975 = vsel %vm1198, %v4920, %v4935
        %v4976 = vsel %vm1204, %v4971, %v4942
        %v4977 = vsel %vm1204, %v4972, %v4944
        %v4978 = vsel %vm1204, %v4973, %v4946
        %v4979 = vsel %vm1204, %v4974, %v4948
        %v4980 = vsel %vm1204, %v4975, %v4950
        %v4981 = vsel %vm1210, %v4976, %v4957
        %v4982 = vsel %vm1210, %v4977, %v4959
        %v4983 = vsel %vm1210, %v4978, %v4961
        %v4984 = vsel %vm1210, %v4979, %v4963
        %v4985 = vsel %vm1210, %v4980, %v4965
        %v4986 = vld [vmem:[%s6 + $0x2] sm:$0x1]
        %v4987 = vperm.slane %v4986, 0
        %v4988 = vmul.f32 %v4987, %v4981
        %v4989 = vmul.f32 %v4987, %v4982
        %v4990 = vmul.f32 %v4987, %v4983
        %v4991 = vmul.f32 %v4987, %v4984
        %v4992 = vadd.f32 %v4907, %v4988
        %v4993 = vadd.f32 %v4908, %v4989
        %v4994 = vadd.f32 %v4909, %v4990
        %v4995 = vadd.f32 %v4910, %v4991
        %v4996 = vld [vmem:[%s6 + $0x5] sm:$0x1]
        %v4997 = vperm.slane %v4996, 0
        %v4998 = vmul.f32 %v4997, %v4981
        %v4999 = vmul.f32 %v4997, %v4982
        %v5000 = vmul.f32 %v4997, %v4983
        %v5001 = vmul.f32 %v4997, %v4984
        %v5002 = vmul.f32 %v4997, %v4985
        %v5008 = vrot.slane %v4998, 1
        %v5009 = vrot.slane %v4999, 1
        %v5010 = vsel %vm1238, %v5008, %v5009
        %v5011 = vrot.slane %v5000, 1
        %v5012 = vsel %vm1238, %v5009, %v5011
        %v5013 = vrot.slane %v5001, 1
        %v5014 = vsel %vm1238, %v5011, %v5013
        %v5015 = vrot.slane %v5002, 1
        %v5016 = vsel %vm1238, %v5013, %v5015
        %v5021 = vadd.f32 %v4992, %v5010
        %v5022 = vadd.f32 %v4993, %v5012
        %v5023 = vadd.f32 %v4994, %v5014
        %v5024 = vadd.f32 %v4995, %v5016
        %v5025 = vld [vmem:[%s6 + $0x8] sm:$0x1]
        %v5026 = vperm.slane %v5025, 0
        %v5027 = vmul.f32 %v5026, %v4981
        %v5028 = vmul.f32 %v5026, %v4982
        %v5029 = vmul.f32 %v5026, %v4983
        %v5030 = vmul.f32 %v5026, %v4984
        %v5031 = vmul.f32 %v5026, %v4985
        %v5037 = vrot.slane %v5027, 2
        %v5038 = vrot.slane %v5028, 2
        %v5039 = vsel %vm1268, %v5037, %v5038
        %v5040 = vrot.slane %v5029, 2
        %v5041 = vsel %vm1268, %v5038, %v5040
        %v5042 = vrot.slane %v5030, 2
        %v5043 = vsel %vm1268, %v5040, %v5042
        %v5044 = vrot.slane %v5031, 2
        %v5045 = vsel %vm1268, %v5042, %v5044
        %v5050 = vadd.f32 %v5021, %v5039
        %v5051 = vadd.f32 %v5022, %v5041
        %v5052 = vadd.f32 %v5023, %v5043
        %v5053 = vadd.f32 %v5024, %v5045
        %v5054 = vld [vmem:[%s4586] sm:$0xff]
        %v5055 = vld [vmem:[%s4586 + $0x8] sm:$0xff]
        %v5056 = vld [vmem:[%s4586 + $0x10] sm:$0xff]
        %v5057 = vld [vmem:[%s4586 + $0x18] sm:$0xff]
        %v5058 = vld [vmem:[%s4586 + $0x20] sm:$0x3]
        %5064 = vrot.lane.b32.xlu0 %v5054, 32
        %v5065 = vpop.permute.xlu0 %5064
        %5066 = vrot.lane.b32.xlu0 %v5055, 32
        %v5067 = vpop.permute.xlu0 %5066
        %5068 = vrot.lane.b32.xlu0 %v5056, 32
        %v5069 = vpop.permute.xlu0 %5068
        %5070 = vrot.lane.b32.xlu0 %v5057, 32
        %v5071 = vpop.permute.xlu0 %5070
        %5072 = vrot.lane.b32.xlu0 %v5058, 32
        %v5073 = vpop.permute.xlu0 %5072
        %5079 = vrot.lane.b32.xlu0 %v5054, 64
        %v5080 = vpop.permute.xlu0 %5079
        %5081 = vrot.lane.b32.xlu0 %v5055, 64
        %v5082 = vpop.permute.xlu0 %5081
        %5083 = vrot.lane.b32.xlu0 %v5056, 64
        %v5084 = vpop.permute.xlu0 %5083
        %5085 = vrot.lane.b32.xlu0 %v5057, 64
        %v5086 = vpop.permute.xlu0 %5085
        %5087 = vrot.lane.b32.xlu0 %v5058, 64
        %v5088 = vpop.permute.xlu0 %5087
        %5094 = vrot.lane.b32.xlu0 %v5054, 96
        %v5095 = vpop.permute.xlu0 %5094
        %5096 = vrot.lane.b32.xlu0 %v5055, 96
        %v5097 = vpop.permute.xlu0 %5096
        %5098 = vrot.lane.b32.xlu0 %v5056, 96
        %v5099 = vpop.permute.xlu0 %5098
        %5100 = vrot.lane.b32.xlu0 %v5057, 96
        %v5101 = vpop.permute.xlu0 %5100
        %5102 = vrot.lane.b32.xlu0 %v5058, 96
        %v5103 = vpop.permute.xlu0 %5102
        %v5109 = vsel %vm1198, %v5054, %v5065
        %v5110 = vsel %vm1198, %v5055, %v5067
        %v5111 = vsel %vm1198, %v5056, %v5069
        %v5112 = vsel %vm1198, %v5057, %v5071
        %v5113 = vsel %vm1198, %v5058, %v5073
        %v5114 = vsel %vm1204, %v5109, %v5080
        %v5115 = vsel %vm1204, %v5110, %v5082
        %v5116 = vsel %vm1204, %v5111, %v5084
        %v5117 = vsel %vm1204, %v5112, %v5086
        %v5118 = vsel %vm1204, %v5113, %v5088
        %v5119 = vsel %vm1210, %v5114, %v5095
        %v5120 = vsel %vm1210, %v5115, %v5097
        %v5121 = vsel %vm1210, %v5116, %v5099
        %v5122 = vsel %vm1210, %v5117, %v5101
        %v5123 = vsel %vm1210, %v5118, %v5103
        %v5124 = vld [vmem:[%s6 + $0x9] sm:$0x1]
        %v5125 = vperm.slane %v5124, 0
        %v5126 = vmul.f32 %v5125, %v5119
        %v5127 = vmul.f32 %v5125, %v5120
        %v5128 = vmul.f32 %v5125, %v5121
        %v5129 = vmul.f32 %v5125, %v5122
        %v5130 = vadd.f32 %v5050, %v5126
        %v5131 = vadd.f32 %v5051, %v5127
        %v5132 = vadd.f32 %v5052, %v5128
        %v5133 = vadd.f32 %v5053, %v5129
        %v5134 = vld [vmem:[%s6 + $0xc] sm:$0x1]
        %v5135 = vperm.slane %v5134, 0
        %v5136 = vmul.f32 %v5135, %v5119
        %v5137 = vmul.f32 %v5135, %v5120
        %v5138 = vmul.f32 %v5135, %v5121
        %v5139 = vmul.f32 %v5135, %v5122
        %v5140 = vmul.f32 %v5135, %v5123
        %v5146 = vrot.slane %v5136, 1
        %v5147 = vrot.slane %v5137, 1
        %v5148 = vsel %vm1238, %v5146, %v5147
        %v5149 = vrot.slane %v5138, 1
        %v5150 = vsel %vm1238, %v5147, %v5149
        %v5151 = vrot.slane %v5139, 1
        %v5152 = vsel %vm1238, %v5149, %v5151
        %v5153 = vrot.slane %v5140, 1
        %v5154 = vsel %vm1238, %v5151, %v5153
        %v5159 = vadd.f32 %v5130, %v5148
        %v5160 = vadd.f32 %v5131, %v5150
        %v5161 = vadd.f32 %v5132, %v5152
        %v5162 = vadd.f32 %v5133, %v5154
        %v5163 = vld [vmem:[%s6 + $0xf] sm:$0x1]
        %v5164 = vperm.slane %v5163, 0
        %v5165 = vmul.f32 %v5164, %v5119
        %v5166 = vmul.f32 %v5164, %v5120
        %v5167 = vmul.f32 %v5164, %v5121
        %v5168 = vmul.f32 %v5164, %v5122
        %v5169 = vmul.f32 %v5164, %v5123
        %v5175 = vrot.slane %v5165, 2
        %v5176 = vrot.slane %v5166, 2
        %v5177 = vsel %vm1268, %v5175, %v5176
        %v5178 = vrot.slane %v5167, 2
        %v5179 = vsel %vm1268, %v5176, %v5178
        %v5180 = vrot.slane %v5168, 2
        %v5181 = vsel %vm1268, %v5178, %v5180
        %v5182 = vrot.slane %v5169, 2
        %v5183 = vsel %vm1268, %v5180, %v5182
        %v5188 = vadd.f32 %v5159, %v5177
        %v5189 = vadd.f32 %v5160, %v5179
        %v5190 = vadd.f32 %v5161, %v5181
        %v5191 = vadd.f32 %v5162, %v5183
        %5192 = vrot.lane.b32.xlu0 %v5054, 127
        %v5193 = vpop.permute.xlu0 %5192
        %5194 = vrot.lane.b32.xlu0 %v5055, 127
        %v5195 = vpop.permute.xlu0 %5194
        %5196 = vrot.lane.b32.xlu0 %v5056, 127
        %v5197 = vpop.permute.xlu0 %5196
        %5198 = vrot.lane.b32.xlu0 %v5057, 127
        %v5199 = vpop.permute.xlu0 %5198
        %5200 = vrot.lane.b32.xlu0 %v5058, 127
        %v5201 = vpop.permute.xlu0 %5200
        %5207 = vrot.lane.b32.xlu0 %v5054, 31
        %v5208 = vpop.permute.xlu0 %5207
        %5209 = vrot.lane.b32.xlu0 %v5055, 31
        %v5210 = vpop.permute.xlu0 %5209
        %5211 = vrot.lane.b32.xlu0 %v5056, 31
        %v5212 = vpop.permute.xlu0 %5211
        %5213 = vrot.lane.b32.xlu0 %v5057, 31
        %v5214 = vpop.permute.xlu0 %5213
        %5215 = vrot.lane.b32.xlu0 %v5058, 31
        %v5216 = vpop.permute.xlu0 %5215
        %5222 = vrot.lane.b32.xlu0 %v5054, 63
        %v5223 = vpop.permute.xlu0 %5222
        %5224 = vrot.lane.b32.xlu0 %v5055, 63
        %v5225 = vpop.permute.xlu0 %5224
        %5226 = vrot.lane.b32.xlu0 %v5056, 63
        %v5227 = vpop.permute.xlu0 %5226
        %5228 = vrot.lane.b32.xlu0 %v5057, 63
        %v5229 = vpop.permute.xlu0 %5228
        %5230 = vrot.lane.b32.xlu0 %v5058, 63
        %v5231 = vpop.permute.xlu0 %5230
        %5237 = vrot.lane.b32.xlu0 %v5054, 95
        %v5238 = vpop.permute.xlu0 %5237
        %5239 = vrot.lane.b32.xlu0 %v5055, 95
        %v5240 = vpop.permute.xlu0 %5239
        %5241 = vrot.lane.b32.xlu0 %v5056, 95
        %v5242 = vpop.permute.xlu0 %5241
        %5243 = vrot.lane.b32.xlu0 %v5057, 95
        %v5244 = vpop.permute.xlu0 %5243
        %5245 = vrot.lane.b32.xlu0 %v5058, 95
        %v5246 = vpop.permute.xlu0 %5245
        %v5252 = vsel %vm1198, %v5193, %v5208
        %v5253 = vsel %vm1198, %v5195, %v5210
        %v5254 = vsel %vm1198, %v5197, %v5212
        %v5255 = vsel %vm1198, %v5199, %v5214
        %v5256 = vsel %vm1198, %v5201, %v5216
        %v5257 = vsel %vm1204, %v5252, %v5223
        %v5258 = vsel %vm1204, %v5253, %v5225
        %v5259 = vsel %vm1204, %v5254, %v5227
        %v5260 = vsel %vm1204, %v5255, %v5229
        %v5261 = vsel %vm1204, %v5256, %v5231
        %v5262 = vsel %vm1210, %v5257, %v5238
        %v5263 = vsel %vm1210, %v5258, %v5240
        %v5264 = vsel %vm1210, %v5259, %v5242
        %v5265 = vsel %vm1210, %v5260, %v5244
        %v5266 = vsel %vm1210, %v5261, %v5246
        %v5267 = vld [vmem:[%s6 + $0xa] sm:$0x1]
        %v5268 = vperm.slane %v5267, 0
        %v5269 = vmul.f32 %v5268, %v5262
        %v5270 = vmul.f32 %v5268, %v5263
        %v5271 = vmul.f32 %v5268, %v5264
        %v5272 = vmul.f32 %v5268, %v5265
        %v5273 = vadd.f32 %v5188, %v5269
        %v5274 = vadd.f32 %v5189, %v5270
        %v5275 = vadd.f32 %v5190, %v5271
        %v5276 = vadd.f32 %v5191, %v5272
        %v5277 = vld [vmem:[%s6 + $0xd] sm:$0x1]
        %v5278 = vperm.slane %v5277, 0
        %v5279 = vmul.f32 %v5278, %v5262
        %v5280 = vmul.f32 %v5278, %v5263
        %v5281 = vmul.f32 %v5278, %v5264
        %v5282 = vmul.f32 %v5278, %v5265
        %v5283 = vmul.f32 %v5278, %v5266
        %v5289 = vrot.slane %v5279, 1
        %v5290 = vrot.slane %v5280, 1
        %v5291 = vsel %vm1238, %v5289, %v5290
        %v5292 = vrot.slane %v5281, 1
        %v5293 = vsel %vm1238, %v5290, %v5292
        %v5294 = vrot.slane %v5282, 1
        %v5295 = vsel %vm1238, %v5292, %v5294
        %v5296 = vrot.slane %v5283, 1
        %v5297 = vsel %vm1238, %v5294, %v5296
        %v5302 = vadd.f32 %v5273, %v5291
        %v5303 = vadd.f32 %v5274, %v5293
        %v5304 = vadd.f32 %v5275, %v5295
        %v5305 = vadd.f32 %v5276, %v5297
        %v5306 = vld [vmem:[%s6 + $0x10] sm:$0x1]
        %v5307 = vperm.slane %v5306, 0
        %v5308 = vmul.f32 %v5307, %v5262
        %v5309 = vmul.f32 %v5307, %v5263
        %v5310 = vmul.f32 %v5307, %v5264
        %v5311 = vmul.f32 %v5307, %v5265
        %v5312 = vmul.f32 %v5307, %v5266
        %v5318 = vrot.slane %v5308, 2
        %v5319 = vrot.slane %v5309, 2
        %v5320 = vsel %vm1268, %v5318, %v5319
        %v5321 = vrot.slane %v5310, 2
        %v5322 = vsel %vm1268, %v5319, %v5321
        %v5323 = vrot.slane %v5311, 2
        %v5324 = vsel %vm1268, %v5321, %v5323
        %v5325 = vrot.slane %v5312, 2
        %v5326 = vsel %vm1268, %v5323, %v5325
        %v5331 = vadd.f32 %v5302, %v5320
        %v5332 = vadd.f32 %v5303, %v5322
        %v5333 = vadd.f32 %v5304, %v5324
        %v5334 = vadd.f32 %v5305, %v5326
        %5335 = vrot.lane.b32.xlu0 %v5054, 126
        %v5336 = vpop.permute.xlu0 %5335
        %5337 = vrot.lane.b32.xlu0 %v5055, 126
        %v5338 = vpop.permute.xlu0 %5337
        %5339 = vrot.lane.b32.xlu0 %v5056, 126
        %v5340 = vpop.permute.xlu0 %5339
        %5341 = vrot.lane.b32.xlu0 %v5057, 126
        %v5342 = vpop.permute.xlu0 %5341
        %5343 = vrot.lane.b32.xlu0 %v5058, 126
        %v5344 = vpop.permute.xlu0 %5343
        %5350 = vrot.lane.b32.xlu0 %v5054, 30
        %v5351 = vpop.permute.xlu0 %5350
        %5352 = vrot.lane.b32.xlu0 %v5055, 30
        %v5353 = vpop.permute.xlu0 %5352
        %5354 = vrot.lane.b32.xlu0 %v5056, 30
        %v5355 = vpop.permute.xlu0 %5354
        %5356 = vrot.lane.b32.xlu0 %v5057, 30
        %v5357 = vpop.permute.xlu0 %5356
        %5358 = vrot.lane.b32.xlu0 %v5058, 30
        %v5359 = vpop.permute.xlu0 %5358
        %5365 = vrot.lane.b32.xlu0 %v5054, 62
        %v5366 = vpop.permute.xlu0 %5365
        %5367 = vrot.lane.b32.xlu0 %v5055, 62
        %v5368 = vpop.permute.xlu0 %5367
        %5369 = vrot.lane.b32.xlu0 %v5056, 62
        %v5370 = vpop.permute.xlu0 %5369
        %5371 = vrot.lane.b32.xlu0 %v5057, 62
        %v5372 = vpop.permute.xlu0 %5371
        %5373 = vrot.lane.b32.xlu0 %v5058, 62
        %v5374 = vpop.permute.xlu0 %5373
        %5380 = vrot.lane.b32.xlu0 %v5054, 94
        %v5381 = vpop.permute.xlu0 %5380
        %5382 = vrot.lane.b32.xlu0 %v5055, 94
        %v5383 = vpop.permute.xlu0 %5382
        %5384 = vrot.lane.b32.xlu0 %v5056, 94
        %v5385 = vpop.permute.xlu0 %5384
        %5386 = vrot.lane.b32.xlu0 %v5057, 94
        %v5387 = vpop.permute.xlu0 %5386
        %5388 = vrot.lane.b32.xlu0 %v5058, 94
        %v5389 = vpop.permute.xlu0 %5388
        %v5395 = vsel %vm1198, %v5336, %v5351
        %v5396 = vsel %vm1198, %v5338, %v5353
        %v5397 = vsel %vm1198, %v5340, %v5355
        %v5398 = vsel %vm1198, %v5342, %v5357
        %v5399 = vsel %vm1198, %v5344, %v5359
        %v5400 = vsel %vm1204, %v5395, %v5366
        %v5401 = vsel %vm1204, %v5396, %v5368
        %v5402 = vsel %vm1204, %v5397, %v5370
        %v5403 = vsel %vm1204, %v5398, %v5372
        %v5404 = vsel %vm1204, %v5399, %v5374
        %v5405 = vsel %vm1210, %v5400, %v5381
        %v5406 = vsel %vm1210, %v5401, %v5383
        %v5407 = vsel %vm1210, %v5402, %v5385
        %v5408 = vsel %vm1210, %v5403, %v5387
        %v5409 = vsel %vm1210, %v5404, %v5389
        %v5410 = vld [vmem:[%s6 + $0xb] sm:$0x1]
        %v5411 = vperm.slane %v5410, 0
        %v5412 = vmul.f32 %v5411, %v5405
        %v5413 = vmul.f32 %v5411, %v5406
        %v5414 = vmul.f32 %v5411, %v5407
        %v5415 = vmul.f32 %v5411, %v5408
        %v5416 = vadd.f32 %v5331, %v5412
        %v5417 = vadd.f32 %v5332, %v5413
        %v5418 = vadd.f32 %v5333, %v5414
        %v5419 = vadd.f32 %v5334, %v5415
        %v5420 = vld [vmem:[%s6 + $0xe] sm:$0x1]
        %v5421 = vperm.slane %v5420, 0
        %v5422 = vmul.f32 %v5421, %v5405
        %v5423 = vmul.f32 %v5421, %v5406
        %v5424 = vmul.f32 %v5421, %v5407
        %v5425 = vmul.f32 %v5421, %v5408
        %v5426 = vmul.f32 %v5421, %v5409
        %v5432 = vrot.slane %v5422, 1
        %v5433 = vrot.slane %v5423, 1
        %v5434 = vsel %vm1238, %v5432, %v5433
        %v5435 = vrot.slane %v5424, 1
        %v5436 = vsel %vm1238, %v5433, %v5435
        %v5437 = vrot.slane %v5425, 1
        %v5438 = vsel %vm1238, %v5435, %v5437
        %v5439 = vrot.slane %v5426, 1
        %v5440 = vsel %vm1238, %v5437, %v5439
        %v5445 = vadd.f32 %v5416, %v5434
        %v5446 = vadd.f32 %v5417, %v5436
        %v5447 = vadd.f32 %v5418, %v5438
        %v5448 = vadd.f32 %v5419, %v5440
        %v5449 = vld [vmem:[%s6 + $0x11] sm:$0x1]
        %v5450 = vperm.slane %v5449, 0
        %v5451 = vmul.f32 %v5450, %v5405
        %v5452 = vmul.f32 %v5450, %v5406
        %v5453 = vmul.f32 %v5450, %v5407
        %v5454 = vmul.f32 %v5450, %v5408
        %v5455 = vmul.f32 %v5450, %v5409
        %v5461 = vrot.slane %v5451, 2
        %v5462 = vrot.slane %v5452, 2
        %v5463 = vsel %vm1268, %v5461, %v5462
        %v5464 = vrot.slane %v5453, 2
        %v5465 = vsel %vm1268, %v5462, %v5464
        %v5466 = vrot.slane %v5454, 2
        %v5467 = vsel %vm1268, %v5464, %v5466
        %v5468 = vrot.slane %v5455, 2
        %v5469 = vsel %vm1268, %v5466, %v5468
        %v5474 = vadd.f32 %v5445, %v5463
        %v5475 = vadd.f32 %v5446, %v5465
        %v5476 = vadd.f32 %v5447, %v5467
        %v5477 = vadd.f32 %v5448, %v5469
        %v5478 = vld [vmem:[%s4603] sm:$0xff]
        %v5479 = vld [vmem:[%s4603 + $0x8] sm:$0xff]
        %v5480 = vld [vmem:[%s4603 + $0x10] sm:$0xff]
        %v5481 = vld [vmem:[%s4603 + $0x18] sm:$0xff]
        %v5482 = vld [vmem:[%s4603 + $0x20] sm:$0x3]
        %5488 = vrot.lane.b32.xlu0 %v5478, 32
        %v5489 = vpop.permute.xlu0 %5488
        %5490 = vrot.lane.b32.xlu0 %v5479, 32
        %v5491 = vpop.permute.xlu0 %5490
        %5492 = vrot.lane.b32.xlu0 %v5480, 32
        %v5493 = vpop.permute.xlu0 %5492
        %5494 = vrot.lane.b32.xlu0 %v5481, 32
        %v5495 = vpop.permute.xlu0 %5494
        %5496 = vrot.lane.b32.xlu0 %v5482, 32
        %v5497 = vpop.permute.xlu0 %5496
        %5503 = vrot.lane.b32.xlu0 %v5478, 64
        %v5504 = vpop.permute.xlu0 %5503
        %5505 = vrot.lane.b32.xlu0 %v5479, 64
        %v5506 = vpop.permute.xlu0 %5505
        %5507 = vrot.lane.b32.xlu0 %v5480, 64
        %v5508 = vpop.permute.xlu0 %5507
        %5509 = vrot.lane.b32.xlu0 %v5481, 64
        %v5510 = vpop.permute.xlu0 %5509
        %5511 = vrot.lane.b32.xlu0 %v5482, 64
        %v5512 = vpop.permute.xlu0 %5511
        %5518 = vrot.lane.b32.xlu0 %v5478, 96
        %v5519 = vpop.permute.xlu0 %5518
        %5520 = vrot.lane.b32.xlu0 %v5479, 96
        %v5521 = vpop.permute.xlu0 %5520
        %5522 = vrot.lane.b32.xlu0 %v5480, 96
        %v5523 = vpop.permute.xlu0 %5522
        %5524 = vrot.lane.b32.xlu0 %v5481, 96
        %v5525 = vpop.permute.xlu0 %5524
        %5526 = vrot.lane.b32.xlu0 %v5482, 96
        %v5527 = vpop.permute.xlu0 %5526
        %v5533 = vsel %vm1198, %v5478, %v5489
        %v5534 = vsel %vm1198, %v5479, %v5491
        %v5535 = vsel %vm1198, %v5480, %v5493
        %v5536 = vsel %vm1198, %v5481, %v5495
        %v5537 = vsel %vm1198, %v5482, %v5497
        %v5538 = vsel %vm1204, %v5533, %v5504
        %v5539 = vsel %vm1204, %v5534, %v5506
        %v5540 = vsel %vm1204, %v5535, %v5508
        %v5541 = vsel %vm1204, %v5536, %v5510
        %v5542 = vsel %vm1204, %v5537, %v5512
        %v5543 = vsel %vm1210, %v5538, %v5519
        %v5544 = vsel %vm1210, %v5539, %v5521
        %v5545 = vsel %vm1210, %v5540, %v5523
        %v5546 = vsel %vm1210, %v5541, %v5525
        %v5547 = vsel %vm1210, %v5542, %v5527
        %v5548 = vld [vmem:[%s6 + $0x12] sm:$0x1]
        %v5549 = vperm.slane %v5548, 0
        %v5550 = vmul.f32 %v5549, %v5543
        %v5551 = vmul.f32 %v5549, %v5544
        %v5552 = vmul.f32 %v5549, %v5545
        %v5553 = vmul.f32 %v5549, %v5546
        %v5554 = vadd.f32 %v5474, %v5550
        %v5555 = vadd.f32 %v5475, %v5551
        %v5556 = vadd.f32 %v5476, %v5552
        %v5557 = vadd.f32 %v5477, %v5553
        %v5558 = vld [vmem:[%s6 + $0x15] sm:$0x1]
        %v5559 = vperm.slane %v5558, 0
        %v5560 = vmul.f32 %v5559, %v5543
        %v5561 = vmul.f32 %v5559, %v5544
        %v5562 = vmul.f32 %v5559, %v5545
        %v5563 = vmul.f32 %v5559, %v5546
        %v5564 = vmul.f32 %v5559, %v5547
        %v5570 = vrot.slane %v5560, 1
        %v5571 = vrot.slane %v5561, 1
        %v5572 = vsel %vm1238, %v5570, %v5571
        %v5573 = vrot.slane %v5562, 1
        %v5574 = vsel %vm1238, %v5571, %v5573
        %v5575 = vrot.slane %v5563, 1
        %v5576 = vsel %vm1238, %v5573, %v5575
        %v5577 = vrot.slane %v5564, 1
        %v5578 = vsel %vm1238, %v5575, %v5577
        %v5583 = vadd.f32 %v5554, %v5572
        %v5584 = vadd.f32 %v5555, %v5574
        %v5585 = vadd.f32 %v5556, %v5576
        %v5586 = vadd.f32 %v5557, %v5578
        %v5587 = vld [vmem:[%s6 + $0x18] sm:$0x1]
        %v5588 = vperm.slane %v5587, 0
        %v5589 = vmul.f32 %v5588, %v5543
        %v5590 = vmul.f32 %v5588, %v5544
        %v5591 = vmul.f32 %v5588, %v5545
        %v5592 = vmul.f32 %v5588, %v5546
        %v5593 = vmul.f32 %v5588, %v5547
        %v5599 = vrot.slane %v5589, 2
        %v5600 = vrot.slane %v5590, 2
        %v5601 = vsel %vm1268, %v5599, %v5600
        %v5602 = vrot.slane %v5591, 2
        %v5603 = vsel %vm1268, %v5600, %v5602
        %v5604 = vrot.slane %v5592, 2
        %v5605 = vsel %vm1268, %v5602, %v5604
        %v5606 = vrot.slane %v5593, 2
        %v5607 = vsel %vm1268, %v5604, %v5606
        %v5612 = vadd.f32 %v5583, %v5601
        %v5613 = vadd.f32 %v5584, %v5603
        %v5614 = vadd.f32 %v5585, %v5605
        %v5615 = vadd.f32 %v5586, %v5607
        %5616 = vrot.lane.b32.xlu0 %v5478, 127
        %v5617 = vpop.permute.xlu0 %5616
        %5618 = vrot.lane.b32.xlu0 %v5479, 127
        %v5619 = vpop.permute.xlu0 %5618
        %5620 = vrot.lane.b32.xlu0 %v5480, 127
        %v5621 = vpop.permute.xlu0 %5620
        %5622 = vrot.lane.b32.xlu0 %v5481, 127
        %v5623 = vpop.permute.xlu0 %5622
        %5624 = vrot.lane.b32.xlu0 %v5482, 127
        %v5625 = vpop.permute.xlu0 %5624
        %5631 = vrot.lane.b32.xlu0 %v5478, 31
        %v5632 = vpop.permute.xlu0 %5631
        %5633 = vrot.lane.b32.xlu0 %v5479, 31
        %v5634 = vpop.permute.xlu0 %5633
        %5635 = vrot.lane.b32.xlu0 %v5480, 31
        %v5636 = vpop.permute.xlu0 %5635
        %5637 = vrot.lane.b32.xlu0 %v5481, 31
        %v5638 = vpop.permute.xlu0 %5637
        %5639 = vrot.lane.b32.xlu0 %v5482, 31
        %v5640 = vpop.permute.xlu0 %5639
        %5646 = vrot.lane.b32.xlu0 %v5478, 63
        %v5647 = vpop.permute.xlu0 %5646
        %5648 = vrot.lane.b32.xlu0 %v5479, 63
        %v5649 = vpop.permute.xlu0 %5648
        %5650 = vrot.lane.b32.xlu0 %v5480, 63
        %v5651 = vpop.permute.xlu0 %5650
        %5652 = vrot.lane.b32.xlu0 %v5481, 63
        %v5653 = vpop.permute.xlu0 %5652
        %5654 = vrot.lane.b32.xlu0 %v5482, 63
        %v5655 = vpop.permute.xlu0 %5654
        %5661 = vrot.lane.b32.xlu0 %v5478, 95
        %v5662 = vpop.permute.xlu0 %5661
        %5663 = vrot.lane.b32.xlu0 %v5479, 95
        %v5664 = vpop.permute.xlu0 %5663
        %5665 = vrot.lane.b32.xlu0 %v5480, 95
        %v5666 = vpop.permute.xlu0 %5665
        %5667 = vrot.lane.b32.xlu0 %v5481, 95
        %v5668 = vpop.permute.xlu0 %5667
        %5669 = vrot.lane.b32.xlu0 %v5482, 95
        %v5670 = vpop.permute.xlu0 %5669
        %v5676 = vsel %vm1198, %v5617, %v5632
        %v5677 = vsel %vm1198, %v5619, %v5634
        %v5678 = vsel %vm1198, %v5621, %v5636
        %v5679 = vsel %vm1198, %v5623, %v5638
        %v5680 = vsel %vm1198, %v5625, %v5640
        %v5681 = vsel %vm1204, %v5676, %v5647
        %v5682 = vsel %vm1204, %v5677, %v5649
        %v5683 = vsel %vm1204, %v5678, %v5651
        %v5684 = vsel %vm1204, %v5679, %v5653
        %v5685 = vsel %vm1204, %v5680, %v5655
        %v5686 = vsel %vm1210, %v5681, %v5662
        %v5687 = vsel %vm1210, %v5682, %v5664
        %v5688 = vsel %vm1210, %v5683, %v5666
        %v5689 = vsel %vm1210, %v5684, %v5668
        %v5690 = vsel %vm1210, %v5685, %v5670
        %v5691 = vld [vmem:[%s6 + $0x13] sm:$0x1]
        %v5692 = vperm.slane %v5691, 0
        %v5693 = vmul.f32 %v5692, %v5686
        %v5694 = vmul.f32 %v5692, %v5687
        %v5695 = vmul.f32 %v5692, %v5688
        %v5696 = vmul.f32 %v5692, %v5689
        %v5697 = vadd.f32 %v5612, %v5693
        %v5698 = vadd.f32 %v5613, %v5694
        %v5699 = vadd.f32 %v5614, %v5695
        %v5700 = vadd.f32 %v5615, %v5696
        %v5701 = vld [vmem:[%s6 + $0x16] sm:$0x1]
        %v5702 = vperm.slane %v5701, 0
        %v5703 = vmul.f32 %v5702, %v5686
        %v5704 = vmul.f32 %v5702, %v5687
        %v5705 = vmul.f32 %v5702, %v5688
        %v5706 = vmul.f32 %v5702, %v5689
        %v5707 = vmul.f32 %v5702, %v5690
        %v5713 = vrot.slane %v5703, 1
        %v5714 = vrot.slane %v5704, 1
        %v5715 = vsel %vm1238, %v5713, %v5714
        %v5716 = vrot.slane %v5705, 1
        %v5717 = vsel %vm1238, %v5714, %v5716
        %v5718 = vrot.slane %v5706, 1
        %v5719 = vsel %vm1238, %v5716, %v5718
        %v5720 = vrot.slane %v5707, 1
        %v5721 = vsel %vm1238, %v5718, %v5720
        %v5726 = vadd.f32 %v5697, %v5715
        %v5727 = vadd.f32 %v5698, %v5717
        %v5728 = vadd.f32 %v5699, %v5719
        %v5729 = vadd.f32 %v5700, %v5721
        %v5730 = vld [vmem:[%s6 + $0x19] sm:$0x1]
        %v5731 = vperm.slane %v5730, 0
        %v5732 = vmul.f32 %v5731, %v5686
        %v5733 = vmul.f32 %v5731, %v5687
        %v5734 = vmul.f32 %v5731, %v5688
        %v5735 = vmul.f32 %v5731, %v5689
        %v5736 = vmul.f32 %v5731, %v5690
        %v5742 = vrot.slane %v5732, 2
        %v5743 = vrot.slane %v5733, 2
        %v5744 = vsel %vm1268, %v5742, %v5743
        %v5745 = vrot.slane %v5734, 2
        %v5746 = vsel %vm1268, %v5743, %v5745
        %v5747 = vrot.slane %v5735, 2
        %v5748 = vsel %vm1268, %v5745, %v5747
        %v5749 = vrot.slane %v5736, 2
        %v5750 = vsel %vm1268, %v5747, %v5749
        %v5755 = vadd.f32 %v5726, %v5744
        %v5756 = vadd.f32 %v5727, %v5746
        %v5757 = vadd.f32 %v5728, %v5748
        %v5758 = vadd.f32 %v5729, %v5750
        %5759 = vrot.lane.b32.xlu0 %v5478, 126
        %v5760 = vpop.permute.xlu0 %5759
        %5761 = vrot.lane.b32.xlu0 %v5479, 126
        %v5762 = vpop.permute.xlu0 %5761
        %5763 = vrot.lane.b32.xlu0 %v5480, 126
        %v5764 = vpop.permute.xlu0 %5763
        %5765 = vrot.lane.b32.xlu0 %v5481, 126
        %v5766 = vpop.permute.xlu0 %5765
        %5767 = vrot.lane.b32.xlu0 %v5482, 126
        %v5768 = vpop.permute.xlu0 %5767
        %5774 = vrot.lane.b32.xlu0 %v5478, 30
        %v5775 = vpop.permute.xlu0 %5774
        %5776 = vrot.lane.b32.xlu0 %v5479, 30
        %v5777 = vpop.permute.xlu0 %5776
        %5778 = vrot.lane.b32.xlu0 %v5480, 30
        %v5779 = vpop.permute.xlu0 %5778
        %5780 = vrot.lane.b32.xlu0 %v5481, 30
        %v5781 = vpop.permute.xlu0 %5780
        %5782 = vrot.lane.b32.xlu0 %v5482, 30
        %v5783 = vpop.permute.xlu0 %5782
        %5789 = vrot.lane.b32.xlu0 %v5478, 62
        %v5790 = vpop.permute.xlu0 %5789
        %5791 = vrot.lane.b32.xlu0 %v5479, 62
        %v5792 = vpop.permute.xlu0 %5791
        %5793 = vrot.lane.b32.xlu0 %v5480, 62
        %v5794 = vpop.permute.xlu0 %5793
        %5795 = vrot.lane.b32.xlu0 %v5481, 62
        %v5796 = vpop.permute.xlu0 %5795
        %5797 = vrot.lane.b32.xlu0 %v5482, 62
        %v5798 = vpop.permute.xlu0 %5797
        %5804 = vrot.lane.b32.xlu0 %v5478, 94
        %v5805 = vpop.permute.xlu0 %5804
        %5806 = vrot.lane.b32.xlu0 %v5479, 94
        %v5807 = vpop.permute.xlu0 %5806
        %5808 = vrot.lane.b32.xlu0 %v5480, 94
        %v5809 = vpop.permute.xlu0 %5808
        %5810 = vrot.lane.b32.xlu0 %v5481, 94
        %v5811 = vpop.permute.xlu0 %5810
        %5812 = vrot.lane.b32.xlu0 %v5482, 94
        %v5813 = vpop.permute.xlu0 %5812
        %v5819 = vsel %vm1198, %v5760, %v5775
        %v5820 = vsel %vm1198, %v5762, %v5777
        %v5821 = vsel %vm1198, %v5764, %v5779
        %v5822 = vsel %vm1198, %v5766, %v5781
        %v5823 = vsel %vm1198, %v5768, %v5783
        %v5824 = vsel %vm1204, %v5819, %v5790
        %v5825 = vsel %vm1204, %v5820, %v5792
        %v5826 = vsel %vm1204, %v5821, %v5794
        %v5827 = vsel %vm1204, %v5822, %v5796
        %v5828 = vsel %vm1204, %v5823, %v5798
        %v5829 = vsel %vm1210, %v5824, %v5805
        %v5830 = vsel %vm1210, %v5825, %v5807
        %v5831 = vsel %vm1210, %v5826, %v5809
        %v5832 = vsel %vm1210, %v5827, %v5811
        %v5833 = vsel %vm1210, %v5828, %v5813
        %v5834 = vld [vmem:[%s6 + $0x14] sm:$0x1]
        %v5835 = vperm.slane %v5834, 0
        %v5836 = vmul.f32 %v5835, %v5829
        %v5837 = vmul.f32 %v5835, %v5830
        %v5838 = vmul.f32 %v5835, %v5831
        %v5839 = vmul.f32 %v5835, %v5832
        %v5840 = vadd.f32 %v5755, %v5836
        %v5841 = vadd.f32 %v5756, %v5837
        %v5842 = vadd.f32 %v5757, %v5838
        %v5843 = vadd.f32 %v5758, %v5839
        %v5844 = vld [vmem:[%s6 + $0x17] sm:$0x1]
        %v5845 = vperm.slane %v5844, 0
        %v5846 = vmul.f32 %v5845, %v5829
        %v5847 = vmul.f32 %v5845, %v5830
        %v5848 = vmul.f32 %v5845, %v5831
        %v5849 = vmul.f32 %v5845, %v5832
        %v5850 = vmul.f32 %v5845, %v5833
        %v5856 = vrot.slane %v5846, 1
        %v5857 = vrot.slane %v5847, 1
        %v5858 = vsel %vm1238, %v5856, %v5857
        %v5859 = vrot.slane %v5848, 1
        %v5860 = vsel %vm1238, %v5857, %v5859
        %v5861 = vrot.slane %v5849, 1
        %v5862 = vsel %vm1238, %v5859, %v5861
        %v5863 = vrot.slane %v5850, 1
        %v5864 = vsel %vm1238, %v5861, %v5863
        %v5869 = vadd.f32 %v5840, %v5858
        %v5870 = vadd.f32 %v5841, %v5860
        %v5871 = vadd.f32 %v5842, %v5862
        %v5872 = vadd.f32 %v5843, %v5864
        %v5873 = vld [vmem:[%s6 + $0x1a] sm:$0x1]
        %v5874 = vperm.slane %v5873, 0
        %v5875 = vmul.f32 %v5874, %v5829
        %v5876 = vmul.f32 %v5874, %v5830
        %v5877 = vmul.f32 %v5874, %v5831
        %v5878 = vmul.f32 %v5874, %v5832
        %v5879 = vmul.f32 %v5874, %v5833
        %v5885 = vrot.slane %v5875, 2
        %v5886 = vrot.slane %v5876, 2
        %v5887 = vsel %vm1268, %v5885, %v5886
        %v5888 = vrot.slane %v5877, 2
        %v5889 = vsel %vm1268, %v5886, %v5888
        %v5890 = vrot.slane %v5878, 2
        %v5891 = vsel %vm1268, %v5888, %v5890
        %v5892 = vrot.slane %v5879, 2
        %v5893 = vsel %vm1268, %v5890, %v5892
        %v5898 = vadd.f32 %v5869, %v5887
        %v5899 = vadd.f32 %v5870, %v5889
        %v5900 = vadd.f32 %v5871, %v5891
        %v5901 = vadd.f32 %v5872, %v5893
        %v5902 = vld [vmem:[%s4620] sm:$0xff]
        %v5903 = vld [vmem:[%s4620 + $0x8] sm:$0xff]
        %v5904 = vld [vmem:[%s4620 + $0x10] sm:$0xff]
        %v5905 = vld [vmem:[%s4620 + $0x18] sm:$0xff]
        %v5906 = vld [vmem:[%s4620 + $0x20] sm:$0x3]
        %5912 = vrot.lane.b32.xlu0 %v5902, 32
        %v5913 = vpop.permute.xlu0 %5912
        %5914 = vrot.lane.b32.xlu0 %v5903, 32
        %v5915 = vpop.permute.xlu0 %5914
        %5916 = vrot.lane.b32.xlu0 %v5904, 32
        %v5917 = vpop.permute.xlu0 %5916
        %5918 = vrot.lane.b32.xlu0 %v5905, 32
        %v5919 = vpop.permute.xlu0 %5918
        %5920 = vrot.lane.b32.xlu0 %v5906, 32
        %v5921 = vpop.permute.xlu0 %5920
        %5927 = vrot.lane.b32.xlu0 %v5902, 64
        %v5928 = vpop.permute.xlu0 %5927
        %5929 = vrot.lane.b32.xlu0 %v5903, 64
        %v5930 = vpop.permute.xlu0 %5929
        %5931 = vrot.lane.b32.xlu0 %v5904, 64
        %v5932 = vpop.permute.xlu0 %5931
        %5933 = vrot.lane.b32.xlu0 %v5905, 64
        %v5934 = vpop.permute.xlu0 %5933
        %5935 = vrot.lane.b32.xlu0 %v5906, 64
        %v5936 = vpop.permute.xlu0 %5935
        %5942 = vrot.lane.b32.xlu0 %v5902, 96
        %v5943 = vpop.permute.xlu0 %5942
        %5944 = vrot.lane.b32.xlu0 %v5903, 96
        %v5945 = vpop.permute.xlu0 %5944
        %5946 = vrot.lane.b32.xlu0 %v5904, 96
        %v5947 = vpop.permute.xlu0 %5946
        %5948 = vrot.lane.b32.xlu0 %v5905, 96
        %v5949 = vpop.permute.xlu0 %5948
        %5950 = vrot.lane.b32.xlu0 %v5906, 96
        %v5951 = vpop.permute.xlu0 %5950
        %v5957 = vsel %vm1198, %v5902, %v5913
        %v5958 = vsel %vm1198, %v5903, %v5915
        %v5959 = vsel %vm1198, %v5904, %v5917
        %v5960 = vsel %vm1198, %v5905, %v5919
        %v5961 = vsel %vm1198, %v5906, %v5921
        %v5962 = vsel %vm1204, %v5957, %v5928
        %v5963 = vsel %vm1204, %v5958, %v5930
        %v5964 = vsel %vm1204, %v5959, %v5932
        %v5965 = vsel %vm1204, %v5960, %v5934
        %v5966 = vsel %vm1204, %v5961, %v5936
        %v5967 = vsel %vm1210, %v5962, %v5943
        %v5968 = vsel %vm1210, %v5963, %v5945
        %v5969 = vsel %vm1210, %v5964, %v5947
        %v5970 = vsel %vm1210, %v5965, %v5949
        %v5971 = vsel %vm1210, %v5966, %v5951
        %v5972 = vld [vmem:[%s6 + $0x1b] sm:$0x1]
        %v5973 = vperm.slane %v5972, 0
        %v5974 = vmul.f32 %v5973, %v5967
        %v5975 = vmul.f32 %v5973, %v5968
        %v5976 = vmul.f32 %v5973, %v5969
        %v5977 = vmul.f32 %v5973, %v5970
        %v5978 = vadd.f32 %v5898, %v5974
        %v5979 = vadd.f32 %v5899, %v5975
        %v5980 = vadd.f32 %v5900, %v5976
        %v5981 = vadd.f32 %v5901, %v5977
        %v5982 = vld [vmem:[%s6 + $0x1e] sm:$0x1]
        %v5983 = vperm.slane %v5982, 0
        %v5984 = vmul.f32 %v5983, %v5967
        %v5985 = vmul.f32 %v5983, %v5968
        %v5986 = vmul.f32 %v5983, %v5969
        %v5987 = vmul.f32 %v5983, %v5970
        %v5988 = vmul.f32 %v5983, %v5971
        %v5994 = vrot.slane %v5984, 1
        %v5995 = vrot.slane %v5985, 1
        %v5996 = vsel %vm1238, %v5994, %v5995
        %v5997 = vrot.slane %v5986, 1
        %v5998 = vsel %vm1238, %v5995, %v5997
        %v5999 = vrot.slane %v5987, 1
        %v6000 = vsel %vm1238, %v5997, %v5999
        %v6001 = vrot.slane %v5988, 1
        %v6002 = vsel %vm1238, %v5999, %v6001
        %v6007 = vadd.f32 %v5978, %v5996
        %v6008 = vadd.f32 %v5979, %v5998
        %v6009 = vadd.f32 %v5980, %v6000
        %v6010 = vadd.f32 %v5981, %v6002
        %v6011 = vld [vmem:[%s6 + $0x21] sm:$0x1]
        %v6012 = vperm.slane %v6011, 0
        %v6013 = vmul.f32 %v6012, %v5967
        %v6014 = vmul.f32 %v6012, %v5968
        %v6015 = vmul.f32 %v6012, %v5969
        %v6016 = vmul.f32 %v6012, %v5970
        %v6017 = vmul.f32 %v6012, %v5971
        %v6023 = vrot.slane %v6013, 2
        %v6024 = vrot.slane %v6014, 2
        %v6025 = vsel %vm1268, %v6023, %v6024
        %v6026 = vrot.slane %v6015, 2
        %v6027 = vsel %vm1268, %v6024, %v6026
        %v6028 = vrot.slane %v6016, 2
        %v6029 = vsel %vm1268, %v6026, %v6028
        %v6030 = vrot.slane %v6017, 2
        %v6031 = vsel %vm1268, %v6028, %v6030
        %v6036 = vadd.f32 %v6007, %v6025
        %v6037 = vadd.f32 %v6008, %v6027
        %v6038 = vadd.f32 %v6009, %v6029
        %v6039 = vadd.f32 %v6010, %v6031
        %6040 = vrot.lane.b32.xlu0 %v5902, 127
        %v6041 = vpop.permute.xlu0 %6040
        %6042 = vrot.lane.b32.xlu0 %v5903, 127
        %v6043 = vpop.permute.xlu0 %6042
        %6044 = vrot.lane.b32.xlu0 %v5904, 127
        %v6045 = vpop.permute.xlu0 %6044
        %6046 = vrot.lane.b32.xlu0 %v5905, 127
        %v6047 = vpop.permute.xlu0 %6046
        %6048 = vrot.lane.b32.xlu0 %v5906, 127
        %v6049 = vpop.permute.xlu0 %6048
        %6055 = vrot.lane.b32.xlu0 %v5902, 31
        %v6056 = vpop.permute.xlu0 %6055
        %6057 = vrot.lane.b32.xlu0 %v5903, 31
        %v6058 = vpop.permute.xlu0 %6057
        %6059 = vrot.lane.b32.xlu0 %v5904, 31
        %v6060 = vpop.permute.xlu0 %6059
        %6061 = vrot.lane.b32.xlu0 %v5905, 31
        %v6062 = vpop.permute.xlu0 %6061
        %6063 = vrot.lane.b32.xlu0 %v5906, 31
        %v6064 = vpop.permute.xlu0 %6063
        %6070 = vrot.lane.b32.xlu0 %v5902, 63
        %v6071 = vpop.permute.xlu0 %6070
        %6072 = vrot.lane.b32.xlu0 %v5903, 63
        %v6073 = vpop.permute.xlu0 %6072
        %6074 = vrot.lane.b32.xlu0 %v5904, 63
        %v6075 = vpop.permute.xlu0 %6074
        %6076 = vrot.lane.b32.xlu0 %v5905, 63
        %v6077 = vpop.permute.xlu0 %6076
        %6078 = vrot.lane.b32.xlu0 %v5906, 63
        %v6079 = vpop.permute.xlu0 %6078
        %6085 = vrot.lane.b32.xlu0 %v5902, 95
        %v6086 = vpop.permute.xlu0 %6085
        %6087 = vrot.lane.b32.xlu0 %v5903, 95
        %v6088 = vpop.permute.xlu0 %6087
        %6089 = vrot.lane.b32.xlu0 %v5904, 95
        %v6090 = vpop.permute.xlu0 %6089
        %6091 = vrot.lane.b32.xlu0 %v5905, 95
        %v6092 = vpop.permute.xlu0 %6091
        %6093 = vrot.lane.b32.xlu0 %v5906, 95
        %v6094 = vpop.permute.xlu0 %6093
        %v6100 = vsel %vm1198, %v6041, %v6056
        %v6101 = vsel %vm1198, %v6043, %v6058
        %v6102 = vsel %vm1198, %v6045, %v6060
        %v6103 = vsel %vm1198, %v6047, %v6062
        %v6104 = vsel %vm1198, %v6049, %v6064
        %v6105 = vsel %vm1204, %v6100, %v6071
        %v6106 = vsel %vm1204, %v6101, %v6073
        %v6107 = vsel %vm1204, %v6102, %v6075
        %v6108 = vsel %vm1204, %v6103, %v6077
        %v6109 = vsel %vm1204, %v6104, %v6079
        %v6110 = vsel %vm1210, %v6105, %v6086
        %v6111 = vsel %vm1210, %v6106, %v6088
        %v6112 = vsel %vm1210, %v6107, %v6090
        %v6113 = vsel %vm1210, %v6108, %v6092
        %v6114 = vsel %vm1210, %v6109, %v6094
        %v6115 = vld [vmem:[%s6 + $0x1c] sm:$0x1]
        %v6116 = vperm.slane %v6115, 0
        %v6117 = vmul.f32 %v6116, %v6110
        %v6118 = vmul.f32 %v6116, %v6111
        %v6119 = vmul.f32 %v6116, %v6112
        %v6120 = vmul.f32 %v6116, %v6113
        %v6121 = vadd.f32 %v6036, %v6117
        %v6122 = vadd.f32 %v6037, %v6118
        %v6123 = vadd.f32 %v6038, %v6119
        %v6124 = vadd.f32 %v6039, %v6120
        %v6125 = vld [vmem:[%s6 + $0x1f] sm:$0x1]
        %v6126 = vperm.slane %v6125, 0
        %v6127 = vmul.f32 %v6126, %v6110
        %v6128 = vmul.f32 %v6126, %v6111
        %v6129 = vmul.f32 %v6126, %v6112
        %v6130 = vmul.f32 %v6126, %v6113
        %v6131 = vmul.f32 %v6126, %v6114
        %v6137 = vrot.slane %v6127, 1
        %v6138 = vrot.slane %v6128, 1
        %v6139 = vsel %vm1238, %v6137, %v6138
        %v6140 = vrot.slane %v6129, 1
        %v6141 = vsel %vm1238, %v6138, %v6140
        %v6142 = vrot.slane %v6130, 1
        %v6143 = vsel %vm1238, %v6140, %v6142
        %v6144 = vrot.slane %v6131, 1
        %v6145 = vsel %vm1238, %v6142, %v6144
        %v6150 = vadd.f32 %v6121, %v6139
        %v6151 = vadd.f32 %v6122, %v6141
        %v6152 = vadd.f32 %v6123, %v6143
        %v6153 = vadd.f32 %v6124, %v6145
        %v6154 = vld [vmem:[%s6 + $0x22] sm:$0x1]
        %v6155 = vperm.slane %v6154, 0
        %v6156 = vmul.f32 %v6155, %v6110
        %v6157 = vmul.f32 %v6155, %v6111
        %v6158 = vmul.f32 %v6155, %v6112
        %v6159 = vmul.f32 %v6155, %v6113
        %v6160 = vmul.f32 %v6155, %v6114
        %v6166 = vrot.slane %v6156, 2
        %v6167 = vrot.slane %v6157, 2
        %v6168 = vsel %vm1268, %v6166, %v6167
        %v6169 = vrot.slane %v6158, 2
        %v6170 = vsel %vm1268, %v6167, %v6169
        %v6171 = vrot.slane %v6159, 2
        %v6172 = vsel %vm1268, %v6169, %v6171
        %v6173 = vrot.slane %v6160, 2
        %v6174 = vsel %vm1268, %v6171, %v6173
        %v6179 = vadd.f32 %v6150, %v6168
        %v6180 = vadd.f32 %v6151, %v6170
        %v6181 = vadd.f32 %v6152, %v6172
        %v6182 = vadd.f32 %v6153, %v6174
        %6183 = vrot.lane.b32.xlu0 %v5902, 126
        %v6184 = vpop.permute.xlu0 %6183
        %6185 = vrot.lane.b32.xlu0 %v5903, 126
        %v6186 = vpop.permute.xlu0 %6185
        %6187 = vrot.lane.b32.xlu0 %v5904, 126
        %v6188 = vpop.permute.xlu0 %6187
        %6189 = vrot.lane.b32.xlu0 %v5905, 126
        %v6190 = vpop.permute.xlu0 %6189
        %6191 = vrot.lane.b32.xlu0 %v5906, 126
        %v6192 = vpop.permute.xlu0 %6191
        %6198 = vrot.lane.b32.xlu0 %v5902, 30
        %v6199 = vpop.permute.xlu0 %6198
        %6200 = vrot.lane.b32.xlu0 %v5903, 30
        %v6201 = vpop.permute.xlu0 %6200
        %6202 = vrot.lane.b32.xlu0 %v5904, 30
        %v6203 = vpop.permute.xlu0 %6202
        %6204 = vrot.lane.b32.xlu0 %v5905, 30
        %v6205 = vpop.permute.xlu0 %6204
        %6206 = vrot.lane.b32.xlu0 %v5906, 30
        %v6207 = vpop.permute.xlu0 %6206
        %6213 = vrot.lane.b32.xlu0 %v5902, 62
        %v6214 = vpop.permute.xlu0 %6213
        %6215 = vrot.lane.b32.xlu0 %v5903, 62
        %v6216 = vpop.permute.xlu0 %6215
        %6217 = vrot.lane.b32.xlu0 %v5904, 62
        %v6218 = vpop.permute.xlu0 %6217
        %6219 = vrot.lane.b32.xlu0 %v5905, 62
        %v6220 = vpop.permute.xlu0 %6219
        %6221 = vrot.lane.b32.xlu0 %v5906, 62
        %v6222 = vpop.permute.xlu0 %6221
        %6228 = vrot.lane.b32.xlu0 %v5902, 94
        %v6229 = vpop.permute.xlu0 %6228
        %6230 = vrot.lane.b32.xlu0 %v5903, 94
        %v6231 = vpop.permute.xlu0 %6230
        %6232 = vrot.lane.b32.xlu0 %v5904, 94
        %v6233 = vpop.permute.xlu0 %6232
        %6234 = vrot.lane.b32.xlu0 %v5905, 94
        %v6235 = vpop.permute.xlu0 %6234
        %6236 = vrot.lane.b32.xlu0 %v5906, 94
        %v6237 = vpop.permute.xlu0 %6236
        %v6243 = vsel %vm1198, %v6184, %v6199
        %v6244 = vsel %vm1198, %v6186, %v6201
        %v6245 = vsel %vm1198, %v6188, %v6203
        %v6246 = vsel %vm1198, %v6190, %v6205
        %v6247 = vsel %vm1198, %v6192, %v6207
        %v6248 = vsel %vm1204, %v6243, %v6214
        %v6249 = vsel %vm1204, %v6244, %v6216
        %v6250 = vsel %vm1204, %v6245, %v6218
        %v6251 = vsel %vm1204, %v6246, %v6220
        %v6252 = vsel %vm1204, %v6247, %v6222
        %v6253 = vsel %vm1210, %v6248, %v6229
        %v6254 = vsel %vm1210, %v6249, %v6231
        %v6255 = vsel %vm1210, %v6250, %v6233
        %v6256 = vsel %vm1210, %v6251, %v6235
        %v6257 = vsel %vm1210, %v6252, %v6237
        %v6258 = vld [vmem:[%s6 + $0x1d] sm:$0x1]
        %v6259 = vperm.slane %v6258, 0
        %v6260 = vmul.f32 %v6259, %v6253
        %v6261 = vmul.f32 %v6259, %v6254
        %v6262 = vmul.f32 %v6259, %v6255
        %v6263 = vmul.f32 %v6259, %v6256
        %v6264 = vadd.f32 %v6179, %v6260
        %v6265 = vadd.f32 %v6180, %v6261
        %v6266 = vadd.f32 %v6181, %v6262
        %v6267 = vadd.f32 %v6182, %v6263
        %v6268 = vld [vmem:[%s6 + $0x20] sm:$0x1]
        %v6269 = vperm.slane %v6268, 0
        %v6270 = vmul.f32 %v6269, %v6253
        %v6271 = vmul.f32 %v6269, %v6254
        %v6272 = vmul.f32 %v6269, %v6255
        %v6273 = vmul.f32 %v6269, %v6256
        %v6274 = vmul.f32 %v6269, %v6257
        %v6280 = vrot.slane %v6270, 1
        %v6281 = vrot.slane %v6271, 1
        %v6282 = vsel %vm1238, %v6280, %v6281
        %v6283 = vrot.slane %v6272, 1
        %v6284 = vsel %vm1238, %v6281, %v6283
        %v6285 = vrot.slane %v6273, 1
        %v6286 = vsel %vm1238, %v6283, %v6285
        %v6287 = vrot.slane %v6274, 1
        %v6288 = vsel %vm1238, %v6285, %v6287
        %v6293 = vadd.f32 %v6264, %v6282
        %v6294 = vadd.f32 %v6265, %v6284
        %v6295 = vadd.f32 %v6266, %v6286
        %v6296 = vadd.f32 %v6267, %v6288
        %v6297 = vld [vmem:[%s6 + $0x23] sm:$0x1]
        %v6298 = vperm.slane %v6297, 0
        %v6299 = vmul.f32 %v6298, %v6253
        %v6300 = vmul.f32 %v6298, %v6254
        %v6301 = vmul.f32 %v6298, %v6255
        %v6302 = vmul.f32 %v6298, %v6256
        %v6303 = vmul.f32 %v6298, %v6257
        %v6309 = vrot.slane %v6299, 2
        %v6310 = vrot.slane %v6300, 2
        %v6311 = vsel %vm1268, %v6309, %v6310
        %v6312 = vrot.slane %v6301, 2
        %v6313 = vsel %vm1268, %v6310, %v6312
        %v6314 = vrot.slane %v6302, 2
        %v6315 = vsel %vm1268, %v6312, %v6314
        %v6316 = vrot.slane %v6303, 2
        %v6317 = vsel %vm1268, %v6314, %v6316
        %v6322 = vadd.f32 %v6293, %v6311
        %v6323 = vadd.f32 %v6294, %v6313
        %v6324 = vadd.f32 %v6295, %v6315
        %v6325 = vadd.f32 %v6296, %v6317
        %v6326 = vmax.f32 %v6322, 0.0
        %v6327 = vmax.f32 %v6323, 0.0
        %v6328 = vmax.f32 %v6324, 0.0
        %v6329 = vmax.f32 %v6325, 0.0
        %v6330 = vperm.slane %v4626, 0
        %v6331 = vmul.f32 %v6326, %v6330
        %v6332 = vmul.f32 %v6327, %v6330
        %v6333 = vmul.f32 %v6328, %v6330
        %v6334 = vmul.f32 %v6329, %v6330
        %v6335 = vperm.slane %v4627, 0
        %v6336 = vadd.f32 %v6331, %v6335
        %v6337 = vadd.f32 %v6332, %v6335
        %v6338 = vadd.f32 %v6333, %v6335
        %v6339 = vadd.f32 %v6334, %v6335
        %6340 = vst [vmem:[%s406] sm:$0xff] %v6336
        %6341 = vst [vmem:[%s406 + $0x8] sm:$0xff] %v6337
        %6342 = vst [vmem:[%s406 + $0x10] sm:$0xff] %v6338
        %6343 = vst [vmem:[%s406 + $0x18] sm:$0xff] %v6339
        %p6344 = scmp.lt.s32.totalorder %s23, 1
        %s6345 = scalar_select %p6344, %s23, 1
        %s6346 = smul.addr %s6345, 4
        %s6347 = smul.addr %s6346, 8
        %s6348 = scalar_lea.vmem %s10, %s6347
        // Predicated region
        $region69: #{upconv_block_forward.1} parent=59 // pred_check
          %p6349 = pneg %p261
        $region70: #{upconv_block_forward.1} parent=59 // pred_check_branch
          %6351 = sbr.rel (%p6349) target = $region72
        $region71: #{upconv_block_forward.1} parent=59 // pred_region
          _
        $region72: #{upconv_block_forward.1} parent=59 // pred_fallthru
          _
      $region60: #{upconv_block_forward.1} parent=5 // pred_fallthru
        _
      %p6352 = scmp.le.s32.totalorder 2, %s18
      // Predicated region
      $region73: #{upconv_block_forward.1} parent=5 // pred_check
        %p6353 = pneg %p6352
      $region74: #{upconv_block_forward.1} parent=5 // pred_check_branch
        %6355 = sbr.rel (%p6353) target = $region76
      $region75: #{upconv_block_forward.1} parent=5 // pred_region
        %s6356 = ssub.s32 %s18, 2
        // Predicated region
        $region77: #{upconv_block_forward.1} parent=75 // pred_check
          %p6357 = pneg %p267
        $region78: #{upconv_block_forward.1} parent=75 // pred_check_branch
          %6359 = sbr.rel (%p6357) target = $region80
        $region79: #{upconv_block_forward.1} parent=75 // pred_region
          %p6360 = scmp.lt.s32.totalorder %s24, 1
          %s6361 = scalar_select %p6360, %s24, 1
          %s6362 = smul.addr %s6361, 4
          %s6363 = smul.addr %s6362, 8
          %s6364 = scalar_lea.vmem %s10, %s6363
        $region80: #{upconv_block_forward.1} parent=75 // pred_fallthru
          _
      $region76: #{upconv_block_forward.1} parent=5 // pred_fallthru
        _
    $region6: #{upconv_block_forward.1} parent=1 // loop_footer
      %s22 = sadd.s32 1, %s18
    $region7: #{upconv_block_forward.1} parent=1 // loop_footer_branch
      %17 = sbr.rel target = $region3
    $region8: #{upconv_block_forward.1} parent=1 // loop_exit
      _
    %6365 = vsyncpa [#allocation5], 1
    %s6366 = scalar_lea.sflag [#allocation5], 1
    %6367 = vsyncpa %s6366, 1
    %6368 = vsyncpa [#allocation7], 1

</llo_original>
